<compile_context>
chip_gen: v7x
topology: tpu7x:2x2x1
jax: 0.10.0
libtpu: 0.0.40
codegen_flags: <defaults>
</compile_context>

<pallas_src>
import functools

import jax
import jax.numpy as jnp
from jax.experimental import pallas as pl
from jax.experimental.pallas import tpu as pltpu

LANE = 128


def _round_up(x, m):
    return ((x + m - 1) // m) * m


@functools.lru_cache(maxsize=None)
def _vmem_budget():
    """(per-call tile budget bytes, vmem_limit_bytes), generation-aware."""
    try:
        cap = int(pltpu.get_tpu_info().vmem_capacity_bytes)
    except Exception:                       # conservative fallback: v7x-sized VMEM
        cap = 64 * 1024 * 1024
    limit = min(cap - 16 * 1024 * 1024, int(cap * 0.85))
    limit = max(limit, 32 * 1024 * 1024)
    budget = max(int(limit * 0.75), 16 * 1024 * 1024)
    return budget, limit


# ---------------------------------------------------------------------------
# Shared epilogue: bias + ReLU (+ fused 2x2 maxpool) from the flat f32 acc.
# ---------------------------------------------------------------------------
def _bias_relu_pool_epilogue(acc_ref, bias, o_ref, *, th, w_cols, row_len, pool):
    """acc_ref row h lives at [h*row_len, h*row_len + w_cols); any columns past
    w_cols are garbage and never read.  Even/odd column selection for the pool
    uses strided VMEM reads (sublane stride 2) -- no MXU involvement."""
    if pool:
        w2 = w_cols // 2
        for hp in range(th // 2):
            r0 = (2 * hp) * row_len
            r1 = (2 * hp + 1) * row_len
            m = jnp.maximum(
                jnp.maximum(acc_ref[pl.ds(r0, w2, 2), :],
                            acc_ref[pl.ds(r0 + 1, w2, 2), :]),
                jnp.maximum(acc_ref[pl.ds(r1, w2, 2), :],
                            acc_ref[pl.ds(r1 + 1, w2, 2), :]))
            o_ref[0, hp] = jnp.maximum(m + bias, 0.0).astype(o_ref.dtype)
    else:
        for h in range(th):
            row = acc_ref[pl.ds(h * row_len, w_cols), :]
            o_ref[0, h] = jnp.maximum(row + bias, 0.0).astype(o_ref.dtype)


# ---------------------------------------------------------------------------
# General lane-dense 3x3 conv kernel (cin padded to a multiple of 128)
# ---------------------------------------------------------------------------
def _conv3x3_kernel(x_ref, w_ref, b_ref, o_ref, acc_ref, *, th, w_cols, wp, pool):
    """x_ref  : (1, (th+3)*wp, cin_p) bf16 flattened zero-padded row window
       w_ref  : (9, cin_p, cout_p)    bf16 (whole-array resident in VMEM)
       b_ref  : (1, cout_p)           f32
       o_ref  : (1, th(/2), w_cols(/2), cout_p)
       acc_ref: (th*wp, cout_p)       f32 VMEM accumulator"""
    L = th * wp
    for kh in range(3):
        for kw in range(3):
            start = kh * wp + kw
            contrib = jnp.dot(x_ref[0, start:start + L, :], w_ref[kh * 3 + kw],
                              preferred_element_type=jnp.float32)      # MXU, f32 acc
            if kh == 0 and kw == 0:
                acc_ref[...] = contrib
            else:
                acc_ref[...] += contrib
    _bias_relu_pool_epilogue(acc_ref, b_ref[...], o_ref,
                             th=th, w_cols=w_cols, row_len=wp, pool=pool)


# ---------------------------------------------------------------------------
# Tap-folded conv kernel for the small-cin first layer (taps folded into K)
# ---------------------------------------------------------------------------
def _conv_folded_kernel(x_ref, w_ref, b_ref, o_ref, acc_ref, *, th, w_cols, pool):
    """x_ref: (1, th*W, 9*cin) bf16, w_ref: (9*cin, cout_p) bf16 -> one matmul."""
    acc_ref[...] = jnp.dot(x_ref[0], w_ref[...], preferred_element_type=jnp.float32)
    _bias_relu_pool_epilogue(acc_ref, b_ref[...], o_ref,
                             th=th, w_cols=w_cols, row_len=w_cols, pool=pool)


# ---------------------------------------------------------------------------
# Row-tile selection (VMEM-budget derived)
# ---------------------------------------------------------------------------
def _candidate_tiles(H, pool, min_tiles, cap=128):
    cands = [th for th in range(min(H, cap), 0, -1)
             if H % th == 0 and not (pool and th % 2)]
    pref = [th for th in cands if H // th >= min_tiles]      # keep both TCs busy
    return pref if pref else cands


def _choose_row_tile(H, W, cin_p, cout_p, pool, budget, min_tiles):
    wp = W + 2
    last = None
    for th in _candidate_tiles(H, pool, min_tiles):
        out_rows = th // 2 if pool else th
        out_cols = W // 2 if pool else W
        total = (2 * (th + 3) * wp * cin_p * 2            # bf16 input window (2 bufs)
                 + 2 * out_rows * out_cols * cout_p * 2   # bf16 output tile  (2 bufs)
                 + 9 * cin_p * cout_p * 2                 # bf16 weights (single copy)
                 + cout_p * 4                             # f32 bias
                 + th * wp * cout_p * 4)                  # f32 accumulator
        last = (th, total)
        if total <= budget:
            return th
    raise ValueError(f"conv3x3 tile {last} exceeds VMEM budget {budget} bytes")


def _choose_row_tile_folded(H, W, K, cout_p, pool, budget, min_tiles):
    last = None
    for th in _candidate_tiles(H, pool, min_tiles):
        if (th * W) % 8 and th != H:                      # (8,128) block constraint
            continue
        out_rows = th // 2 if pool else th
        out_cols = W // 2 if pool else W
        total = (2 * th * W * K * 2
                 + 2 * out_rows * out_cols * cout_p * 2
                 + K * cout_p * 2
                 + cout_p * 4
                 + th * W * cout_p * 4)
        last = (th, total)
        if total <= budget:
            return th
    raise ValueError(f"tap-folded conv tile {last} exceeds VMEM budget {budget} bytes")


# ---------------------------------------------------------------------------
# Conv wrappers
# ---------------------------------------------------------------------------
def conv3x3_relu(x, w_taps, b, *, pool):
    """3x3 conv (stride 1, pad 1) + bias + ReLU, optionally fused 2x2 maxpool.

    x      : (N, H, W, C) activations; channels are zero-padded up to the
             weight's cin_p here if needed (no-op for already padded inputs).
    w_taps : (9, cin_p, cout_p) bf16  (prepared), b: (1, cout_p) f32 (prepared).
    Returns (N, H', W', cout_p) bf16.
    """
    N, H, W, cx = x.shape
    taps, cin_p, cout_p = w_taps.shape
    assert taps == 9 and cx <= cin_p and cin_p % LANE == 0 and cout_p % LANE == 0
    if pool:
        assert H % 2 == 0 and W % 2 == 0

    x = x.astype(jnp.bfloat16)
    if cx < cin_p:
        x = jnp.pad(x, ((0, 0), (0, 0), (0, 0), (0, cin_p - cx)))

    budget, vmem_limit = _vmem_budget()
    min_tiles = 1 if N > 1 else 2
    th = _choose_row_tile(H, W, cin_p, cout_p, pool, budget, min_tiles)
    n_tiles = H // th
    wp = W + 2
    p_rows = (th + 3) * wp
    L = th * wp

    # Spatial zero-pad (one extra bottom row keeps the flattened tap slices in
    # bounds) and overlapping row windows (only a 3-row halo/tile is duplicated).
    xp = jnp.pad(x, ((0, 0), (1, 2), (1, 1), (0, 0)))
    xw = jnp.stack([xp[:, t * th:t * th + th + 3] for t in range(n_tiles)], axis=1)
    xw = xw.reshape(N * n_tiles, p_rows, cin_p)

    out_rows = th // 2 if pool else th
    out_cols = W // 2 if pool else W
    out_shape = jax.ShapeDtypeStruct((N * n_tiles, out_rows, out_cols, cout_p),
                                     jnp.bfloat16)

    flops = 2 * (N * n_tiles) * L * cin_p * cout_p * 9
    bytes_accessed = (xw.size * 2 + w_taps.size * 2 + b.size * 4
                      + (N * n_tiles) * out_rows * out_cols * cout_p * 2)

    kern = functools.partial(_conv3x3_kernel, th=th, w_cols=W, wp=wp, pool=pool)
    out = pl.pallas_call(
        kern,
        out_shape=out_shape,
        grid=(N * n_tiles,),
        in_specs=[
            pl.BlockSpec((1, p_rows, cin_p), lambda g: (g, 0, 0)),
            pl.BlockSpec(memory_space=pltpu.MemorySpace.VMEM),   # weights, 1 copy
            pl.BlockSpec(memory_space=pltpu.MemorySpace.VMEM),   # bias
        ],
        out_specs=pl.BlockSpec((1, out_rows, out_cols, cout_p),
                               lambda g: (g, 0, 0, 0)),
        scratch_shapes=[pltpu.VMEM((L, cout_p), jnp.float32)],
        compiler_params=pltpu.CompilerParams(
            dimension_semantics=("parallel",),
            vmem_limit_bytes=vmem_limit),
        cost_estimate=pl.CostEstimate(flops=flops, transcendentals=0,
                                      bytes_accessed=bytes_accessed),
    )(xw, w_taps, b)

    H_out = H // 2 if pool else H
    return out.reshape(N, H_out, out_cols, cout_p)


def conv3x3_folded_relu(x, w_flat, b, *, pool):
    """First-layer 3x3 conv with the 9 taps folded into the MXU K dimension.

    x: (N, H, W, cin) with small cin (unpadded), w_flat: (9*cin, cout_p) bf16,
    b: (1, cout_p) f32.  Returns (N, H', W', cout_p) bf16.
    """
    N, H, W, cin = x.shape
    K, cout_p = w_flat.shape
    assert K == 9 * cin and cout_p % LANE == 0
    if pool:
        assert H % 2 == 0 and W % 2 == 0

    # Wrapper-side tap fold ("im2col" at 9*cin channels -- tiny for RGB input,
    # far cheaper than padding the raw image to 128 channels).
    xp = jnp.pad(x.astype(jnp.bfloat16), ((0, 0), (1, 1), (1, 1), (0, 0)))
    patches = [xp[:, kh:kh + H, kw:kw + W, :] for kh in range(3) for kw in range(3)]
    xi = jnp.concatenate(patches, axis=-1).reshape(N, H * W, K)

    budget, vmem_limit = _vmem_budget()
    min_tiles = 1 if N > 1 else 2
    th = _choose_row_tile_folded(H, W, K, cout_p, pool, budget, min_tiles)
    n_tiles = H // th

    out_rows = th // 2 if pool else th
    out_cols = W // 2 if pool else W
    H_out = H // 2 if pool else H

    flops = 2 * N * H * W * K * cout_p
    bytes_accessed = (xi.size * 2 + w_flat.size * 2 + b.size * 4
                      + N * H_out * out_cols * cout_p * 2)

    kern = functools.partial(_conv_folded_kernel, th=th, w_cols=W, pool=pool)
    out = pl.pallas_call(
        kern,
        out_shape=jax.ShapeDtypeStruct((N, H_out, out_cols, cout_p), jnp.bfloat16),
        grid=(N, n_tiles),
        in_specs=[
            pl.BlockSpec((1, th * W, K), lambda n, t: (n, t, 0)),
            pl.BlockSpec(memory_space=pltpu.MemorySpace.VMEM),
            pl.BlockSpec(memory_space=pltpu.MemorySpace.VMEM),
        ],
        out_specs=pl.BlockSpec((1, out_rows, out_cols, cout_p),
                               lambda n, t: (n, t, 0, 0)),
        scratch_shapes=[pltpu.VMEM((th * W, cout_p), jnp.float32)],
        compiler_params=pltpu.CompilerParams(
            dimension_semantics=("parallel", "parallel"),
            vmem_limit_bytes=vmem_limit),
        cost_estimate=pl.CostEstimate(flops=flops, transcendentals=0,
                                      bytes_accessed=bytes_accessed),
    )(xi, w_flat, b)
    return out


# ---------------------------------------------------------------------------
# Standalone 2x2 maxpool (pure VPU / strided reads; used only when not fusable)
# ---------------------------------------------------------------------------
def _maxpool_rowpair_kernel(xe_ref, xo_ref, o_ref, m_ref, *, w_cols):
    m_ref[...] = jnp.maximum(xe_ref[0, 0].astype(jnp.float32),
                             xo_ref[0, 0].astype(jnp.float32))
    w2 = w_cols // 2
    row = jnp.maximum(m_ref[pl.ds(0, w2, 2), :], m_ref[pl.ds(1, w2, 2), :])
    o_ref[0, 0] = row.astype(o_ref.dtype)


def maxpool2x2(x):
    """MaxPool2d(2, 2) on (N, H, W, C)."""
    N, H, W, C = x.shape
    assert H % 2 == 0 and W % 2 == 0
    _, vmem_limit = _vmem_budget()
    itemsize = x.dtype.itemsize
    kern = functools.partial(_maxpool_rowpair_kernel, w_cols=W)
    return pl.pallas_call(
        kern,
        out_shape=jax.ShapeDtypeStruct((N, H // 2, W // 2, C), x.dtype),
        grid=(N, H // 2),
        in_specs=[
            pl.BlockSpec((1, 1, W, C), lambda n, r: (n, 2 * r, 0, 0)),
            pl.BlockSpec((1, 1, W, C), lambda n, r: (n, 2 * r + 1, 0, 0)),
        ],
        out_specs=pl.BlockSpec((1, 1, W // 2, C), lambda n, r: (n, r, 0, 0)),
        scratch_shapes=[pltpu.VMEM((W, C), jnp.float32)],
        compiler_params=pltpu.CompilerParams(
            dimension_semantics=("parallel", "parallel"),
            vmem_limit_bytes=vmem_limit),
        cost_estimate=pl.CostEstimate(
            flops=N * H * W * C, transcendentals=0,
            bytes_accessed=x.size * itemsize + N * (H // 2) * (W // 2) * C * itemsize),
    )(x, x)


# ---------------------------------------------------------------------------
# Parameters: synthetic init + one-time kernel-layout preparation
# ---------------------------------------------------------------------------
def init_vgg_params(key, cfg, in_channels=3):
    """Synthetic deterministic init (HWIO conv weights + biases)."""
    params = []
    c = in_channels
    for v in cfg:
        if v == 'M':
            continue
        key, kw_, kb_ = jax.random.split(key, 3)
        params.append((jax.random.normal(kw_, (3, 3, c, v), jnp.float32) * 0.05,
                       jax.random.normal(kb_, (v,), jnp.float32) * 0.01))
        c = v
    return params


def prepare_vgg_params(conv_params, cfg, in_channels=3):
    """One-time weight/bias preparation (pad, tap layout, bf16 cast).

    The first conv with small cin gets the tap-folded (9*cin, cout_p) layout;
    all other convs get the lane-dense (9, cin_p, cout_p) layout.
    """
    prepped = []
    c = in_channels
    first = True
    pi = 0
    for v in cfg:
        if v == 'M':
            continue
        w, b = conv_params[pi]
        pi += 1
        cout_p = _round_up(v, LANE)
        if first and 9 * c <= 2 * LANE:
            wk = jnp.pad(w, ((0, 0), (0, 0), (0, 0), (0, cout_p - v)))
            wk = wk.reshape(9 * c, cout_p).astype(jnp.bfloat16)
        else:
            cin_p = _round_up(c, LANE)
            wk = jnp.pad(w, ((0, 0), (0, 0), (0, cin_p - c), (0, cout_p - v)))
            wk = wk.reshape(9, cin_p, cout_p).astype(jnp.bfloat16)
        bk = jnp.pad(b, (0, cout_p - v)).astype(jnp.float32).reshape(1, cout_p)
        prepped.append((wk, bk))
        c = v
        first = False
    return prepped


# ---------------------------------------------------------------------------
# VGG "features" forward (Pallas) + pure-JAX reference
# ---------------------------------------------------------------------------
def vgg_forward(x_nchw, length, prepared_params, *, cfg):
    """Pallas forward of VGG.features; `length` kept for interface parity."""
    del length
    x = jnp.transpose(x_nchw, (0, 2, 3, 1))                  # NCHW -> NHWC
    last_cout = x.shape[-1]
    i, pi = 0, 0
    while i < len(cfg):
        v = cfg[i]
        if v == 'M':
            # Only reached if a pool is not directly preceded by a conv
            # (never the case in standard VGG cfgs -- pools get fused).
            x = maxpool2x2(x)
            i += 1
        else:
            w, b = prepared_params[pi]
            pi += 1
            fuse = i + 1 < len(cfg) and cfg[i + 1] == 'M'
            if w.ndim == 2:                                   # tap-folded first conv
                x = conv3x3_folded_relu(x, w, b, pool=fuse)
            else:
                x = conv3x3_relu(x, w, b, pool=fuse)
            last_cout = v
            i += 2 if fuse else 1
    x = x[..., :last_cout].astype(jnp.float32)                # strip channel pad
    return jnp.transpose(x, (0, 3, 1, 2))                     # NHWC -> NCHW


def vgg_forward_ref(x_nchw, conv_params, cfg):
    """Pure-JAX reference with the same bf16-in / f32-accumulate numerics."""
    x = jnp.transpose(x_nchw, (0, 2, 3, 1)).astype(jnp.bfloat16)
    pi = 0
    for v in cfg:
        if v == 'M':
            x = jax.lax.reduce_window(
                x.astype(jnp.float32), -jnp.inf, jax.lax.max,
                (1, 2, 2, 1), (1, 2, 2, 1), 'VALID').astype(jnp.bfloat16)
        else:
            w, b = conv_params[pi]
            pi += 1
            y = jax.lax.conv_general_dilated(
                x, w.astype(jnp.bfloat16), (1, 1), 'SAME',
                dimension_numbers=('NHWC', 'HWIO', 'NHWC'),
                preferred_element_type=jnp.float32)
            x = jnp.maximum(y + b, 0.0).astype(jnp.bfloat16)
    return jnp.transpose(x.astype(jnp.float32), (0, 3, 1, 2))


if __name__ == "__main__":
    key = jax.random.PRNGKey(0)
    kx, kp, kq = jax.random.split(key, 3)

    # Small VGG-style features config: conv8, conv8, pool, conv16, pool.
    cfg = [8, 8, 'M', 16, 'M']
    conv_params = init_vgg_params(kp, cfg, in_channels=3)
    prepared = prepare_vgg_params(conv_params, cfg, in_channels=3)   # one-time prep

    x = jax.random.normal(kx, (2, 3, 16, 16), jnp.float32)    # NCHW, like PyTorch
    length = jnp.array([16, 16], jnp.int32)                   # unused by forward

    fwd = jax.jit(functools.partial(vgg_forward, cfg=cfg))
    out = jax.block_until_ready(fwd(x, length, prepared))
    assert out.shape == (2, 16, 4, 4), out.shape

    ref = vgg_forward_ref(x, conv_params, cfg)
    max_err = float(jnp.max(jnp.abs(out - ref)))
    assert jnp.allclose(out, ref, rtol=2e-2, atol=2e-3), max_err

    # Standalone pool kernel sanity check (pools are fused into the conv
    # epilogue in the VGG stack, so exercise this path directly).
    xt = jax.random.normal(kq, (2, 8, 8, 128), jnp.float32).astype(jnp.bfloat16)
    pout = jax.block_until_ready(maxpool2x2(xt))
    pref = jax.lax.reduce_window(xt.astype(jnp.float32), -jnp.inf, jax.lax.max,
                                 (1, 2, 2, 1), (1, 2, 2, 1), 'VALID')
    assert jnp.allclose(pout.astype(jnp.float32), pref, rtol=0, atol=1e-6)

    print("KERNEL_OK")
</pallas_src>

<mosaic_0001>
module attributes {stable_mosaic.version = 11 : i64} {
  func.func @_conv_folded_kernel(%arg0: i32, %arg1: i32, %arg2: memref<1x256x27xbf16, #tpu.memory_space<vmem>>, %arg3: memref<27x128xbf16, #tpu.memory_space<vmem>>, %arg4: memref<1x128xf32, #tpu.memory_space<vmem>>, %arg5: memref<1x16x16x128xbf16, #tpu.memory_space<vmem>>, %arg6: memref<256x128xf32, #tpu.memory_space<vmem>>) attributes {dimension_semantics = [#tpu.dimension_semantics<parallel>, #tpu.dimension_semantics<parallel>], iteration_bounds = array<i64: 2, 1>, scalar_prefetch = 0 : i64, scratch_operands = 1 : i64, tpu.core_type = #tpu.core_type<tc>, window_params = [{transform_indices = @transform_0, window_bounds = array<i64: 1, 256, 27>}, {pipeline_mode = #tpu.pipeline_mode<synchronous>, transform_indices = @transform_1, window_bounds = array<i64: 27, 128>}, {pipeline_mode = #tpu.pipeline_mode<synchronous>, transform_indices = @transform_2, window_bounds = array<i64: 1, 128>}, {transform_indices = @transform_3, window_bounds = array<i64: 1, 16, 16, 128>}]} {
    %c0 = arith.constant 0 : index
    %c0_0 = arith.constant 0 : index
    %c0_1 = arith.constant 0 : index
    %0 = vector.load %arg2[%c0, %c0_0, %c0_1] : memref<1x256x27xbf16, #tpu.memory_space<vmem>>, vector<1x256x27xbf16>
    %1 = vector.shape_cast %0 : vector<1x256x27xbf16> to vector<256x27xbf16>
    %c0_2 = arith.constant 0 : index
    %c0_3 = arith.constant 0 : index
    %2 = vector.load %arg3[%c0_2, %c0_3] : memref<27x128xbf16, #tpu.memory_space<vmem>>, vector<27x128xbf16>
    %cst = arith.constant dense<0.000000e+00> : vector<256x128xf32>
    %3 = tpu.matmul %1, %2, %cst {dimension_numbers = #tpu.dot_dimension_numbers<[1], [0], [0], [1], [0, 0, 1, 1], [], []>} : vector<256x27xbf16>, vector<27x128xbf16>, vector<256x128xf32> -> vector<256x128xf32>
    %c0_4 = arith.constant 0 : index
    %c0_5 = arith.constant 0 : index
    %4 = vector.load %arg6[%c0_4, %c0_5] : memref<256x128xf32, #tpu.memory_space<vmem>>, vector<256x128xf32>
    tpu.vector_store %arg6[%c0_4, %c0_5], %3 {strides = array<i32>} : memref<256x128xf32, #tpu.memory_space<vmem>>, vector<256x128xf32>,
    %c0_6 = arith.constant 0 : index
    %c0_7 = arith.constant 0 : index
    %5 = vector.load %arg4[%c0_6, %c0_7] : memref<1x128xf32, #tpu.memory_space<vmem>>, vector<1x128xf32>
    %c0_8 = arith.constant 0 : index
    %c0_9 = arith.constant 0 : index
    %6 = vector.load %arg6[%c0_8, %c0_9] : memref<256x128xf32, #tpu.memory_space<vmem>>, vector<16x128xf32>
    %7 = vector.broadcast %5 : vector<1x128xf32> to vector<16x128xf32>
    %8 = arith.addf %6, %7 : vector<16x128xf32>
    %cst_10 = arith.constant 0.000000e+00 : f32
    %9 = vector.broadcast %cst_10 : f32 to vector<16x128xf32>
    %10 = arith.maximumf %8, %9 : vector<16x128xf32>
    %11 = arith.truncf %10 : vector<16x128xf32> to vector<16x128xbf16>
    %c0_11 = arith.constant 0 : index
    %c0_12 = arith.constant 0 : index
    %c0_13 = arith.constant 0 : index
    %c0_14 = arith.constant 0 : index
    %12 = vector.load %arg5[%c0_11, %c0_12, %c0_13, %c0_14] : memref<1x16x16x128xbf16, #tpu.memory_space<vmem>>, vector<1x1x16x128xbf16>
    %13 = vector.shape_cast %12 : vector<1x1x16x128xbf16> to vector<16x128xbf16>
    %14 = vector.shape_cast %11 : vector<16x128xbf16> to vector<1x1x16x128xbf16>
    tpu.vector_store %arg5[%c0_11, %c0_12, %c0_13, %c0_14], %14 {strides = array<i32>} : memref<1x16x16x128xbf16, #tpu.memory_space<vmem>>, vector<1x1x16x128xbf16>,
    %c16 = arith.constant 16 : index
    %c0_15 = arith.constant 0 : index
    %15 = vector.load %arg6[%c16, %c0_15] : memref<256x128xf32, #tpu.memory_space<vmem>>, vector<16x128xf32>
    %16 = vector.broadcast %5 : vector<1x128xf32> to vector<16x128xf32>
    %17 = arith.addf %15, %16 : vector<16x128xf32>
    %cst_16 = arith.constant 0.000000e+00 : f32
    %18 = vector.broadcast %cst_16 : f32 to vector<16x128xf32>
    %19 = arith.maximumf %17, %18 : vector<16x128xf32>
    %20 = arith.truncf %19 : vector<16x128xf32> to vector<16x128xbf16>
    %c0_17 = arith.constant 0 : index
    %c1 = arith.constant 1 : index
    %c0_18 = arith.constant 0 : index
    %c0_19 = arith.constant 0 : index
    %21 = vector.load %arg5[%c0_17, %c1, %c0_18, %c0_19] : memref<1x16x16x128xbf16, #tpu.memory_space<vmem>>, vector<1x1x16x128xbf16>
    %22 = vector.shape_cast %21 : vector<1x1x16x128xbf16> to vector<16x128xbf16>
    %23 = vector.shape_cast %20 : vector<16x128xbf16> to vector<1x1x16x128xbf16>
    tpu.vector_store %arg5[%c0_17, %c1, %c0_18, %c0_19], %23 {strides = array<i32>} : memref<1x16x16x128xbf16, #tpu.memory_space<vmem>>, vector<1x1x16x128xbf16>,
    %c32 = arith.constant 32 : index
    %c0_20 = arith.constant 0 : index
    %24 = vector.load %arg6[%c32, %c0_20] : memref<256x128xf32, #tpu.memory_space<vmem>>, vector<16x128xf32>
    %25 = vector.broadcast %5 : vector<1x128xf32> to vector<16x128xf32>
    %26 = arith.addf %24, %25 : vector<16x128xf32>
    %cst_21 = arith.constant 0.000000e+00 : f32
    %27 = vector.broadcast %cst_21 : f32 to vector<16x128xf32>
    %28 = arith.maximumf %26, %27 : vector<16x128xf32>
    %29 = arith.truncf %28 : vector<16x128xf32> to vector<16x128xbf16>
    %c0_22 = arith.constant 0 : index
    %c2 = arith.constant 2 : index
    %c0_23 = arith.constant 0 : index
    %c0_24 = arith.constant 0 : index
    %30 = vector.load %arg5[%c0_22, %c2, %c0_23, %c0_24] : memref<1x16x16x128xbf16, #tpu.memory_space<vmem>>, vector<1x1x16x128xbf16>
    %31 = vector.shape_cast %30 : vector<1x1x16x128xbf16> to vector<16x128xbf16>
    %32 = vector.shape_cast %29 : vector<16x128xbf16> to vector<1x1x16x128xbf16>
    tpu.vector_store %arg5[%c0_22, %c2, %c0_23, %c0_24], %32 {strides = array<i32>} : memref<1x16x16x128xbf16, #tpu.memory_space<vmem>>, vector<1x1x16x128xbf16>,
    %c48 = arith.constant 48 : index
    %c0_25 = arith.constant 0 : index
    %33 = vector.load %arg6[%c48, %c0_25] : memref<256x128xf32, #tpu.memory_space<vmem>>, vector<16x128xf32>
    %34 = vector.broadcast %5 : vector<1x128xf32> to vector<16x128xf32>
    %35 = arith.addf %33, %34 : vector<16x128xf32>
    %cst_26 = arith.constant 0.000000e+00 : f32
    %36 = vector.broadcast %cst_26 : f32 to vector<16x128xf32>
    %37 = arith.maximumf %35, %36 : vector<16x128xf32>
    %38 = arith.truncf %37 : vector<16x128xf32> to vector<16x128xbf16>
    %c0_27 = arith.constant 0 : index
    %c3 = arith.constant 3 : index
    %c0_28 = arith.constant 0 : index
    %c0_29 = arith.constant 0 : index
    %39 = vector.load %arg5[%c0_27, %c3, %c0_28, %c0_29] : memref<1x16x16x128xbf16, #tpu.memory_space<vmem>>, vector<1x1x16x128xbf16>
    %40 = vector.shape_cast %39 : vector<1x1x16x128xbf16> to vector<16x128xbf16>
    %41 = vector.shape_cast %38 : vector<16x128xbf16> to vector<1x1x16x128xbf16>
    tpu.vector_store %arg5[%c0_27, %c3, %c0_28, %c0_29], %41 {strides = array<i32>} : memref<1x16x16x128xbf16, #tpu.memory_space<vmem>>, vector<1x1x16x128xbf16>,
    %c64 = arith.constant 64 : index
    %c0_30 = arith.constant 0 : index
    %42 = vector.load %arg6[%c64, %c0_30] : memref<256x128xf32, #tpu.memory_space<vmem>>, vector<16x128xf32>
    %43 = vector.broadcast %5 : vector<1x128xf32> to vector<16x128xf32>
    %44 = arith.addf %42, %43 : vector<16x128xf32>
    %cst_31 = arith.constant 0.000000e+00 : f32
    %45 = vector.broadcast %cst_31 : f32 to vector<16x128xf32>
    %46 = arith.maximumf %44, %45 : vector<16x128xf32>
    %47 = arith.truncf %46 : vector<16x128xf32> to vector<16x128xbf16>
    %c0_32 = arith.constant 0 : index
    %c4 = arith.constant 4 : index
    %c0_33 = arith.constant 0 : index
    %c0_34 = arith.constant 0 : index
    %48 = vector.load %arg5[%c0_32, %c4, %c0_33, %c0_34] : memref<1x16x16x128xbf16, #tpu.memory_space<vmem>>, vector<1x1x16x128xbf16>
    %49 = vector.shape_cast %48 : vector<1x1x16x128xbf16> to vector<16x128xbf16>
    %50 = vector.shape_cast %47 : vector<16x128xbf16> to vector<1x1x16x128xbf16>
    tpu.vector_store %arg5[%c0_32, %c4, %c0_33, %c0_34], %50 {strides = array<i32>} : memref<1x16x16x128xbf16, #tpu.memory_space<vmem>>, vector<1x1x16x128xbf16>,
    %c80 = arith.constant 80 : index
    %c0_35 = arith.constant 0 : index
    %51 = vector.load %arg6[%c80, %c0_35] : memref<256x128xf32, #tpu.memory_space<vmem>>, vector<16x128xf32>
    %52 = vector.broadcast %5 : vector<1x128xf32> to vector<16x128xf32>
    %53 = arith.addf %51, %52 : vector<16x128xf32>
    %cst_36 = arith.constant 0.000000e+00 : f32
    %54 = vector.broadcast %cst_36 : f32 to vector<16x128xf32>
    %55 = arith.maximumf %53, %54 : vector<16x128xf32>
    %56 = arith.truncf %55 : vector<16x128xf32> to vector<16x128xbf16>
    %c0_37 = arith.constant 0 : index
    %c5 = arith.constant 5 : index
    %c0_38 = arith.constant 0 : index
    %c0_39 = arith.constant 0 : index
    %57 = vector.load %arg5[%c0_37, %c5, %c0_38, %c0_39] : memref<1x16x16x128xbf16, #tpu.memory_space<vmem>>, vector<1x1x16x128xbf16>
    %58 = vector.shape_cast %57 : vector<1x1x16x128xbf16> to vector<16x128xbf16>
    %59 = vector.shape_cast %56 : vector<16x128xbf16> to vector<1x1x16x128xbf16>
    tpu.vector_store %arg5[%c0_37, %c5, %c0_38, %c0_39], %59 {strides = array<i32>} : memref<1x16x16x128xbf16, #tpu.memory_space<vmem>>, vector<1x1x16x128xbf16>,
    %c96 = arith.constant 96 : index
    %c0_40 = arith.constant 0 : index
    %60 = vector.load %arg6[%c96, %c0_40] : memref<256x128xf32, #tpu.memory_space<vmem>>, vector<16x128xf32>
    %61 = vector.broadcast %5 : vector<1x128xf32> to vector<16x128xf32>
    %62 = arith.addf %60, %61 : vector<16x128xf32>
    %cst_41 = arith.constant 0.000000e+00 : f32
    %63 = vector.broadcast %cst_41 : f32 to vector<16x128xf32>
    %64 = arith.maximumf %62, %63 : vector<16x128xf32>
    %65 = arith.truncf %64 : vector<16x128xf32> to vector<16x128xbf16>
    %c0_42 = arith.constant 0 : index
    %c6 = arith.constant 6 : index
    %c0_43 = arith.constant 0 : index
    %c0_44 = arith.constant 0 : index
    %66 = vector.load %arg5[%c0_42, %c6, %c0_43, %c0_44] : memref<1x16x16x128xbf16, #tpu.memory_space<vmem>>, vector<1x1x16x128xbf16>
    %67 = vector.shape_cast %66 : vector<1x1x16x128xbf16> to vector<16x128xbf16>
    %68 = vector.shape_cast %65 : vector<16x128xbf16> to vector<1x1x16x128xbf16>
    tpu.vector_store %arg5[%c0_42, %c6, %c0_43, %c0_44], %68 {strides = array<i32>} : memref<1x16x16x128xbf16, #tpu.memory_space<vmem>>, vector<1x1x16x128xbf16>,
    %c112 = arith.constant 112 : index
    %c0_45 = arith.constant 0 : index
    %69 = vector.load %arg6[%c112, %c0_45] : memref<256x128xf32, #tpu.memory_space<vmem>>, vector<16x128xf32>
    %70 = vector.broadcast %5 : vector<1x128xf32> to vector<16x128xf32>
    %71 = arith.addf %69, %70 : vector<16x128xf32>
    %cst_46 = arith.constant 0.000000e+00 : f32
    %72 = vector.broadcast %cst_46 : f32 to vector<16x128xf32>
    %73 = arith.maximumf %71, %72 : vector<16x128xf32>
    %74 = arith.truncf %73 : vector<16x128xf32> to vector<16x128xbf16>
    %c0_47 = arith.constant 0 : index
    %c7 = arith.constant 7 : index
    %c0_48 = arith.constant 0 : index
    %c0_49 = arith.constant 0 : index
    %75 = vector.load %arg5[%c0_47, %c7, %c0_48, %c0_49] : memref<1x16x16x128xbf16, #tpu.memory_space<vmem>>, vector<1x1x16x128xbf16>
    %76 = vector.shape_cast %75 : vector<1x1x16x128xbf16> to vector<16x128xbf16>
    %77 = vector.shape_cast %74 : vector<16x128xbf16> to vector<1x1x16x128xbf16>
    tpu.vector_store %arg5[%c0_47, %c7, %c0_48, %c0_49], %77 {strides = array<i32>} : memref<1x16x16x128xbf16, #tpu.memory_space<vmem>>, vector<1x1x16x128xbf16>,
    %c128 = arith.constant 128 : index
    %c0_50 = arith.constant 0 : index
    %78 = vector.load %arg6[%c128, %c0_50] : memref<256x128xf32, #tpu.memory_space<vmem>>, vector<16x128xf32>
    %79 = vector.broadcast %5 : vector<1x128xf32> to vector<16x128xf32>
    %80 = arith.addf %78, %79 : vector<16x128xf32>
    %cst_51 = arith.constant 0.000000e+00 : f32
    %81 = vector.broadcast %cst_51 : f32 to vector<16x128xf32>
    %82 = arith.maximumf %80, %81 : vector<16x128xf32>
    %83 = arith.truncf %82 : vector<16x128xf32> to vector<16x128xbf16>
    %c0_52 = arith.constant 0 : index
    %c8 = arith.constant 8 : index
    %c0_53 = arith.constant 0 : index
    %c0_54 = arith.constant 0 : index
    %84 = vector.load %arg5[%c0_52, %c8, %c0_53, %c0_54] : memref<1x16x16x128xbf16, #tpu.memory_space<vmem>>, vector<1x1x16x128xbf16>
    %85 = vector.shape_cast %84 : vector<1x1x16x128xbf16> to vector<16x128xbf16>
    %86 = vector.shape_cast %83 : vector<16x128xbf16> to vector<1x1x16x128xbf16>
    tpu.vector_store %arg5[%c0_52, %c8, %c0_53, %c0_54], %86 {strides = array<i32>} : memref<1x16x16x128xbf16, #tpu.memory_space<vmem>>, vector<1x1x16x128xbf16>,
    %c144 = arith.constant 144 : index
    %c0_55 = arith.constant 0 : index
    %87 = vector.load %arg6[%c144, %c0_55] : memref<256x128xf32, #tpu.memory_space<vmem>>, vector<16x128xf32>
    %88 = vector.broadcast %5 : vector<1x128xf32> to vector<16x128xf32>
    %89 = arith.addf %87, %88 : vector<16x128xf32>
    %cst_56 = arith.constant 0.000000e+00 : f32
    %90 = vector.broadcast %cst_56 : f32 to vector<16x128xf32>
    %91 = arith.maximumf %89, %90 : vector<16x128xf32>
    %92 = arith.truncf %91 : vector<16x128xf32> to vector<16x128xbf16>
    %c0_57 = arith.constant 0 : index
    %c9 = arith.constant 9 : index
    %c0_58 = arith.constant 0 : index
    %c0_59 = arith.constant 0 : index
    %93 = vector.load %arg5[%c0_57, %c9, %c0_58, %c0_59] : memref<1x16x16x128xbf16, #tpu.memory_space<vmem>>, vector<1x1x16x128xbf16>
    %94 = vector.shape_cast %93 : vector<1x1x16x128xbf16> to vector<16x128xbf16>
    %95 = vector.shape_cast %92 : vector<16x128xbf16> to vector<1x1x16x128xbf16>
    tpu.vector_store %arg5[%c0_57, %c9, %c0_58, %c0_59], %95 {strides = array<i32>} : memref<1x16x16x128xbf16, #tpu.memory_space<vmem>>, vector<1x1x16x128xbf16>,
    %c160 = arith.constant 160 : index
    %c0_60 = arith.constant 0 : index
    %96 = vector.load %arg6[%c160, %c0_60] : memref<256x128xf32, #tpu.memory_space<vmem>>, vector<16x128xf32>
    %97 = vector.broadcast %5 : vector<1x128xf32> to vector<16x128xf32>
    %98 = arith.addf %96, %97 : vector<16x128xf32>
    %cst_61 = arith.constant 0.000000e+00 : f32
    %99 = vector.broadcast %cst_61 : f32 to vector<16x128xf32>
    %100 = arith.maximumf %98, %99 : vector<16x128xf32>
    %101 = arith.truncf %100 : vector<16x128xf32> to vector<16x128xbf16>
    %c0_62 = arith.constant 0 : index
    %c10 = arith.constant 10 : index
    %c0_63 = arith.constant 0 : index
    %c0_64 = arith.constant 0 : index
    %102 = vector.load %arg5[%c0_62, %c10, %c0_63, %c0_64] : memref<1x16x16x128xbf16, #tpu.memory_space<vmem>>, vector<1x1x16x128xbf16>
    %103 = vector.shape_cast %102 : vector<1x1x16x128xbf16> to vector<16x128xbf16>
    %104 = vector.shape_cast %101 : vector<16x128xbf16> to vector<1x1x16x128xbf16>
    tpu.vector_store %arg5[%c0_62, %c10, %c0_63, %c0_64], %104 {strides = array<i32>} : memref<1x16x16x128xbf16, #tpu.memory_space<vmem>>, vector<1x1x16x128xbf16>,
    %c176 = arith.constant 176 : index
    %c0_65 = arith.constant 0 : index
    %105 = vector.load %arg6[%c176, %c0_65] : memref<256x128xf32, #tpu.memory_space<vmem>>, vector<16x128xf32>
    %106 = vector.broadcast %5 : vector<1x128xf32> to vector<16x128xf32>
    %107 = arith.addf %105, %106 : vector<16x128xf32>
    %cst_66 = arith.constant 0.000000e+00 : f32
    %108 = vector.broadcast %cst_66 : f32 to vector<16x128xf32>
    %109 = arith.maximumf %107, %108 : vector<16x128xf32>
    %110 = arith.truncf %109 : vector<16x128xf32> to vector<16x128xbf16>
    %c0_67 = arith.constant 0 : index
    %c11 = arith.constant 11 : index
    %c0_68 = arith.constant 0 : index
    %c0_69 = arith.constant 0 : index
    %111 = vector.load %arg5[%c0_67, %c11, %c0_68, %c0_69] : memref<1x16x16x128xbf16, #tpu.memory_space<vmem>>, vector<1x1x16x128xbf16>
    %112 = vector.shape_cast %111 : vector<1x1x16x128xbf16> to vector<16x128xbf16>
    %113 = vector.shape_cast %110 : vector<16x128xbf16> to vector<1x1x16x128xbf16>
    tpu.vector_store %arg5[%c0_67, %c11, %c0_68, %c0_69], %113 {strides = array<i32>} : memref<1x16x16x128xbf16, #tpu.memory_space<vmem>>, vector<1x1x16x128xbf16>,
    %c192 = arith.constant 192 : index
    %c0_70 = arith.constant 0 : index
    %114 = vector.load %arg6[%c192, %c0_70] : memref<256x128xf32, #tpu.memory_space<vmem>>, vector<16x128xf32>
    %115 = vector.broadcast %5 : vector<1x128xf32> to vector<16x128xf32>
    %116 = arith.addf %114, %115 : vector<16x128xf32>
    %cst_71 = arith.constant 0.000000e+00 : f32
    %117 = vector.broadcast %cst_71 : f32 to vector<16x128xf32>
    %118 = arith.maximumf %116, %117 : vector<16x128xf32>
    %119 = arith.truncf %118 : vector<16x128xf32> to vector<16x128xbf16>
    %c0_72 = arith.constant 0 : index
    %c12 = arith.constant 12 : index
    %c0_73 = arith.constant 0 : index
    %c0_74 = arith.constant 0 : index
    %120 = vector.load %arg5[%c0_72, %c12, %c0_73, %c0_74] : memref<1x16x16x128xbf16, #tpu.memory_space<vmem>>, vector<1x1x16x128xbf16>
    %121 = vector.shape_cast %120 : vector<1x1x16x128xbf16> to vector<16x128xbf16>
    %122 = vector.shape_cast %119 : vector<16x128xbf16> to vector<1x1x16x128xbf16>
    tpu.vector_store %arg5[%c0_72, %c12, %c0_73, %c0_74], %122 {strides = array<i32>} : memref<1x16x16x128xbf16, #tpu.memory_space<vmem>>, vector<1x1x16x128xbf16>,
    %c208 = arith.constant 208 : index
    %c0_75 = arith.constant 0 : index
    %123 = vector.load %arg6[%c208, %c0_75] : memref<256x128xf32, #tpu.memory_space<vmem>>, vector<16x128xf32>
    %124 = vector.broadcast %5 : vector<1x128xf32> to vector<16x128xf32>
    %125 = arith.addf %123, %124 : vector<16x128xf32>
    %cst_76 = arith.constant 0.000000e+00 : f32
    %126 = vector.broadcast %cst_76 : f32 to vector<16x128xf32>
    %127 = arith.maximumf %125, %126 : vector<16x128xf32>
    %128 = arith.truncf %127 : vector<16x128xf32> to vector<16x128xbf16>
    %c0_77 = arith.constant 0 : index
    %c13 = arith.constant 13 : index
    %c0_78 = arith.constant 0 : index
    %c0_79 = arith.constant 0 : index
    %129 = vector.load %arg5[%c0_77, %c13, %c0_78, %c0_79] : memref<1x16x16x128xbf16, #tpu.memory_space<vmem>>, vector<1x1x16x128xbf16>
    %130 = vector.shape_cast %129 : vector<1x1x16x128xbf16> to vector<16x128xbf16>
    %131 = vector.shape_cast %128 : vector<16x128xbf16> to vector<1x1x16x128xbf16>
    tpu.vector_store %arg5[%c0_77, %c13, %c0_78, %c0_79], %131 {strides = array<i32>} : memref<1x16x16x128xbf16, #tpu.memory_space<vmem>>, vector<1x1x16x128xbf16>,
    %c224 = arith.constant 224 : index
    %c0_80 = arith.constant 0 : index
    %132 = vector.load %arg6[%c224, %c0_80] : memref<256x128xf32, #tpu.memory_space<vmem>>, vector<16x128xf32>
    %133 = vector.broadcast %5 : vector<1x128xf32> to vector<16x128xf32>
    %134 = arith.addf %132, %133 : vector<16x128xf32>
    %cst_81 = arith.constant 0.000000e+00 : f32
    %135 = vector.broadcast %cst_81 : f32 to vector<16x128xf32>
    %136 = arith.maximumf %134, %135 : vector<16x128xf32>
    %137 = arith.truncf %136 : vector<16x128xf32> to vector<16x128xbf16>
    %c0_82 = arith.constant 0 : index
    %c14 = arith.constant 14 : index
    %c0_83 = arith.constant 0 : index
    %c0_84 = arith.constant 0 : index
    %138 = vector.load %arg5[%c0_82, %c14, %c0_83, %c0_84] : memref<1x16x16x128xbf16, #tpu.memory_space<vmem>>, vector<1x1x16x128xbf16>
    %139 = vector.shape_cast %138 : vector<1x1x16x128xbf16> to vector<16x128xbf16>
    %140 = vector.shape_cast %137 : vector<16x128xbf16> to vector<1x1x16x128xbf16>
    tpu.vector_store %arg5[%c0_82, %c14, %c0_83, %c0_84], %140 {strides = array<i32>} : memref<1x16x16x128xbf16, #tpu.memory_space<vmem>>, vector<1x1x16x128xbf16>,
    %c240 = arith.constant 240 : index
    %c0_85 = arith.constant 0 : index
    %141 = vector.load %arg6[%c240, %c0_85] : memref<256x128xf32, #tpu.memory_space<vmem>>, vector<16x128xf32>
    %142 = vector.broadcast %5 : vector<1x128xf32> to vector<16x128xf32>
    %143 = arith.addf %141, %142 : vector<16x128xf32>
    %cst_86 = arith.constant 0.000000e+00 : f32
    %144 = vector.broadcast %cst_86 : f32 to vector<16x128xf32>
    %145 = arith.maximumf %143, %144 : vector<16x128xf32>
    %146 = arith.truncf %145 : vector<16x128xf32> to vector<16x128xbf16>
    %c0_87 = arith.constant 0 : index
    %c15 = arith.constant 15 : index
    %c0_88 = arith.constant 0 : index
    %c0_89 = arith.constant 0 : index
    %147 = vector.load %arg5[%c0_87, %c15, %c0_88, %c0_89] : memref<1x16x16x128xbf16, #tpu.memory_space<vmem>>, vector<1x1x16x128xbf16>
    %148 = vector.shape_cast %147 : vector<1x1x16x128xbf16> to vector<16x128xbf16>
    %149 = vector.shape_cast %146 : vector<16x128xbf16> to vector<1x1x16x128xbf16>
    tpu.vector_store %arg5[%c0_87, %c15, %c0_88, %c0_89], %149 {strides = array<i32>} : memref<1x16x16x128xbf16, #tpu.memory_space<vmem>>, vector<1x1x16x128xbf16>,
    return
  }
  func.func @transform_0(%arg0: i32, %arg1: i32) -> (i32, i32, i32) {
    %c0_i32 = arith.constant 0 : i32
    %c0_i32_0 = arith.constant 0 : i32
    return %arg0, %arg1, %c0_i32 : i32, i32, i32
  }
  func.func @transform_1(%arg0: i32, %arg1: i32) -> (i32, i32) {
    %c0_i32 = arith.constant 0 : i32
    %c0_i32_0 = arith.constant 0 : i32
    %c0_i32_1 = arith.constant 0 : i32
    return %c0_i32, %c0_i32_0 : i32, i32
  }
  func.func @transform_2(%arg0: i32, %arg1: i32) -> (i32, i32) {
    %c0_i32 = arith.constant 0 : i32
    %c0_i32_0 = arith.constant 0 : i32
    %c0_i32_1 = arith.constant 0 : i32
    return %c0_i32, %c0_i32_0 : i32, i32
  }
  func.func @transform_3(%arg0: i32, %arg1: i32) -> (i32, i32, i32, i32) {
    %c0_i32 = arith.constant 0 : i32
    %c0_i32_0 = arith.constant 0 : i32
    %c0_i32_1 = arith.constant 0 : i32
    return %arg0, %arg1, %c0_i32, %c0_i32_0 : i32, i32, i32, i32
  }
}

module attributes {stable_mosaic.version = 11 : i64} {
  func.func @_conv3x3_kernel(%arg0: i32, %arg1: memref<1x342x128xbf16, #tpu.memory_space<vmem>>, %arg2: memref<9x128x128xbf16, #tpu.memory_space<vmem>>, %arg3: memref<1x128xf32, #tpu.memory_space<vmem>>, %arg4: memref<1x8x8x128xbf16, #tpu.memory_space<vmem>>, %arg5: memref<288x128xf32, #tpu.memory_space<vmem>>) attributes {dimension_semantics = [#tpu.dimension_semantics<parallel>], iteration_bounds = array<i64: 2>, scalar_prefetch = 0 : i64, scratch_operands = 1 : i64, tpu.core_type = #tpu.core_type<tc>, window_params = [{transform_indices = @transform_0, window_bounds = array<i64: 1, 342, 128>}, {pipeline_mode = #tpu.pipeline_mode<synchronous>, transform_indices = @transform_1, window_bounds = array<i64: 9, 128, 128>}, {pipeline_mode = #tpu.pipeline_mode<synchronous>, transform_indices = @transform_2, window_bounds = array<i64: 1, 128>}, {transform_indices = @transform_3, window_bounds = array<i64: 1, 8, 8, 128>}]} {
    %c0 = arith.constant 0 : index
    %c0_0 = arith.constant 0 : index
    %c0_1 = arith.constant 0 : index
    %0 = vector.load %arg1[%c0, %c0_0, %c0_1] : memref<1x342x128xbf16, #tpu.memory_space<vmem>>, vector<1x288x128xbf16>
    %1 = vector.shape_cast %0 : vector<1x288x128xbf16> to vector<288x128xbf16>
    %c0_2 = arith.constant 0 : index
    %c0_3 = arith.constant 0 : index
    %c0_4 = arith.constant 0 : index
    %2 = vector.load %arg2[%c0_2, %c0_3, %c0_4] : memref<9x128x128xbf16, #tpu.memory_space<vmem>>, vector<1x128x128xbf16>
    %3 = vector.shape_cast %2 : vector<1x128x128xbf16> to vector<128x128xbf16>
    %cst = arith.constant dense<0.000000e+00> : vector<288x128xf32>
    %4 = tpu.matmul %1, %3, %cst {dimension_numbers = #tpu.dot_dimension_numbers<[1], [0], [0], [1], [0, 0, 1, 1], [], []>} : vector<288x128xbf16>, vector<128x128xbf16>, vector<288x128xf32> -> vector<288x128xf32>
    %c0_5 = arith.constant 0 : index
    %c0_6 = arith.constant 0 : index
    %5 = vector.load %arg5[%c0_5, %c0_6] : memref<288x128xf32, #tpu.memory_space<vmem>>, vector<288x128xf32>
    tpu.vector_store %arg5[%c0_5, %c0_6], %4 {strides = array<i32>} : memref<288x128xf32, #tpu.memory_space<vmem>>, vector<288x128xf32>,
    %c0_7 = arith.constant 0 : index
    %c1 = arith.constant 1 : index
    %c0_8 = arith.constant 0 : index
    %6 = vector.load %arg1[%c0_7, %c1, %c0_8] : memref<1x342x128xbf16, #tpu.memory_space<vmem>>, vector<1x288x128xbf16>
    %7 = vector.shape_cast %6 : vector<1x288x128xbf16> to vector<288x128xbf16>
    %c1_9 = arith.constant 1 : index
    %c0_10 = arith.constant 0 : index
    %c0_11 = arith.constant 0 : index
    %8 = vector.load %arg2[%c1_9, %c0_10, %c0_11] : memref<9x128x128xbf16, #tpu.memory_space<vmem>>, vector<1x128x128xbf16>
    %9 = vector.shape_cast %8 : vector<1x128x128xbf16> to vector<128x128xbf16>
    %cst_12 = arith.constant dense<0.000000e+00> : vector<288x128xf32>
    %10 = tpu.matmul %7, %9, %cst_12 {dimension_numbers = #tpu.dot_dimension_numbers<[1], [0], [0], [1], [0, 0, 1, 1], [], []>} : vector<288x128xbf16>, vector<128x128xbf16>, vector<288x128xf32> -> vector<288x128xf32>
    %c0_13 = arith.constant 0 : index
    %c0_14 = arith.constant 0 : index
    %11 = vector.load %arg5[%c0_13, %c0_14] : memref<288x128xf32, #tpu.memory_space<vmem>>, vector<288x128xf32>
    %12 = arith.addf %11, %10 : vector<288x128xf32>
    %c0_15 = arith.constant 0 : index
    %c0_16 = arith.constant 0 : index
    %13 = vector.load %arg5[%c0_15, %c0_16] : memref<288x128xf32, #tpu.memory_space<vmem>>, vector<288x128xf32>
    tpu.vector_store %arg5[%c0_15, %c0_16], %12 {strides = array<i32>} : memref<288x128xf32, #tpu.memory_space<vmem>>, vector<288x128xf32>,
    %c0_17 = arith.constant 0 : index
    %c2 = arith.constant 2 : index
    %c0_18 = arith.constant 0 : index
    %14 = vector.load %arg1[%c0_17, %c2, %c0_18] : memref<1x342x128xbf16, #tpu.memory_space<vmem>>, vector<1x288x128xbf16>
    %15 = vector.shape_cast %14 : vector<1x288x128xbf16> to vector<288x128xbf16>
    %c2_19 = arith.constant 2 : index
    %c0_20 = arith.constant 0 : index
    %c0_21 = arith.constant 0 : index
    %16 = vector.load %arg2[%c2_19, %c0_20, %c0_21] : memref<9x128x128xbf16, #tpu.memory_space<vmem>>, vector<1x128x128xbf16>
    %17 = vector.shape_cast %16 : vector<1x128x128xbf16> to vector<128x128xbf16>
    %cst_22 = arith.constant dense<0.000000e+00> : vector<288x128xf32>
    %18 = tpu.matmul %15, %17, %cst_22 {dimension_numbers = #tpu.dot_dimension_numbers<[1], [0], [0], [1], [0, 0, 1, 1], [], []>} : vector<288x128xbf16>, vector<128x128xbf16>, vector<288x128xf32> -> vector<288x128xf32>
    %c0_23 = arith.constant 0 : index
    %c0_24 = arith.constant 0 : index
    %19 = vector.load %arg5[%c0_23, %c0_24] : memref<288x128xf32, #tpu.memory_space<vmem>>, vector<288x128xf32>
    %20 = arith.addf %19, %18 : vector<288x128xf32>
    %c0_25 = arith.constant 0 : index
    %c0_26 = arith.constant 0 : index
    %21 = vector.load %arg5[%c0_25, %c0_26] : memref<288x128xf32, #tpu.memory_space<vmem>>, vector<288x128xf32>
    tpu.vector_store %arg5[%c0_25, %c0_26], %20 {strides = array<i32>} : memref<288x128xf32, #tpu.memory_space<vmem>>, vector<288x128xf32>,
    %c0_27 = arith.constant 0 : index
    %c18 = arith.constant 18 : index
    %c0_28 = arith.constant 0 : index
    %22 = vector.load %arg1[%c0_27, %c18, %c0_28] : memref<1x342x128xbf16, #tpu.memory_space<vmem>>, vector<1x288x128xbf16>
    %23 = vector.shape_cast %22 : vector<1x288x128xbf16> to vector<288x128xbf16>
    %c3 = arith.constant 3 : index
    %c0_29 = arith.constant 0 : index
    %c0_30 = arith.constant 0 : index
    %24 = vector.load %arg2[%c3, %c0_29, %c0_30] : memref<9x128x128xbf16, #tpu.memory_space<vmem>>, vector<1x128x128xbf16>
    %25 = vector.shape_cast %24 : vector<1x128x128xbf16> to vector<128x128xbf16>
    %cst_31 = arith.constant dense<0.000000e+00> : vector<288x128xf32>
    %26 = tpu.matmul %23, %25, %cst_31 {dimension_numbers = #tpu.dot_dimension_numbers<[1], [0], [0], [1], [0, 0, 1, 1], [], []>} : vector<288x128xbf16>, vector<128x128xbf16>, vector<288x128xf32> -> vector<288x128xf32>
    %c0_32 = arith.constant 0 : index
    %c0_33 = arith.constant 0 : index
    %27 = vector.load %arg5[%c0_32, %c0_33] : memref<288x128xf32, #tpu.memory_space<vmem>>, vector<288x128xf32>
    %28 = arith.addf %27, %26 : vector<288x128xf32>
    %c0_34 = arith.constant 0 : index
    %c0_35 = arith.constant 0 : index
    %29 = vector.load %arg5[%c0_34, %c0_35] : memref<288x128xf32, #tpu.memory_space<vmem>>, vector<288x128xf32>
    tpu.vector_store %arg5[%c0_34, %c0_35], %28 {strides = array<i32>} : memref<288x128xf32, #tpu.memory_space<vmem>>, vector<288x128xf32>,
    %c0_36 = arith.constant 0 : index
    %c19 = arith.constant 19 : index
    %c0_37 = arith.constant 0 : index
    %30 = vector.load %arg1[%c0_36, %c19, %c0_37] : memref<1x342x128xbf16, #tpu.memory_space<vmem>>, vector<1x288x128xbf16>
    %31 = vector.shape_cast %30 : vector<1x288x128xbf16> to vector<288x128xbf16>
    %c4 = arith.constant 4 : index
    %c0_38 = arith.constant 0 : index
    %c0_39 = arith.constant 0 : index
    %32 = vector.load %arg2[%c4, %c0_38, %c0_39] : memref<9x128x128xbf16, #tpu.memory_space<vmem>>, vector<1x128x128xbf16>
    %33 = vector.shape_cast %32 : vector<1x128x128xbf16> to vector<128x128xbf16>
    %cst_40 = arith.constant dense<0.000000e+00> : vector<288x128xf32>
    %34 = tpu.matmul %31, %33, %cst_40 {dimension_numbers = #tpu.dot_dimension_numbers<[1], [0], [0], [1], [0, 0, 1, 1], [], []>} : vector<288x128xbf16>, vector<128x128xbf16>, vector<288x128xf32> -> vector<288x128xf32>
    %c0_41 = arith.constant 0 : index
    %c0_42 = arith.constant 0 : index
    %35 = vector.load %arg5[%c0_41, %c0_42] : memref<288x128xf32, #tpu.memory_space<vmem>>, vector<288x128xf32>
    %36 = arith.addf %35, %34 : vector<288x128xf32>
    %c0_43 = arith.constant 0 : index
    %c0_44 = arith.constant 0 : index
    %37 = vector.load %arg5[%c0_43, %c0_44] : memref<288x128xf32, #tpu.memory_space<vmem>>, vector<288x128xf32>
    tpu.vector_store %arg5[%c0_43, %c0_44], %36 {strides = array<i32>} : memref<288x128xf32, #tpu.memory_space<vmem>>, vector<288x128xf32>,
    %c0_45 = arith.constant 0 : index
    %c20 = arith.constant 20 : index
    %c0_46 = arith.constant 0 : index
    %38 = vector.load %arg1[%c0_45, %c20, %c0_46] : memref<1x342x128xbf16, #tpu.memory_space<vmem>>, vector<1x288x128xbf16>
    %39 = vector.shape_cast %38 : vector<1x288x128xbf16> to vector<288x128xbf16>
    %c5 = arith.constant 5 : index
    %c0_47 = arith.constant 0 : index
    %c0_48 = arith.constant 0 : index
    %40 = vector.load %arg2[%c5, %c0_47, %c0_48] : memref<9x128x128xbf16, #tpu.memory_space<vmem>>, vector<1x128x128xbf16>
    %41 = vector.shape_cast %40 : vector<1x128x128xbf16> to vector<128x128xbf16>
    %cst_49 = arith.constant dense<0.000000e+00> : vector<288x128xf32>
    %42 = tpu.matmul %39, %41, %cst_49 {dimension_numbers = #tpu.dot_dimension_numbers<[1], [0], [0], [1], [0, 0, 1, 1], [], []>} : vector<288x128xbf16>, vector<128x128xbf16>, vector<288x128xf32> -> vector<288x128xf32>
    %c0_50 = arith.constant 0 : index
    %c0_51 = arith.constant 0 : index
    %43 = vector.load %arg5[%c0_50, %c0_51] : memref<288x128xf32, #tpu.memory_space<vmem>>, vector<288x128xf32>
    %44 = arith.addf %43, %42 : vector<288x128xf32>
    %c0_52 = arith.constant 0 : index
    %c0_53 = arith.constant 0 : index
    %45 = vector.load %arg5[%c0_52, %c0_53] : memref<288x128xf32, #tpu.memory_space<vmem>>, vector<288x128xf32>
    tpu.vector_store %arg5[%c0_52, %c0_53], %44 {strides = array<i32>} : memref<288x128xf32, #tpu.memory_space<vmem>>, vector<288x128xf32>,
    %c0_54 = arith.constant 0 : index
    %c36 = arith.constant 36 : index
    %c0_55 = arith.constant 0 : index
    %46 = vector.load %arg1[%c0_54, %c36, %c0_55] : memref<1x342x128xbf16, #tpu.memory_space<vmem>>, vector<1x288x128xbf16>
    %47 = vector.shape_cast %46 : vector<1x288x128xbf16> to vector<288x128xbf16>
    %c6 = arith.constant 6 : index
    %c0_56 = arith.constant 0 : index
    %c0_57 = arith.constant 0 : index
    %48 = vector.load %arg2[%c6, %c0_56, %c0_57] : memref<9x128x128xbf16, #tpu.memory_space<vmem>>, vector<1x128x128xbf16>
    %49 = vector.shape_cast %48 : vector<1x128x128xbf16> to vector<128x128xbf16>
    %cst_58 = arith.constant dense<0.000000e+00> : vector<288x128xf32>
    %50 = tpu.matmul %47, %49, %cst_58 {dimension_numbers = #tpu.dot_dimension_numbers<[1], [0], [0], [1], [0, 0, 1, 1], [], []>} : vector<288x128xbf16>, vector<128x128xbf16>, vector<288x128xf32> -> vector<288x128xf32>
    %c0_59 = arith.constant 0 : index
    %c0_60 = arith.constant 0 : index
    %51 = vector.load %arg5[%c0_59, %c0_60] : memref<288x128xf32, #tpu.memory_space<vmem>>, vector<288x128xf32>
    %52 = arith.addf %51, %50 : vector<288x128xf32>
    %c0_61 = arith.constant 0 : index
    %c0_62 = arith.constant 0 : index
    %53 = vector.load %arg5[%c0_61, %c0_62] : memref<288x128xf32, #tpu.memory_space<vmem>>, vector<288x128xf32>
    tpu.vector_store %arg5[%c0_61, %c0_62], %52 {strides = array<i32>} : memref<288x128xf32, #tpu.memory_space<vmem>>, vector<288x128xf32>,
    %c0_63 = arith.constant 0 : index
    %c37 = arith.constant 37 : index
    %c0_64 = arith.constant 0 : index
    %54 = vector.load %arg1[%c0_63, %c37, %c0_64] : memref<1x342x128xbf16, #tpu.memory_space<vmem>>, vector<1x288x128xbf16>
    %55 = vector.shape_cast %54 : vector<1x288x128xbf16> to vector<288x128xbf16>
    %c7 = arith.constant 7 : index
    %c0_65 = arith.constant 0 : index
    %c0_66 = arith.constant 0 : index
    %56 = vector.load %arg2[%c7, %c0_65, %c0_66] : memref<9x128x128xbf16, #tpu.memory_space<vmem>>, vector<1x128x128xbf16>
    %57 = vector.shape_cast %56 : vector<1x128x128xbf16> to vector<128x128xbf16>
    %cst_67 = arith.constant dense<0.000000e+00> : vector<288x128xf32>
    %58 = tpu.matmul %55, %57, %cst_67 {dimension_numbers = #tpu.dot_dimension_numbers<[1], [0], [0], [1], [0, 0, 1, 1], [], []>} : vector<288x128xbf16>, vector<128x128xbf16>, vector<288x128xf32> -> vector<288x128xf32>
    %c0_68 = arith.constant 0 : index
    %c0_69 = arith.constant 0 : index
    %59 = vector.load %arg5[%c0_68, %c0_69] : memref<288x128xf32, #tpu.memory_space<vmem>>, vector<288x128xf32>
    %60 = arith.addf %59, %58 : vector<288x128xf32>
    %c0_70 = arith.constant 0 : index
    %c0_71 = arith.constant 0 : index
    %61 = vector.load %arg5[%c0_70, %c0_71] : memref<288x128xf32, #tpu.memory_space<vmem>>, vector<288x128xf32>
    tpu.vector_store %arg5[%c0_70, %c0_71], %60 {strides = array<i32>} : memref<288x128xf32, #tpu.memory_space<vmem>>, vector<288x128xf32>,
    %c0_72 = arith.constant 0 : index
    %c38 = arith.constant 38 : index
    %c0_73 = arith.constant 0 : index
    %62 = vector.load %arg1[%c0_72, %c38, %c0_73] : memref<1x342x128xbf16, #tpu.memory_space<vmem>>, vector<1x288x128xbf16>
    %63 = vector.shape_cast %62 : vector<1x288x128xbf16> to vector<288x128xbf16>
    %c8 = arith.constant 8 : index
    %c0_74 = arith.constant 0 : index
    %c0_75 = arith.constant 0 : index
    %64 = vector.load %arg2[%c8, %c0_74, %c0_75] : memref<9x128x128xbf16, #tpu.memory_space<vmem>>, vector<1x128x128xbf16>
    %65 = vector.shape_cast %64 : vector<1x128x128xbf16> to vector<128x128xbf16>
    %cst_76 = arith.constant dense<0.000000e+00> : vector<288x128xf32>
    %66 = tpu.matmul %63, %65, %cst_76 {dimension_numbers = #tpu.dot_dimension_numbers<[1], [0], [0], [1], [0, 0, 1, 1], [], []>} : vector<288x128xbf16>, vector<128x128xbf16>, vector<288x128xf32> -> vector<288x128xf32>
    %c0_77 = arith.constant 0 : index
    %c0_78 = arith.constant 0 : index
    %67 = vector.load %arg5[%c0_77, %c0_78] : memref<288x128xf32, #tpu.memory_space<vmem>>, vector<288x128xf32>
    %68 = arith.addf %67, %66 : vector<288x128xf32>
    %c0_79 = arith.constant 0 : index
    %c0_80 = arith.constant 0 : index
    %69 = vector.load %arg5[%c0_79, %c0_80] : memref<288x128xf32, #tpu.memory_space<vmem>>, vector<288x128xf32>
    tpu.vector_store %arg5[%c0_79, %c0_80], %68 {strides = array<i32>} : memref<288x128xf32, #tpu.memory_space<vmem>>, vector<288x128xf32>,
    %c0_81 = arith.constant 0 : index
    %c0_82 = arith.constant 0 : index
    %70 = vector.load %arg3[%c0_81, %c0_82] : memref<1x128xf32, #tpu.memory_space<vmem>>, vector<1x128xf32>
    %c0_83 = arith.constant 0 : index
    %c0_84 = arith.constant 0 : index
    %71 = tpu.strided_load %arg5[%c0_83, %c0_84] {strides = array<i32: 2, 1>} : memref<288x128xf32, #tpu.memory_space<vmem>>, vector<8x128xf32>
    %c1_85 = arith.constant 1 : index
    %c0_86 = arith.constant 0 : index
    %72 = tpu.strided_load %arg5[%c1_85, %c0_86] {strides = array<i32: 2, 1>} : memref<288x128xf32, #tpu.memory_space<vmem>>, vector<8x128xf32>
    %73 = arith.maximumf %71, %72 : vector<8x128xf32>
    %c18_87 = arith.constant 18 : index
    %c0_88 = arith.constant 0 : index
    %74 = tpu.strided_load %arg5[%c18_87, %c0_88] {strides = array<i32: 2, 1>} : memref<288x128xf32, #tpu.memory_space<vmem>>, vector<8x128xf32>
    %c19_89 = arith.constant 19 : index
    %c0_90 = arith.constant 0 : index
    %75 = tpu.strided_load %arg5[%c19_89, %c0_90] {strides = array<i32: 2, 1>} : memref<288x128xf32, #tpu.memory_space<vmem>>, vector<8x128xf32>
    %76 = arith.maximumf %74, %75 : vector<8x128xf32>
    %77 = arith.maximumf %73, %76 : vector<8x128xf32>
    %78 = vector.broadcast %70 : vector<1x128xf32> to vector<8x128xf32>
    %79 = arith.addf %77, %78 : vector<8x128xf32>
    %cst_91 = arith.constant 0.000000e+00 : f32
    %80 = vector.broadcast %cst_91 : f32 to vector<8x128xf32>
    %81 = arith.maximumf %79, %80 : vector<8x128xf32>
    %82 = arith.truncf %81 : vector<8x128xf32> to vector<8x128xbf16>
    %c0_92 = arith.constant 0 : index
    %c0_93 = arith.constant 0 : index
    %c0_94 = arith.constant 0 : index
    %c0_95 = arith.constant 0 : index
    %83 = vector.load %arg4[%c0_92, %c0_93, %c0_94, %c0_95] : memref<1x8x8x128xbf16, #tpu.memory_space<vmem>>, vector<1x1x8x128xbf16>
    %84 = vector.shape_cast %83 : vector<1x1x8x128xbf16> to vector<8x128xbf16>
    %85 = vector.shape_cast %82 : vector<8x128xbf16> to vector<1x1x8x128xbf16>
    tpu.vector_store %arg4[%c0_92, %c0_93, %c0_94, %c0_95], %85 {strides = array<i32>} : memref<1x8x8x128xbf16, #tpu.memory_space<vmem>>, vector<1x1x8x128xbf16>,
    %c36_96 = arith.constant 36 : index
    %c0_97 = arith.constant 0 : index
    %86 = tpu.strided_load %arg5[%c36_96, %c0_97] {strides = array<i32: 2, 1>} : memref<288x128xf32, #tpu.memory_space<vmem>>, vector<8x128xf32>
    %c37_98 = arith.constant 37 : index
    %c0_99 = arith.constant 0 : index
    %87 = tpu.strided_load %arg5[%c37_98, %c0_99] {strides = array<i32: 2, 1>} : memref<288x128xf32, #tpu.memory_space<vmem>>, vector<8x128xf32>
    %88 = arith.maximumf %86, %87 : vector<8x128xf32>
    %c54 = arith.constant 54 : index
    %c0_100 = arith.constant 0 : index
    %89 = tpu.strided_load %arg5[%c54, %c0_100] {strides = array<i32: 2, 1>} : memref<288x128xf32, #tpu.memory_space<vmem>>, vector<8x128xf32>
    %c55 = arith.constant 55 : index
    %c0_101 = arith.constant 0 : index
    %90 = tpu.strided_load %arg5[%c55, %c0_101] {strides = array<i32: 2, 1>} : memref<288x128xf32, #tpu.memory_space<vmem>>, vector<8x128xf32>
    %91 = arith.maximumf %89, %90 : vector<8x128xf32>
    %92 = arith.maximumf %88, %91 : vector<8x128xf32>
    %93 = vector.broadcast %70 : vector<1x128xf32> to vector<8x128xf32>
    %94 = arith.addf %92, %93 : vector<8x128xf32>
    %cst_102 = arith.constant 0.000000e+00 : f32
    %95 = vector.broadcast %cst_102 : f32 to vector<8x128xf32>
    %96 = arith.maximumf %94, %95 : vector<8x128xf32>
    %97 = arith.truncf %96 : vector<8x128xf32> to vector<8x128xbf16>
    %c0_103 = arith.constant 0 : index
    %c1_104 = arith.constant 1 : index
    %c0_105 = arith.constant 0 : index
    %c0_106 = arith.constant 0 : index
    %98 = vector.load %arg4[%c0_103, %c1_104, %c0_105, %c0_106] : memref<1x8x8x128xbf16, #tpu.memory_space<vmem>>, vector<1x1x8x128xbf16>
    %99 = vector.shape_cast %98 : vector<1x1x8x128xbf16> to vector<8x128xbf16>
    %100 = vector.shape_cast %97 : vector<8x128xbf16> to vector<1x1x8x128xbf16>
    tpu.vector_store %arg4[%c0_103, %c1_104, %c0_105, %c0_106], %100 {strides = array<i32>} : memref<1x8x8x128xbf16, #tpu.memory_space<vmem>>, vector<1x1x8x128xbf16>,
    %c72 = arith.constant 72 : index
    %c0_107 = arith.constant 0 : index
    %101 = tpu.strided_load %arg5[%c72, %c0_107] {strides = array<i32: 2, 1>} : memref<288x128xf32, #tpu.memory_space<vmem>>, vector<8x128xf32>
    %c73 = arith.constant 73 : index
    %c0_108 = arith.constant 0 : index
    %102 = tpu.strided_load %arg5[%c73, %c0_108] {strides = array<i32: 2, 1>} : memref<288x128xf32, #tpu.memory_space<vmem>>, vector<8x128xf32>
    %103 = arith.maximumf %101, %102 : vector<8x128xf32>
    %c90 = arith.constant 90 : index
    %c0_109 = arith.constant 0 : index
    %104 = tpu.strided_load %arg5[%c90, %c0_109] {strides = array<i32: 2, 1>} : memref<288x128xf32, #tpu.memory_space<vmem>>, vector<8x128xf32>
    %c91 = arith.constant 91 : index
    %c0_110 = arith.constant 0 : index
    %105 = tpu.strided_load %arg5[%c91, %c0_110] {strides = array<i32: 2, 1>} : memref<288x128xf32, #tpu.memory_space<vmem>>, vector<8x128xf32>
    %106 = arith.maximumf %104, %105 : vector<8x128xf32>
    %107 = arith.maximumf %103, %106 : vector<8x128xf32>
    %108 = vector.broadcast %70 : vector<1x128xf32> to vector<8x128xf32>
    %109 = arith.addf %107, %108 : vector<8x128xf32>
    %cst_111 = arith.constant 0.000000e+00 : f32
    %110 = vector.broadcast %cst_111 : f32 to vector<8x128xf32>
    %111 = arith.maximumf %109, %110 : vector<8x128xf32>
    %112 = arith.truncf %111 : vector<8x128xf32> to vector<8x128xbf16>
    %c0_112 = arith.constant 0 : index
    %c2_113 = arith.constant 2 : index
    %c0_114 = arith.constant 0 : index
    %c0_115 = arith.constant 0 : index
    %113 = vector.load %arg4[%c0_112, %c2_113, %c0_114, %c0_115] : memref<1x8x8x128xbf16, #tpu.memory_space<vmem>>, vector<1x1x8x128xbf16>
    %114 = vector.shape_cast %113 : vector<1x1x8x128xbf16> to vector<8x128xbf16>
    %115 = vector.shape_cast %112 : vector<8x128xbf16> to vector<1x1x8x128xbf16>
    tpu.vector_store %arg4[%c0_112, %c2_113, %c0_114, %c0_115], %115 {strides = array<i32>} : memref<1x8x8x128xbf16, #tpu.memory_space<vmem>>, vector<1x1x8x128xbf16>,
    %c108 = arith.constant 108 : index
    %c0_116 = arith.constant 0 : index
    %116 = tpu.strided_load %arg5[%c108, %c0_116] {strides = array<i32: 2, 1>} : memref<288x128xf32, #tpu.memory_space<vmem>>, vector<8x128xf32>
    %c109 = arith.constant 109 : index
    %c0_117 = arith.constant 0 : index
    %117 = tpu.strided_load %arg5[%c109, %c0_117] {strides = array<i32: 2, 1>} : memref<288x128xf32, #tpu.memory_space<vmem>>, vector<8x128xf32>
    %118 = arith.maximumf %116, %117 : vector<8x128xf32>
    %c126 = arith.constant 126 : index
    %c0_118 = arith.constant 0 : index
    %119 = tpu.strided_load %arg5[%c126, %c0_118] {strides = array<i32: 2, 1>} : memref<288x128xf32, #tpu.memory_space<vmem>>, vector<8x128xf32>
    %c127 = arith.constant 127 : index
    %c0_119 = arith.constant 0 : index
    %120 = tpu.strided_load %arg5[%c127, %c0_119] {strides = array<i32: 2, 1>} : memref<288x128xf32, #tpu.memory_space<vmem>>, vector<8x128xf32>
    %121 = arith.maximumf %119, %120 : vector<8x128xf32>
    %122 = arith.maximumf %118, %121 : vector<8x128xf32>
    %123 = vector.broadcast %70 : vector<1x128xf32> to vector<8x128xf32>
    %124 = arith.addf %122, %123 : vector<8x128xf32>
    %cst_120 = arith.constant 0.000000e+00 : f32
    %125 = vector.broadcast %cst_120 : f32 to vector<8x128xf32>
    %126 = arith.maximumf %124, %125 : vector<8x128xf32>
    %127 = arith.truncf %126 : vector<8x128xf32> to vector<8x128xbf16>
    %c0_121 = arith.constant 0 : index
    %c3_122 = arith.constant 3 : index
    %c0_123 = arith.constant 0 : index
    %c0_124 = arith.constant 0 : index
    %128 = vector.load %arg4[%c0_121, %c3_122, %c0_123, %c0_124] : memref<1x8x8x128xbf16, #tpu.memory_space<vmem>>, vector<1x1x8x128xbf16>
    %129 = vector.shape_cast %128 : vector<1x1x8x128xbf16> to vector<8x128xbf16>
    %130 = vector.shape_cast %127 : vector<8x128xbf16> to vector<1x1x8x128xbf16>
    tpu.vector_store %arg4[%c0_121, %c3_122, %c0_123, %c0_124], %130 {strides = array<i32>} : memref<1x8x8x128xbf16, #tpu.memory_space<vmem>>, vector<1x1x8x128xbf16>,
    %c144 = arith.constant 144 : index
    %c0_125 = arith.constant 0 : index
    %131 = tpu.strided_load %arg5[%c144, %c0_125] {strides = array<i32: 2, 1>} : memref<288x128xf32, #tpu.memory_space<vmem>>, vector<8x128xf32>
    %c145 = arith.constant 145 : index
    %c0_126 = arith.constant 0 : index
    %132 = tpu.strided_load %arg5[%c145, %c0_126] {strides = array<i32: 2, 1>} : memref<288x128xf32, #tpu.memory_space<vmem>>, vector<8x128xf32>
    %133 = arith.maximumf %131, %132 : vector<8x128xf32>
    %c162 = arith.constant 162 : index
    %c0_127 = arith.constant 0 : index
    %134 = tpu.strided_load %arg5[%c162, %c0_127] {strides = array<i32: 2, 1>} : memref<288x128xf32, #tpu.memory_space<vmem>>, vector<8x128xf32>
    %c163 = arith.constant 163 : index
    %c0_128 = arith.constant 0 : index
    %135 = tpu.strided_load %arg5[%c163, %c0_128] {strides = array<i32: 2, 1>} : memref<288x128xf32, #tpu.memory_space<vmem>>, vector<8x128xf32>
    %136 = arith.maximumf %134, %135 : vector<8x128xf32>
    %137 = arith.maximumf %133, %136 : vector<8x128xf32>
    %138 = vector.broadcast %70 : vector<1x128xf32> to vector<8x128xf32>
    %139 = arith.addf %137, %138 : vector<8x128xf32>
    %cst_129 = arith.constant 0.000000e+00 : f32
    %140 = vector.broadcast %cst_129 : f32 to vector<8x128xf32>
    %141 = arith.maximumf %139, %140 : vector<8x128xf32>
    %142 = arith.truncf %141 : vector<8x128xf32> to vector<8x128xbf16>
    %c0_130 = arith.constant 0 : index
    %c4_131 = arith.constant 4 : index
    %c0_132 = arith.constant 0 : index
    %c0_133 = arith.constant 0 : index
    %143 = vector.load %arg4[%c0_130, %c4_131, %c0_132, %c0_133] : memref<1x8x8x128xbf16, #tpu.memory_space<vmem>>, vector<1x1x8x128xbf16>
    %144 = vector.shape_cast %143 : vector<1x1x8x128xbf16> to vector<8x128xbf16>
    %145 = vector.shape_cast %142 : vector<8x128xbf16> to vector<1x1x8x128xbf16>
    tpu.vector_store %arg4[%c0_130, %c4_131, %c0_132, %c0_133], %145 {strides = array<i32>} : memref<1x8x8x128xbf16, #tpu.memory_space<vmem>>, vector<1x1x8x128xbf16>,
    %c180 = arith.constant 180 : index
    %c0_134 = arith.constant 0 : index
    %146 = tpu.strided_load %arg5[%c180, %c0_134] {strides = array<i32: 2, 1>} : memref<288x128xf32, #tpu.memory_space<vmem>>, vector<8x128xf32>
    %c181 = arith.constant 181 : index
    %c0_135 = arith.constant 0 : index
    %147 = tpu.strided_load %arg5[%c181, %c0_135] {strides = array<i32: 2, 1>} : memref<288x128xf32, #tpu.memory_space<vmem>>, vector<8x128xf32>
    %148 = arith.maximumf %146, %147 : vector<8x128xf32>
    %c198 = arith.constant 198 : index
    %c0_136 = arith.constant 0 : index
    %149 = tpu.strided_load %arg5[%c198, %c0_136] {strides = array<i32: 2, 1>} : memref<288x128xf32, #tpu.memory_space<vmem>>, vector<8x128xf32>
    %c199 = arith.constant 199 : index
    %c0_137 = arith.constant 0 : index
    %150 = tpu.strided_load %arg5[%c199, %c0_137] {strides = array<i32: 2, 1>} : memref<288x128xf32, #tpu.memory_space<vmem>>, vector<8x128xf32>
    %151 = arith.maximumf %149, %150 : vector<8x128xf32>
    %152 = arith.maximumf %148, %151 : vector<8x128xf32>
    %153 = vector.broadcast %70 : vector<1x128xf32> to vector<8x128xf32>
    %154 = arith.addf %152, %153 : vector<8x128xf32>
    %cst_138 = arith.constant 0.000000e+00 : f32
    %155 = vector.broadcast %cst_138 : f32 to vector<8x128xf32>
    %156 = arith.maximumf %154, %155 : vector<8x128xf32>
    %157 = arith.truncf %156 : vector<8x128xf32> to vector<8x128xbf16>
    %c0_139 = arith.constant 0 : index
    %c5_140 = arith.constant 5 : index
    %c0_141 = arith.constant 0 : index
    %c0_142 = arith.constant 0 : index
    %158 = vector.load %arg4[%c0_139, %c5_140, %c0_141, %c0_142] : memref<1x8x8x128xbf16, #tpu.memory_space<vmem>>, vector<1x1x8x128xbf16>
    %159 = vector.shape_cast %158 : vector<1x1x8x128xbf16> to vector<8x128xbf16>
    %160 = vector.shape_cast %157 : vector<8x128xbf16> to vector<1x1x8x128xbf16>
    tpu.vector_store %arg4[%c0_139, %c5_140, %c0_141, %c0_142], %160 {strides = array<i32>} : memref<1x8x8x128xbf16, #tpu.memory_space<vmem>>, vector<1x1x8x128xbf16>,
    %c216 = arith.constant 216 : index
    %c0_143 = arith.constant 0 : index
    %161 = tpu.strided_load %arg5[%c216, %c0_143] {strides = array<i32: 2, 1>} : memref<288x128xf32, #tpu.memory_space<vmem>>, vector<8x128xf32>
    %c217 = arith.constant 217 : index
    %c0_144 = arith.constant 0 : index
    %162 = tpu.strided_load %arg5[%c217, %c0_144] {strides = array<i32: 2, 1>} : memref<288x128xf32, #tpu.memory_space<vmem>>, vector<8x128xf32>
    %163 = arith.maximumf %161, %162 : vector<8x128xf32>
    %c234 = arith.constant 234 : index
    %c0_145 = arith.constant 0 : index
    %164 = tpu.strided_load %arg5[%c234, %c0_145] {strides = array<i32: 2, 1>} : memref<288x128xf32, #tpu.memory_space<vmem>>, vector<8x128xf32>
    %c235 = arith.constant 235 : index
    %c0_146 = arith.constant 0 : index
    %165 = tpu.strided_load %arg5[%c235, %c0_146] {strides = array<i32: 2, 1>} : memref<288x128xf32, #tpu.memory_space<vmem>>, vector<8x128xf32>
    %166 = arith.maximumf %164, %165 : vector<8x128xf32>
    %167 = arith.maximumf %163, %166 : vector<8x128xf32>
    %168 = vector.broadcast %70 : vector<1x128xf32> to vector<8x128xf32>
    %169 = arith.addf %167, %168 : vector<8x128xf32>
    %cst_147 = arith.constant 0.000000e+00 : f32
    %170 = vector.broadcast %cst_147 : f32 to vector<8x128xf32>
    %171 = arith.maximumf %169, %170 : vector<8x128xf32>
    %172 = arith.truncf %171 : vector<8x128xf32> to vector<8x128xbf16>
    %c0_148 = arith.constant 0 : index
    %c6_149 = arith.constant 6 : index
    %c0_150 = arith.constant 0 : index
    %c0_151 = arith.constant 0 : index
    %173 = vector.load %arg4[%c0_148, %c6_149, %c0_150, %c0_151] : memref<1x8x8x128xbf16, #tpu.memory_space<vmem>>, vector<1x1x8x128xbf16>
    %174 = vector.shape_cast %173 : vector<1x1x8x128xbf16> to vector<8x128xbf16>
    %175 = vector.shape_cast %172 : vector<8x128xbf16> to vector<1x1x8x128xbf16>
    tpu.vector_store %arg4[%c0_148, %c6_149, %c0_150, %c0_151], %175 {strides = array<i32>} : memref<1x8x8x128xbf16, #tpu.memory_space<vmem>>, vector<1x1x8x128xbf16>,
    %c252 = arith.constant 252 : index
    %c0_152 = arith.constant 0 : index
    %176 = tpu.strided_load %arg5[%c252, %c0_152] {strides = array<i32: 2, 1>} : memref<288x128xf32, #tpu.memory_space<vmem>>, vector<8x128xf32>
    %c253 = arith.constant 253 : index
    %c0_153 = arith.constant 0 : index
    %177 = tpu.strided_load %arg5[%c253, %c0_153] {strides = array<i32: 2, 1>} : memref<288x128xf32, #tpu.memory_space<vmem>>, vector<8x128xf32>
    %178 = arith.maximumf %176, %177 : vector<8x128xf32>
    %c270 = arith.constant 270 : index
    %c0_154 = arith.constant 0 : index
    %179 = tpu.strided_load %arg5[%c270, %c0_154] {strides = array<i32: 2, 1>} : memref<288x128xf32, #tpu.memory_space<vmem>>, vector<8x128xf32>
    %c271 = arith.constant 271 : index
    %c0_155 = arith.constant 0 : index
    %180 = tpu.strided_load %arg5[%c271, %c0_155] {strides = array<i32: 2, 1>} : memref<288x128xf32, #tpu.memory_space<vmem>>, vector<8x128xf32>
    %181 = arith.maximumf %179, %180 : vector<8x128xf32>
    %182 = arith.maximumf %178, %181 : vector<8x128xf32>
    %183 = vector.broadcast %70 : vector<1x128xf32> to vector<8x128xf32>
    %184 = arith.addf %182, %183 : vector<8x128xf32>
    %cst_156 = arith.constant 0.000000e+00 : f32
    %185 = vector.broadcast %cst_156 : f32 to vector<8x128xf32>
    %186 = arith.maximumf %184, %185 : vector<8x128xf32>
    %187 = arith.truncf %186 : vector<8x128xf32> to vector<8x128xbf16>
    %c0_157 = arith.constant 0 : index
    %c7_158 = arith.constant 7 : index
    %c0_159 = arith.constant 0 : index
    %c0_160 = arith.constant 0 : index
    %188 = vector.load %arg4[%c0_157, %c7_158, %c0_159, %c0_160] : memref<1x8x8x128xbf16, #tpu.memory_space<vmem>>, vector<1x1x8x128xbf16>
    %189 = vector.shape_cast %188 : vector<1x1x8x128xbf16> to vector<8x128xbf16>
    %190 = vector.shape_cast %187 : vector<8x128xbf16> to vector<1x1x8x128xbf16>
    tpu.vector_store %arg4[%c0_157, %c7_158, %c0_159, %c0_160], %190 {strides = array<i32>} : memref<1x8x8x128xbf16, #tpu.memory_space<vmem>>, vector<1x1x8x128xbf16>,
    return
  }
  func.func @transform_0(%arg0: i32) -> (i32, i32, i32) {
    %c0_i32 = arith.constant 0 : i32
    %c0_i32_0 = arith.constant 0 : i32
    %c0_i32_1 = arith.constant 0 : i32
    return %arg0, %c0_i32, %c0_i32_0 : i32, i32, i32
  }
  func.func @transform_1(%arg0: i32) -> (i32, i32, i32) {
    %c0_i32 = arith.constant 0 : i32
    %c0_i32_0 = arith.constant 0 : i32
    %c0_i32_1 = arith.constant 0 : i32
    %c0_i32_2 = arith.constant 0 : i32
    return %c0_i32, %c0_i32_0, %c0_i32_1 : i32, i32, i32
  }
  func.func @transform_2(%arg0: i32) -> (i32, i32) {
    %c0_i32 = arith.constant 0 : i32
    %c0_i32_0 = arith.constant 0 : i32
    %c0_i32_1 = arith.constant 0 : i32
    return %c0_i32, %c0_i32_0 : i32, i32
  }
  func.func @transform_3(%arg0: i32) -> (i32, i32, i32, i32) {
    %c0_i32 = arith.constant 0 : i32
    %c0_i32_0 = arith.constant 0 : i32
    %c0_i32_1 = arith.constant 0 : i32
    %c0_i32_2 = arith.constant 0 : i32
    return %arg0, %c0_i32, %c0_i32_0, %c0_i32_1 : i32, i32, i32, i32
  }
}

module attributes {stable_mosaic.version = 11 : i64} {
  func.func @_conv3x3_kernel(%arg0: i32, %arg1: memref<1x110x128xbf16, #tpu.memory_space<vmem>>, %arg2: memref<9x128x128xbf16, #tpu.memory_space<vmem>>, %arg3: memref<1x128xf32, #tpu.memory_space<vmem>>, %arg4: memref<1x4x4x128xbf16, #tpu.memory_space<vmem>>, %arg5: memref<80x128xf32, #tpu.memory_space<vmem>>) attributes {dimension_semantics = [#tpu.dimension_semantics<parallel>], iteration_bounds = array<i64: 2>, scalar_prefetch = 0 : i64, scratch_operands = 1 : i64, tpu.core_type = #tpu.core_type<tc>, window_params = [{transform_indices = @transform_0, window_bounds = array<i64: 1, 110, 128>}, {pipeline_mode = #tpu.pipeline_mode<synchronous>, transform_indices = @transform_1, window_bounds = array<i64: 9, 128, 128>}, {pipeline_mode = #tpu.pipeline_mode<synchronous>, transform_indices = @transform_2, window_bounds = array<i64: 1, 128>}, {transform_indices = @transform_3, window_bounds = array<i64: 1, 4, 4, 128>}]} {
    %c0 = arith.constant 0 : index
    %c0_0 = arith.constant 0 : index
    %c0_1 = arith.constant 0 : index
    %0 = vector.load %arg1[%c0, %c0_0, %c0_1] : memref<1x110x128xbf16, #tpu.memory_space<vmem>>, vector<1x80x128xbf16>
    %1 = vector.shape_cast %0 : vector<1x80x128xbf16> to vector<80x128xbf16>
    %c0_2 = arith.constant 0 : index
    %c0_3 = arith.constant 0 : index
    %c0_4 = arith.constant 0 : index
    %2 = vector.load %arg2[%c0_2, %c0_3, %c0_4] : memref<9x128x128xbf16, #tpu.memory_space<vmem>>, vector<1x128x128xbf16>
    %3 = vector.shape_cast %2 : vector<1x128x128xbf16> to vector<128x128xbf16>
    %cst = arith.constant dense<0.000000e+00> : vector<80x128xf32>
    %4 = tpu.matmul %1, %3, %cst {dimension_numbers = #tpu.dot_dimension_numbers<[1], [0], [0], [1], [0, 0, 1, 1], [], []>} : vector<80x128xbf16>, vector<128x128xbf16>, vector<80x128xf32> -> vector<80x128xf32>
    %c0_5 = arith.constant 0 : index
    %c0_6 = arith.constant 0 : index
    %5 = vector.load %arg5[%c0_5, %c0_6] : memref<80x128xf32, #tpu.memory_space<vmem>>, vector<80x128xf32>
    tpu.vector_store %arg5[%c0_5, %c0_6], %4 {strides = array<i32>} : memref<80x128xf32, #tpu.memory_space<vmem>>, vector<80x128xf32>,
    %c0_7 = arith.constant 0 : index
    %c1 = arith.constant 1 : index
    %c0_8 = arith.constant 0 : index
    %6 = vector.load %arg1[%c0_7, %c1, %c0_8] : memref<1x110x128xbf16, #tpu.memory_space<vmem>>, vector<1x80x128xbf16>
    %7 = vector.shape_cast %6 : vector<1x80x128xbf16> to vector<80x128xbf16>
    %c1_9 = arith.constant 1 : index
    %c0_10 = arith.constant 0 : index
    %c0_11 = arith.constant 0 : index
    %8 = vector.load %arg2[%c1_9, %c0_10, %c0_11] : memref<9x128x128xbf16, #tpu.memory_space<vmem>>, vector<1x128x128xbf16>
    %9 = vector.shape_cast %8 : vector<1x128x128xbf16> to vector<128x128xbf16>
    %cst_12 = arith.constant dense<0.000000e+00> : vector<80x128xf32>
    %10 = tpu.matmul %7, %9, %cst_12 {dimension_numbers = #tpu.dot_dimension_numbers<[1], [0], [0], [1], [0, 0, 1, 1], [], []>} : vector<80x128xbf16>, vector<128x128xbf16>, vector<80x128xf32> -> vector<80x128xf32>
    %c0_13 = arith.constant 0 : index
    %c0_14 = arith.constant 0 : index
    %11 = vector.load %arg5[%c0_13, %c0_14] : memref<80x128xf32, #tpu.memory_space<vmem>>, vector<80x128xf32>
    %12 = arith.addf %11, %10 : vector<80x128xf32>
    %c0_15 = arith.constant 0 : index
    %c0_16 = arith.constant 0 : index
    %13 = vector.load %arg5[%c0_15, %c0_16] : memref<80x128xf32, #tpu.memory_space<vmem>>, vector<80x128xf32>
    tpu.vector_store %arg5[%c0_15, %c0_16], %12 {strides = array<i32>} : memref<80x128xf32, #tpu.memory_space<vmem>>, vector<80x128xf32>,
    %c0_17 = arith.constant 0 : index
    %c2 = arith.constant 2 : index
    %c0_18 = arith.constant 0 : index
    %14 = vector.load %arg1[%c0_17, %c2, %c0_18] : memref<1x110x128xbf16, #tpu.memory_space<vmem>>, vector<1x80x128xbf16>
    %15 = vector.shape_cast %14 : vector<1x80x128xbf16> to vector<80x128xbf16>
    %c2_19 = arith.constant 2 : index
    %c0_20 = arith.constant 0 : index
    %c0_21 = arith.constant 0 : index
    %16 = vector.load %arg2[%c2_19, %c0_20, %c0_21] : memref<9x128x128xbf16, #tpu.memory_space<vmem>>, vector<1x128x128xbf16>
    %17 = vector.shape_cast %16 : vector<1x128x128xbf16> to vector<128x128xbf16>
    %cst_22 = arith.constant dense<0.000000e+00> : vector<80x128xf32>
    %18 = tpu.matmul %15, %17, %cst_22 {dimension_numbers = #tpu.dot_dimension_numbers<[1], [0], [0], [1], [0, 0, 1, 1], [], []>} : vector<80x128xbf16>, vector<128x128xbf16>, vector<80x128xf32> -> vector<80x128xf32>
    %c0_23 = arith.constant 0 : index
    %c0_24 = arith.constant 0 : index
    %19 = vector.load %arg5[%c0_23, %c0_24] : memref<80x128xf32, #tpu.memory_space<vmem>>, vector<80x128xf32>
    %20 = arith.addf %19, %18 : vector<80x128xf32>
    %c0_25 = arith.constant 0 : index
    %c0_26 = arith.constant 0 : index
    %21 = vector.load %arg5[%c0_25, %c0_26] : memref<80x128xf32, #tpu.memory_space<vmem>>, vector<80x128xf32>
    tpu.vector_store %arg5[%c0_25, %c0_26], %20 {strides = array<i32>} : memref<80x128xf32, #tpu.memory_space<vmem>>, vector<80x128xf32>,
    %c0_27 = arith.constant 0 : index
    %c10 = arith.constant 10 : index
    %c0_28 = arith.constant 0 : index
    %22 = vector.load %arg1[%c0_27, %c10, %c0_28] : memref<1x110x128xbf16, #tpu.memory_space<vmem>>, vector<1x80x128xbf16>
    %23 = vector.shape_cast %22 : vector<1x80x128xbf16> to vector<80x128xbf16>
    %c3 = arith.constant 3 : index
    %c0_29 = arith.constant 0 : index
    %c0_30 = arith.constant 0 : index
    %24 = vector.load %arg2[%c3, %c0_29, %c0_30] : memref<9x128x128xbf16, #tpu.memory_space<vmem>>, vector<1x128x128xbf16>
    %25 = vector.shape_cast %24 : vector<1x128x128xbf16> to vector<128x128xbf16>
    %cst_31 = arith.constant dense<0.000000e+00> : vector<80x128xf32>
    %26 = tpu.matmul %23, %25, %cst_31 {dimension_numbers = #tpu.dot_dimension_numbers<[1], [0], [0], [1], [0, 0, 1, 1], [], []>} : vector<80x128xbf16>, vector<128x128xbf16>, vector<80x128xf32> -> vector<80x128xf32>
    %c0_32 = arith.constant 0 : index
    %c0_33 = arith.constant 0 : index
    %27 = vector.load %arg5[%c0_32, %c0_33] : memref<80x128xf32, #tpu.memory_space<vmem>>, vector<80x128xf32>
    %28 = arith.addf %27, %26 : vector<80x128xf32>
    %c0_34 = arith.constant 0 : index
    %c0_35 = arith.constant 0 : index
    %29 = vector.load %arg5[%c0_34, %c0_35] : memref<80x128xf32, #tpu.memory_space<vmem>>, vector<80x128xf32>
    tpu.vector_store %arg5[%c0_34, %c0_35], %28 {strides = array<i32>} : memref<80x128xf32, #tpu.memory_space<vmem>>, vector<80x128xf32>,
    %c0_36 = arith.constant 0 : index
    %c11 = arith.constant 11 : index
    %c0_37 = arith.constant 0 : index
    %30 = vector.load %arg1[%c0_36, %c11, %c0_37] : memref<1x110x128xbf16, #tpu.memory_space<vmem>>, vector<1x80x128xbf16>
    %31 = vector.shape_cast %30 : vector<1x80x128xbf16> to vector<80x128xbf16>
    %c4 = arith.constant 4 : index
    %c0_38 = arith.constant 0 : index
    %c0_39 = arith.constant 0 : index
    %32 = vector.load %arg2[%c4, %c0_38, %c0_39] : memref<9x128x128xbf16, #tpu.memory_space<vmem>>, vector<1x128x128xbf16>
    %33 = vector.shape_cast %32 : vector<1x128x128xbf16> to vector<128x128xbf16>
    %cst_40 = arith.constant dense<0.000000e+00> : vector<80x128xf32>
    %34 = tpu.matmul %31, %33, %cst_40 {dimension_numbers = #tpu.dot_dimension_numbers<[1], [0], [0], [1], [0, 0, 1, 1], [], []>} : vector<80x128xbf16>, vector<128x128xbf16>, vector<80x128xf32> -> vector<80x128xf32>
    %c0_41 = arith.constant 0 : index
    %c0_42 = arith.constant 0 : index
    %35 = vector.load %arg5[%c0_41, %c0_42] : memref<80x128xf32, #tpu.memory_space<vmem>>, vector<80x128xf32>
    %36 = arith.addf %35, %34 : vector<80x128xf32>
    %c0_43 = arith.constant 0 : index
    %c0_44 = arith.constant 0 : index
    %37 = vector.load %arg5[%c0_43, %c0_44] : memref<80x128xf32, #tpu.memory_space<vmem>>, vector<80x128xf32>
    tpu.vector_store %arg5[%c0_43, %c0_44], %36 {strides = array<i32>} : memref<80x128xf32, #tpu.memory_space<vmem>>, vector<80x128xf32>,
    %c0_45 = arith.constant 0 : index
    %c12 = arith.constant 12 : index
    %c0_46 = arith.constant 0 : index
    %38 = vector.load %arg1[%c0_45, %c12, %c0_46] : memref<1x110x128xbf16, #tpu.memory_space<vmem>>, vector<1x80x128xbf16>
    %39 = vector.shape_cast %38 : vector<1x80x128xbf16> to vector<80x128xbf16>
    %c5 = arith.constant 5 : index
    %c0_47 = arith.constant 0 : index
    %c0_48 = arith.constant 0 : index
    %40 = vector.load %arg2[%c5, %c0_47, %c0_48] : memref<9x128x128xbf16, #tpu.memory_space<vmem>>, vector<1x128x128xbf16>
    %41 = vector.shape_cast %40 : vector<1x128x128xbf16> to vector<128x128xbf16>
    %cst_49 = arith.constant dense<0.000000e+00> : vector<80x128xf32>
    %42 = tpu.matmul %39, %41, %cst_49 {dimension_numbers = #tpu.dot_dimension_numbers<[1], [0], [0], [1], [0, 0, 1, 1], [], []>} : vector<80x128xbf16>, vector<128x128xbf16>, vector<80x128xf32> -> vector<80x128xf32>
    %c0_50 = arith.constant 0 : index
    %c0_51 = arith.constant 0 : index
    %43 = vector.load %arg5[%c0_50, %c0_51] : memref<80x128xf32, #tpu.memory_space<vmem>>, vector<80x128xf32>
    %44 = arith.addf %43, %42 : vector<80x128xf32>
    %c0_52 = arith.constant 0 : index
    %c0_53 = arith.constant 0 : index
    %45 = vector.load %arg5[%c0_52, %c0_53] : memref<80x128xf32, #tpu.memory_space<vmem>>, vector<80x128xf32>
    tpu.vector_store %arg5[%c0_52, %c0_53], %44 {strides = array<i32>} : memref<80x128xf32, #tpu.memory_space<vmem>>, vector<80x128xf32>,
    %c0_54 = arith.constant 0 : index
    %c20 = arith.constant 20 : index
    %c0_55 = arith.constant 0 : index
    %46 = vector.load %arg1[%c0_54, %c20, %c0_55] : memref<1x110x128xbf16, #tpu.memory_space<vmem>>, vector<1x80x128xbf16>
    %47 = vector.shape_cast %46 : vector<1x80x128xbf16> to vector<80x128xbf16>
    %c6 = arith.constant 6 : index
    %c0_56 = arith.constant 0 : index
    %c0_57 = arith.constant 0 : index
    %48 = vector.load %arg2[%c6, %c0_56, %c0_57] : memref<9x128x128xbf16, #tpu.memory_space<vmem>>, vector<1x128x128xbf16>
    %49 = vector.shape_cast %48 : vector<1x128x128xbf16> to vector<128x128xbf16>
    %cst_58 = arith.constant dense<0.000000e+00> : vector<80x128xf32>
    %50 = tpu.matmul %47, %49, %cst_58 {dimension_numbers = #tpu.dot_dimension_numbers<[1], [0], [0], [1], [0, 0, 1, 1], [], []>} : vector<80x128xbf16>, vector<128x128xbf16>, vector<80x128xf32> -> vector<80x128xf32>
    %c0_59 = arith.constant 0 : index
    %c0_60 = arith.constant 0 : index
    %51 = vector.load %arg5[%c0_59, %c0_60] : memref<80x128xf32, #tpu.memory_space<vmem>>, vector<80x128xf32>
    %52 = arith.addf %51, %50 : vector<80x128xf32>
    %c0_61 = arith.constant 0 : index
    %c0_62 = arith.constant 0 : index
    %53 = vector.load %arg5[%c0_61, %c0_62] : memref<80x128xf32, #tpu.memory_space<vmem>>, vector<80x128xf32>
    tpu.vector_store %arg5[%c0_61, %c0_62], %52 {strides = array<i32>} : memref<80x128xf32, #tpu.memory_space<vmem>>, vector<80x128xf32>,
    %c0_63 = arith.constant 0 : index
    %c21 = arith.constant 21 : index
    %c0_64 = arith.constant 0 : index
    %54 = vector.load %arg1[%c0_63, %c21, %c0_64] : memref<1x110x128xbf16, #tpu.memory_space<vmem>>, vector<1x80x128xbf16>
    %55 = vector.shape_cast %54 : vector<1x80x128xbf16> to vector<80x128xbf16>
    %c7 = arith.constant 7 : index
    %c0_65 = arith.constant 0 : index
    %c0_66 = arith.constant 0 : index
    %56 = vector.load %arg2[%c7, %c0_65, %c0_66] : memref<9x128x128xbf16, #tpu.memory_space<vmem>>, vector<1x128x128xbf16>
    %57 = vector.shape_cast %56 : vector<1x128x128xbf16> to vector<128x128xbf16>
    %cst_67 = arith.constant dense<0.000000e+00> : vector<80x128xf32>
    %58 = tpu.matmul %55, %57, %cst_67 {dimension_numbers = #tpu.dot_dimension_numbers<[1], [0], [0], [1], [0, 0, 1, 1], [], []>} : vector<80x128xbf16>, vector<128x128xbf16>, vector<80x128xf32> -> vector<80x128xf32>
    %c0_68 = arith.constant 0 : index
    %c0_69 = arith.constant 0 : index
    %59 = vector.load %arg5[%c0_68, %c0_69] : memref<80x128xf32, #tpu.memory_space<vmem>>, vector<80x128xf32>
    %60 = arith.addf %59, %58 : vector<80x128xf32>
    %c0_70 = arith.constant 0 : index
    %c0_71 = arith.constant 0 : index
    %61 = vector.load %arg5[%c0_70, %c0_71] : memref<80x128xf32, #tpu.memory_space<vmem>>, vector<80x128xf32>
    tpu.vector_store %arg5[%c0_70, %c0_71], %60 {strides = array<i32>} : memref<80x128xf32, #tpu.memory_space<vmem>>, vector<80x128xf32>,
    %c0_72 = arith.constant 0 : index
    %c22 = arith.constant 22 : index
    %c0_73 = arith.constant 0 : index
    %62 = vector.load %arg1[%c0_72, %c22, %c0_73] : memref<1x110x128xbf16, #tpu.memory_space<vmem>>, vector<1x80x128xbf16>
    %63 = vector.shape_cast %62 : vector<1x80x128xbf16> to vector<80x128xbf16>
    %c8 = arith.constant 8 : index
    %c0_74 = arith.constant 0 : index
    %c0_75 = arith.constant 0 : index
    %64 = vector.load %arg2[%c8, %c0_74, %c0_75] : memref<9x128x128xbf16, #tpu.memory_space<vmem>>, vector<1x128x128xbf16>
    %65 = vector.shape_cast %64 : vector<1x128x128xbf16> to vector<128x128xbf16>
    %cst_76 = arith.constant dense<0.000000e+00> : vector<80x128xf32>
    %66 = tpu.matmul %63, %65, %cst_76 {dimension_numbers = #tpu.dot_dimension_numbers<[1], [0], [0], [1], [0, 0, 1, 1], [], []>} : vector<80x128xbf16>, vector<128x128xbf16>, vector<80x128xf32> -> vector<80x128xf32>
    %c0_77 = arith.constant 0 : index
    %c0_78 = arith.constant 0 : index
    %67 = vector.load %arg5[%c0_77, %c0_78] : memref<80x128xf32, #tpu.memory_space<vmem>>, vector<80x128xf32>
    %68 = arith.addf %67, %66 : vector<80x128xf32>
    %c0_79 = arith.constant 0 : index
    %c0_80 = arith.constant 0 : index
    %69 = vector.load %arg5[%c0_79, %c0_80] : memref<80x128xf32, #tpu.memory_space<vmem>>, vector<80x128xf32>
    tpu.vector_store %arg5[%c0_79, %c0_80], %68 {strides = array<i32>} : memref<80x128xf32, #tpu.memory_space<vmem>>, vector<80x128xf32>,
    %c0_81 = arith.constant 0 : index
    %c0_82 = arith.constant 0 : index
    %70 = vector.load %arg3[%c0_81, %c0_82] : memref<1x128xf32, #tpu.memory_space<vmem>>, vector<1x128xf32>
    %c0_83 = arith.constant 0 : index
    %c0_84 = arith.constant 0 : index
    %71 = tpu.strided_load %arg5[%c0_83, %c0_84] {strides = array<i32: 2, 1>} : memref<80x128xf32, #tpu.memory_space<vmem>>, vector<4x128xf32>
    %c1_85 = arith.constant 1 : index
    %c0_86 = arith.constant 0 : index
    %72 = tpu.strided_load %arg5[%c1_85, %c0_86] {strides = array<i32: 2, 1>} : memref<80x128xf32, #tpu.memory_space<vmem>>, vector<4x128xf32>
    %73 = arith.maximumf %71, %72 : vector<4x128xf32>
    %c10_87 = arith.constant 10 : index
    %c0_88 = arith.constant 0 : index
    %74 = tpu.strided_load %arg5[%c10_87, %c0_88] {strides = array<i32: 2, 1>} : memref<80x128xf32, #tpu.memory_space<vmem>>, vector<4x128xf32>
    %c11_89 = arith.constant 11 : index
    %c0_90 = arith.constant 0 : index
    %75 = tpu.strided_load %arg5[%c11_89, %c0_90] {strides = array<i32: 2, 1>} : memref<80x128xf32, #tpu.memory_space<vmem>>, vector<4x128xf32>
    %76 = arith.maximumf %74, %75 : vector<4x128xf32>
    %77 = arith.maximumf %73, %76 : vector<4x128xf32>
    %78 = vector.broadcast %70 : vector<1x128xf32> to vector<4x128xf32>
    %79 = arith.addf %77, %78 : vector<4x128xf32>
    %cst_91 = arith.constant 0.000000e+00 : f32
    %80 = vector.broadcast %cst_91 : f32 to vector<4x128xf32>
    %81 = arith.maximumf %79, %80 : vector<4x128xf32>
    %82 = arith.truncf %81 : vector<4x128xf32> to vector<4x128xbf16>
    %c0_92 = arith.constant 0 : index
    %c0_93 = arith.constant 0 : index
    %c0_94 = arith.constant 0 : index
    %c0_95 = arith.constant 0 : index
    %83 = vector.load %arg4[%c0_92, %c0_93, %c0_94, %c0_95] : memref<1x4x4x128xbf16, #tpu.memory_space<vmem>>, vector<1x1x4x128xbf16>
    %84 = vector.shape_cast %83 : vector<1x1x4x128xbf16> to vector<4x128xbf16>
    %85 = vector.shape_cast %82 : vector<4x128xbf16> to vector<1x1x4x128xbf16>
    tpu.vector_store %arg4[%c0_92, %c0_93, %c0_94, %c0_95], %85 {strides = array<i32>} : memref<1x4x4x128xbf16, #tpu.memory_space<vmem>>, vector<1x1x4x128xbf16>,
    %c20_96 = arith.constant 20 : index
    %c0_97 = arith.constant 0 : index
    %86 = tpu.strided_load %arg5[%c20_96, %c0_97] {strides = array<i32: 2, 1>} : memref<80x128xf32, #tpu.memory_space<vmem>>, vector<4x128xf32>
    %c21_98 = arith.constant 21 : index
    %c0_99 = arith.constant 0 : index
    %87 = tpu.strided_load %arg5[%c21_98, %c0_99] {strides = array<i32: 2, 1>} : memref<80x128xf32, #tpu.memory_space<vmem>>, vector<4x128xf32>
    %88 = arith.maximumf %86, %87 : vector<4x128xf32>
    %c30 = arith.constant 30 : index
    %c0_100 = arith.constant 0 : index
    %89 = tpu.strided_load %arg5[%c30, %c0_100] {strides = array<i32: 2, 1>} : memref<80x128xf32, #tpu.memory_space<vmem>>, vector<4x128xf32>
    %c31 = arith.constant 31 : index
    %c0_101 = arith.constant 0 : index
    %90 = tpu.strided_load %arg5[%c31, %c0_101] {strides = array<i32: 2, 1>} : memref<80x128xf32, #tpu.memory_space<vmem>>, vector<4x128xf32>
    %91 = arith.maximumf %89, %90 : vector<4x128xf32>
    %92 = arith.maximumf %88, %91 : vector<4x128xf32>
    %93 = vector.broadcast %70 : vector<1x128xf32> to vector<4x128xf32>
    %94 = arith.addf %92, %93 : vector<4x128xf32>
    %cst_102 = arith.constant 0.000000e+00 : f32
    %95 = vector.broadcast %cst_102 : f32 to vector<4x128xf32>
    %96 = arith.maximumf %94, %95 : vector<4x128xf32>
    %97 = arith.truncf %96 : vector<4x128xf32> to vector<4x128xbf16>
    %c0_103 = arith.constant 0 : index
    %c1_104 = arith.constant 1 : index
    %c0_105 = arith.constant 0 : index
    %c0_106 = arith.constant 0 : index
    %98 = vector.load %arg4[%c0_103, %c1_104, %c0_105, %c0_106] : memref<1x4x4x128xbf16, #tpu.memory_space<vmem>>, vector<1x1x4x128xbf16>
    %99 = vector.shape_cast %98 : vector<1x1x4x128xbf16> to vector<4x128xbf16>
    %100 = vector.shape_cast %97 : vector<4x128xbf16> to vector<1x1x4x128xbf16>
    tpu.vector_store %arg4[%c0_103, %c1_104, %c0_105, %c0_106], %100 {strides = array<i32>} : memref<1x4x4x128xbf16, #tpu.memory_space<vmem>>, vector<1x1x4x128xbf16>,
    %c40 = arith.constant 40 : index
    %c0_107 = arith.constant 0 : index
    %101 = tpu.strided_load %arg5[%c40, %c0_107] {strides = array<i32: 2, 1>} : memref<80x128xf32, #tpu.memory_space<vmem>>, vector<4x128xf32>
    %c41 = arith.constant 41 : index
    %c0_108 = arith.constant 0 : index
    %102 = tpu.strided_load %arg5[%c41, %c0_108] {strides = array<i32: 2, 1>} : memref<80x128xf32, #tpu.memory_space<vmem>>, vector<4x128xf32>
    %103 = arith.maximumf %101, %102 : vector<4x128xf32>
    %c50 = arith.constant 50 : index
    %c0_109 = arith.constant 0 : index
    %104 = tpu.strided_load %arg5[%c50, %c0_109] {strides = array<i32: 2, 1>} : memref<80x128xf32, #tpu.memory_space<vmem>>, vector<4x128xf32>
    %c51 = arith.constant 51 : index
    %c0_110 = arith.constant 0 : index
    %105 = tpu.strided_load %arg5[%c51, %c0_110] {strides = array<i32: 2, 1>} : memref<80x128xf32, #tpu.memory_space<vmem>>, vector<4x128xf32>
    %106 = arith.maximumf %104, %105 : vector<4x128xf32>
    %107 = arith.maximumf %103, %106 : vector<4x128xf32>
    %108 = vector.broadcast %70 : vector<1x128xf32> to vector<4x128xf32>
    %109 = arith.addf %107, %108 : vector<4x128xf32>
    %cst_111 = arith.constant 0.000000e+00 : f32
    %110 = vector.broadcast %cst_111 : f32 to vector<4x128xf32>
    %111 = arith.maximumf %109, %110 : vector<4x128xf32>
    %112 = arith.truncf %111 : vector<4x128xf32> to vector<4x128xbf16>
    %c0_112 = arith.constant 0 : index
    %c2_113 = arith.constant 2 : index
    %c0_114 = arith.constant 0 : index
    %c0_115 = arith.constant 0 : index
    %113 = vector.load %arg4[%c0_112, %c2_113, %c0_114, %c0_115] : memref<1x4x4x128xbf16, #tpu.memory_space<vmem>>, vector<1x1x4x128xbf16>
    %114 = vector.shape_cast %113 : vector<1x1x4x128xbf16> to vector<4x128xbf16>
    %115 = vector.shape_cast %112 : vector<4x128xbf16> to vector<1x1x4x128xbf16>
    tpu.vector_store %arg4[%c0_112, %c2_113, %c0_114, %c0_115], %115 {strides = array<i32>} : memref<1x4x4x128xbf16, #tpu.memory_space<vmem>>, vector<1x1x4x128xbf16>,
    %c60 = arith.constant 60 : index
    %c0_116 = arith.constant 0 : index
    %116 = tpu.strided_load %arg5[%c60, %c0_116] {strides = array<i32: 2, 1>} : memref<80x128xf32, #tpu.memory_space<vmem>>, vector<4x128xf32>
    %c61 = arith.constant 61 : index
    %c0_117 = arith.constant 0 : index
    %117 = tpu.strided_load %arg5[%c61, %c0_117] {strides = array<i32: 2, 1>} : memref<80x128xf32, #tpu.memory_space<vmem>>, vector<4x128xf32>
    %118 = arith.maximumf %116, %117 : vector<4x128xf32>
    %c70 = arith.constant 70 : index
    %c0_118 = arith.constant 0 : index
    %119 = tpu.strided_load %arg5[%c70, %c0_118] {strides = array<i32: 2, 1>} : memref<80x128xf32, #tpu.memory_space<vmem>>, vector<4x128xf32>
    %c71 = arith.constant 71 : index
    %c0_119 = arith.constant 0 : index
    %120 = tpu.strided_load %arg5[%c71, %c0_119] {strides = array<i32: 2, 1>} : memref<80x128xf32, #tpu.memory_space<vmem>>, vector<4x128xf32>
    %121 = arith.maximumf %119, %120 : vector<4x128xf32>
    %122 = arith.maximumf %118, %121 : vector<4x128xf32>
    %123 = vector.broadcast %70 : vector<1x128xf32> to vector<4x128xf32>
    %124 = arith.addf %122, %123 : vector<4x128xf32>
    %cst_120 = arith.constant 0.000000e+00 : f32
    %125 = vector.broadcast %cst_120 : f32 to vector<4x128xf32>
    %126 = arith.maximumf %124, %125 : vector<4x128xf32>
    %127 = arith.truncf %126 : vector<4x128xf32> to vector<4x128xbf16>
    %c0_121 = arith.constant 0 : index
    %c3_122 = arith.constant 3 : index
    %c0_123 = arith.constant 0 : index
    %c0_124 = arith.constant 0 : index
    %128 = vector.load %arg4[%c0_121, %c3_122, %c0_123, %c0_124] : memref<1x4x4x128xbf16, #tpu.memory_space<vmem>>, vector<1x1x4x128xbf16>
    %129 = vector.shape_cast %128 : vector<1x1x4x128xbf16> to vector<4x128xbf16>
    %130 = vector.shape_cast %127 : vector<4x128xbf16> to vector<1x1x4x128xbf16>
    tpu.vector_store %arg4[%c0_121, %c3_122, %c0_123, %c0_124], %130 {strides = array<i32>} : memref<1x4x4x128xbf16, #tpu.memory_space<vmem>>, vector<1x1x4x128xbf16>,
    return
  }
  func.func @transform_0(%arg0: i32) -> (i32, i32, i32) {
    %c0_i32 = arith.constant 0 : i32
    %c0_i32_0 = arith.constant 0 : i32
    %c0_i32_1 = arith.constant 0 : i32
    return %arg0, %c0_i32, %c0_i32_0 : i32, i32, i32
  }
  func.func @transform_1(%arg0: i32) -> (i32, i32, i32) {
    %c0_i32 = arith.constant 0 : i32
    %c0_i32_0 = arith.constant 0 : i32
    %c0_i32_1 = arith.constant 0 : i32
    %c0_i32_2 = arith.constant 0 : i32
    return %c0_i32, %c0_i32_0, %c0_i32_1 : i32, i32, i32
  }
  func.func @transform_2(%arg0: i32) -> (i32, i32) {
    %c0_i32 = arith.constant 0 : i32
    %c0_i32_0 = arith.constant 0 : i32
    %c0_i32_1 = arith.constant 0 : i32
    return %c0_i32, %c0_i32_0 : i32, i32
  }
  func.func @transform_3(%arg0: i32) -> (i32, i32, i32, i32) {
    %c0_i32 = arith.constant 0 : i32
    %c0_i32_0 = arith.constant 0 : i32
    %c0_i32_1 = arith.constant 0 : i32
    %c0_i32_2 = arith.constant 0 : i32
    return %arg0, %c0_i32, %c0_i32_0, %c0_i32_1 : i32, i32, i32, i32
  }
}

</mosaic_0001>

<llo_original>
// kernel: vgg_forward.3
$region0: #{vgg_forward.3}
  #allocation0 [shape = 'u32[]', space=smem, size = 0x4, offset = 0x4, fixed_abs, tag = 'smem constant byte address 0x4 - core index']
  #allocation1 [shape = 'u32[144,128]{1,0:T(1,128)}', space=vmem, size = 0x12000, scoped, tag = 'internal scratch']
  #allocation2 [shape = 'f32[256,128]{1,0:T(8,128)}', space=vmem, size = 0x20000, scoped, tag = 'scratch operand']
  %s0 = inlined_call_operand.vmem [shape: bf16[2,256,27], index: 0, kind: input, shape index: {}]
  %s1 = inlined_call_operand.vmem [shape: bf16[27,128], index: 1, kind: input, shape index: {}]
  %s2 = inlined_call_operand.vmem [shape: f32[1,128], index: 2, kind: input, shape index: {}]
  %s3 = inlined_call_operand.vmem [shape: bf16[2,16,16,128], index: 3, kind: output, shape index: {}]
  %s4 = sld [smem:[#allocation0]]
  $region45: #{vgg_forward.3} parent=0
    _
  %s6 = ssub.s32 1, %s4
  %s7 = scalar_select 0, %s6, %s4
  loop: start=0, step=1, limit=4
  $region2: #{vgg_forward.3} parent=0 // loop_pre_header
    _
  $region3: #{vgg_forward.3} parent=0 // loop_header
    %s9 = sphi 0, %s13
    %p10 = scmp.ge.s32.totalorder %s9, 4
    %s16 = sphi 0, %s28
    %s17 = sphi 0, %s24
    %s18 = sphi 0, %s16
    %s19 = sphi 0, %s17
    %s20 = sphi 0, %s18
    %s21 = sphi 0, %s19
    %s33 = sphi 0, %s35
    %s36 = sphi 0, %s33
    %s37 = sphi 0, %s36
    %s53 = sphi 0, %s37
    %s57 = sphi 0, %s57
    %s59 = sphi 0, %s57
    %s60 = sphi 0, %s59
    %s74 = sphi 0, %s60
    %s78 = sphi 0, %s78
    %s80 = sphi 0, %s78
    %s81 = sphi 0, %s80
    %s95 = sphi 0, %s81
    %s103 = sphi 0, %s105
    %s106 = sphi 0, %s103
    %s107 = sphi 0, %s106
    %s123 = sphi 0, %s107
  $region4: #{vgg_forward.3} parent=0 // loop_header_branch
    %12 = sbr.rel (%p10) target = $region8
  $region5: #{vgg_forward.3} parent=0 // loop_body
    %s14 = ssub.s32 %s9, 1
    %s15 = ssub.s32 %s9, 2
    %s22 = sadd.s32 1, %s17
    %p23 = scmp.ge.s32.totalorder %s22, 1
    %s24 = scalar_select %p23, 0, %s22
    %s25 = sadd.s32 1, %s16
    %s26 = scalar_select %p23, %s25, %s16
    %p27 = scmp.ge.s32.totalorder %s26, 2
    %s28 = scalar_select %p27, 0, %s26
    %s29 = ssub.s32 %s16, %s28
    %s30 = ssub.s32 %s17, %s24
    %s31 = sor.u32 %s29, %s30
    %p32 = scmp.eq.s32.totalorder %s31, 0
    %s34 = sadd.s32 %s33, 1
    %s35 = scalar_select %p32, %s33, %s34
    %p38 = pneg %p32
    %p39 = scmp.eq.s32.totalorder %s9, 1
    %p40 = por %p38, %p39
    %p41 = scmp.ne.s32.totalorder %s33, %s36
    %p42 = scmp.eq.s32.totalorder %s9, 0
    %p43 = por %p41, %p42
    %p44 = scmp.ne.s32.totalorder %s33, %s36
    %p45 = scmp.eq.s32.totalorder %s14, 1
    %p46 = por %p44, %p45
    %p47 = scmp.ne.s32.totalorder %s36, %s37
    %p48 = scmp.eq.s32.totalorder %s14, 0
    %p49 = por %p47, %p48
    %p50 = scmp.ne.s32.totalorder %s36, %s37
    %p51 = scmp.eq.s32.totalorder %s15, 1
    %p52 = por %p50, %p51
    %p54 = scmp.ne.s32.totalorder %s37, %s53
    %p55 = scmp.eq.s32.totalorder %s15, 0
    %p56 = por %p54, %p55
    %s58 = sadd.s32 %s57, 1
    %p61 = scmp.eq.s32.totalorder %s9, 1
    %p62 = scmp.ne.s32.totalorder %s57, %s59
    %p63 = scmp.eq.s32.totalorder %s9, 0
    %p64 = por %p62, %p63
    %p65 = scmp.ne.s32.totalorder %s57, %s59
    %p66 = scmp.eq.s32.totalorder %s14, 1
    %p67 = por %p65, %p66
    %p68 = scmp.ne.s32.totalorder %s59, %s60
    %p69 = scmp.eq.s32.totalorder %s14, 0
    %p70 = por %p68, %p69
    %p71 = scmp.ne.s32.totalorder %s59, %s60
    %p72 = scmp.eq.s32.totalorder %s15, 1
    %p73 = por %p71, %p72
    %p75 = scmp.ne.s32.totalorder %s60, %s74
    %p76 = scmp.eq.s32.totalorder %s15, 0
    %p77 = por %p75, %p76
    %s79 = sadd.s32 %s78, 1
    %p82 = scmp.eq.s32.totalorder %s9, 1
    %p83 = scmp.ne.s32.totalorder %s78, %s80
    %p84 = scmp.eq.s32.totalorder %s9, 0
    %p85 = por %p83, %p84
    %p86 = scmp.ne.s32.totalorder %s78, %s80
    %p87 = scmp.eq.s32.totalorder %s14, 1
    %p88 = por %p86, %p87
    %p89 = scmp.ne.s32.totalorder %s80, %s81
    %p90 = scmp.eq.s32.totalorder %s14, 0
    %p91 = por %p89, %p90
    %p92 = scmp.ne.s32.totalorder %s80, %s81
    %p93 = scmp.eq.s32.totalorder %s15, 1
    %p94 = por %p92, %p93
    %p96 = scmp.ne.s32.totalorder %s81, %s95
    %p97 = scmp.eq.s32.totalorder %s15, 0
    %p98 = por %p96, %p97
    %s99 = ssub.s32 %s16, %s28
    %s100 = ssub.s32 %s17, %s24
    %s101 = sor.u32 %s99, %s100
    %p102 = scmp.eq.s32.totalorder %s101, 0
    %s104 = sadd.s32 %s103, 1
    %s105 = scalar_select %p102, %s103, %s104
    %p108 = pneg %p102
    %p109 = scmp.eq.s32.totalorder %s9, 1
    %p110 = por %p108, %p109
    %p111 = scmp.ne.s32.totalorder %s103, %s106
    %p112 = scmp.eq.s32.totalorder %s9, 0
    %p113 = por %p111, %p112
    %p114 = scmp.ne.s32.totalorder %s103, %s106
    %p115 = scmp.eq.s32.totalorder %s14, 1
    %p116 = por %p114, %p115
    %p117 = scmp.ne.s32.totalorder %s106, %s107
    %p118 = scmp.eq.s32.totalorder %s14, 0
    %p119 = por %p117, %p118
    %p120 = scmp.ne.s32.totalorder %s106, %s107
    %p121 = scmp.eq.s32.totalorder %s15, 1
    %p122 = por %p120, %p121
    %p124 = scmp.ne.s32.totalorder %s107, %s123
    %p125 = scmp.eq.s32.totalorder %s15, 0
    %p126 = por %p124, %p125
    %p127 = scmp.le.s32.totalorder 1, %s9
    %p128 = scmp.lt.s32.totalorder %s9, 3
    %p129 = pnand %p127, %p128
    %p130 = pneg %p129
    // Predicated region
    $region9: #{vgg_forward.3} parent=5 // pred_check
      _
    $region10: #{vgg_forward.3} parent=5 // pred_check_branch
      %132 = sbr.rel (%p129) target = $region12
    $region11: #{vgg_forward.3} parent=5 // pred_region
      %s133 = ssub.s32 %s9, 1
      // Predicated region
      $region13: #{vgg_forward.3} parent=11 // pred_check
        %p134 = pneg %p70
      $region14: #{vgg_forward.3} parent=11 // pred_check_branch
        %136 = sbr.rel (%p134) target = $region16
      $region15: #{vgg_forward.3} parent=11 // pred_region
        _
      $region16: #{vgg_forward.3} parent=11 // pred_fallthru
        _
      // Predicated region
      $region17: #{vgg_forward.3} parent=11 // pred_check
        %p137 = pneg %p91
      $region18: #{vgg_forward.3} parent=11 // pred_check_branch
        %139 = sbr.rel (%p137) target = $region20
      $region19: #{vgg_forward.3} parent=11 // pred_region
        _
      $region20: #{vgg_forward.3} parent=11 // pred_fallthru
        _
    $region12: #{vgg_forward.3} parent=5 // pred_fallthru
      _
    %p140 = scmp.lt.s32.totalorder %s9, 2
    // Predicated region
    $region21: #{vgg_forward.3} parent=5 // pred_check
      %p141 = pneg %p140
    $region22: #{vgg_forward.3} parent=5 // pred_check_branch
      %143 = sbr.rel (%p141) target = $region24
    $region23: #{vgg_forward.3} parent=5 // pred_region
      // Predicated region
      $region25: #{vgg_forward.3} parent=23 // pred_check
        %p144 = pneg %p43
      $region26: #{vgg_forward.3} parent=23 // pred_check_branch
        %146 = sbr.rel (%p144) target = $region28
      $region27: #{vgg_forward.3} parent=23 // pred_region
        %s147 = smul.u32 32, %s17
        %p148 = scmp.lt.s32.totalorder %s16, 1
        %s149 = scalar_select %p148, %s16, 1
        %p150 = scmp.lt.s32.totalorder %s147, 31
        %s151 = scalar_select %p150, %s147, 31
        %s152 = smul.addr %s149, 32
        %s153 = sadd.s32 %s151, %s152
        %s154 = smul.addr %s153, 4
        %s155 = scalar_lea.vmem %s0, %s154
        %s156 = smul.u32 32, %s17
      $region28: #{vgg_forward.3} parent=23 // pred_fallthru
        _
    $region24: #{vgg_forward.3} parent=5 // pred_fallthru
      _
    %p157 = scmp.le.s32.totalorder 1, %s9
    %p158 = scmp.lt.s32.totalorder %s9, 3
    %p159 = pnand %p157, %p158
    %p160 = pneg %p159
    // Predicated region
    $region29: #{vgg_forward.3} parent=5 // pred_check
      _
    $region30: #{vgg_forward.3} parent=5 // pred_check_branch
      %162 = sbr.rel (%p159) target = $region32
    $region31: #{vgg_forward.3} parent=5 // pred_region
      %s163 = ssub.s32 %s9, 1
      %s164 = smul.u32 32, %s19
      %p165 = scmp.lt.s32.totalorder %s18, 1
      %s166 = scalar_select %p165, %s18, 1
      %p167 = scmp.lt.s32.totalorder %s164, 31
      %s168 = scalar_select %p167, %s164, 31
      %s169 = smul.addr %s166, 32
      %s170 = sadd.s32 %s168, %s169
      %s171 = smul.addr %s170, 4
      %s172 = scalar_lea.vmem %s0, %s171
      %p173 = pneg %p49
      %p174 = pneg %p46
      %p175 = pneg %p70
      %p176 = pneg %p67
      %p177 = pneg %p91
      %p178 = pneg %p88
      %p179 = pneg %p119
      %p180 = pneg %p116
      %s181 = smul.u32 16, %s19
      %p182 = scmp.lt.s32.totalorder %s18, 1
      %s183 = scalar_select %p182, %s18, 1
      %p184 = scmp.lt.s32.totalorder %s181, 15
      %s185 = scalar_select %p184, %s181, 15
      %s186 = smul.addr %s185, 2
      %s187 = smul.addr %s183, 32
      %s188 = sadd.s32 %s186, %s187
      %s189 = smul.addr %s188, 4
      %s190 = scalar_lea.vmem %s3, %s189
      %s191 = smul.u32 32, %s19
      %p192 = scmp.lt.s32.totalorder %s18, 1
      %s193 = scalar_select %p192, %s18, 1
      %p194 = scmp.lt.s32.totalorder %s191, 31
      %s195 = scalar_select %p194, %s191, 31
      %s196 = smul.addr %s193, 32
      %s197 = sadd.s32 %s195, %s196
      %s198 = smul.addr %s197, 4
      %s199 = scalar_lea.vmem %s0, %s198
      %s200 = smul.u32 32, %s19
      %s201 = smul.u32 16, %s19
      %p202 = scmp.lt.s32.totalorder %s18, 1
      %s203 = scalar_select %p202, %s18, 1
      %p204 = scmp.lt.s32.totalorder %s201, 15
      %s205 = scalar_select %p204, %s201, 15
      %s206 = smul.addr %s205, 2
      %s207 = smul.addr %s203, 32
      %s208 = sadd.s32 %s206, %s207
      %s209 = smul.addr %s208, 4
      %s210 = scalar_lea.vmem %s3, %s209
      %s211 = smul.u32 16, %s19
      %v213 = vld [vmem:[%s199] sm:$0xf]
      %v214 = vld [vmem:[%s199 + $0x4] sm:$0xf]
      %v215 = vld [vmem:[%s199 + $0x8] sm:$0xf]
      %v216 = vld [vmem:[%s199 + $0xc] sm:$0xf]
      %v217 = vld [vmem:[%s199 + $0x10] sm:$0xf]
      %v218 = vld [vmem:[%s199 + $0x14] sm:$0xf]
      %v219 = vld [vmem:[%s199 + $0x18] sm:$0xf]
      %v220 = vld [vmem:[%s199 + $0x1c] sm:$0xf]
      %v221 = vld [vmem:[%s199 + $0x20] sm:$0xf]
      %v222 = vld [vmem:[%s199 + $0x24] sm:$0xf]
      %v223 = vld [vmem:[%s199 + $0x28] sm:$0xf]
      %v224 = vld [vmem:[%s199 + $0x2c] sm:$0xf]
      %v225 = vld [vmem:[%s199 + $0x30] sm:$0xf]
      %v226 = vld [vmem:[%s199 + $0x34] sm:$0xf]
      %v227 = vld [vmem:[%s199 + $0x38] sm:$0xf]
      %v228 = vld [vmem:[%s199 + $0x3c] sm:$0xf]
      %v229 = vld [vmem:[%s199 + $0x40] sm:$0xf]
      %v230 = vld [vmem:[%s199 + $0x44] sm:$0xf]
      %v231 = vld [vmem:[%s199 + $0x48] sm:$0xf]
      %v232 = vld [vmem:[%s199 + $0x4c] sm:$0xf]
      %v233 = vld [vmem:[%s199 + $0x50] sm:$0xf]
      %v234 = vld [vmem:[%s199 + $0x54] sm:$0xf]
      %v235 = vld [vmem:[%s199 + $0x58] sm:$0xf]
      %v236 = vld [vmem:[%s199 + $0x5c] sm:$0xf]
      %v237 = vld [vmem:[%s199 + $0x60] sm:$0xf]
      %v238 = vld [vmem:[%s199 + $0x64] sm:$0xf]
      %v239 = vld [vmem:[%s199 + $0x68] sm:$0xf]
      %v240 = vld [vmem:[%s199 + $0x6c] sm:$0xf]
      %v241 = vld [vmem:[%s199 + $0x70] sm:$0xf]
      %v242 = vld [vmem:[%s199 + $0x74] sm:$0xf]
      %v243 = vld [vmem:[%s199 + $0x78] sm:$0xf]
      %v244 = vld [vmem:[%s199 + $0x7c] sm:$0xf]
      %v245 = vld [vmem:[%s1] sm:$0xf]
      %v246 = vld [vmem:[%s1 + $0x4] sm:$0xf]
      %v247 = vld [vmem:[%s1 + $0x8] sm:$0xf]
      %v248 = vld [vmem:[%s1 + $0xc] sm:$0x3]
      %v281 = vunpack.c.l.b16 %v213
      %v282 = vunpack.c.l.b16 %v214
      %v283 = vunpack.c.l.b16 %v215
      %v284 = vunpack.c.l.b16 %v216
      %v285 = vunpack.c.l.b16 %v217
      %v286 = vunpack.c.l.b16 %v218
      %v287 = vunpack.c.l.b16 %v219
      %v288 = vunpack.c.l.b16 %v220
      %v289 = vunpack.c.l.b16 %v221
      %v290 = vunpack.c.l.b16 %v222
      %v291 = vunpack.c.l.b16 %v223
      %v292 = vunpack.c.l.b16 %v224
      %v293 = vunpack.c.l.b16 %v225
      %v294 = vunpack.c.l.b16 %v226
      %v295 = vunpack.c.l.b16 %v227
      %v296 = vunpack.c.l.b16 %v228
      %v297 = vunpack.c.l.b16 %v229
      %v298 = vunpack.c.l.b16 %v230
      %v299 = vunpack.c.l.b16 %v231
      %v300 = vunpack.c.l.b16 %v232
      %v301 = vunpack.c.l.b16 %v233
      %v302 = vunpack.c.l.b16 %v234
      %v303 = vunpack.c.l.b16 %v235
      %v304 = vunpack.c.l.b16 %v236
      %v305 = vunpack.c.l.b16 %v237
      %v306 = vunpack.c.l.b16 %v238
      %v307 = vunpack.c.l.b16 %v239
      %v308 = vunpack.c.l.b16 %v240
      %v309 = vunpack.c.l.b16 %v241
      %v310 = vunpack.c.l.b16 %v242
      %v311 = vunpack.c.l.b16 %v243
      %v312 = vunpack.c.l.b16 %v244
      %v313 = vpack.c.b16 %v282, %v281
      %v314 = vpack.c.b16 %v284, %v283
      %v315 = vpack.c.b16 %v286, %v285
      %v316 = vpack.c.b16 %v288, %v287
      %v317 = vpack.c.b16 %v290, %v289
      %v318 = vpack.c.b16 %v292, %v291
      %v319 = vpack.c.b16 %v294, %v293
      %v320 = vpack.c.b16 %v296, %v295
      %v321 = vpack.c.b16 %v298, %v297
      %v322 = vpack.c.b16 %v300, %v299
      %v323 = vpack.c.b16 %v302, %v301
      %v324 = vpack.c.b16 %v304, %v303
      %v325 = vpack.c.b16 %v306, %v305
      %v326 = vpack.c.b16 %v308, %v307
      %v327 = vpack.c.b16 %v310, %v309
      %v328 = vpack.c.b16 %v312, %v311
      %v333 = vunpack.c.l.b16 %v245
      %v334 = vunpack.c.l.b16 %v246
      %v335 = vunpack.c.l.b16 %v247
      %v336 = vunpack.c.l.b16 %v248
      %v337 = vpack.c.b16 %v334, %v333
      %v338 = vpack.c.b16 %v336, %v335
      %vm340 = vcmask 220160
      %v342 = vsel %vm340, %v313, 0
      %v345 = vsel %vm340, %v314, 0
      %v348 = vsel %vm340, %v315, 0
      %v351 = vsel %vm340, %v316, 0
      %v354 = vsel %vm340, %v317, 0
      %v357 = vsel %vm340, %v318, 0
      %v360 = vsel %vm340, %v319, 0
      %v363 = vsel %vm340, %v320, 0
      %v366 = vsel %vm340, %v321, 0
      %v369 = vsel %vm340, %v322, 0
      %v372 = vsel %vm340, %v323, 0
      %v375 = vsel %vm340, %v324, 0
      %v378 = vsel %vm340, %v325, 0
      %v381 = vsel %vm340, %v326, 0
      %v384 = vsel %vm340, %v327, 0
      %v387 = vsel %vm340, %v328, 0
      %vm389 = vcmask 1044480
      %vm390 = vcmask 1045504
      %v391 = vsel %vm389, 4294967295, 65535
      %v392 = vsel %vm390, %v391, 0
      %v394 = vand.u32 %v338, %v392
      %396 = vmatprep.subr.bf16.mxu0 0
      %397 = vmatpush1.bf16.msra.mxu0 %v337
      %398 = vmatprep.subr.bf16.mxu0 0
      %399 = vmatpush1.bf16.msra.mxu0 %v394
      %400 = vmatprep.subr.bf16.mxu0 0
      %401 = vmatpush1.bf16.msra.mxu0 0
      %402 = vmatprep.subr.bf16.mxu0 0
      %403 = vmatpush1.bf16.msra.mxu0 0
      %404 = vmatprep.subr.bf16.mxu0 0
      %405 = vmatpush1.bf16.msra.mxu0 0
      %406 = vmatprep.subr.bf16.mxu0 0
      %407 = vmatpush1.bf16.msra.mxu0 0
      %408 = vmatprep.subr.bf16.mxu0 0
      %409 = vmatpush1.bf16.msra.mxu0 0
      %410 = vmatprep.subr.bf16.mxu0 0
      %411 = vmatpush1.bf16.msra.mxu0 0
      %412 = vmatprep.subr.bf16.mxu0 0
      %413 = vmatpush1.bf16.msra.mxu0 0
      %414 = vmatprep.subr.bf16.mxu0 0
      %415 = vmatpush1.bf16.msra.mxu0 0
      %416 = vmatprep.subr.bf16.mxu0 0
      %417 = vmatpush1.bf16.msra.mxu0 0
      %418 = vmatprep.subr.bf16.mxu0 0
      %419 = vmatpush1.bf16.msra.mxu0 0
      %420 = vmatprep.subr.bf16.mxu0 0
      %421 = vmatpush1.bf16.msra.mxu0 0
      %422 = vmatprep.subr.bf16.mxu0 0
      %423 = vmatpush1.bf16.msra.mxu0 0
      %424 = vmatprep.subr.bf16.mxu0 0
      %425 = vmatpush1.bf16.msra.mxu0 0
      %426 = vmatprep.subr.bf16.mxu0 0
      %427 = vmatpush1.bf16.msra.mxu0 0
      %428 = vmatprep.mubr.bf16.mxu0 0
      %429 = vmatmul.mubr.bf16.gmra.mrb[0].mxu0 %v342
      %v430 = vpop.f32.mrb[0].mxu0
      %v431 = vadd.f32 0.0, %v430
      %v432 = vpop.f32.mrb[0].mxu0
      %v433 = vpop.f32.mrb[0].mxu0
      %v434 = vadd.f32 0.0, %v433
      %v435 = vpop.f32.mrb[0].mxu0
      %436 = vmatprep.mubr.bf16.mxu0 0
      %437 = vmatmul.mubr.bf16.gmra.mrb[0].mxu0 %v345
      %v438 = vpop.f32.mrb[0].mxu0
      %v439 = vadd.f32 0.0, %v438
      %v440 = vpop.f32.mrb[0].mxu0
      %v441 = vpop.f32.mrb[0].mxu0
      %v442 = vadd.f32 0.0, %v441
      %v443 = vpop.f32.mrb[0].mxu0
      %444 = vmatprep.mubr.bf16.mxu0 0
      %445 = vmatmul.mubr.bf16.gmra.mrb[0].mxu0 %v348
      %v446 = vpop.f32.mrb[0].mxu0
      %v447 = vadd.f32 0.0, %v446
      %v448 = vpop.f32.mrb[0].mxu0
      %v449 = vpop.f32.mrb[0].mxu0
      %v450 = vadd.f32 0.0, %v449
      %v451 = vpop.f32.mrb[0].mxu0
      %452 = vmatprep.mubr.bf16.mxu0 0
      %453 = vmatmul.mubr.bf16.gmra.mrb[0].mxu0 %v351
      %v454 = vpop.f32.mrb[0].mxu0
      %v455 = vadd.f32 0.0, %v454
      %v456 = vpop.f32.mrb[0].mxu0
      %v457 = vpop.f32.mrb[0].mxu0
      %v458 = vadd.f32 0.0, %v457
      %v459 = vpop.f32.mrb[0].mxu0
      %460 = vmatprep.mubr.bf16.mxu0 0
      %461 = vmatmul.mubr.bf16.gmra.mrb[0].mxu0 %v354
      %v462 = vpop.f32.mrb[0].mxu0
      %v463 = vadd.f32 0.0, %v462
      %v464 = vpop.f32.mrb[0].mxu0
      %v465 = vpop.f32.mrb[0].mxu0
      %v466 = vadd.f32 0.0, %v465
      %v467 = vpop.f32.mrb[0].mxu0
      %468 = vmatprep.mubr.bf16.mxu0 0
      %469 = vmatmul.mubr.bf16.gmra.mrb[0].mxu0 %v357
      %v470 = vpop.f32.mrb[0].mxu0
      %v471 = vadd.f32 0.0, %v470
      %v472 = vpop.f32.mrb[0].mxu0
      %v473 = vpop.f32.mrb[0].mxu0
      %v474 = vadd.f32 0.0, %v473
      %v475 = vpop.f32.mrb[0].mxu0
      %476 = vmatprep.mubr.bf16.mxu0 0
      %477 = vmatmul.mubr.bf16.gmra.mrb[0].mxu0 %v360
      %v478 = vpop.f32.mrb[0].mxu0
      %v479 = vadd.f32 0.0, %v478
      %v480 = vpop.f32.mrb[0].mxu0
      %v481 = vpop.f32.mrb[0].mxu0
      %v482 = vadd.f32 0.0, %v481
      %v483 = vpop.f32.mrb[0].mxu0
      %484 = vmatprep.mubr.bf16.mxu0 0
      %485 = vmatmul.mubr.bf16.gmra.mrb[0].mxu0 %v363
      %v486 = vpop.f32.mrb[0].mxu0
      %v487 = vadd.f32 0.0, %v486
      %v488 = vpop.f32.mrb[0].mxu0
      %v489 = vpop.f32.mrb[0].mxu0
      %v490 = vadd.f32 0.0, %v489
      %v491 = vpop.f32.mrb[0].mxu0
      %492 = vmatprep.mubr.bf16.mxu0 0
      %493 = vmatmul.mubr.bf16.gmra.mrb[0].mxu0 %v366
      %v494 = vpop.f32.mrb[0].mxu0
      %v495 = vadd.f32 0.0, %v494
      %v496 = vpop.f32.mrb[0].mxu0
      %v497 = vpop.f32.mrb[0].mxu0
      %v498 = vadd.f32 0.0, %v497
      %v499 = vpop.f32.mrb[0].mxu0
      %500 = vmatprep.mubr.bf16.mxu0 0
      %501 = vmatmul.mubr.bf16.gmra.mrb[0].mxu0 %v369
      %v502 = vpop.f32.mrb[0].mxu0
      %v503 = vadd.f32 0.0, %v502
      %v504 = vpop.f32.mrb[0].mxu0
      %v505 = vpop.f32.mrb[0].mxu0
      %v506 = vadd.f32 0.0, %v505
      %v507 = vpop.f32.mrb[0].mxu0
      %508 = vmatprep.mubr.bf16.mxu0 0
      %509 = vmatmul.mubr.bf16.gmra.mrb[0].mxu0 %v372
      %v510 = vpop.f32.mrb[0].mxu0
      %v511 = vadd.f32 0.0, %v510
      %v512 = vpop.f32.mrb[0].mxu0
      %v513 = vpop.f32.mrb[0].mxu0
      %v514 = vadd.f32 0.0, %v513
      %v515 = vpop.f32.mrb[0].mxu0
      %516 = vmatprep.mubr.bf16.mxu0 0
      %517 = vmatmul.mubr.bf16.gmra.mrb[0].mxu0 %v375
      %v518 = vpop.f32.mrb[0].mxu0
      %v519 = vadd.f32 0.0, %v518
      %v520 = vpop.f32.mrb[0].mxu0
      %v521 = vpop.f32.mrb[0].mxu0
      %v522 = vadd.f32 0.0, %v521
      %v523 = vpop.f32.mrb[0].mxu0
      %524 = vmatprep.mubr.bf16.mxu0 0
      %525 = vmatmul.mubr.bf16.gmra.mrb[0].mxu0 %v378
      %v526 = vpop.f32.mrb[0].mxu0
      %v527 = vadd.f32 0.0, %v526
      %v528 = vpop.f32.mrb[0].mxu0
      %v529 = vpop.f32.mrb[0].mxu0
      %v530 = vadd.f32 0.0, %v529
      %v531 = vpop.f32.mrb[0].mxu0
      %532 = vmatprep.mubr.bf16.mxu0 0
      %533 = vmatmul.mubr.bf16.gmra.mrb[0].mxu0 %v381
      %v534 = vpop.f32.mrb[0].mxu0
      %v535 = vadd.f32 0.0, %v534
      %v536 = vpop.f32.mrb[0].mxu0
      %v537 = vpop.f32.mrb[0].mxu0
      %v538 = vadd.f32 0.0, %v537
      %v539 = vpop.f32.mrb[0].mxu0
      %540 = vmatprep.mubr.bf16.mxu0 0
      %541 = vmatmul.mubr.bf16.gmra.mrb[0].mxu0 %v384
      %v542 = vpop.f32.mrb[0].mxu0
      %v543 = vadd.f32 0.0, %v542
      %v544 = vpop.f32.mrb[0].mxu0
      %v545 = vpop.f32.mrb[0].mxu0
      %v546 = vadd.f32 0.0, %v545
      %v547 = vpop.f32.mrb[0].mxu0
      %548 = vmatprep.mubr.bf16.mxu0 0
      %549 = vmatmul.mubr.bf16.gmra.mrb[0].mxu0 %v387
      %v550 = vpop.f32.mrb[0].mxu0
      %v551 = vadd.f32 0.0, %v550
      %v552 = vpop.f32.mrb[0].mxu0
      %v553 = vpop.f32.mrb[0].mxu0
      %v554 = vadd.f32 0.0, %v553
      %v555 = vpop.f32.mrb[0].mxu0
      %556 = vdwg.mxu0
      %557 = vst [vmem:[#allocation2] sm:$0xff] %v431
      %558 = vst [vmem:[#allocation2 + $0x8] sm:$0xff] %v434
      %559 = vst [vmem:[#allocation2 + $0x10] sm:$0xff] %v439
      %560 = vst [vmem:[#allocation2 + $0x18] sm:$0xff] %v442
      %561 = vst [vmem:[#allocation2 + $0x20] sm:$0xff] %v447
      %562 = vst [vmem:[#allocation2 + $0x28] sm:$0xff] %v450
      %563 = vst [vmem:[#allocation2 + $0x30] sm:$0xff] %v455
      %564 = vst [vmem:[#allocation2 + $0x38] sm:$0xff] %v458
      %565 = vst [vmem:[#allocation2 + $0x40] sm:$0xff] %v463
      %566 = vst [vmem:[#allocation2 + $0x48] sm:$0xff] %v466
      %567 = vst [vmem:[#allocation2 + $0x50] sm:$0xff] %v471
      %568 = vst [vmem:[#allocation2 + $0x58] sm:$0xff] %v474
      %569 = vst [vmem:[#allocation2 + $0x60] sm:$0xff] %v479
      %570 = vst [vmem:[#allocation2 + $0x68] sm:$0xff] %v482
      %571 = vst [vmem:[#allocation2 + $0x70] sm:$0xff] %v487
      %572 = vst [vmem:[#allocation2 + $0x78] sm:$0xff] %v490
      %573 = vst [vmem:[#allocation2 + $0x80] sm:$0xff] %v495
      %574 = vst [vmem:[#allocation2 + $0x88] sm:$0xff] %v498
      %575 = vst [vmem:[#allocation2 + $0x90] sm:$0xff] %v503
      %576 = vst [vmem:[#allocation2 + $0x98] sm:$0xff] %v506
      %577 = vst [vmem:[#allocation2 + $0xa0] sm:$0xff] %v511
      %578 = vst [vmem:[#allocation2 + $0xa8] sm:$0xff] %v514
      %579 = vst [vmem:[#allocation2 + $0xb0] sm:$0xff] %v519
      %580 = vst [vmem:[#allocation2 + $0xb8] sm:$0xff] %v522
      %581 = vst [vmem:[#allocation2 + $0xc0] sm:$0xff] %v527
      %582 = vst [vmem:[#allocation2 + $0xc8] sm:$0xff] %v530
      %583 = vst [vmem:[#allocation2 + $0xd0] sm:$0xff] %v535
      %584 = vst [vmem:[#allocation2 + $0xd8] sm:$0xff] %v538
      %585 = vst [vmem:[#allocation2 + $0xe0] sm:$0xff] %v543
      %586 = vst [vmem:[#allocation2 + $0xe8] sm:$0xff] %v546
      %587 = vst [vmem:[#allocation2 + $0xf0] sm:$0xff] %v551
      %588 = vst [vmem:[#allocation2 + $0xf8] sm:$0xff] %v554
      %v589 = vld [vmem:[%s2] sm:$0x1]
      %v590 = vld [vmem:[#allocation2] sm:$0xff]
      %v591 = vld [vmem:[#allocation2 + $0x8] sm:$0xff]
      %v593 = vlaneseq
      %v594 = vshrl.u32 %v593, 7
      %v595 = vsub.s32 0, %v594
      %v596 = vrot.slane %v589, %v595
      %v598 = vadd.f32 %v590, %v596
      %v599 = vadd.f32 %v591, %v596
      %v600 = vmax.f32 %v598, 0.0
      %v601 = vmax.f32 %v599, 0.0
      %v602 = vpack.c.bf16 %v601, %v600
      %v604 = vunpack.c.l.b16 %v602
      %v605 = vunpack.c.h.b16 %v602
      %v606 = vpack.c.b16 %v604, %v604
      %v607 = vpack.c.b16 %v605, %v605
      %610 = vst [vmem:[%s210] sm:$0xf] %v606
      %611 = vst [vmem:[%s210 + $0x4] sm:$0xf] %v607
      %v612 = vld [vmem:[#allocation2 + $0x10] sm:$0xff]
      %v613 = vld [vmem:[#allocation2 + $0x18] sm:$0xff]
      %v614 = vadd.f32 %v612, %v596
      %v615 = vadd.f32 %v613, %v596
      %v616 = vmax.f32 %v614, 0.0
      %v617 = vmax.f32 %v615, 0.0
      %v618 = vpack.c.bf16 %v617, %v616
      %v620 = vunpack.c.l.b16 %v618
      %v621 = vunpack.c.h.b16 %v618
      %v622 = vpack.c.b16 %v620, %v620
      %v623 = vpack.c.b16 %v621, %v621
      %s626 = scalar_lea.vmem %s210, 8
      %627 = vst [vmem:[%s626] sm:$0xf] %v622
      %628 = vst [vmem:[%s626 + $0x4] sm:$0xf] %v623
      %v629 = vld [vmem:[#allocation2 + $0x20] sm:$0xff]
      %v630 = vld [vmem:[#allocation2 + $0x28] sm:$0xff]
      %v631 = vadd.f32 %v629, %v596
      %v632 = vadd.f32 %v630, %v596
      %v633 = vmax.f32 %v631, 0.0
      %v634 = vmax.f32 %v632, 0.0
      %v635 = vpack.c.bf16 %v634, %v633
      %v637 = vunpack.c.l.b16 %v635
      %v638 = vunpack.c.h.b16 %v635
      %v639 = vpack.c.b16 %v637, %v637
      %v640 = vpack.c.b16 %v638, %v638
      %s643 = scalar_lea.vmem %s210, 16
      %644 = vst [vmem:[%s643] sm:$0xf] %v639
      %645 = vst [vmem:[%s643 + $0x4] sm:$0xf] %v640
      %v646 = vld [vmem:[#allocation2 + $0x30] sm:$0xff]
      %v647 = vld [vmem:[#allocation2 + $0x38] sm:$0xff]
      %v648 = vadd.f32 %v646, %v596
      %v649 = vadd.f32 %v647, %v596
      %v650 = vmax.f32 %v648, 0.0
      %v651 = vmax.f32 %v649, 0.0
      %v652 = vpack.c.bf16 %v651, %v650
      %v654 = vunpack.c.l.b16 %v652
      %v655 = vunpack.c.h.b16 %v652
      %v656 = vpack.c.b16 %v654, %v654
      %v657 = vpack.c.b16 %v655, %v655
      %s660 = scalar_lea.vmem %s210, 24
      %661 = vst [vmem:[%s660] sm:$0xf] %v656
      %662 = vst [vmem:[%s660 + $0x4] sm:$0xf] %v657
      %v663 = vld [vmem:[#allocation2 + $0x40] sm:$0xff]
      %v664 = vld [vmem:[#allocation2 + $0x48] sm:$0xff]
      %v665 = vadd.f32 %v663, %v596
      %v666 = vadd.f32 %v664, %v596
      %v667 = vmax.f32 %v665, 0.0
      %v668 = vmax.f32 %v666, 0.0
      %v669 = vpack.c.bf16 %v668, %v667
      %v671 = vunpack.c.l.b16 %v669
      %v672 = vunpack.c.h.b16 %v669
      %v673 = vpack.c.b16 %v671, %v671
      %v674 = vpack.c.b16 %v672, %v672
      %s677 = scalar_lea.vmem %s210, 32
      %678 = vst [vmem:[%s677] sm:$0xf] %v673
      %679 = vst [vmem:[%s677 + $0x4] sm:$0xf] %v674
      %v680 = vld [vmem:[#allocation2 + $0x50] sm:$0xff]
      %v681 = vld [vmem:[#allocation2 + $0x58] sm:$0xff]
      %v682 = vadd.f32 %v680, %v596
      %v683 = vadd.f32 %v681, %v596
      %v684 = vmax.f32 %v682, 0.0
      %v685 = vmax.f32 %v683, 0.0
      %v686 = vpack.c.bf16 %v685, %v684
      %v688 = vunpack.c.l.b16 %v686
      %v689 = vunpack.c.h.b16 %v686
      %v690 = vpack.c.b16 %v688, %v688
      %v691 = vpack.c.b16 %v689, %v689
      %s694 = scalar_lea.vmem %s210, 40
      %695 = vst [vmem:[%s694] sm:$0xf] %v690
      %696 = vst [vmem:[%s694 + $0x4] sm:$0xf] %v691
      %v697 = vld [vmem:[#allocation2 + $0x60] sm:$0xff]
      %v698 = vld [vmem:[#allocation2 + $0x68] sm:$0xff]
      %v699 = vadd.f32 %v697, %v596
      %v700 = vadd.f32 %v698, %v596
      %v701 = vmax.f32 %v699, 0.0
      %v702 = vmax.f32 %v700, 0.0
      %v703 = vpack.c.bf16 %v702, %v701
      %v705 = vunpack.c.l.b16 %v703
      %v706 = vunpack.c.h.b16 %v703
      %v707 = vpack.c.b16 %v705, %v705
      %v708 = vpack.c.b16 %v706, %v706
      %s711 = scalar_lea.vmem %s210, 48
      %712 = vst [vmem:[%s711] sm:$0xf] %v707
      %713 = vst [vmem:[%s711 + $0x4] sm:$0xf] %v708
      %v714 = vld [vmem:[#allocation2 + $0x70] sm:$0xff]
      %v715 = vld [vmem:[#allocation2 + $0x78] sm:$0xff]
      %v716 = vadd.f32 %v714, %v596
      %v717 = vadd.f32 %v715, %v596
      %v718 = vmax.f32 %v716, 0.0
      %v719 = vmax.f32 %v717, 0.0
      %v720 = vpack.c.bf16 %v719, %v718
      %v722 = vunpack.c.l.b16 %v720
      %v723 = vunpack.c.h.b16 %v720
      %v724 = vpack.c.b16 %v722, %v722
      %v725 = vpack.c.b16 %v723, %v723
      %s728 = scalar_lea.vmem %s210, 56
      %729 = vst [vmem:[%s728] sm:$0xf] %v724
      %730 = vst [vmem:[%s728 + $0x4] sm:$0xf] %v725
      %v731 = vld [vmem:[#allocation2 + $0x80] sm:$0xff]
      %v732 = vld [vmem:[#allocation2 + $0x88] sm:$0xff]
      %v733 = vadd.f32 %v731, %v596
      %v734 = vadd.f32 %v732, %v596
      %v735 = vmax.f32 %v733, 0.0
      %v736 = vmax.f32 %v734, 0.0
      %v737 = vpack.c.bf16 %v736, %v735
      %v739 = vunpack.c.l.b16 %v737
      %v740 = vunpack.c.h.b16 %v737
      %v741 = vpack.c.b16 %v739, %v739
      %v742 = vpack.c.b16 %v740, %v740
      %s745 = scalar_lea.vmem %s210, 64
      %746 = vst [vmem:[%s745] sm:$0xf] %v741
      %747 = vst [vmem:[%s745 + $0x4] sm:$0xf] %v742
      %v748 = vld [vmem:[#allocation2 + $0x90] sm:$0xff]
      %v749 = vld [vmem:[#allocation2 + $0x98] sm:$0xff]
      %v750 = vadd.f32 %v748, %v596
      %v751 = vadd.f32 %v749, %v596
      %v752 = vmax.f32 %v750, 0.0
      %v753 = vmax.f32 %v751, 0.0
      %v754 = vpack.c.bf16 %v753, %v752
      %v756 = vunpack.c.l.b16 %v754
      %v757 = vunpack.c.h.b16 %v754
      %v758 = vpack.c.b16 %v756, %v756
      %v759 = vpack.c.b16 %v757, %v757
      %s762 = scalar_lea.vmem %s210, 72
      %763 = vst [vmem:[%s762] sm:$0xf] %v758
      %764 = vst [vmem:[%s762 + $0x4] sm:$0xf] %v759
      %v765 = vld [vmem:[#allocation2 + $0xa0] sm:$0xff]
      %v766 = vld [vmem:[#allocation2 + $0xa8] sm:$0xff]
      %v767 = vadd.f32 %v765, %v596
      %v768 = vadd.f32 %v766, %v596
      %v769 = vmax.f32 %v767, 0.0
      %v770 = vmax.f32 %v768, 0.0
      %v771 = vpack.c.bf16 %v770, %v769
      %v773 = vunpack.c.l.b16 %v771
      %v774 = vunpack.c.h.b16 %v771
      %v775 = vpack.c.b16 %v773, %v773
      %v776 = vpack.c.b16 %v774, %v774
      %s779 = scalar_lea.vmem %s210, 80
      %780 = vst [vmem:[%s779] sm:$0xf] %v775
      %781 = vst [vmem:[%s779 + $0x4] sm:$0xf] %v776
      %v782 = vld [vmem:[#allocation2 + $0xb0] sm:$0xff]
      %v783 = vld [vmem:[#allocation2 + $0xb8] sm:$0xff]
      %v784 = vadd.f32 %v782, %v596
      %v785 = vadd.f32 %v783, %v596
      %v786 = vmax.f32 %v784, 0.0
      %v787 = vmax.f32 %v785, 0.0
      %v788 = vpack.c.bf16 %v787, %v786
      %v790 = vunpack.c.l.b16 %v788
      %v791 = vunpack.c.h.b16 %v788
      %v792 = vpack.c.b16 %v790, %v790
      %v793 = vpack.c.b16 %v791, %v791
      %s796 = scalar_lea.vmem %s210, 88
      %797 = vst [vmem:[%s796] sm:$0xf] %v792
      %798 = vst [vmem:[%s796 + $0x4] sm:$0xf] %v793
      %v799 = vld [vmem:[#allocation2 + $0xc0] sm:$0xff]
      %v800 = vld [vmem:[#allocation2 + $0xc8] sm:$0xff]
      %v801 = vadd.f32 %v799, %v596
      %v802 = vadd.f32 %v800, %v596
      %v803 = vmax.f32 %v801, 0.0
      %v804 = vmax.f32 %v802, 0.0
      %v805 = vpack.c.bf16 %v804, %v803
      %v807 = vunpack.c.l.b16 %v805
      %v808 = vunpack.c.h.b16 %v805
      %v809 = vpack.c.b16 %v807, %v807
      %v810 = vpack.c.b16 %v808, %v808
      %s813 = scalar_lea.vmem %s210, 96
      %814 = vst [vmem:[%s813] sm:$0xf] %v809
      %815 = vst [vmem:[%s813 + $0x4] sm:$0xf] %v810
      %v816 = vld [vmem:[#allocation2 + $0xd0] sm:$0xff]
      %v817 = vld [vmem:[#allocation2 + $0xd8] sm:$0xff]
      %v818 = vadd.f32 %v816, %v596
      %v819 = vadd.f32 %v817, %v596
      %v820 = vmax.f32 %v818, 0.0
      %v821 = vmax.f32 %v819, 0.0
      %v822 = vpack.c.bf16 %v821, %v820
      %v824 = vunpack.c.l.b16 %v822
      %v825 = vunpack.c.h.b16 %v822
      %v826 = vpack.c.b16 %v824, %v824
      %v827 = vpack.c.b16 %v825, %v825
      %s830 = scalar_lea.vmem %s210, 104
      %831 = vst [vmem:[%s830] sm:$0xf] %v826
      %832 = vst [vmem:[%s830 + $0x4] sm:$0xf] %v827
      %v833 = vld [vmem:[#allocation2 + $0xe0] sm:$0xff]
      %v834 = vld [vmem:[#allocation2 + $0xe8] sm:$0xff]
      %v835 = vadd.f32 %v833, %v596
      %v836 = vadd.f32 %v834, %v596
      %v837 = vmax.f32 %v835, 0.0
      %v838 = vmax.f32 %v836, 0.0
      %v839 = vpack.c.bf16 %v838, %v837
      %v841 = vunpack.c.l.b16 %v839
      %v842 = vunpack.c.h.b16 %v839
      %v843 = vpack.c.b16 %v841, %v841
      %v844 = vpack.c.b16 %v842, %v842
      %s847 = scalar_lea.vmem %s210, 112
      %848 = vst [vmem:[%s847] sm:$0xf] %v843
      %849 = vst [vmem:[%s847 + $0x4] sm:$0xf] %v844
      %v850 = vld [vmem:[#allocation2 + $0xf0] sm:$0xff]
      %v851 = vld [vmem:[#allocation2 + $0xf8] sm:$0xff]
      %v852 = vadd.f32 %v850, %v596
      %v853 = vadd.f32 %v851, %v596
      %v854 = vmax.f32 %v852, 0.0
      %v855 = vmax.f32 %v853, 0.0
      %v856 = vpack.c.bf16 %v855, %v854
      %v858 = vunpack.c.l.b16 %v856
      %v859 = vunpack.c.h.b16 %v856
      %v860 = vpack.c.b16 %v858, %v858
      %v861 = vpack.c.b16 %v859, %v859
      %s864 = scalar_lea.vmem %s210, 120
      %865 = vst [vmem:[%s864] sm:$0xf] %v860
      %866 = vst [vmem:[%s864 + $0x4] sm:$0xf] %v861
      %s867 = smul.u32 16, %s19
      %p868 = scmp.lt.s32.totalorder %s18, 1
      %s869 = scalar_select %p868, %s18, 1
      %p870 = scmp.lt.s32.totalorder %s867, 15
      %s871 = scalar_select %p870, %s867, 15
      %s872 = smul.addr %s871, 2
      %s873 = smul.addr %s869, 32
      %s874 = sadd.s32 %s872, %s873
      %s875 = smul.addr %s874, 4
      %s876 = scalar_lea.vmem %s3, %s875
      // Predicated region
      $region33: #{vgg_forward.3} parent=31 // pred_check
        %p877 = pneg %p116
      $region34: #{vgg_forward.3} parent=31 // pred_check_branch
        %879 = sbr.rel (%p877) target = $region36
      $region35: #{vgg_forward.3} parent=31 // pred_region
        %s880 = smul.u32 16, %s19
      $region36: #{vgg_forward.3} parent=31 // pred_fallthru
        _
    $region32: #{vgg_forward.3} parent=5 // pred_fallthru
      _
    %p881 = scmp.le.s32.totalorder 2, %s9
    // Predicated region
    $region37: #{vgg_forward.3} parent=5 // pred_check
      %p882 = pneg %p881
    $region38: #{vgg_forward.3} parent=5 // pred_check_branch
      %884 = sbr.rel (%p882) target = $region40
    $region39: #{vgg_forward.3} parent=5 // pred_region
      %s885 = ssub.s32 %s9, 2
      // Predicated region
      $region41: #{vgg_forward.3} parent=39 // pred_check
        %p886 = pneg %p122
      $region42: #{vgg_forward.3} parent=39 // pred_check_branch
        %888 = sbr.rel (%p886) target = $region44
      $region43: #{vgg_forward.3} parent=39 // pred_region
        %s889 = smul.u32 16, %s21
        %p890 = scmp.lt.s32.totalorder %s20, 1
        %s891 = scalar_select %p890, %s20, 1
        %p892 = scmp.lt.s32.totalorder %s889, 15
        %s893 = scalar_select %p892, %s889, 15
        %s894 = smul.addr %s893, 2
        %s895 = smul.addr %s891, 32
        %s896 = sadd.s32 %s894, %s895
        %s897 = smul.addr %s896, 4
        %s898 = scalar_lea.vmem %s3, %s897
      $region44: #{vgg_forward.3} parent=39 // pred_fallthru
        _
    $region40: #{vgg_forward.3} parent=5 // pred_fallthru
      _
  $region6: #{vgg_forward.3} parent=0 // loop_footer
    %s13 = sadd.s32 1, %s9
  $region7: #{vgg_forward.3} parent=0 // loop_footer_branch
    %8 = sbr.rel target = $region3
  $region8: #{vgg_forward.3} parent=0 // loop_exit
    _

// kernel: vgg_forward.5
$region0: #{vgg_forward.5}
  #allocation0 [shape = 'u32[]', space=smem, size = 0x4, offset = 0x4, fixed_abs, tag = 'smem constant byte address 0x4 - core index']
  #allocation1 [shape = 'u32[144,128]{1,0:T(1,128)}', space=vmem, size = 0x12000, scoped, tag = 'internal scratch']
  #allocation2 [shape = 'f32[80,128]{1,0:T(8,128)}', space=vmem, size = 0xa000, scoped, tag = 'scratch operand']
  %s0 = inlined_call_operand.vmem [shape: bf16[2,110,128], index: 0, kind: input, shape index: {}]
  %s1 = inlined_call_operand.vmem [shape: bf16[9,128,128], index: 1, kind: input, shape index: {}]
  %s2 = inlined_call_operand.vmem [shape: f32[1,128], index: 2, kind: input, shape index: {}]
  %s3 = inlined_call_operand.vmem [shape: bf16[2,4,4,128], index: 3, kind: output, shape index: {}]
  %s4 = sld [smem:[#allocation0]]
  $region45: #{vgg_forward.5} parent=0
    _
  %s6 = ssub.s32 1, %s4
  %s7 = scalar_select 0, %s6, %s4
  loop: start=0, step=1, limit=4
  $region2: #{vgg_forward.5} parent=0 // loop_pre_header
    _
  $region3: #{vgg_forward.5} parent=0 // loop_header
    %s9 = sphi 0, %s13
    %p10 = scmp.ge.s32.totalorder %s9, 4
    %s19 = sphi 0, %s21
    %s22 = sphi 0, %s19
    %s23 = sphi 0, %s22
    %s39 = sphi 0, %s23
    %s43 = sphi 0, %s43
    %s45 = sphi 0, %s43
    %s46 = sphi 0, %s45
    %s60 = sphi 0, %s46
    %s64 = sphi 0, %s64
    %s66 = sphi 0, %s64
    %s67 = sphi 0, %s66
    %s81 = sphi 0, %s67
    %s87 = sphi 0, %s89
    %s90 = sphi 0, %s87
    %s91 = sphi 0, %s90
    %s107 = sphi 0, %s91
  $region4: #{vgg_forward.5} parent=0 // loop_header_branch
    %12 = sbr.rel (%p10) target = $region8
  $region5: #{vgg_forward.5} parent=0 // loop_body
    %s14 = ssub.s32 %s9, 1
    %s15 = ssub.s32 %s9, 2
    %s16 = sadd.s32 %s9, 1
    %s17 = ssub.s32 %s9, %s16
    %p18 = scmp.eq.s32.totalorder %s17, 0
    %s20 = sadd.s32 %s19, 1
    %s21 = scalar_select %p18, %s19, %s20
    %p24 = pneg %p18
    %p25 = scmp.eq.s32.totalorder %s9, 1
    %p26 = por %p24, %p25
    %p27 = scmp.ne.s32.totalorder %s19, %s22
    %p28 = scmp.eq.s32.totalorder %s9, 0
    %p29 = por %p27, %p28
    %p30 = scmp.ne.s32.totalorder %s19, %s22
    %p31 = scmp.eq.s32.totalorder %s14, 1
    %p32 = por %p30, %p31
    %p33 = scmp.ne.s32.totalorder %s22, %s23
    %p34 = scmp.eq.s32.totalorder %s14, 0
    %p35 = por %p33, %p34
    %p36 = scmp.ne.s32.totalorder %s22, %s23
    %p37 = scmp.eq.s32.totalorder %s15, 1
    %p38 = por %p36, %p37
    %p40 = scmp.ne.s32.totalorder %s23, %s39
    %p41 = scmp.eq.s32.totalorder %s15, 0
    %p42 = por %p40, %p41
    %s44 = sadd.s32 %s43, 1
    %p47 = scmp.eq.s32.totalorder %s9, 1
    %p48 = scmp.ne.s32.totalorder %s43, %s45
    %p49 = scmp.eq.s32.totalorder %s9, 0
    %p50 = por %p48, %p49
    %p51 = scmp.ne.s32.totalorder %s43, %s45
    %p52 = scmp.eq.s32.totalorder %s14, 1
    %p53 = por %p51, %p52
    %p54 = scmp.ne.s32.totalorder %s45, %s46
    %p55 = scmp.eq.s32.totalorder %s14, 0
    %p56 = por %p54, %p55
    %p57 = scmp.ne.s32.totalorder %s45, %s46
    %p58 = scmp.eq.s32.totalorder %s15, 1
    %p59 = por %p57, %p58
    %p61 = scmp.ne.s32.totalorder %s46, %s60
    %p62 = scmp.eq.s32.totalorder %s15, 0
    %p63 = por %p61, %p62
    %s65 = sadd.s32 %s64, 1
    %p68 = scmp.eq.s32.totalorder %s9, 1
    %p69 = scmp.ne.s32.totalorder %s64, %s66
    %p70 = scmp.eq.s32.totalorder %s9, 0
    %p71 = por %p69, %p70
    %p72 = scmp.ne.s32.totalorder %s64, %s66
    %p73 = scmp.eq.s32.totalorder %s14, 1
    %p74 = por %p72, %p73
    %p75 = scmp.ne.s32.totalorder %s66, %s67
    %p76 = scmp.eq.s32.totalorder %s14, 0
    %p77 = por %p75, %p76
    %p78 = scmp.ne.s32.totalorder %s66, %s67
    %p79 = scmp.eq.s32.totalorder %s15, 1
    %p80 = por %p78, %p79
    %p82 = scmp.ne.s32.totalorder %s67, %s81
    %p83 = scmp.eq.s32.totalorder %s15, 0
    %p84 = por %p82, %p83
    %s85 = ssub.s32 %s9, %s16
    %p86 = scmp.eq.s32.totalorder %s85, 0
    %s88 = sadd.s32 %s87, 1
    %s89 = scalar_select %p86, %s87, %s88
    %p92 = pneg %p86
    %p93 = scmp.eq.s32.totalorder %s9, 1
    %p94 = por %p92, %p93
    %p95 = scmp.ne.s32.totalorder %s87, %s90
    %p96 = scmp.eq.s32.totalorder %s9, 0
    %p97 = por %p95, %p96
    %p98 = scmp.ne.s32.totalorder %s87, %s90
    %p99 = scmp.eq.s32.totalorder %s14, 1
    %p100 = por %p98, %p99
    %p101 = scmp.ne.s32.totalorder %s90, %s91
    %p102 = scmp.eq.s32.totalorder %s14, 0
    %p103 = por %p101, %p102
    %p104 = scmp.ne.s32.totalorder %s90, %s91
    %p105 = scmp.eq.s32.totalorder %s15, 1
    %p106 = por %p104, %p105
    %p108 = scmp.ne.s32.totalorder %s91, %s107
    %p109 = scmp.eq.s32.totalorder %s15, 0
    %p110 = por %p108, %p109
    %p111 = scmp.le.s32.totalorder 1, %s9
    %p112 = scmp.lt.s32.totalorder %s9, 3
    %p113 = pnand %p111, %p112
    %p114 = pneg %p113
    // Predicated region
    $region9: #{vgg_forward.5} parent=5 // pred_check
      _
    $region10: #{vgg_forward.5} parent=5 // pred_check_branch
      %116 = sbr.rel (%p113) target = $region12
    $region11: #{vgg_forward.5} parent=5 // pred_region
      %s117 = ssub.s32 %s9, 1
      // Predicated region
      $region13: #{vgg_forward.5} parent=11 // pred_check
        %p118 = pneg %p56
      $region14: #{vgg_forward.5} parent=11 // pred_check_branch
        %120 = sbr.rel (%p118) target = $region16
      $region15: #{vgg_forward.5} parent=11 // pred_region
        _
      $region16: #{vgg_forward.5} parent=11 // pred_fallthru
        _
      // Predicated region
      $region17: #{vgg_forward.5} parent=11 // pred_check
        %p121 = pneg %p77
      $region18: #{vgg_forward.5} parent=11 // pred_check_branch
        %123 = sbr.rel (%p121) target = $region20
      $region19: #{vgg_forward.5} parent=11 // pred_region
        _
      $region20: #{vgg_forward.5} parent=11 // pred_fallthru
        _
    $region12: #{vgg_forward.5} parent=5 // pred_fallthru
      _
    %p124 = scmp.lt.s32.totalorder %s9, 2
    // Predicated region
    $region21: #{vgg_forward.5} parent=5 // pred_check
      %p125 = pneg %p124
    $region22: #{vgg_forward.5} parent=5 // pred_check_branch
      %127 = sbr.rel (%p125) target = $region24
    $region23: #{vgg_forward.5} parent=5 // pred_region
      // Predicated region
      $region25: #{vgg_forward.5} parent=23 // pred_check
        %p128 = pneg %p29
      $region26: #{vgg_forward.5} parent=23 // pred_check_branch
        %130 = sbr.rel (%p128) target = $region28
      $region27: #{vgg_forward.5} parent=23 // pred_region
        %p131 = scmp.lt.s32.totalorder %s9, 1
        %s132 = scalar_select %p131, %s9, 1
        %s133 = smul.addr %s132, 14
        %s134 = smul.addr %s133, 4
        %s135 = scalar_lea.vmem %s0, %s134
      $region28: #{vgg_forward.5} parent=23 // pred_fallthru
        _
    $region24: #{vgg_forward.5} parent=5 // pred_fallthru
      _
    %p136 = scmp.le.s32.totalorder 1, %s9
    %p137 = scmp.lt.s32.totalorder %s9, 3
    %p138 = pnand %p136, %p137
    %p139 = pneg %p138
    // Predicated region
    $region29: #{vgg_forward.5} parent=5 // pred_check
      _
    $region30: #{vgg_forward.5} parent=5 // pred_check_branch
      %141 = sbr.rel (%p138) target = $region32
    $region31: #{vgg_forward.5} parent=5 // pred_region
      %s142 = ssub.s32 %s9, 1
      %p143 = scmp.lt.s32.totalorder %s14, 1
      %s144 = scalar_select %p143, %s14, 1
      %s145 = smul.addr %s144, 14
      %s146 = smul.addr %s145, 4
      %s147 = scalar_lea.vmem %s0, %s146
      %p148 = pneg %p35
      %p149 = pneg %p32
      %p150 = pneg %p56
      %p151 = pneg %p53
      %p152 = pneg %p77
      %p153 = pneg %p74
      %p154 = pneg %p103
      %p155 = pneg %p100
      %p156 = scmp.lt.s32.totalorder %s14, 1
      %s157 = scalar_select %p156, %s14, 1
      %s158 = smul.addr %s157, 4
      %s159 = smul.addr %s158, 2
      %s160 = scalar_lea.vmem %s3, %s159
      %p161 = scmp.lt.s32.totalorder %s14, 1
      %s162 = scalar_select %p161, %s14, 1
      %s163 = smul.addr %s162, 14
      %s164 = smul.addr %s163, 4
      %s165 = scalar_lea.vmem %s0, %s164
      %p166 = scmp.lt.s32.totalorder %s14, 1
      %s167 = scalar_select %p166, %s14, 1
      %s168 = smul.addr %s167, 4
      %s169 = smul.addr %s168, 2
      %s170 = scalar_lea.vmem %s3, %s169
      %v172 = vld [vmem:[%s165] sm:$0xf]
      %v173 = vld [vmem:[%s165 + $0x4] sm:$0xf]
      %v174 = vld [vmem:[%s165 + $0x8] sm:$0xf]
      %v175 = vld [vmem:[%s165 + $0xc] sm:$0xf]
      %v176 = vld [vmem:[%s165 + $0x10] sm:$0xf]
      %v177 = vld [vmem:[%s165 + $0x14] sm:$0xf]
      %v178 = vld [vmem:[%s165 + $0x18] sm:$0xf]
      %v179 = vld [vmem:[%s165 + $0x1c] sm:$0xf]
      %v180 = vld [vmem:[%s165 + $0x20] sm:$0xf]
      %v181 = vld [vmem:[%s165 + $0x24] sm:$0xf]
      %v182 = vld [vmem:[%s1] sm:$0xf]
      %v183 = vld [vmem:[%s1 + $0x4] sm:$0xf]
      %v184 = vld [vmem:[%s1 + $0x8] sm:$0xf]
      %v185 = vld [vmem:[%s1 + $0xc] sm:$0xf]
      %v186 = vld [vmem:[%s1 + $0x10] sm:$0xf]
      %v187 = vld [vmem:[%s1 + $0x14] sm:$0xf]
      %v188 = vld [vmem:[%s1 + $0x18] sm:$0xf]
      %v189 = vld [vmem:[%s1 + $0x1c] sm:$0xf]
      %v190 = vld [vmem:[%s1 + $0x20] sm:$0xf]
      %v191 = vld [vmem:[%s1 + $0x24] sm:$0xf]
      %v192 = vld [vmem:[%s1 + $0x28] sm:$0xf]
      %v193 = vld [vmem:[%s1 + $0x2c] sm:$0xf]
      %v194 = vld [vmem:[%s1 + $0x30] sm:$0xf]
      %v195 = vld [vmem:[%s1 + $0x34] sm:$0xf]
      %v196 = vld [vmem:[%s1 + $0x38] sm:$0xf]
      %v197 = vld [vmem:[%s1 + $0x3c] sm:$0xf]
      %v208 = vunpack.c.l.b16 %v172
      %v209 = vunpack.c.l.b16 %v173
      %v210 = vunpack.c.l.b16 %v174
      %v211 = vunpack.c.l.b16 %v175
      %v212 = vunpack.c.l.b16 %v176
      %v213 = vunpack.c.l.b16 %v177
      %v214 = vunpack.c.l.b16 %v178
      %v215 = vunpack.c.l.b16 %v179
      %v216 = vunpack.c.l.b16 %v180
      %v217 = vunpack.c.l.b16 %v181
      %v218 = vpack.c.b16 %v209, %v208
      %v219 = vpack.c.b16 %v211, %v210
      %v220 = vpack.c.b16 %v213, %v212
      %v221 = vpack.c.b16 %v215, %v214
      %v222 = vpack.c.b16 %v217, %v216
      %v244 = vunpack.c.l.b16 %v182
      %v245 = vunpack.c.l.b16 %v183
      %v246 = vunpack.c.l.b16 %v184
      %v247 = vunpack.c.l.b16 %v185
      %v248 = vunpack.c.l.b16 %v186
      %v249 = vunpack.c.l.b16 %v187
      %v250 = vunpack.c.l.b16 %v188
      %v251 = vunpack.c.l.b16 %v189
      %v252 = vunpack.c.l.b16 %v190
      %v253 = vunpack.c.l.b16 %v191
      %v254 = vunpack.c.l.b16 %v192
      %v255 = vunpack.c.l.b16 %v193
      %v256 = vunpack.c.l.b16 %v194
      %v257 = vunpack.c.l.b16 %v195
      %v258 = vunpack.c.l.b16 %v196
      %v259 = vunpack.c.l.b16 %v197
      %v260 = vpack.c.b16 %v245, %v244
      %v261 = vpack.c.b16 %v247, %v246
      %v262 = vpack.c.b16 %v249, %v248
      %v263 = vpack.c.b16 %v251, %v250
      %v264 = vpack.c.b16 %v253, %v252
      %v265 = vpack.c.b16 %v255, %v254
      %v266 = vpack.c.b16 %v257, %v256
      %v267 = vpack.c.b16 %v259, %v258
      %276 = vmatprep.subr.bf16.mxu0 0
      %277 = vmatpush1.bf16.msra.mxu0 %v260
      %278 = vmatprep.subr.bf16.mxu0 0
      %279 = vmatpush1.bf16.msra.mxu0 %v261
      %280 = vmatprep.subr.bf16.mxu0 0
      %281 = vmatpush1.bf16.msra.mxu0 %v262
      %282 = vmatprep.subr.bf16.mxu0 0
      %283 = vmatpush1.bf16.msra.mxu0 %v263
      %284 = vmatprep.subr.bf16.mxu0 0
      %285 = vmatpush1.bf16.msra.mxu0 %v264
      %286 = vmatprep.subr.bf16.mxu0 0
      %287 = vmatpush1.bf16.msra.mxu0 %v265
      %288 = vmatprep.subr.bf16.mxu0 0
      %289 = vmatpush1.bf16.msra.mxu0 %v266
      %290 = vmatprep.subr.bf16.mxu0 0
      %291 = vmatpush1.bf16.msra.mxu0 %v267
      %292 = vmatprep.subr.bf16.mxu0 0
      %293 = vmatpush1.bf16.msra.mxu0 0
      %294 = vmatprep.subr.bf16.mxu0 0
      %295 = vmatpush1.bf16.msra.mxu0 0
      %296 = vmatprep.subr.bf16.mxu0 0
      %297 = vmatpush1.bf16.msra.mxu0 0
      %298 = vmatprep.subr.bf16.mxu0 0
      %299 = vmatpush1.bf16.msra.mxu0 0
      %300 = vmatprep.subr.bf16.mxu0 0
      %301 = vmatpush1.bf16.msra.mxu0 0
      %302 = vmatprep.subr.bf16.mxu0 0
      %303 = vmatpush1.bf16.msra.mxu0 0
      %304 = vmatprep.subr.bf16.mxu0 0
      %305 = vmatpush1.bf16.msra.mxu0 0
      %306 = vmatprep.subr.bf16.mxu0 0
      %307 = vmatpush1.bf16.msra.mxu0 0
      %308 = vmatprep.mubr.bf16.mxu0 0
      %309 = vmatmul.mubr.bf16.gmra.mrb[0].mxu0 %v218
      %v310 = vpop.f32.mrb[0].mxu0
      %v311 = vadd.f32 0.0, %v310
      %v312 = vpop.f32.mrb[0].mxu0
      %v313 = vpop.f32.mrb[0].mxu0
      %v314 = vadd.f32 0.0, %v313
      %v315 = vpop.f32.mrb[0].mxu0
      %316 = vmatprep.mubr.bf16.mxu0 0
      %317 = vmatmul.mubr.bf16.gmra.mrb[0].mxu0 %v219
      %v318 = vpop.f32.mrb[0].mxu0
      %v319 = vadd.f32 0.0, %v318
      %v320 = vpop.f32.mrb[0].mxu0
      %v321 = vpop.f32.mrb[0].mxu0
      %v322 = vadd.f32 0.0, %v321
      %v323 = vpop.f32.mrb[0].mxu0
      %324 = vmatprep.mubr.bf16.mxu0 0
      %325 = vmatmul.mubr.bf16.gmra.mrb[0].mxu0 %v220
      %v326 = vpop.f32.mrb[0].mxu0
      %v327 = vadd.f32 0.0, %v326
      %v328 = vpop.f32.mrb[0].mxu0
      %v329 = vpop.f32.mrb[0].mxu0
      %v330 = vadd.f32 0.0, %v329
      %v331 = vpop.f32.mrb[0].mxu0
      %332 = vmatprep.mubr.bf16.mxu0 0
      %333 = vmatmul.mubr.bf16.gmra.mrb[0].mxu0 %v221
      %v334 = vpop.f32.mrb[0].mxu0
      %v335 = vadd.f32 0.0, %v334
      %v336 = vpop.f32.mrb[0].mxu0
      %v337 = vpop.f32.mrb[0].mxu0
      %v338 = vadd.f32 0.0, %v337
      %v339 = vpop.f32.mrb[0].mxu0
      %340 = vmatprep.mubr.bf16.mxu0 0
      %341 = vmatmul.mubr.bf16.gmra.mrb[0].mxu0 %v222
      %v342 = vpop.f32.mrb[0].mxu0
      %v343 = vadd.f32 0.0, %v342
      %v344 = vpop.f32.mrb[0].mxu0
      %v345 = vpop.f32.mrb[0].mxu0
      %v346 = vadd.f32 0.0, %v345
      %v347 = vpop.f32.mrb[0].mxu0
      %348 = vdwg.mxu0
      %349 = vst [vmem:[#allocation2] sm:$0xff] %v311
      %350 = vst [vmem:[#allocation2 + $0x8] sm:$0xff] %v314
      %351 = vst [vmem:[#allocation2 + $0x10] sm:$0xff] %v319
      %352 = vst [vmem:[#allocation2 + $0x18] sm:$0xff] %v322
      %353 = vst [vmem:[#allocation2 + $0x20] sm:$0xff] %v327
      %354 = vst [vmem:[#allocation2 + $0x28] sm:$0xff] %v330
      %355 = vst [vmem:[#allocation2 + $0x30] sm:$0xff] %v335
      %356 = vst [vmem:[#allocation2 + $0x38] sm:$0xff] %v338
      %357 = vst [vmem:[#allocation2 + $0x40] sm:$0xff] %v343
      %358 = vst [vmem:[#allocation2 + $0x48] sm:$0xff] %v346
      %v359 = vld [vmem:[%s165] sm:$0xf]
      %v360 = vld [vmem:[%s165 + $0x4] sm:$0xf]
      %v361 = vld [vmem:[%s165 + $0x8] sm:$0xf]
      %v362 = vld [vmem:[%s165 + $0xc] sm:$0xf]
      %v363 = vld [vmem:[%s165 + $0x10] sm:$0xf]
      %v364 = vld [vmem:[%s165 + $0x14] sm:$0xf]
      %v365 = vld [vmem:[%s165 + $0x18] sm:$0xf]
      %v366 = vld [vmem:[%s165 + $0x1c] sm:$0xf]
      %v367 = vld [vmem:[%s165 + $0x20] sm:$0xf]
      %v368 = vld [vmem:[%s165 + $0x24] sm:$0xf]
      %v369 = vld [vmem:[%s165 + $0x28] sm:$0x1]
      %s370 = scalar_lea.vmem %s1, 64
      %v371 = vld [vmem:[%s370] sm:$0xf]
      %v372 = vld [vmem:[%s370 + $0x4] sm:$0xf]
      %v373 = vld [vmem:[%s370 + $0x8] sm:$0xf]
      %v374 = vld [vmem:[%s370 + $0xc] sm:$0xf]
      %v375 = vld [vmem:[%s370 + $0x10] sm:$0xf]
      %v376 = vld [vmem:[%s370 + $0x14] sm:$0xf]
      %v377 = vld [vmem:[%s370 + $0x18] sm:$0xf]
      %v378 = vld [vmem:[%s370 + $0x1c] sm:$0xf]
      %v379 = vld [vmem:[%s370 + $0x20] sm:$0xf]
      %v380 = vld [vmem:[%s370 + $0x24] sm:$0xf]
      %v381 = vld [vmem:[%s370 + $0x28] sm:$0xf]
      %v382 = vld [vmem:[%s370 + $0x2c] sm:$0xf]
      %v383 = vld [vmem:[%s370 + $0x30] sm:$0xf]
      %v384 = vld [vmem:[%s370 + $0x34] sm:$0xf]
      %v385 = vld [vmem:[%s370 + $0x38] sm:$0xf]
      %v386 = vld [vmem:[%s370 + $0x3c] sm:$0xf]
      %v398 = vunpack.c.l.b16 %v359
      %v399 = vunpack.c.l.b16 %v360
      %v400 = vunpack.c.l.b16 %v361
      %v401 = vunpack.c.l.b16 %v362
      %v402 = vunpack.c.l.b16 %v363
      %v403 = vunpack.c.l.b16 %v364
      %v404 = vunpack.c.l.b16 %v365
      %v405 = vunpack.c.l.b16 %v366
      %v406 = vunpack.c.l.b16 %v367
      %v407 = vunpack.c.l.b16 %v368
      %v408 = vunpack.c.l.b16 %v369
      %v409 = vpack.c.b16 %v399, %v398
      %v410 = vpack.c.b16 %v401, %v400
      %v411 = vpack.c.b16 %v403, %v402
      %v412 = vpack.c.b16 %v405, %v404
      %v413 = vpack.c.b16 %v407, %v406
      %v414 = vpack.c.b16 %v408, %v408
      %vm415 = vsmask.f32 7424
      %v417 = vshrl.u32 %v409, 16
      %v419 = vshll.u32 %v409, 16
      %v421 = vrot.slane %v419, 1
      %v422 = vor.u32 %v417, %v421
      %v424 = vshll.u32 %v410, 16
      %v426 = vrot.slane %v424, 1
      %v427 = vsel %vm415, %v422, %v426
      %v428 = vshrl.u32 %v410, 16
      %v430 = vor.u32 %v428, %v426
      %v432 = vshll.u32 %v411, 16
      %v434 = vrot.slane %v432, 1
      %v435 = vsel %vm415, %v430, %v434
      %v436 = vshrl.u32 %v411, 16
      %v438 = vor.u32 %v436, %v434
      %v440 = vshll.u32 %v412, 16
      %v442 = vrot.slane %v440, 1
      %v443 = vsel %vm415, %v438, %v442
      %v444 = vshrl.u32 %v412, 16
      %v446 = vor.u32 %v444, %v442
      %v448 = vshll.u32 %v413, 16
      %v450 = vrot.slane %v448, 1
      %v451 = vsel %vm415, %v446, %v450
      %v452 = vshrl.u32 %v413, 16
      %v454 = vor.u32 %v452, %v450
      %v456 = vshll.u32 %v414, 16
      %v458 = vrot.slane %v456, 1
      %v459 = vsel %vm415, %v454, %v458
      %v481 = vunpack.c.l.b16 %v371
      %v482 = vunpack.c.l.b16 %v372
      %v483 = vunpack.c.l.b16 %v373
      %v484 = vunpack.c.l.b16 %v374
      %v485 = vunpack.c.l.b16 %v375
      %v486 = vunpack.c.l.b16 %v376
      %v487 = vunpack.c.l.b16 %v377
      %v488 = vunpack.c.l.b16 %v378
      %v489 = vunpack.c.l.b16 %v379
      %v490 = vunpack.c.l.b16 %v380
      %v491 = vunpack.c.l.b16 %v381
      %v492 = vunpack.c.l.b16 %v382
      %v493 = vunpack.c.l.b16 %v383
      %v494 = vunpack.c.l.b16 %v384
      %v495 = vunpack.c.l.b16 %v385
      %v496 = vunpack.c.l.b16 %v386
      %v497 = vpack.c.b16 %v482, %v481
      %v498 = vpack.c.b16 %v484, %v483
      %v499 = vpack.c.b16 %v486, %v485
      %v500 = vpack.c.b16 %v488, %v487
      %v501 = vpack.c.b16 %v490, %v489
      %v502 = vpack.c.b16 %v492, %v491
      %v503 = vpack.c.b16 %v494, %v493
      %v504 = vpack.c.b16 %v496, %v495
      %513 = vmatprep.subr.bf16.mxu0 0
      %514 = vmatpush1.bf16.msra.mxu0 %v497
      %515 = vmatprep.subr.bf16.mxu0 0
      %516 = vmatpush1.bf16.msra.mxu0 %v498
      %517 = vmatprep.subr.bf16.mxu0 0
      %518 = vmatpush1.bf16.msra.mxu0 %v499
      %519 = vmatprep.subr.bf16.mxu0 0
      %520 = vmatpush1.bf16.msra.mxu0 %v500
      %521 = vmatprep.subr.bf16.mxu0 0
      %522 = vmatpush1.bf16.msra.mxu0 %v501
      %523 = vmatprep.subr.bf16.mxu0 0
      %524 = vmatpush1.bf16.msra.mxu0 %v502
      %525 = vmatprep.subr.bf16.mxu0 0
      %526 = vmatpush1.bf16.msra.mxu0 %v503
      %527 = vmatprep.subr.bf16.mxu0 0
      %528 = vmatpush1.bf16.msra.mxu0 %v504
      %529 = vmatprep.subr.bf16.mxu0 0
      %530 = vmatpush1.bf16.msra.mxu0 0
      %531 = vmatprep.subr.bf16.mxu0 0
      %532 = vmatpush1.bf16.msra.mxu0 0
      %533 = vmatprep.subr.bf16.mxu0 0
      %534 = vmatpush1.bf16.msra.mxu0 0
      %535 = vmatprep.subr.bf16.mxu0 0
      %536 = vmatpush1.bf16.msra.mxu0 0
      %537 = vmatprep.subr.bf16.mxu0 0
      %538 = vmatpush1.bf16.msra.mxu0 0
      %539 = vmatprep.subr.bf16.mxu0 0
      %540 = vmatpush1.bf16.msra.mxu0 0
      %541 = vmatprep.subr.bf16.mxu0 0
      %542 = vmatpush1.bf16.msra.mxu0 0
      %543 = vmatprep.subr.bf16.mxu0 0
      %544 = vmatpush1.bf16.msra.mxu0 0
      %545 = vmatprep.mubr.bf16.mxu0 0
      %546 = vmatmul.mubr.bf16.gmra.mrb[0].mxu0 %v427
      %v547 = vpop.f32.mrb[0].mxu0
      %v548 = vadd.f32 0.0, %v547
      %v549 = vpop.f32.mrb[0].mxu0
      %v550 = vpop.f32.mrb[0].mxu0
      %v551 = vadd.f32 0.0, %v550
      %v552 = vpop.f32.mrb[0].mxu0
      %553 = vmatprep.mubr.bf16.mxu0 0
      %554 = vmatmul.mubr.bf16.gmra.mrb[0].mxu0 %v435
      %v555 = vpop.f32.mrb[0].mxu0
      %v556 = vadd.f32 0.0, %v555
      %v557 = vpop.f32.mrb[0].mxu0
      %v558 = vpop.f32.mrb[0].mxu0
      %v559 = vadd.f32 0.0, %v558
      %v560 = vpop.f32.mrb[0].mxu0
      %561 = vmatprep.mubr.bf16.mxu0 0
      %562 = vmatmul.mubr.bf16.gmra.mrb[0].mxu0 %v443
      %v563 = vpop.f32.mrb[0].mxu0
      %v564 = vadd.f32 0.0, %v563
      %v565 = vpop.f32.mrb[0].mxu0
      %v566 = vpop.f32.mrb[0].mxu0
      %v567 = vadd.f32 0.0, %v566
      %v568 = vpop.f32.mrb[0].mxu0
      %569 = vmatprep.mubr.bf16.mxu0 0
      %570 = vmatmul.mubr.bf16.gmra.mrb[0].mxu0 %v451
      %v571 = vpop.f32.mrb[0].mxu0
      %v572 = vadd.f32 0.0, %v571
      %v573 = vpop.f32.mrb[0].mxu0
      %v574 = vpop.f32.mrb[0].mxu0
      %v575 = vadd.f32 0.0, %v574
      %v576 = vpop.f32.mrb[0].mxu0
      %577 = vmatprep.mubr.bf16.mxu0 0
      %578 = vmatmul.mubr.bf16.gmra.mrb[0].mxu0 %v459
      %v579 = vpop.f32.mrb[0].mxu0
      %v580 = vadd.f32 0.0, %v579
      %v581 = vpop.f32.mrb[0].mxu0
      %v582 = vpop.f32.mrb[0].mxu0
      %v583 = vadd.f32 0.0, %v582
      %v584 = vpop.f32.mrb[0].mxu0
      %585 = vdwg.mxu0
      %v586 = vld [vmem:[#allocation2] sm:$0xff]
      %v587 = vld [vmem:[#allocation2 + $0x8] sm:$0xff]
      %v588 = vld [vmem:[#allocation2 + $0x10] sm:$0xff]
      %v589 = vld [vmem:[#allocation2 + $0x18] sm:$0xff]
      %v590 = vld [vmem:[#allocation2 + $0x20] sm:$0xff]
      %v591 = vld [vmem:[#allocation2 + $0x28] sm:$0xff]
      %v592 = vld [vmem:[#allocation2 + $0x30] sm:$0xff]
      %v593 = vld [vmem:[#allocation2 + $0x38] sm:$0xff]
      %v594 = vld [vmem:[#allocation2 + $0x40] sm:$0xff]
      %v595 = vld [vmem:[#allocation2 + $0x48] sm:$0xff]
      %v596 = vadd.f32 %v586, %v548
      %v597 = vadd.f32 %v587, %v551
      %v598 = vadd.f32 %v588, %v556
      %v599 = vadd.f32 %v589, %v559
      %v600 = vadd.f32 %v590, %v564
      %v601 = vadd.f32 %v591, %v567
      %v602 = vadd.f32 %v592, %v572
      %v603 = vadd.f32 %v593, %v575
      %v604 = vadd.f32 %v594, %v580
      %v605 = vadd.f32 %v595, %v583
      %606 = vst [vmem:[#allocation2] sm:$0xff] %v596
      %607 = vst [vmem:[#allocation2 + $0x8] sm:$0xff] %v597
      %608 = vst [vmem:[#allocation2 + $0x10] sm:$0xff] %v598
      %609 = vst [vmem:[#allocation2 + $0x18] sm:$0xff] %v599
      %610 = vst [vmem:[#allocation2 + $0x20] sm:$0xff] %v600
      %611 = vst [vmem:[#allocation2 + $0x28] sm:$0xff] %v601
      %612 = vst [vmem:[#allocation2 + $0x30] sm:$0xff] %v602
      %613 = vst [vmem:[#allocation2 + $0x38] sm:$0xff] %v603
      %614 = vst [vmem:[#allocation2 + $0x40] sm:$0xff] %v604
      %615 = vst [vmem:[#allocation2 + $0x48] sm:$0xff] %v605
      %v616 = vld [vmem:[%s165] sm:$0xe]
      %v617 = vld [vmem:[%s165 + $0x4] sm:$0xf]
      %v618 = vld [vmem:[%s165 + $0x8] sm:$0xf]
      %v619 = vld [vmem:[%s165 + $0xc] sm:$0xf]
      %v620 = vld [vmem:[%s165 + $0x10] sm:$0xf]
      %v621 = vld [vmem:[%s165 + $0x14] sm:$0xf]
      %v622 = vld [vmem:[%s165 + $0x18] sm:$0xf]
      %v623 = vld [vmem:[%s165 + $0x1c] sm:$0xf]
      %v624 = vld [vmem:[%s165 + $0x20] sm:$0xf]
      %v625 = vld [vmem:[%s165 + $0x24] sm:$0xf]
      %v626 = vld [vmem:[%s165 + $0x28] sm:$0x1]
      %s627 = scalar_lea.vmem %s1, 128
      %v628 = vld [vmem:[%s627] sm:$0xf]
      %v629 = vld [vmem:[%s627 + $0x4] sm:$0xf]
      %v630 = vld [vmem:[%s627 + $0x8] sm:$0xf]
      %v631 = vld [vmem:[%s627 + $0xc] sm:$0xf]
      %v632 = vld [vmem:[%s627 + $0x10] sm:$0xf]
      %v633 = vld [vmem:[%s627 + $0x14] sm:$0xf]
      %v634 = vld [vmem:[%s627 + $0x18] sm:$0xf]
      %v635 = vld [vmem:[%s627 + $0x1c] sm:$0xf]
      %v636 = vld [vmem:[%s627 + $0x20] sm:$0xf]
      %v637 = vld [vmem:[%s627 + $0x24] sm:$0xf]
      %v638 = vld [vmem:[%s627 + $0x28] sm:$0xf]
      %v639 = vld [vmem:[%s627 + $0x2c] sm:$0xf]
      %v640 = vld [vmem:[%s627 + $0x30] sm:$0xf]
      %v641 = vld [vmem:[%s627 + $0x34] sm:$0xf]
      %v642 = vld [vmem:[%s627 + $0x38] sm:$0xf]
      %v643 = vld [vmem:[%s627 + $0x3c] sm:$0xf]
      %v655 = vunpack.c.l.b16 %v616
      %v656 = vunpack.c.l.b16 %v617
      %v657 = vunpack.c.l.b16 %v618
      %v658 = vunpack.c.l.b16 %v619
      %v659 = vunpack.c.l.b16 %v620
      %v660 = vunpack.c.l.b16 %v621
      %v661 = vunpack.c.l.b16 %v622
      %v662 = vunpack.c.l.b16 %v623
      %v663 = vunpack.c.l.b16 %v624
      %v664 = vunpack.c.l.b16 %v625
      %v665 = vunpack.c.l.b16 %v626
      %v666 = vpack.c.b16 %v656, %v655
      %v667 = vpack.c.b16 %v658, %v657
      %v668 = vpack.c.b16 %v660, %v659
      %v669 = vpack.c.b16 %v662, %v661
      %v670 = vpack.c.b16 %v664, %v663
      %v671 = vpack.c.b16 %v665, %v665
      %vm672 = vcmask 1046528
      %v673 = vrot.slane %v666, 1
      %v674 = vrot.slane %v667, 1
      %v675 = vsel %vm672, %v673, %v674
      %v676 = vrot.slane %v668, 1
      %v677 = vsel %vm672, %v674, %v676
      %v678 = vrot.slane %v669, 1
      %v679 = vsel %vm672, %v676, %v678
      %v680 = vrot.slane %v670, 1
      %v681 = vsel %vm672, %v678, %v680
      %v682 = vrot.slane %v671, 1
      %v683 = vsel %vm672, %v680, %v682
      %v705 = vunpack.c.l.b16 %v628
      %v706 = vunpack.c.l.b16 %v629
      %v707 = vunpack.c.l.b16 %v630
      %v708 = vunpack.c.l.b16 %v631
      %v709 = vunpack.c.l.b16 %v632
      %v710 = vunpack.c.l.b16 %v633
      %v711 = vunpack.c.l.b16 %v634
      %v712 = vunpack.c.l.b16 %v635
      %v713 = vunpack.c.l.b16 %v636
      %v714 = vunpack.c.l.b16 %v637
      %v715 = vunpack.c.l.b16 %v638
      %v716 = vunpack.c.l.b16 %v639
      %v717 = vunpack.c.l.b16 %v640
      %v718 = vunpack.c.l.b16 %v641
      %v719 = vunpack.c.l.b16 %v642
      %v720 = vunpack.c.l.b16 %v643
      %v721 = vpack.c.b16 %v706, %v705
      %v722 = vpack.c.b16 %v708, %v707
      %v723 = vpack.c.b16 %v710, %v709
      %v724 = vpack.c.b16 %v712, %v711
      %v725 = vpack.c.b16 %v714, %v713
      %v726 = vpack.c.b16 %v716, %v715
      %v727 = vpack.c.b16 %v718, %v717
      %v728 = vpack.c.b16 %v720, %v719
      %737 = vmatprep.subr.bf16.mxu0 0
      %738 = vmatpush1.bf16.msra.mxu0 %v721
      %739 = vmatprep.subr.bf16.mxu0 0
      %740 = vmatpush1.bf16.msra.mxu0 %v722
      %741 = vmatprep.subr.bf16.mxu0 0
      %742 = vmatpush1.bf16.msra.mxu0 %v723
      %743 = vmatprep.subr.bf16.mxu0 0
      %744 = vmatpush1.bf16.msra.mxu0 %v724
      %745 = vmatprep.subr.bf16.mxu0 0
      %746 = vmatpush1.bf16.msra.mxu0 %v725
      %747 = vmatprep.subr.bf16.mxu0 0
      %748 = vmatpush1.bf16.msra.mxu0 %v726
      %749 = vmatprep.subr.bf16.mxu0 0
      %750 = vmatpush1.bf16.msra.mxu0 %v727
      %751 = vmatprep.subr.bf16.mxu0 0
      %752 = vmatpush1.bf16.msra.mxu0 %v728
      %753 = vmatprep.subr.bf16.mxu0 0
      %754 = vmatpush1.bf16.msra.mxu0 0
      %755 = vmatprep.subr.bf16.mxu0 0
      %756 = vmatpush1.bf16.msra.mxu0 0
      %757 = vmatprep.subr.bf16.mxu0 0
      %758 = vmatpush1.bf16.msra.mxu0 0
      %759 = vmatprep.subr.bf16.mxu0 0
      %760 = vmatpush1.bf16.msra.mxu0 0
      %761 = vmatprep.subr.bf16.mxu0 0
      %762 = vmatpush1.bf16.msra.mxu0 0
      %763 = vmatprep.subr.bf16.mxu0 0
      %764 = vmatpush1.bf16.msra.mxu0 0
      %765 = vmatprep.subr.bf16.mxu0 0
      %766 = vmatpush1.bf16.msra.mxu0 0
      %767 = vmatprep.subr.bf16.mxu0 0
      %768 = vmatpush1.bf16.msra.mxu0 0
      %769 = vmatprep.mubr.bf16.mxu0 0
      %770 = vmatmul.mubr.bf16.gmra.mrb[0].mxu0 %v675
      %v771 = vpop.f32.mrb[0].mxu0
      %v772 = vadd.f32 0.0, %v771
      %v773 = vpop.f32.mrb[0].mxu0
      %v774 = vpop.f32.mrb[0].mxu0
      %v775 = vadd.f32 0.0, %v774
      %v776 = vpop.f32.mrb[0].mxu0
      %777 = vmatprep.mubr.bf16.mxu0 0
      %778 = vmatmul.mubr.bf16.gmra.mrb[0].mxu0 %v677
      %v779 = vpop.f32.mrb[0].mxu0
      %v780 = vadd.f32 0.0, %v779
      %v781 = vpop.f32.mrb[0].mxu0
      %v782 = vpop.f32.mrb[0].mxu0
      %v783 = vadd.f32 0.0, %v782
      %v784 = vpop.f32.mrb[0].mxu0
      %785 = vmatprep.mubr.bf16.mxu0 0
      %786 = vmatmul.mubr.bf16.gmra.mrb[0].mxu0 %v679
      %v787 = vpop.f32.mrb[0].mxu0
      %v788 = vadd.f32 0.0, %v787
      %v789 = vpop.f32.mrb[0].mxu0
      %v790 = vpop.f32.mrb[0].mxu0
      %v791 = vadd.f32 0.0, %v790
      %v792 = vpop.f32.mrb[0].mxu0
      %793 = vmatprep.mubr.bf16.mxu0 0
      %794 = vmatmul.mubr.bf16.gmra.mrb[0].mxu0 %v681
      %v795 = vpop.f32.mrb[0].mxu0
      %v796 = vadd.f32 0.0, %v795
      %v797 = vpop.f32.mrb[0].mxu0
      %v798 = vpop.f32.mrb[0].mxu0
      %v799 = vadd.f32 0.0, %v798
      %v800 = vpop.f32.mrb[0].mxu0
      %801 = vmatprep.mubr.bf16.mxu0 0
      %802 = vmatmul.mubr.bf16.gmra.mrb[0].mxu0 %v683
      %v803 = vpop.f32.mrb[0].mxu0
      %v804 = vadd.f32 0.0, %v803
      %v805 = vpop.f32.mrb[0].mxu0
      %v806 = vpop.f32.mrb[0].mxu0
      %v807 = vadd.f32 0.0, %v806
      %v808 = vpop.f32.mrb[0].mxu0
      %809 = vdwg.mxu0
      %v810 = vld [vmem:[#allocation2] sm:$0xff]
      %v811 = vld [vmem:[#allocation2 + $0x8] sm:$0xff]
      %v812 = vld [vmem:[#allocation2 + $0x10] sm:$0xff]
      %v813 = vld [vmem:[#allocation2 + $0x18] sm:$0xff]
      %v814 = vld [vmem:[#allocation2 + $0x20] sm:$0xff]
      %v815 = vld [vmem:[#allocation2 + $0x28] sm:$0xff]
      %v816 = vld [vmem:[#allocation2 + $0x30] sm:$0xff]
      %v817 = vld [vmem:[#allocation2 + $0x38] sm:$0xff]
      %v818 = vld [vmem:[#allocation2 + $0x40] sm:$0xff]
      %v819 = vld [vmem:[#allocation2 + $0x48] sm:$0xff]
      %v820 = vadd.f32 %v810, %v772
      %v821 = vadd.f32 %v811, %v775
      %v822 = vadd.f32 %v812, %v780
      %v823 = vadd.f32 %v813, %v783
      %v824 = vadd.f32 %v814, %v788
      %v825 = vadd.f32 %v815, %v791
      %v826 = vadd.f32 %v816, %v796
      %v827 = vadd.f32 %v817, %v799
      %v828 = vadd.f32 %v818, %v804
      %v829 = vadd.f32 %v819, %v807
      %830 = vst [vmem:[#allocation2] sm:$0xff] %v820
      %831 = vst [vmem:[#allocation2 + $0x8] sm:$0xff] %v821
      %832 = vst [vmem:[#allocation2 + $0x10] sm:$0xff] %v822
      %833 = vst [vmem:[#allocation2 + $0x18] sm:$0xff] %v823
      %834 = vst [vmem:[#allocation2 + $0x20] sm:$0xff] %v824
      %835 = vst [vmem:[#allocation2 + $0x28] sm:$0xff] %v825
      %836 = vst [vmem:[#allocation2 + $0x30] sm:$0xff] %v826
      %837 = vst [vmem:[#allocation2 + $0x38] sm:$0xff] %v827
      %838 = vst [vmem:[#allocation2 + $0x40] sm:$0xff] %v828
      %839 = vst [vmem:[#allocation2 + $0x48] sm:$0xff] %v829
      %v840 = vld [vmem:[%s165 + $0x4] sm:$0xe]
      %v841 = vld [vmem:[%s165 + $0x8] sm:$0xf]
      %v842 = vld [vmem:[%s165 + $0xc] sm:$0xf]
      %v843 = vld [vmem:[%s165 + $0x10] sm:$0xf]
      %v844 = vld [vmem:[%s165 + $0x14] sm:$0xf]
      %v845 = vld [vmem:[%s165 + $0x18] sm:$0xf]
      %v846 = vld [vmem:[%s165 + $0x1c] sm:$0xf]
      %v847 = vld [vmem:[%s165 + $0x20] sm:$0xf]
      %v848 = vld [vmem:[%s165 + $0x24] sm:$0xf]
      %v849 = vld [vmem:[%s165 + $0x28] sm:$0xf]
      %v850 = vld [vmem:[%s165 + $0x2c] sm:$0x1]
      %s851 = scalar_lea.vmem %s1, 192
      %v852 = vld [vmem:[%s851] sm:$0xf]
      %v853 = vld [vmem:[%s851 + $0x4] sm:$0xf]
      %v854 = vld [vmem:[%s851 + $0x8] sm:$0xf]
      %v855 = vld [vmem:[%s851 + $0xc] sm:$0xf]
      %v856 = vld [vmem:[%s851 + $0x10] sm:$0xf]
      %v857 = vld [vmem:[%s851 + $0x14] sm:$0xf]
      %v858 = vld [vmem:[%s851 + $0x18] sm:$0xf]
      %v859 = vld [vmem:[%s851 + $0x1c] sm:$0xf]
      %v860 = vld [vmem:[%s851 + $0x20] sm:$0xf]
      %v861 = vld [vmem:[%s851 + $0x24] sm:$0xf]
      %v862 = vld [vmem:[%s851 + $0x28] sm:$0xf]
      %v863 = vld [vmem:[%s851 + $0x2c] sm:$0xf]
      %v864 = vld [vmem:[%s851 + $0x30] sm:$0xf]
      %v865 = vld [vmem:[%s851 + $0x34] sm:$0xf]
      %v866 = vld [vmem:[%s851 + $0x38] sm:$0xf]
      %v867 = vld [vmem:[%s851 + $0x3c] sm:$0xf]
      %v879 = vunpack.c.l.b16 %v840
      %v880 = vunpack.c.l.b16 %v841
      %v881 = vunpack.c.l.b16 %v842
      %v882 = vunpack.c.l.b16 %v843
      %v883 = vunpack.c.l.b16 %v844
      %v884 = vunpack.c.l.b16 %v845
      %v885 = vunpack.c.l.b16 %v846
      %v886 = vunpack.c.l.b16 %v847
      %v887 = vunpack.c.l.b16 %v848
      %v888 = vunpack.c.l.b16 %v849
      %v889 = vunpack.c.l.b16 %v850
      %v890 = vpack.c.b16 %v880, %v879
      %v891 = vpack.c.b16 %v882, %v881
      %v892 = vpack.c.b16 %v884, %v883
      %v893 = vpack.c.b16 %v886, %v885
      %v894 = vpack.c.b16 %v888, %v887
      %v895 = vpack.c.b16 %v889, %v889
      %v896 = vrot.slane %v890, 1
      %v897 = vrot.slane %v891, 1
      %v898 = vsel %vm672, %v896, %v897
      %v899 = vrot.slane %v892, 1
      %v900 = vsel %vm672, %v897, %v899
      %v901 = vrot.slane %v893, 1
      %v902 = vsel %vm672, %v899, %v901
      %v903 = vrot.slane %v894, 1
      %v904 = vsel %vm672, %v901, %v903
      %v905 = vrot.slane %v895, 1
      %v906 = vsel %vm672, %v903, %v905
      %v928 = vunpack.c.l.b16 %v852
      %v929 = vunpack.c.l.b16 %v853
      %v930 = vunpack.c.l.b16 %v854
      %v931 = vunpack.c.l.b16 %v855
      %v932 = vunpack.c.l.b16 %v856
      %v933 = vunpack.c.l.b16 %v857
      %v934 = vunpack.c.l.b16 %v858
      %v935 = vunpack.c.l.b16 %v859
      %v936 = vunpack.c.l.b16 %v860
      %v937 = vunpack.c.l.b16 %v861
      %v938 = vunpack.c.l.b16 %v862
      %v939 = vunpack.c.l.b16 %v863
      %v940 = vunpack.c.l.b16 %v864
      %v941 = vunpack.c.l.b16 %v865
      %v942 = vunpack.c.l.b16 %v866
      %v943 = vunpack.c.l.b16 %v867
      %v944 = vpack.c.b16 %v929, %v928
      %v945 = vpack.c.b16 %v931, %v930
      %v946 = vpack.c.b16 %v933, %v932
      %v947 = vpack.c.b16 %v935, %v934
      %v948 = vpack.c.b16 %v937, %v936
      %v949 = vpack.c.b16 %v939, %v938
      %v950 = vpack.c.b16 %v941, %v940
      %v951 = vpack.c.b16 %v943, %v942
      %960 = vmatprep.subr.bf16.mxu0 0
      %961 = vmatpush1.bf16.msra.mxu0 %v944
      %962 = vmatprep.subr.bf16.mxu0 0
      %963 = vmatpush1.bf16.msra.mxu0 %v945
      %964 = vmatprep.subr.bf16.mxu0 0
      %965 = vmatpush1.bf16.msra.mxu0 %v946
      %966 = vmatprep.subr.bf16.mxu0 0
      %967 = vmatpush1.bf16.msra.mxu0 %v947
      %968 = vmatprep.subr.bf16.mxu0 0
      %969 = vmatpush1.bf16.msra.mxu0 %v948
      %970 = vmatprep.subr.bf16.mxu0 0
      %971 = vmatpush1.bf16.msra.mxu0 %v949
      %972 = vmatprep.subr.bf16.mxu0 0
      %973 = vmatpush1.bf16.msra.mxu0 %v950
      %974 = vmatprep.subr.bf16.mxu0 0
      %975 = vmatpush1.bf16.msra.mxu0 %v951
      %976 = vmatprep.subr.bf16.mxu0 0
      %977 = vmatpush1.bf16.msra.mxu0 0
      %978 = vmatprep.subr.bf16.mxu0 0
      %979 = vmatpush1.bf16.msra.mxu0 0
      %980 = vmatprep.subr.bf16.mxu0 0
      %981 = vmatpush1.bf16.msra.mxu0 0
      %982 = vmatprep.subr.bf16.mxu0 0
      %983 = vmatpush1.bf16.msra.mxu0 0
      %984 = vmatprep.subr.bf16.mxu0 0
      %985 = vmatpush1.bf16.msra.mxu0 0
      %986 = vmatprep.subr.bf16.mxu0 0
      %987 = vmatpush1.bf16.msra.mxu0 0
      %988 = vmatprep.subr.bf16.mxu0 0
      %989 = vmatpush1.bf16.msra.mxu0 0
      %990 = vmatprep.subr.bf16.mxu0 0
      %991 = vmatpush1.bf16.msra.mxu0 0
      %992 = vmatprep.mubr.bf16.mxu0 0
      %993 = vmatmul.mubr.bf16.gmra.mrb[0].mxu0 %v898
      %v994 = vpop.f32.mrb[0].mxu0
      %v995 = vadd.f32 0.0, %v994
      %v996 = vpop.f32.mrb[0].mxu0
      %v997 = vpop.f32.mrb[0].mxu0
      %v998 = vadd.f32 0.0, %v997
      %v999 = vpop.f32.mrb[0].mxu0
      %1000 = vmatprep.mubr.bf16.mxu0 0
      %1001 = vmatmul.mubr.bf16.gmra.mrb[0].mxu0 %v900
      %v1002 = vpop.f32.mrb[0].mxu0
      %v1003 = vadd.f32 0.0, %v1002
      %v1004 = vpop.f32.mrb[0].mxu0
      %v1005 = vpop.f32.mrb[0].mxu0
      %v1006 = vadd.f32 0.0, %v1005
      %v1007 = vpop.f32.mrb[0].mxu0
      %1008 = vmatprep.mubr.bf16.mxu0 0
      %1009 = vmatmul.mubr.bf16.gmra.mrb[0].mxu0 %v902
      %v1010 = vpop.f32.mrb[0].mxu0
      %v1011 = vadd.f32 0.0, %v1010
      %v1012 = vpop.f32.mrb[0].mxu0
      %v1013 = vpop.f32.mrb[0].mxu0
      %v1014 = vadd.f32 0.0, %v1013
      %v1015 = vpop.f32.mrb[0].mxu0
      %1016 = vmatprep.mubr.bf16.mxu0 0
      %1017 = vmatmul.mubr.bf16.gmra.mrb[0].mxu0 %v904
      %v1018 = vpop.f32.mrb[0].mxu0
      %v1019 = vadd.f32 0.0, %v1018
      %v1020 = vpop.f32.mrb[0].mxu0
      %v1021 = vpop.f32.mrb[0].mxu0
      %v1022 = vadd.f32 0.0, %v1021
      %v1023 = vpop.f32.mrb[0].mxu0
      %1024 = vmatprep.mubr.bf16.mxu0 0
      %1025 = vmatmul.mubr.bf16.gmra.mrb[0].mxu0 %v906
      %v1026 = vpop.f32.mrb[0].mxu0
      %v1027 = vadd.f32 0.0, %v1026
      %v1028 = vpop.f32.mrb[0].mxu0
      %v1029 = vpop.f32.mrb[0].mxu0
      %v1030 = vadd.f32 0.0, %v1029
      %v1031 = vpop.f32.mrb[0].mxu0
      %1032 = vdwg.mxu0
      %v1033 = vld [vmem:[#allocation2] sm:$0xff]
      %v1034 = vld [vmem:[#allocation2 + $0x8] sm:$0xff]
      %v1035 = vld [vmem:[#allocation2 + $0x10] sm:$0xff]
      %v1036 = vld [vmem:[#allocation2 + $0x18] sm:$0xff]
      %v1037 = vld [vmem:[#allocation2 + $0x20] sm:$0xff]
      %v1038 = vld [vmem:[#allocation2 + $0x28] sm:$0xff]
      %v1039 = vld [vmem:[#allocation2 + $0x30] sm:$0xff]
      %v1040 = vld [vmem:[#allocation2 + $0x38] sm:$0xff]
      %v1041 = vld [vmem:[#allocation2 + $0x40] sm:$0xff]
      %v1042 = vld [vmem:[#allocation2 + $0x48] sm:$0xff]
      %v1043 = vadd.f32 %v1033, %v995
      %v1044 = vadd.f32 %v1034, %v998
      %v1045 = vadd.f32 %v1035, %v1003
      %v1046 = vadd.f32 %v1036, %v1006
      %v1047 = vadd.f32 %v1037, %v1011
      %v1048 = vadd.f32 %v1038, %v1014
      %v1049 = vadd.f32 %v1039, %v1019
      %v1050 = vadd.f32 %v1040, %v1022
      %v1051 = vadd.f32 %v1041, %v1027
      %v1052 = vadd.f32 %v1042, %v1030
      %1053 = vst [vmem:[#allocation2] sm:$0xff] %v1043
      %1054 = vst [vmem:[#allocation2 + $0x8] sm:$0xff] %v1044
      %1055 = vst [vmem:[#allocation2 + $0x10] sm:$0xff] %v1045
      %1056 = vst [vmem:[#allocation2 + $0x18] sm:$0xff] %v1046
      %1057 = vst [vmem:[#allocation2 + $0x20] sm:$0xff] %v1047
      %1058 = vst [vmem:[#allocation2 + $0x28] sm:$0xff] %v1048
      %1059 = vst [vmem:[#allocation2 + $0x30] sm:$0xff] %v1049
      %1060 = vst [vmem:[#allocation2 + $0x38] sm:$0xff] %v1050
      %1061 = vst [vmem:[#allocation2 + $0x40] sm:$0xff] %v1051
      %1062 = vst [vmem:[#allocation2 + $0x48] sm:$0xff] %v1052
      %v1063 = vld [vmem:[%s165 + $0x4] sm:$0xe]
      %v1064 = vld [vmem:[%s165 + $0x8] sm:$0xf]
      %v1065 = vld [vmem:[%s165 + $0xc] sm:$0xf]
      %v1066 = vld [vmem:[%s165 + $0x10] sm:$0xf]
      %v1067 = vld [vmem:[%s165 + $0x14] sm:$0xf]
      %v1068 = vld [vmem:[%s165 + $0x18] sm:$0xf]
      %v1069 = vld [vmem:[%s165 + $0x1c] sm:$0xf]
      %v1070 = vld [vmem:[%s165 + $0x20] sm:$0xf]
      %v1071 = vld [vmem:[%s165 + $0x24] sm:$0xf]
      %v1072 = vld [vmem:[%s165 + $0x28] sm:$0xf]
      %v1073 = vld [vmem:[%s165 + $0x2c] sm:$0x3]
      %s1074 = scalar_lea.vmem %s1, 256
      %v1075 = vld [vmem:[%s1074] sm:$0xf]
      %v1076 = vld [vmem:[%s1074 + $0x4] sm:$0xf]
      %v1077 = vld [vmem:[%s1074 + $0x8] sm:$0xf]
      %v1078 = vld [vmem:[%s1074 + $0xc] sm:$0xf]
      %v1079 = vld [vmem:[%s1074 + $0x10] sm:$0xf]
      %v1080 = vld [vmem:[%s1074 + $0x14] sm:$0xf]
      %v1081 = vld [vmem:[%s1074 + $0x18] sm:$0xf]
      %v1082 = vld [vmem:[%s1074 + $0x1c] sm:$0xf]
      %v1083 = vld [vmem:[%s1074 + $0x20] sm:$0xf]
      %v1084 = vld [vmem:[%s1074 + $0x24] sm:$0xf]
      %v1085 = vld [vmem:[%s1074 + $0x28] sm:$0xf]
      %v1086 = vld [vmem:[%s1074 + $0x2c] sm:$0xf]
      %v1087 = vld [vmem:[%s1074 + $0x30] sm:$0xf]
      %v1088 = vld [vmem:[%s1074 + $0x34] sm:$0xf]
      %v1089 = vld [vmem:[%s1074 + $0x38] sm:$0xf]
      %v1090 = vld [vmem:[%s1074 + $0x3c] sm:$0xf]
      %v1102 = vunpack.c.l.b16 %v1063
      %v1103 = vunpack.c.l.b16 %v1064
      %v1104 = vunpack.c.l.b16 %v1065
      %v1105 = vunpack.c.l.b16 %v1066
      %v1106 = vunpack.c.l.b16 %v1067
      %v1107 = vunpack.c.l.b16 %v1068
      %v1108 = vunpack.c.l.b16 %v1069
      %v1109 = vunpack.c.l.b16 %v1070
      %v1110 = vunpack.c.l.b16 %v1071
      %v1111 = vunpack.c.l.b16 %v1072
      %v1112 = vunpack.c.l.b16 %v1073
      %v1113 = vpack.c.b16 %v1103, %v1102
      %v1114 = vpack.c.b16 %v1105, %v1104
      %v1115 = vpack.c.b16 %v1107, %v1106
      %v1116 = vpack.c.b16 %v1109, %v1108
      %v1117 = vpack.c.b16 %v1111, %v1110
      %v1118 = vpack.c.b16 %v1112, %v1112
      %vm1119 = vsmask.f32 6400
      %v1121 = vshrl.u32 %v1113, 16
      %v1123 = vrot.slane %v1121, 1
      %v1124 = vshll.u32 %v1113, 16
      %v1126 = vrot.slane %v1124, 2
      %v1127 = vor.u32 %v1123, %v1126
      %v1129 = vshrl.u32 %v1114, 16
      %v1131 = vrot.slane %v1129, 1
      %v1132 = vshll.u32 %v1114, 16
      %v1134 = vrot.slane %v1132, 2
      %v1135 = vor.u32 %v1131, %v1134
      %v1136 = vsel %vm1119, %v1127, %v1135
      %v1138 = vshrl.u32 %v1115, 16
      %v1140 = vrot.slane %v1138, 1
      %v1141 = vshll.u32 %v1115, 16
      %v1143 = vrot.slane %v1141, 2
      %v1144 = vor.u32 %v1140, %v1143
      %v1145 = vsel %vm1119, %v1135, %v1144
      %v1147 = vshrl.u32 %v1116, 16
      %v1149 = vrot.slane %v1147, 1
      %v1150 = vshll.u32 %v1116, 16
      %v1152 = vrot.slane %v1150, 2
      %v1153 = vor.u32 %v1149, %v1152
      %v1154 = vsel %vm1119, %v1144, %v1153
      %v1156 = vshrl.u32 %v1117, 16
      %v1158 = vrot.slane %v1156, 1
      %v1159 = vshll.u32 %v1117, 16
      %v1161 = vrot.slane %v1159, 2
      %v1162 = vor.u32 %v1158, %v1161
      %v1163 = vsel %vm1119, %v1153, %v1162
      %v1165 = vshrl.u32 %v1118, 16
      %v1167 = vrot.slane %v1165, 1
      %v1168 = vshll.u32 %v1118, 16
      %v1170 = vrot.slane %v1168, 2
      %v1171 = vor.u32 %v1167, %v1170
      %v1172 = vsel %vm1119, %v1162, %v1171
      %v1194 = vunpack.c.l.b16 %v1075
      %v1195 = vunpack.c.l.b16 %v1076
      %v1196 = vunpack.c.l.b16 %v1077
      %v1197 = vunpack.c.l.b16 %v1078
      %v1198 = vunpack.c.l.b16 %v1079
      %v1199 = vunpack.c.l.b16 %v1080
      %v1200 = vunpack.c.l.b16 %v1081
      %v1201 = vunpack.c.l.b16 %v1082
      %v1202 = vunpack.c.l.b16 %v1083
      %v1203 = vunpack.c.l.b16 %v1084
      %v1204 = vunpack.c.l.b16 %v1085
      %v1205 = vunpack.c.l.b16 %v1086
      %v1206 = vunpack.c.l.b16 %v1087
      %v1207 = vunpack.c.l.b16 %v1088
      %v1208 = vunpack.c.l.b16 %v1089
      %v1209 = vunpack.c.l.b16 %v1090
      %v1210 = vpack.c.b16 %v1195, %v1194
      %v1211 = vpack.c.b16 %v1197, %v1196
      %v1212 = vpack.c.b16 %v1199, %v1198
      %v1213 = vpack.c.b16 %v1201, %v1200
      %v1214 = vpack.c.b16 %v1203, %v1202
      %v1215 = vpack.c.b16 %v1205, %v1204
      %v1216 = vpack.c.b16 %v1207, %v1206
      %v1217 = vpack.c.b16 %v1209, %v1208
      %1226 = vmatprep.subr.bf16.mxu0 0
      %1227 = vmatpush1.bf16.msra.mxu0 %v1210
      %1228 = vmatprep.subr.bf16.mxu0 0
      %1229 = vmatpush1.bf16.msra.mxu0 %v1211
      %1230 = vmatprep.subr.bf16.mxu0 0
      %1231 = vmatpush1.bf16.msra.mxu0 %v1212
      %1232 = vmatprep.subr.bf16.mxu0 0
      %1233 = vmatpush1.bf16.msra.mxu0 %v1213
      %1234 = vmatprep.subr.bf16.mxu0 0
      %1235 = vmatpush1.bf16.msra.mxu0 %v1214
      %1236 = vmatprep.subr.bf16.mxu0 0
      %1237 = vmatpush1.bf16.msra.mxu0 %v1215
      %1238 = vmatprep.subr.bf16.mxu0 0
      %1239 = vmatpush1.bf16.msra.mxu0 %v1216
      %1240 = vmatprep.subr.bf16.mxu0 0
      %1241 = vmatpush1.bf16.msra.mxu0 %v1217
      %1242 = vmatprep.subr.bf16.mxu0 0
      %1243 = vmatpush1.bf16.msra.mxu0 0
      %1244 = vmatprep.subr.bf16.mxu0 0
      %1245 = vmatpush1.bf16.msra.mxu0 0
      %1246 = vmatprep.subr.bf16.mxu0 0
      %1247 = vmatpush1.bf16.msra.mxu0 0
      %1248 = vmatprep.subr.bf16.mxu0 0
      %1249 = vmatpush1.bf16.msra.mxu0 0
      %1250 = vmatprep.subr.bf16.mxu0 0
      %1251 = vmatpush1.bf16.msra.mxu0 0
      %1252 = vmatprep.subr.bf16.mxu0 0
      %1253 = vmatpush1.bf16.msra.mxu0 0
      %1254 = vmatprep.subr.bf16.mxu0 0
      %1255 = vmatpush1.bf16.msra.mxu0 0
      %1256 = vmatprep.subr.bf16.mxu0 0
      %1257 = vmatpush1.bf16.msra.mxu0 0
      %1258 = vmatprep.mubr.bf16.mxu0 0
      %1259 = vmatmul.mubr.bf16.gmra.mrb[0].mxu0 %v1136
      %v1260 = vpop.f32.mrb[0].mxu0
      %v1261 = vadd.f32 0.0, %v1260
      %v1262 = vpop.f32.mrb[0].mxu0
      %v1263 = vpop.f32.mrb[0].mxu0
      %v1264 = vadd.f32 0.0, %v1263
      %v1265 = vpop.f32.mrb[0].mxu0
      %1266 = vmatprep.mubr.bf16.mxu0 0
      %1267 = vmatmul.mubr.bf16.gmra.mrb[0].mxu0 %v1145
      %v1268 = vpop.f32.mrb[0].mxu0
      %v1269 = vadd.f32 0.0, %v1268
      %v1270 = vpop.f32.mrb[0].mxu0
      %v1271 = vpop.f32.mrb[0].mxu0
      %v1272 = vadd.f32 0.0, %v1271
      %v1273 = vpop.f32.mrb[0].mxu0
      %1274 = vmatprep.mubr.bf16.mxu0 0
      %1275 = vmatmul.mubr.bf16.gmra.mrb[0].mxu0 %v1154
      %v1276 = vpop.f32.mrb[0].mxu0
      %v1277 = vadd.f32 0.0, %v1276
      %v1278 = vpop.f32.mrb[0].mxu0
      %v1279 = vpop.f32.mrb[0].mxu0
      %v1280 = vadd.f32 0.0, %v1279
      %v1281 = vpop.f32.mrb[0].mxu0
      %1282 = vmatprep.mubr.bf16.mxu0 0
      %1283 = vmatmul.mubr.bf16.gmra.mrb[0].mxu0 %v1163
      %v1284 = vpop.f32.mrb[0].mxu0
      %v1285 = vadd.f32 0.0, %v1284
      %v1286 = vpop.f32.mrb[0].mxu0
      %v1287 = vpop.f32.mrb[0].mxu0
      %v1288 = vadd.f32 0.0, %v1287
      %v1289 = vpop.f32.mrb[0].mxu0
      %1290 = vmatprep.mubr.bf16.mxu0 0
      %1291 = vmatmul.mubr.bf16.gmra.mrb[0].mxu0 %v1172
      %v1292 = vpop.f32.mrb[0].mxu0
      %v1293 = vadd.f32 0.0, %v1292
      %v1294 = vpop.f32.mrb[0].mxu0
      %v1295 = vpop.f32.mrb[0].mxu0
      %v1296 = vadd.f32 0.0, %v1295
      %v1297 = vpop.f32.mrb[0].mxu0
      %1298 = vdwg.mxu0
      %v1299 = vld [vmem:[#allocation2] sm:$0xff]
      %v1300 = vld [vmem:[#allocation2 + $0x8] sm:$0xff]
      %v1301 = vld [vmem:[#allocation2 + $0x10] sm:$0xff]
      %v1302 = vld [vmem:[#allocation2 + $0x18] sm:$0xff]
      %v1303 = vld [vmem:[#allocation2 + $0x20] sm:$0xff]
      %v1304 = vld [vmem:[#allocation2 + $0x28] sm:$0xff]
      %v1305 = vld [vmem:[#allocation2 + $0x30] sm:$0xff]
      %v1306 = vld [vmem:[#allocation2 + $0x38] sm:$0xff]
      %v1307 = vld [vmem:[#allocation2 + $0x40] sm:$0xff]
      %v1308 = vld [vmem:[#allocation2 + $0x48] sm:$0xff]
      %v1309 = vadd.f32 %v1299, %v1261
      %v1310 = vadd.f32 %v1300, %v1264
      %v1311 = vadd.f32 %v1301, %v1269
      %v1312 = vadd.f32 %v1302, %v1272
      %v1313 = vadd.f32 %v1303, %v1277
      %v1314 = vadd.f32 %v1304, %v1280
      %v1315 = vadd.f32 %v1305, %v1285
      %v1316 = vadd.f32 %v1306, %v1288
      %v1317 = vadd.f32 %v1307, %v1293
      %v1318 = vadd.f32 %v1308, %v1296
      %1319 = vst [vmem:[#allocation2] sm:$0xff] %v1309
      %1320 = vst [vmem:[#allocation2 + $0x8] sm:$0xff] %v1310
      %1321 = vst [vmem:[#allocation2 + $0x10] sm:$0xff] %v1311
      %1322 = vst [vmem:[#allocation2 + $0x18] sm:$0xff] %v1312
      %1323 = vst [vmem:[#allocation2 + $0x20] sm:$0xff] %v1313
      %1324 = vst [vmem:[#allocation2 + $0x28] sm:$0xff] %v1314
      %1325 = vst [vmem:[#allocation2 + $0x30] sm:$0xff] %v1315
      %1326 = vst [vmem:[#allocation2 + $0x38] sm:$0xff] %v1316
      %1327 = vst [vmem:[#allocation2 + $0x40] sm:$0xff] %v1317
      %1328 = vst [vmem:[#allocation2 + $0x48] sm:$0xff] %v1318
      %v1329 = vld [vmem:[%s165 + $0x4] sm:$0xc]
      %v1330 = vld [vmem:[%s165 + $0x8] sm:$0xf]
      %v1331 = vld [vmem:[%s165 + $0xc] sm:$0xf]
      %v1332 = vld [vmem:[%s165 + $0x10] sm:$0xf]
      %v1333 = vld [vmem:[%s165 + $0x14] sm:$0xf]
      %v1334 = vld [vmem:[%s165 + $0x18] sm:$0xf]
      %v1335 = vld [vmem:[%s165 + $0x1c] sm:$0xf]
      %v1336 = vld [vmem:[%s165 + $0x20] sm:$0xf]
      %v1337 = vld [vmem:[%s165 + $0x24] sm:$0xf]
      %v1338 = vld [vmem:[%s165 + $0x28] sm:$0xf]
      %v1339 = vld [vmem:[%s165 + $0x2c] sm:$0x3]
      %s1340 = scalar_lea.vmem %s1, 320
      %v1341 = vld [vmem:[%s1340] sm:$0xf]
      %v1342 = vld [vmem:[%s1340 + $0x4] sm:$0xf]
      %v1343 = vld [vmem:[%s1340 + $0x8] sm:$0xf]
      %v1344 = vld [vmem:[%s1340 + $0xc] sm:$0xf]
      %v1345 = vld [vmem:[%s1340 + $0x10] sm:$0xf]
      %v1346 = vld [vmem:[%s1340 + $0x14] sm:$0xf]
      %v1347 = vld [vmem:[%s1340 + $0x18] sm:$0xf]
      %v1348 = vld [vmem:[%s1340 + $0x1c] sm:$0xf]
      %v1349 = vld [vmem:[%s1340 + $0x20] sm:$0xf]
      %v1350 = vld [vmem:[%s1340 + $0x24] sm:$0xf]
      %v1351 = vld [vmem:[%s1340 + $0x28] sm:$0xf]
      %v1352 = vld [vmem:[%s1340 + $0x2c] sm:$0xf]
      %v1353 = vld [vmem:[%s1340 + $0x30] sm:$0xf]
      %v1354 = vld [vmem:[%s1340 + $0x34] sm:$0xf]
      %v1355 = vld [vmem:[%s1340 + $0x38] sm:$0xf]
      %v1356 = vld [vmem:[%s1340 + $0x3c] sm:$0xf]
      %v1368 = vunpack.c.l.b16 %v1329
      %v1369 = vunpack.c.l.b16 %v1330
      %v1370 = vunpack.c.l.b16 %v1331
      %v1371 = vunpack.c.l.b16 %v1332
      %v1372 = vunpack.c.l.b16 %v1333
      %v1373 = vunpack.c.l.b16 %v1334
      %v1374 = vunpack.c.l.b16 %v1335
      %v1375 = vunpack.c.l.b16 %v1336
      %v1376 = vunpack.c.l.b16 %v1337
      %v1377 = vunpack.c.l.b16 %v1338
      %v1378 = vunpack.c.l.b16 %v1339
      %v1379 = vpack.c.b16 %v1369, %v1368
      %v1380 = vpack.c.b16 %v1371, %v1370
      %v1381 = vpack.c.b16 %v1373, %v1372
      %v1382 = vpack.c.b16 %v1375, %v1374
      %v1383 = vpack.c.b16 %v1377, %v1376
      %v1384 = vpack.c.b16 %v1378, %v1378
      %vm1385 = vcmask 1045504
      %v1386 = vrot.slane %v1379, 2
      %v1387 = vrot.slane %v1380, 2
      %v1388 = vsel %vm1385, %v1386, %v1387
      %v1389 = vrot.slane %v1381, 2
      %v1390 = vsel %vm1385, %v1387, %v1389
      %v1391 = vrot.slane %v1382, 2
      %v1392 = vsel %vm1385, %v1389, %v1391
      %v1393 = vrot.slane %v1383, 2
      %v1394 = vsel %vm1385, %v1391, %v1393
      %v1395 = vrot.slane %v1384, 2
      %v1396 = vsel %vm1385, %v1393, %v1395
      %v1418 = vunpack.c.l.b16 %v1341
      %v1419 = vunpack.c.l.b16 %v1342
      %v1420 = vunpack.c.l.b16 %v1343
      %v1421 = vunpack.c.l.b16 %v1344
      %v1422 = vunpack.c.l.b16 %v1345
      %v1423 = vunpack.c.l.b16 %v1346
      %v1424 = vunpack.c.l.b16 %v1347
      %v1425 = vunpack.c.l.b16 %v1348
      %v1426 = vunpack.c.l.b16 %v1349
      %v1427 = vunpack.c.l.b16 %v1350
      %v1428 = vunpack.c.l.b16 %v1351
      %v1429 = vunpack.c.l.b16 %v1352
      %v1430 = vunpack.c.l.b16 %v1353
      %v1431 = vunpack.c.l.b16 %v1354
      %v1432 = vunpack.c.l.b16 %v1355
      %v1433 = vunpack.c.l.b16 %v1356
      %v1434 = vpack.c.b16 %v1419, %v1418
      %v1435 = vpack.c.b16 %v1421, %v1420
      %v1436 = vpack.c.b16 %v1423, %v1422
      %v1437 = vpack.c.b16 %v1425, %v1424
      %v1438 = vpack.c.b16 %v1427, %v1426
      %v1439 = vpack.c.b16 %v1429, %v1428
      %v1440 = vpack.c.b16 %v1431, %v1430
      %v1441 = vpack.c.b16 %v1433, %v1432
      %1450 = vmatprep.subr.bf16.mxu0 0
      %1451 = vmatpush1.bf16.msra.mxu0 %v1434
      %1452 = vmatprep.subr.bf16.mxu0 0
      %1453 = vmatpush1.bf16.msra.mxu0 %v1435
      %1454 = vmatprep.subr.bf16.mxu0 0
      %1455 = vmatpush1.bf16.msra.mxu0 %v1436
      %1456 = vmatprep.subr.bf16.mxu0 0
      %1457 = vmatpush1.bf16.msra.mxu0 %v1437
      %1458 = vmatprep.subr.bf16.mxu0 0
      %1459 = vmatpush1.bf16.msra.mxu0 %v1438
      %1460 = vmatprep.subr.bf16.mxu0 0
      %1461 = vmatpush1.bf16.msra.mxu0 %v1439
      %1462 = vmatprep.subr.bf16.mxu0 0
      %1463 = vmatpush1.bf16.msra.mxu0 %v1440
      %1464 = vmatprep.subr.bf16.mxu0 0
      %1465 = vmatpush1.bf16.msra.mxu0 %v1441
      %1466 = vmatprep.subr.bf16.mxu0 0
      %1467 = vmatpush1.bf16.msra.mxu0 0
      %1468 = vmatprep.subr.bf16.mxu0 0
      %1469 = vmatpush1.bf16.msra.mxu0 0
      %1470 = vmatprep.subr.bf16.mxu0 0
      %1471 = vmatpush1.bf16.msra.mxu0 0
      %1472 = vmatprep.subr.bf16.mxu0 0
      %1473 = vmatpush1.bf16.msra.mxu0 0
      %1474 = vmatprep.subr.bf16.mxu0 0
      %1475 = vmatpush1.bf16.msra.mxu0 0
      %1476 = vmatprep.subr.bf16.mxu0 0
      %1477 = vmatpush1.bf16.msra.mxu0 0
      %1478 = vmatprep.subr.bf16.mxu0 0
      %1479 = vmatpush1.bf16.msra.mxu0 0
      %1480 = vmatprep.subr.bf16.mxu0 0
      %1481 = vmatpush1.bf16.msra.mxu0 0
      %1482 = vmatprep.mubr.bf16.mxu0 0
      %1483 = vmatmul.mubr.bf16.gmra.mrb[0].mxu0 %v1388
      %v1484 = vpop.f32.mrb[0].mxu0
      %v1485 = vadd.f32 0.0, %v1484
      %v1486 = vpop.f32.mrb[0].mxu0
      %v1487 = vpop.f32.mrb[0].mxu0
      %v1488 = vadd.f32 0.0, %v1487
      %v1489 = vpop.f32.mrb[0].mxu0
      %1490 = vmatprep.mubr.bf16.mxu0 0
      %1491 = vmatmul.mubr.bf16.gmra.mrb[0].mxu0 %v1390
      %v1492 = vpop.f32.mrb[0].mxu0
      %v1493 = vadd.f32 0.0, %v1492
      %v1494 = vpop.f32.mrb[0].mxu0
      %v1495 = vpop.f32.mrb[0].mxu0
      %v1496 = vadd.f32 0.0, %v1495
      %v1497 = vpop.f32.mrb[0].mxu0
      %1498 = vmatprep.mubr.bf16.mxu0 0
      %1499 = vmatmul.mubr.bf16.gmra.mrb[0].mxu0 %v1392
      %v1500 = vpop.f32.mrb[0].mxu0
      %v1501 = vadd.f32 0.0, %v1500
      %v1502 = vpop.f32.mrb[0].mxu0
      %v1503 = vpop.f32.mrb[0].mxu0
      %v1504 = vadd.f32 0.0, %v1503
      %v1505 = vpop.f32.mrb[0].mxu0
      %1506 = vmatprep.mubr.bf16.mxu0 0
      %1507 = vmatmul.mubr.bf16.gmra.mrb[0].mxu0 %v1394
      %v1508 = vpop.f32.mrb[0].mxu0
      %v1509 = vadd.f32 0.0, %v1508
      %v1510 = vpop.f32.mrb[0].mxu0
      %v1511 = vpop.f32.mrb[0].mxu0
      %v1512 = vadd.f32 0.0, %v1511
      %v1513 = vpop.f32.mrb[0].mxu0
      %1514 = vmatprep.mubr.bf16.mxu0 0
      %1515 = vmatmul.mubr.bf16.gmra.mrb[0].mxu0 %v1396
      %v1516 = vpop.f32.mrb[0].mxu0
      %v1517 = vadd.f32 0.0, %v1516
      %v1518 = vpop.f32.mrb[0].mxu0
      %v1519 = vpop.f32.mrb[0].mxu0
      %v1520 = vadd.f32 0.0, %v1519
      %v1521 = vpop.f32.mrb[0].mxu0
      %1522 = vdwg.mxu0
      %v1523 = vld [vmem:[#allocation2] sm:$0xff]
      %v1524 = vld [vmem:[#allocation2 + $0x8] sm:$0xff]
      %v1525 = vld [vmem:[#allocation2 + $0x10] sm:$0xff]
      %v1526 = vld [vmem:[#allocation2 + $0x18] sm:$0xff]
      %v1527 = vld [vmem:[#allocation2 + $0x20] sm:$0xff]
      %v1528 = vld [vmem:[#allocation2 + $0x28] sm:$0xff]
      %v1529 = vld [vmem:[#allocation2 + $0x30] sm:$0xff]
      %v1530 = vld [vmem:[#allocation2 + $0x38] sm:$0xff]
      %v1531 = vld [vmem:[#allocation2 + $0x40] sm:$0xff]
      %v1532 = vld [vmem:[#allocation2 + $0x48] sm:$0xff]
      %v1533 = vadd.f32 %v1523, %v1485
      %v1534 = vadd.f32 %v1524, %v1488
      %v1535 = vadd.f32 %v1525, %v1493
      %v1536 = vadd.f32 %v1526, %v1496
      %v1537 = vadd.f32 %v1527, %v1501
      %v1538 = vadd.f32 %v1528, %v1504
      %v1539 = vadd.f32 %v1529, %v1509
      %v1540 = vadd.f32 %v1530, %v1512
      %v1541 = vadd.f32 %v1531, %v1517
      %v1542 = vadd.f32 %v1532, %v1520
      %1543 = vst [vmem:[#allocation2] sm:$0xff] %v1533
      %1544 = vst [vmem:[#allocation2 + $0x8] sm:$0xff] %v1534
      %1545 = vst [vmem:[#allocation2 + $0x10] sm:$0xff] %v1535
      %1546 = vst [vmem:[#allocation2 + $0x18] sm:$0xff] %v1536
      %1547 = vst [vmem:[#allocation2 + $0x20] sm:$0xff] %v1537
      %1548 = vst [vmem:[#allocation2 + $0x28] sm:$0xff] %v1538
      %1549 = vst [vmem:[#allocation2 + $0x30] sm:$0xff] %v1539
      %1550 = vst [vmem:[#allocation2 + $0x38] sm:$0xff] %v1540
      %1551 = vst [vmem:[#allocation2 + $0x40] sm:$0xff] %v1541
      %1552 = vst [vmem:[#allocation2 + $0x48] sm:$0xff] %v1542
      %v1553 = vld [vmem:[%s165 + $0x8] sm:$0xc]
      %v1554 = vld [vmem:[%s165 + $0xc] sm:$0xf]
      %v1555 = vld [vmem:[%s165 + $0x10] sm:$0xf]
      %v1556 = vld [vmem:[%s165 + $0x14] sm:$0xf]
      %v1557 = vld [vmem:[%s165 + $0x18] sm:$0xf]
      %v1558 = vld [vmem:[%s165 + $0x1c] sm:$0xf]
      %v1559 = vld [vmem:[%s165 + $0x20] sm:$0xf]
      %v1560 = vld [vmem:[%s165 + $0x24] sm:$0xf]
      %v1561 = vld [vmem:[%s165 + $0x28] sm:$0xf]
      %v1562 = vld [vmem:[%s165 + $0x2c] sm:$0xf]
      %v1563 = vld [vmem:[%s165 + $0x30] sm:$0x3]
      %s1564 = scalar_lea.vmem %s1, 384
      %v1565 = vld [vmem:[%s1564] sm:$0xf]
      %v1566 = vld [vmem:[%s1564 + $0x4] sm:$0xf]
      %v1567 = vld [vmem:[%s1564 + $0x8] sm:$0xf]
      %v1568 = vld [vmem:[%s1564 + $0xc] sm:$0xf]
      %v1569 = vld [vmem:[%s1564 + $0x10] sm:$0xf]
      %v1570 = vld [vmem:[%s1564 + $0x14] sm:$0xf]
      %v1571 = vld [vmem:[%s1564 + $0x18] sm:$0xf]
      %v1572 = vld [vmem:[%s1564 + $0x1c] sm:$0xf]
      %v1573 = vld [vmem:[%s1564 + $0x20] sm:$0xf]
      %v1574 = vld [vmem:[%s1564 + $0x24] sm:$0xf]
      %v1575 = vld [vmem:[%s1564 + $0x28] sm:$0xf]
      %v1576 = vld [vmem:[%s1564 + $0x2c] sm:$0xf]
      %v1577 = vld [vmem:[%s1564 + $0x30] sm:$0xf]
      %v1578 = vld [vmem:[%s1564 + $0x34] sm:$0xf]
      %v1579 = vld [vmem:[%s1564 + $0x38] sm:$0xf]
      %v1580 = vld [vmem:[%s1564 + $0x3c] sm:$0xf]
      %v1592 = vunpack.c.l.b16 %v1553
      %v1593 = vunpack.c.l.b16 %v1554
      %v1594 = vunpack.c.l.b16 %v1555
      %v1595 = vunpack.c.l.b16 %v1556
      %v1596 = vunpack.c.l.b16 %v1557
      %v1597 = vunpack.c.l.b16 %v1558
      %v1598 = vunpack.c.l.b16 %v1559
      %v1599 = vunpack.c.l.b16 %v1560
      %v1600 = vunpack.c.l.b16 %v1561
      %v1601 = vunpack.c.l.b16 %v1562
      %v1602 = vunpack.c.l.b16 %v1563
      %v1603 = vpack.c.b16 %v1593, %v1592
      %v1604 = vpack.c.b16 %v1595, %v1594
      %v1605 = vpack.c.b16 %v1597, %v1596
      %v1606 = vpack.c.b16 %v1599, %v1598
      %v1607 = vpack.c.b16 %v1601, %v1600
      %v1608 = vpack.c.b16 %v1602, %v1602
      %v1609 = vrot.slane %v1603, 2
      %v1610 = vrot.slane %v1604, 2
      %v1611 = vsel %vm1385, %v1609, %v1610
      %v1612 = vrot.slane %v1605, 2
      %v1613 = vsel %vm1385, %v1610, %v1612
      %v1614 = vrot.slane %v1606, 2
      %v1615 = vsel %vm1385, %v1612, %v1614
      %v1616 = vrot.slane %v1607, 2
      %v1617 = vsel %vm1385, %v1614, %v1616
      %v1618 = vrot.slane %v1608, 2
      %v1619 = vsel %vm1385, %v1616, %v1618
      %v1641 = vunpack.c.l.b16 %v1565
      %v1642 = vunpack.c.l.b16 %v1566
      %v1643 = vunpack.c.l.b16 %v1567
      %v1644 = vunpack.c.l.b16 %v1568
      %v1645 = vunpack.c.l.b16 %v1569
      %v1646 = vunpack.c.l.b16 %v1570
      %v1647 = vunpack.c.l.b16 %v1571
      %v1648 = vunpack.c.l.b16 %v1572
      %v1649 = vunpack.c.l.b16 %v1573
      %v1650 = vunpack.c.l.b16 %v1574
      %v1651 = vunpack.c.l.b16 %v1575
      %v1652 = vunpack.c.l.b16 %v1576
      %v1653 = vunpack.c.l.b16 %v1577
      %v1654 = vunpack.c.l.b16 %v1578
      %v1655 = vunpack.c.l.b16 %v1579
      %v1656 = vunpack.c.l.b16 %v1580
      %v1657 = vpack.c.b16 %v1642, %v1641
      %v1658 = vpack.c.b16 %v1644, %v1643
      %v1659 = vpack.c.b16 %v1646, %v1645
      %v1660 = vpack.c.b16 %v1648, %v1647
      %v1661 = vpack.c.b16 %v1650, %v1649
      %v1662 = vpack.c.b16 %v1652, %v1651
      %v1663 = vpack.c.b16 %v1654, %v1653
      %v1664 = vpack.c.b16 %v1656, %v1655
      %1673 = vmatprep.subr.bf16.mxu0 0
      %1674 = vmatpush1.bf16.msra.mxu0 %v1657
      %1675 = vmatprep.subr.bf16.mxu0 0
      %1676 = vmatpush1.bf16.msra.mxu0 %v1658
      %1677 = vmatprep.subr.bf16.mxu0 0
      %1678 = vmatpush1.bf16.msra.mxu0 %v1659
      %1679 = vmatprep.subr.bf16.mxu0 0
      %1680 = vmatpush1.bf16.msra.mxu0 %v1660
      %1681 = vmatprep.subr.bf16.mxu0 0
      %1682 = vmatpush1.bf16.msra.mxu0 %v1661
      %1683 = vmatprep.subr.bf16.mxu0 0
      %1684 = vmatpush1.bf16.msra.mxu0 %v1662
      %1685 = vmatprep.subr.bf16.mxu0 0
      %1686 = vmatpush1.bf16.msra.mxu0 %v1663
      %1687 = vmatprep.subr.bf16.mxu0 0
      %1688 = vmatpush1.bf16.msra.mxu0 %v1664
      %1689 = vmatprep.subr.bf16.mxu0 0
      %1690 = vmatpush1.bf16.msra.mxu0 0
      %1691 = vmatprep.subr.bf16.mxu0 0
      %1692 = vmatpush1.bf16.msra.mxu0 0
      %1693 = vmatprep.subr.bf16.mxu0 0
      %1694 = vmatpush1.bf16.msra.mxu0 0
      %1695 = vmatprep.subr.bf16.mxu0 0
      %1696 = vmatpush1.bf16.msra.mxu0 0
      %1697 = vmatprep.subr.bf16.mxu0 0
      %1698 = vmatpush1.bf16.msra.mxu0 0
      %1699 = vmatprep.subr.bf16.mxu0 0
      %1700 = vmatpush1.bf16.msra.mxu0 0
      %1701 = vmatprep.subr.bf16.mxu0 0
      %1702 = vmatpush1.bf16.msra.mxu0 0
      %1703 = vmatprep.subr.bf16.mxu0 0
      %1704 = vmatpush1.bf16.msra.mxu0 0
      %1705 = vmatprep.mubr.bf16.mxu0 0
      %1706 = vmatmul.mubr.bf16.gmra.mrb[0].mxu0 %v1611
      %v1707 = vpop.f32.mrb[0].mxu0
      %v1708 = vadd.f32 0.0, %v1707
      %v1709 = vpop.f32.mrb[0].mxu0
      %v1710 = vpop.f32.mrb[0].mxu0
      %v1711 = vadd.f32 0.0, %v1710
      %v1712 = vpop.f32.mrb[0].mxu0
      %1713 = vmatprep.mubr.bf16.mxu0 0
      %1714 = vmatmul.mubr.bf16.gmra.mrb[0].mxu0 %v1613
      %v1715 = vpop.f32.mrb[0].mxu0
      %v1716 = vadd.f32 0.0, %v1715
      %v1717 = vpop.f32.mrb[0].mxu0
      %v1718 = vpop.f32.mrb[0].mxu0
      %v1719 = vadd.f32 0.0, %v1718
      %v1720 = vpop.f32.mrb[0].mxu0
      %1721 = vmatprep.mubr.bf16.mxu0 0
      %1722 = vmatmul.mubr.bf16.gmra.mrb[0].mxu0 %v1615
      %v1723 = vpop.f32.mrb[0].mxu0
      %v1724 = vadd.f32 0.0, %v1723
      %v1725 = vpop.f32.mrb[0].mxu0
      %v1726 = vpop.f32.mrb[0].mxu0
      %v1727 = vadd.f32 0.0, %v1726
      %v1728 = vpop.f32.mrb[0].mxu0
      %1729 = vmatprep.mubr.bf16.mxu0 0
      %1730 = vmatmul.mubr.bf16.gmra.mrb[0].mxu0 %v1617
      %v1731 = vpop.f32.mrb[0].mxu0
      %v1732 = vadd.f32 0.0, %v1731
      %v1733 = vpop.f32.mrb[0].mxu0
      %v1734 = vpop.f32.mrb[0].mxu0
      %v1735 = vadd.f32 0.0, %v1734
      %v1736 = vpop.f32.mrb[0].mxu0
      %1737 = vmatprep.mubr.bf16.mxu0 0
      %1738 = vmatmul.mubr.bf16.gmra.mrb[0].mxu0 %v1619
      %v1739 = vpop.f32.mrb[0].mxu0
      %v1740 = vadd.f32 0.0, %v1739
      %v1741 = vpop.f32.mrb[0].mxu0
      %v1742 = vpop.f32.mrb[0].mxu0
      %v1743 = vadd.f32 0.0, %v1742
      %v1744 = vpop.f32.mrb[0].mxu0
      %1745 = vdwg.mxu0
      %v1746 = vld [vmem:[#allocation2] sm:$0xff]
      %v1747 = vld [vmem:[#allocation2 + $0x8] sm:$0xff]
      %v1748 = vld [vmem:[#allocation2 + $0x10] sm:$0xff]
      %v1749 = vld [vmem:[#allocation2 + $0x18] sm:$0xff]
      %v1750 = vld [vmem:[#allocation2 + $0x20] sm:$0xff]
      %v1751 = vld [vmem:[#allocation2 + $0x28] sm:$0xff]
      %v1752 = vld [vmem:[#allocation2 + $0x30] sm:$0xff]
      %v1753 = vld [vmem:[#allocation2 + $0x38] sm:$0xff]
      %v1754 = vld [vmem:[#allocation2 + $0x40] sm:$0xff]
      %v1755 = vld [vmem:[#allocation2 + $0x48] sm:$0xff]
      %v1756 = vadd.f32 %v1746, %v1708
      %v1757 = vadd.f32 %v1747, %v1711
      %v1758 = vadd.f32 %v1748, %v1716
      %v1759 = vadd.f32 %v1749, %v1719
      %v1760 = vadd.f32 %v1750, %v1724
      %v1761 = vadd.f32 %v1751, %v1727
      %v1762 = vadd.f32 %v1752, %v1732
      %v1763 = vadd.f32 %v1753, %v1735
      %v1764 = vadd.f32 %v1754, %v1740
      %v1765 = vadd.f32 %v1755, %v1743
      %1766 = vst [vmem:[#allocation2] sm:$0xff] %v1756
      %1767 = vst [vmem:[#allocation2 + $0x8] sm:$0xff] %v1757
      %1768 = vst [vmem:[#allocation2 + $0x10] sm:$0xff] %v1758
      %1769 = vst [vmem:[#allocation2 + $0x18] sm:$0xff] %v1759
      %1770 = vst [vmem:[#allocation2 + $0x20] sm:$0xff] %v1760
      %1771 = vst [vmem:[#allocation2 + $0x28] sm:$0xff] %v1761
      %1772 = vst [vmem:[#allocation2 + $0x30] sm:$0xff] %v1762
      %1773 = vst [vmem:[#allocation2 + $0x38] sm:$0xff] %v1763
      %1774 = vst [vmem:[#allocation2 + $0x40] sm:$0xff] %v1764
      %1775 = vst [vmem:[#allocation2 + $0x48] sm:$0xff] %v1765
      %v1776 = vld [vmem:[%s165 + $0x8] sm:$0xc]
      %v1777 = vld [vmem:[%s165 + $0xc] sm:$0xf]
      %v1778 = vld [vmem:[%s165 + $0x10] sm:$0xf]
      %v1779 = vld [vmem:[%s165 + $0x14] sm:$0xf]
      %v1780 = vld [vmem:[%s165 + $0x18] sm:$0xf]
      %v1781 = vld [vmem:[%s165 + $0x1c] sm:$0xf]
      %v1782 = vld [vmem:[%s165 + $0x20] sm:$0xf]
      %v1783 = vld [vmem:[%s165 + $0x24] sm:$0xf]
      %v1784 = vld [vmem:[%s165 + $0x28] sm:$0xf]
      %v1785 = vld [vmem:[%s165 + $0x2c] sm:$0xf]
      %v1786 = vld [vmem:[%s165 + $0x30] sm:$0x7]
      %s1787 = scalar_lea.vmem %s1, 448
      %v1788 = vld [vmem:[%s1787] sm:$0xf]
      %v1789 = vld [vmem:[%s1787 + $0x4] sm:$0xf]
      %v1790 = vld [vmem:[%s1787 + $0x8] sm:$0xf]
      %v1791 = vld [vmem:[%s1787 + $0xc] sm:$0xf]
      %v1792 = vld [vmem:[%s1787 + $0x10] sm:$0xf]
      %v1793 = vld [vmem:[%s1787 + $0x14] sm:$0xf]
      %v1794 = vld [vmem:[%s1787 + $0x18] sm:$0xf]
      %v1795 = vld [vmem:[%s1787 + $0x1c] sm:$0xf]
      %v1796 = vld [vmem:[%s1787 + $0x20] sm:$0xf]
      %v1797 = vld [vmem:[%s1787 + $0x24] sm:$0xf]
      %v1798 = vld [vmem:[%s1787 + $0x28] sm:$0xf]
      %v1799 = vld [vmem:[%s1787 + $0x2c] sm:$0xf]
      %v1800 = vld [vmem:[%s1787 + $0x30] sm:$0xf]
      %v1801 = vld [vmem:[%s1787 + $0x34] sm:$0xf]
      %v1802 = vld [vmem:[%s1787 + $0x38] sm:$0xf]
      %v1803 = vld [vmem:[%s1787 + $0x3c] sm:$0xf]
      %v1815 = vunpack.c.l.b16 %v1776
      %v1816 = vunpack.c.l.b16 %v1777
      %v1817 = vunpack.c.l.b16 %v1778
      %v1818 = vunpack.c.l.b16 %v1779
      %v1819 = vunpack.c.l.b16 %v1780
      %v1820 = vunpack.c.l.b16 %v1781
      %v1821 = vunpack.c.l.b16 %v1782
      %v1822 = vunpack.c.l.b16 %v1783
      %v1823 = vunpack.c.l.b16 %v1784
      %v1824 = vunpack.c.l.b16 %v1785
      %v1825 = vunpack.c.l.b16 %v1786
      %v1826 = vpack.c.b16 %v1816, %v1815
      %v1827 = vpack.c.b16 %v1818, %v1817
      %v1828 = vpack.c.b16 %v1820, %v1819
      %v1829 = vpack.c.b16 %v1822, %v1821
      %v1830 = vpack.c.b16 %v1824, %v1823
      %v1831 = vpack.c.b16 %v1825, %v1825
      %vm1832 = vsmask.f32 5376
      %v1834 = vshrl.u32 %v1826, 16
      %v1836 = vrot.slane %v1834, 2
      %v1837 = vshll.u32 %v1826, 16
      %v1839 = vrot.slane %v1837, 3
      %v1840 = vor.u32 %v1836, %v1839
      %v1842 = vshrl.u32 %v1827, 16
      %v1844 = vrot.slane %v1842, 2
      %v1845 = vshll.u32 %v1827, 16
      %v1847 = vrot.slane %v1845, 3
      %v1848 = vor.u32 %v1844, %v1847
      %v1849 = vsel %vm1832, %v1840, %v1848
      %v1851 = vshrl.u32 %v1828, 16
      %v1853 = vrot.slane %v1851, 2
      %v1854 = vshll.u32 %v1828, 16
      %v1856 = vrot.slane %v1854, 3
      %v1857 = vor.u32 %v1853, %v1856
      %v1858 = vsel %vm1832, %v1848, %v1857
      %v1860 = vshrl.u32 %v1829, 16
      %v1862 = vrot.slane %v1860, 2
      %v1863 = vshll.u32 %v1829, 16
      %v1865 = vrot.slane %v1863, 3
      %v1866 = vor.u32 %v1862, %v1865
      %v1867 = vsel %vm1832, %v1857, %v1866
      %v1869 = vshrl.u32 %v1830, 16
      %v1871 = vrot.slane %v1869, 2
      %v1872 = vshll.u32 %v1830, 16
      %v1874 = vrot.slane %v1872, 3
      %v1875 = vor.u32 %v1871, %v1874
      %v1876 = vsel %vm1832, %v1866, %v1875
      %v1878 = vshrl.u32 %v1831, 16
      %v1880 = vrot.slane %v1878, 2
      %v1881 = vshll.u32 %v1831, 16
      %v1883 = vrot.slane %v1881, 3
      %v1884 = vor.u32 %v1880, %v1883
      %v1885 = vsel %vm1832, %v1875, %v1884
      %v1907 = vunpack.c.l.b16 %v1788
      %v1908 = vunpack.c.l.b16 %v1789
      %v1909 = vunpack.c.l.b16 %v1790
      %v1910 = vunpack.c.l.b16 %v1791
      %v1911 = vunpack.c.l.b16 %v1792
      %v1912 = vunpack.c.l.b16 %v1793
      %v1913 = vunpack.c.l.b16 %v1794
      %v1914 = vunpack.c.l.b16 %v1795
      %v1915 = vunpack.c.l.b16 %v1796
      %v1916 = vunpack.c.l.b16 %v1797
      %v1917 = vunpack.c.l.b16 %v1798
      %v1918 = vunpack.c.l.b16 %v1799
      %v1919 = vunpack.c.l.b16 %v1800
      %v1920 = vunpack.c.l.b16 %v1801
      %v1921 = vunpack.c.l.b16 %v1802
      %v1922 = vunpack.c.l.b16 %v1803
      %v1923 = vpack.c.b16 %v1908, %v1907
      %v1924 = vpack.c.b16 %v1910, %v1909
      %v1925 = vpack.c.b16 %v1912, %v1911
      %v1926 = vpack.c.b16 %v1914, %v1913
      %v1927 = vpack.c.b16 %v1916, %v1915
      %v1928 = vpack.c.b16 %v1918, %v1917
      %v1929 = vpack.c.b16 %v1920, %v1919
      %v1930 = vpack.c.b16 %v1922, %v1921
      %1939 = vmatprep.subr.bf16.mxu0 0
      %1940 = vmatpush1.bf16.msra.mxu0 %v1923
      %1941 = vmatprep.subr.bf16.mxu0 0
      %1942 = vmatpush1.bf16.msra.mxu0 %v1924
      %1943 = vmatprep.subr.bf16.mxu0 0
      %1944 = vmatpush1.bf16.msra.mxu0 %v1925
      %1945 = vmatprep.subr.bf16.mxu0 0
      %1946 = vmatpush1.bf16.msra.mxu0 %v1926
      %1947 = vmatprep.subr.bf16.mxu0 0
      %1948 = vmatpush1.bf16.msra.mxu0 %v1927
      %1949 = vmatprep.subr.bf16.mxu0 0
      %1950 = vmatpush1.bf16.msra.mxu0 %v1928
      %1951 = vmatprep.subr.bf16.mxu0 0
      %1952 = vmatpush1.bf16.msra.mxu0 %v1929
      %1953 = vmatprep.subr.bf16.mxu0 0
      %1954 = vmatpush1.bf16.msra.mxu0 %v1930
      %1955 = vmatprep.subr.bf16.mxu0 0
      %1956 = vmatpush1.bf16.msra.mxu0 0
      %1957 = vmatprep.subr.bf16.mxu0 0
      %1958 = vmatpush1.bf16.msra.mxu0 0
      %1959 = vmatprep.subr.bf16.mxu0 0
      %1960 = vmatpush1.bf16.msra.mxu0 0
      %1961 = vmatprep.subr.bf16.mxu0 0
      %1962 = vmatpush1.bf16.msra.mxu0 0
      %1963 = vmatprep.subr.bf16.mxu0 0
      %1964 = vmatpush1.bf16.msra.mxu0 0
      %1965 = vmatprep.subr.bf16.mxu0 0
      %1966 = vmatpush1.bf16.msra.mxu0 0
      %1967 = vmatprep.subr.bf16.mxu0 0
      %1968 = vmatpush1.bf16.msra.mxu0 0
      %1969 = vmatprep.subr.bf16.mxu0 0
      %1970 = vmatpush1.bf16.msra.mxu0 0
      %1971 = vmatprep.mubr.bf16.mxu0 0
      %1972 = vmatmul.mubr.bf16.gmra.mrb[0].mxu0 %v1849
      %v1973 = vpop.f32.mrb[0].mxu0
      %v1974 = vadd.f32 0.0, %v1973
      %v1975 = vpop.f32.mrb[0].mxu0
      %v1976 = vpop.f32.mrb[0].mxu0
      %v1977 = vadd.f32 0.0, %v1976
      %v1978 = vpop.f32.mrb[0].mxu0
      %1979 = vmatprep.mubr.bf16.mxu0 0
      %1980 = vmatmul.mubr.bf16.gmra.mrb[0].mxu0 %v1858
      %v1981 = vpop.f32.mrb[0].mxu0
      %v1982 = vadd.f32 0.0, %v1981
      %v1983 = vpop.f32.mrb[0].mxu0
      %v1984 = vpop.f32.mrb[0].mxu0
      %v1985 = vadd.f32 0.0, %v1984
      %v1986 = vpop.f32.mrb[0].mxu0
      %1987 = vmatprep.mubr.bf16.mxu0 0
      %1988 = vmatmul.mubr.bf16.gmra.mrb[0].mxu0 %v1867
      %v1989 = vpop.f32.mrb[0].mxu0
      %v1990 = vadd.f32 0.0, %v1989
      %v1991 = vpop.f32.mrb[0].mxu0
      %v1992 = vpop.f32.mrb[0].mxu0
      %v1993 = vadd.f32 0.0, %v1992
      %v1994 = vpop.f32.mrb[0].mxu0
      %1995 = vmatprep.mubr.bf16.mxu0 0
      %1996 = vmatmul.mubr.bf16.gmra.mrb[0].mxu0 %v1876
      %v1997 = vpop.f32.mrb[0].mxu0
      %v1998 = vadd.f32 0.0, %v1997
      %v1999 = vpop.f32.mrb[0].mxu0
      %v2000 = vpop.f32.mrb[0].mxu0
      %v2001 = vadd.f32 0.0, %v2000
      %v2002 = vpop.f32.mrb[0].mxu0
      %2003 = vmatprep.mubr.bf16.mxu0 0
      %2004 = vmatmul.mubr.bf16.gmra.mrb[0].mxu0 %v1885
      %v2005 = vpop.f32.mrb[0].mxu0
      %v2006 = vadd.f32 0.0, %v2005
      %v2007 = vpop.f32.mrb[0].mxu0
      %v2008 = vpop.f32.mrb[0].mxu0
      %v2009 = vadd.f32 0.0, %v2008
      %v2010 = vpop.f32.mrb[0].mxu0
      %2011 = vdwg.mxu0
      %v2012 = vld [vmem:[#allocation2] sm:$0xff]
      %v2013 = vld [vmem:[#allocation2 + $0x8] sm:$0xff]
      %v2014 = vld [vmem:[#allocation2 + $0x10] sm:$0xff]
      %v2015 = vld [vmem:[#allocation2 + $0x18] sm:$0xff]
      %v2016 = vld [vmem:[#allocation2 + $0x20] sm:$0xff]
      %v2017 = vld [vmem:[#allocation2 + $0x28] sm:$0xff]
      %v2018 = vld [vmem:[#allocation2 + $0x30] sm:$0xff]
      %v2019 = vld [vmem:[#allocation2 + $0x38] sm:$0xff]
      %v2020 = vld [vmem:[#allocation2 + $0x40] sm:$0xff]
      %v2021 = vld [vmem:[#allocation2 + $0x48] sm:$0xff]
      %v2022 = vadd.f32 %v2012, %v1974
      %v2023 = vadd.f32 %v2013, %v1977
      %v2024 = vadd.f32 %v2014, %v1982
      %v2025 = vadd.f32 %v2015, %v1985
      %v2026 = vadd.f32 %v2016, %v1990
      %v2027 = vadd.f32 %v2017, %v1993
      %v2028 = vadd.f32 %v2018, %v1998
      %v2029 = vadd.f32 %v2019, %v2001
      %v2030 = vadd.f32 %v2020, %v2006
      %v2031 = vadd.f32 %v2021, %v2009
      %2032 = vst [vmem:[#allocation2] sm:$0xff] %v2022
      %2033 = vst [vmem:[#allocation2 + $0x8] sm:$0xff] %v2023
      %2034 = vst [vmem:[#allocation2 + $0x10] sm:$0xff] %v2024
      %2035 = vst [vmem:[#allocation2 + $0x18] sm:$0xff] %v2025
      %2036 = vst [vmem:[#allocation2 + $0x20] sm:$0xff] %v2026
      %2037 = vst [vmem:[#allocation2 + $0x28] sm:$0xff] %v2027
      %2038 = vst [vmem:[#allocation2 + $0x30] sm:$0xff] %v2028
      %2039 = vst [vmem:[#allocation2 + $0x38] sm:$0xff] %v2029
      %2040 = vst [vmem:[#allocation2 + $0x40] sm:$0xff] %v2030
      %2041 = vst [vmem:[#allocation2 + $0x48] sm:$0xff] %v2031
      %v2042 = vld [vmem:[%s165 + $0x8] sm:$0x8]
      %v2043 = vld [vmem:[%s165 + $0xc] sm:$0xf]
      %v2044 = vld [vmem:[%s165 + $0x10] sm:$0xf]
      %v2045 = vld [vmem:[%s165 + $0x14] sm:$0xf]
      %v2046 = vld [vmem:[%s165 + $0x18] sm:$0xf]
      %v2047 = vld [vmem:[%s165 + $0x1c] sm:$0xf]
      %v2048 = vld [vmem:[%s165 + $0x20] sm:$0xf]
      %v2049 = vld [vmem:[%s165 + $0x24] sm:$0xf]
      %v2050 = vld [vmem:[%s165 + $0x28] sm:$0xf]
      %v2051 = vld [vmem:[%s165 + $0x2c] sm:$0xf]
      %v2052 = vld [vmem:[%s165 + $0x30] sm:$0x7]
      %s2053 = scalar_lea.vmem %s1, 512
      %v2054 = vld [vmem:[%s2053] sm:$0xf]
      %v2055 = vld [vmem:[%s2053 + $0x4] sm:$0xf]
      %v2056 = vld [vmem:[%s2053 + $0x8] sm:$0xf]
      %v2057 = vld [vmem:[%s2053 + $0xc] sm:$0xf]
      %v2058 = vld [vmem:[%s2053 + $0x10] sm:$0xf]
      %v2059 = vld [vmem:[%s2053 + $0x14] sm:$0xf]
      %v2060 = vld [vmem:[%s2053 + $0x18] sm:$0xf]
      %v2061 = vld [vmem:[%s2053 + $0x1c] sm:$0xf]
      %v2062 = vld [vmem:[%s2053 + $0x20] sm:$0xf]
      %v2063 = vld [vmem:[%s2053 + $0x24] sm:$0xf]
      %v2064 = vld [vmem:[%s2053 + $0x28] sm:$0xf]
      %v2065 = vld [vmem:[%s2053 + $0x2c] sm:$0xf]
      %v2066 = vld [vmem:[%s2053 + $0x30] sm:$0xf]
      %v2067 = vld [vmem:[%s2053 + $0x34] sm:$0xf]
      %v2068 = vld [vmem:[%s2053 + $0x38] sm:$0xf]
      %v2069 = vld [vmem:[%s2053 + $0x3c] sm:$0xf]
      %v2081 = vunpack.c.l.b16 %v2042
      %v2082 = vunpack.c.l.b16 %v2043
      %v2083 = vunpack.c.l.b16 %v2044
      %v2084 = vunpack.c.l.b16 %v2045
      %v2085 = vunpack.c.l.b16 %v2046
      %v2086 = vunpack.c.l.b16 %v2047
      %v2087 = vunpack.c.l.b16 %v2048
      %v2088 = vunpack.c.l.b16 %v2049
      %v2089 = vunpack.c.l.b16 %v2050
      %v2090 = vunpack.c.l.b16 %v2051
      %v2091 = vunpack.c.l.b16 %v2052
      %v2092 = vpack.c.b16 %v2082, %v2081
      %v2093 = vpack.c.b16 %v2084, %v2083
      %v2094 = vpack.c.b16 %v2086, %v2085
      %v2095 = vpack.c.b16 %v2088, %v2087
      %v2096 = vpack.c.b16 %v2090, %v2089
      %v2097 = vpack.c.b16 %v2091, %v2091
      %vm2098 = vcmask 1044480
      %v2099 = vrot.slane %v2092, 3
      %v2100 = vrot.slane %v2093, 3
      %v2101 = vsel %vm2098, %v2099, %v2100
      %v2102 = vrot.slane %v2094, 3
      %v2103 = vsel %vm2098, %v2100, %v2102
      %v2104 = vrot.slane %v2095, 3
      %v2105 = vsel %vm2098, %v2102, %v2104
      %v2106 = vrot.slane %v2096, 3
      %v2107 = vsel %vm2098, %v2104, %v2106
      %v2108 = vrot.slane %v2097, 3
      %v2109 = vsel %vm2098, %v2106, %v2108
      %v2131 = vunpack.c.l.b16 %v2054
      %v2132 = vunpack.c.l.b16 %v2055
      %v2133 = vunpack.c.l.b16 %v2056
      %v2134 = vunpack.c.l.b16 %v2057
      %v2135 = vunpack.c.l.b16 %v2058
      %v2136 = vunpack.c.l.b16 %v2059
      %v2137 = vunpack.c.l.b16 %v2060
      %v2138 = vunpack.c.l.b16 %v2061
      %v2139 = vunpack.c.l.b16 %v2062
      %v2140 = vunpack.c.l.b16 %v2063
      %v2141 = vunpack.c.l.b16 %v2064
      %v2142 = vunpack.c.l.b16 %v2065
      %v2143 = vunpack.c.l.b16 %v2066
      %v2144 = vunpack.c.l.b16 %v2067
      %v2145 = vunpack.c.l.b16 %v2068
      %v2146 = vunpack.c.l.b16 %v2069
      %v2147 = vpack.c.b16 %v2132, %v2131
      %v2148 = vpack.c.b16 %v2134, %v2133
      %v2149 = vpack.c.b16 %v2136, %v2135
      %v2150 = vpack.c.b16 %v2138, %v2137
      %v2151 = vpack.c.b16 %v2140, %v2139
      %v2152 = vpack.c.b16 %v2142, %v2141
      %v2153 = vpack.c.b16 %v2144, %v2143
      %v2154 = vpack.c.b16 %v2146, %v2145
      %2163 = vmatprep.subr.bf16.mxu0 0
      %2164 = vmatpush1.bf16.msra.mxu0 %v2147
      %2165 = vmatprep.subr.bf16.mxu0 0
      %2166 = vmatpush1.bf16.msra.mxu0 %v2148
      %2167 = vmatprep.subr.bf16.mxu0 0
      %2168 = vmatpush1.bf16.msra.mxu0 %v2149
      %2169 = vmatprep.subr.bf16.mxu0 0
      %2170 = vmatpush1.bf16.msra.mxu0 %v2150
      %2171 = vmatprep.subr.bf16.mxu0 0
      %2172 = vmatpush1.bf16.msra.mxu0 %v2151
      %2173 = vmatprep.subr.bf16.mxu0 0
      %2174 = vmatpush1.bf16.msra.mxu0 %v2152
      %2175 = vmatprep.subr.bf16.mxu0 0
      %2176 = vmatpush1.bf16.msra.mxu0 %v2153
      %2177 = vmatprep.subr.bf16.mxu0 0
      %2178 = vmatpush1.bf16.msra.mxu0 %v2154
      %2179 = vmatprep.subr.bf16.mxu0 0
      %2180 = vmatpush1.bf16.msra.mxu0 0
      %2181 = vmatprep.subr.bf16.mxu0 0
      %2182 = vmatpush1.bf16.msra.mxu0 0
      %2183 = vmatprep.subr.bf16.mxu0 0
      %2184 = vmatpush1.bf16.msra.mxu0 0
      %2185 = vmatprep.subr.bf16.mxu0 0
      %2186 = vmatpush1.bf16.msra.mxu0 0
      %2187 = vmatprep.subr.bf16.mxu0 0
      %2188 = vmatpush1.bf16.msra.mxu0 0
      %2189 = vmatprep.subr.bf16.mxu0 0
      %2190 = vmatpush1.bf16.msra.mxu0 0
      %2191 = vmatprep.subr.bf16.mxu0 0
      %2192 = vmatpush1.bf16.msra.mxu0 0
      %2193 = vmatprep.subr.bf16.mxu0 0
      %2194 = vmatpush1.bf16.msra.mxu0 0
      %2195 = vmatprep.mubr.bf16.mxu0 0
      %2196 = vmatmul.mubr.bf16.gmra.mrb[0].mxu0 %v2101
      %v2197 = vpop.f32.mrb[0].mxu0
      %v2198 = vadd.f32 0.0, %v2197
      %v2199 = vpop.f32.mrb[0].mxu0
      %v2200 = vpop.f32.mrb[0].mxu0
      %v2201 = vadd.f32 0.0, %v2200
      %v2202 = vpop.f32.mrb[0].mxu0
      %2203 = vmatprep.mubr.bf16.mxu0 0
      %2204 = vmatmul.mubr.bf16.gmra.mrb[0].mxu0 %v2103
      %v2205 = vpop.f32.mrb[0].mxu0
      %v2206 = vadd.f32 0.0, %v2205
      %v2207 = vpop.f32.mrb[0].mxu0
      %v2208 = vpop.f32.mrb[0].mxu0
      %v2209 = vadd.f32 0.0, %v2208
      %v2210 = vpop.f32.mrb[0].mxu0
      %2211 = vmatprep.mubr.bf16.mxu0 0
      %2212 = vmatmul.mubr.bf16.gmra.mrb[0].mxu0 %v2105
      %v2213 = vpop.f32.mrb[0].mxu0
      %v2214 = vadd.f32 0.0, %v2213
      %v2215 = vpop.f32.mrb[0].mxu0
      %v2216 = vpop.f32.mrb[0].mxu0
      %v2217 = vadd.f32 0.0, %v2216
      %v2218 = vpop.f32.mrb[0].mxu0
      %2219 = vmatprep.mubr.bf16.mxu0 0
      %2220 = vmatmul.mubr.bf16.gmra.mrb[0].mxu0 %v2107
      %v2221 = vpop.f32.mrb[0].mxu0
      %v2222 = vadd.f32 0.0, %v2221
      %v2223 = vpop.f32.mrb[0].mxu0
      %v2224 = vpop.f32.mrb[0].mxu0
      %v2225 = vadd.f32 0.0, %v2224
      %v2226 = vpop.f32.mrb[0].mxu0
      %2227 = vmatprep.mubr.bf16.mxu0 0
      %2228 = vmatmul.mubr.bf16.gmra.mrb[0].mxu0 %v2109
      %v2229 = vpop.f32.mrb[0].mxu0
      %v2230 = vadd.f32 0.0, %v2229
      %v2231 = vpop.f32.mrb[0].mxu0
      %v2232 = vpop.f32.mrb[0].mxu0
      %v2233 = vadd.f32 0.0, %v2232
      %v2234 = vpop.f32.mrb[0].mxu0
      %2235 = vdwg.mxu0
      %v2236 = vld [vmem:[#allocation2] sm:$0xff]
      %v2237 = vld [vmem:[#allocation2 + $0x8] sm:$0xff]
      %v2238 = vld [vmem:[#allocation2 + $0x10] sm:$0xff]
      %v2239 = vld [vmem:[#allocation2 + $0x18] sm:$0xff]
      %v2240 = vld [vmem:[#allocation2 + $0x20] sm:$0xff]
      %v2241 = vld [vmem:[#allocation2 + $0x28] sm:$0xff]
      %v2242 = vld [vmem:[#allocation2 + $0x30] sm:$0xff]
      %v2243 = vld [vmem:[#allocation2 + $0x38] sm:$0xff]
      %v2244 = vld [vmem:[#allocation2 + $0x40] sm:$0xff]
      %v2245 = vld [vmem:[#allocation2 + $0x48] sm:$0xff]
      %v2246 = vadd.f32 %v2236, %v2198
      %v2247 = vadd.f32 %v2237, %v2201
      %v2248 = vadd.f32 %v2238, %v2206
      %v2249 = vadd.f32 %v2239, %v2209
      %v2250 = vadd.f32 %v2240, %v2214
      %v2251 = vadd.f32 %v2241, %v2217
      %v2252 = vadd.f32 %v2242, %v2222
      %v2253 = vadd.f32 %v2243, %v2225
      %v2254 = vadd.f32 %v2244, %v2230
      %v2255 = vadd.f32 %v2245, %v2233
      %2256 = vst [vmem:[#allocation2] sm:$0xff] %v2246
      %2257 = vst [vmem:[#allocation2 + $0x8] sm:$0xff] %v2247
      %2258 = vst [vmem:[#allocation2 + $0x10] sm:$0xff] %v2248
      %2259 = vst [vmem:[#allocation2 + $0x18] sm:$0xff] %v2249
      %2260 = vst [vmem:[#allocation2 + $0x20] sm:$0xff] %v2250
      %2261 = vst [vmem:[#allocation2 + $0x28] sm:$0xff] %v2251
      %2262 = vst [vmem:[#allocation2 + $0x30] sm:$0xff] %v2252
      %2263 = vst [vmem:[#allocation2 + $0x38] sm:$0xff] %v2253
      %2264 = vst [vmem:[#allocation2 + $0x40] sm:$0xff] %v2254
      %2265 = vst [vmem:[#allocation2 + $0x48] sm:$0xff] %v2255
      %v2266 = vld [vmem:[%s2] sm:$0x1]
      %v2267 = vld [vmem:[#allocation2] ss:$2 sm:$0xf]
      %s2268 = scalar_lea.vmem [#allocation2], 1
      %v2269 = vld [vmem:[%s2268] ss:$2 sm:$0xf]
      %v2270 = vmax.f32 %v2267, %v2269
      %s2271 = scalar_lea.vmem [#allocation2], 10
      %v2272 = vld [vmem:[%s2271] ss:$2 sm:$0xf]
      %s2273 = scalar_lea.vmem [#allocation2], 11
      %v2274 = vld [vmem:[%s2273] ss:$2 sm:$0xf]
      %v2275 = vmax.f32 %v2272, %v2274
      %v2276 = vmax.f32 %v2270, %v2275
      %v2278 = vlaneseq
      %v2279 = vshrl.u32 %v2278, 7
      %v2280 = vsub.s32 0, %v2279
      %v2281 = vrot.slane %v2266, %v2280
      %v2283 = vadd.f32 %v2276, %v2281
      %v2284 = vmax.f32 %v2283, 0.0
      %v2285 = vpack.c.bf16 %v2284, %v2284
      %2286 = vst [vmem:[%s170] sm:$0x3] %v2285
      %s2287 = scalar_lea.vmem [#allocation2], 20
      %v2288 = vld [vmem:[%s2287] ss:$2 sm:$0xf]
      %s2289 = scalar_lea.vmem [#allocation2], 21
      %v2290 = vld [vmem:[%s2289] ss:$2 sm:$0xf]
      %v2291 = vmax.f32 %v2288, %v2290
      %s2292 = scalar_lea.vmem [#allocation2], 30
      %v2293 = vld [vmem:[%s2292] ss:$2 sm:$0xf]
      %s2294 = scalar_lea.vmem [#allocation2], 31
      %v2295 = vld [vmem:[%s2294] ss:$2 sm:$0xf]
      %v2296 = vmax.f32 %v2293, %v2295
      %v2297 = vmax.f32 %v2291, %v2296
      %v2298 = vadd.f32 %v2297, %v2281
      %v2299 = vmax.f32 %v2298, 0.0
      %v2300 = vpack.c.bf16 %v2299, %v2299
      %s2301 = scalar_lea.vmem %s170, 2
      %2302 = vst [vmem:[%s2301] sm:$0x3] %v2300
      %s2303 = scalar_lea.vmem [#allocation2], 40
      %v2304 = vld [vmem:[%s2303] ss:$2 sm:$0xf]
      %s2305 = scalar_lea.vmem [#allocation2], 41
      %v2306 = vld [vmem:[%s2305] ss:$2 sm:$0xf]
      %v2307 = vmax.f32 %v2304, %v2306
      %s2308 = scalar_lea.vmem [#allocation2], 50
      %v2309 = vld [vmem:[%s2308] ss:$2 sm:$0xf]
      %s2310 = scalar_lea.vmem [#allocation2], 51
      %v2311 = vld [vmem:[%s2310] ss:$2 sm:$0xf]
      %v2312 = vmax.f32 %v2309, %v2311
      %v2313 = vmax.f32 %v2307, %v2312
      %v2314 = vadd.f32 %v2313, %v2281
      %v2315 = vmax.f32 %v2314, 0.0
      %v2316 = vpack.c.bf16 %v2315, %v2315
      %s2317 = scalar_lea.vmem %s170, 4
      %2318 = vst [vmem:[%s2317] sm:$0x3] %v2316
      %s2319 = scalar_lea.vmem [#allocation2], 60
      %v2320 = vld [vmem:[%s2319] ss:$2 sm:$0xf]
      %s2321 = scalar_lea.vmem [#allocation2], 61
      %v2322 = vld [vmem:[%s2321] ss:$2 sm:$0xf]
      %v2323 = vmax.f32 %v2320, %v2322
      %s2324 = scalar_lea.vmem [#allocation2], 70
      %v2325 = vld [vmem:[%s2324] ss:$2 sm:$0xf]
      %s2326 = scalar_lea.vmem [#allocation2], 71
      %v2327 = vld [vmem:[%s2326] ss:$2 sm:$0xf]
      %v2328 = vmax.f32 %v2325, %v2327
      %v2329 = vmax.f32 %v2323, %v2328
      %v2330 = vadd.f32 %v2329, %v2281
      %v2331 = vmax.f32 %v2330, 0.0
      %v2332 = vpack.c.bf16 %v2331, %v2331
      %s2333 = scalar_lea.vmem %s170, 6
      %2334 = vst [vmem:[%s2333] sm:$0x3] %v2332
      %p2335 = scmp.lt.s32.totalorder %s14, 1
      %s2336 = scalar_select %p2335, %s14, 1
      %s2337 = smul.addr %s2336, 4
      %s2338 = smul.addr %s2337, 2
      %s2339 = scalar_lea.vmem %s3, %s2338
      // Predicated region
      $region33: #{vgg_forward.5} parent=31 // pred_check
        %p2340 = pneg %p100
      $region34: #{vgg_forward.5} parent=31 // pred_check_branch
        %2342 = sbr.rel (%p2340) target = $region36
      $region35: #{vgg_forward.5} parent=31 // pred_region
        _
      $region36: #{vgg_forward.5} parent=31 // pred_fallthru
        _
    $region32: #{vgg_forward.5} parent=5 // pred_fallthru
      _
    %p2343 = scmp.le.s32.totalorder 2, %s9
    // Predicated region
    $region37: #{vgg_forward.5} parent=5 // pred_check
      %p2344 = pneg %p2343
    $region38: #{vgg_forward.5} parent=5 // pred_check_branch
      %2346 = sbr.rel (%p2344) target = $region40
    $region39: #{vgg_forward.5} parent=5 // pred_region
      %s2347 = ssub.s32 %s9, 2
      // Predicated region
      $region41: #{vgg_forward.5} parent=39 // pred_check
        %p2348 = pneg %p106
      $region42: #{vgg_forward.5} parent=39 // pred_check_branch
        %2350 = sbr.rel (%p2348) target = $region44
      $region43: #{vgg_forward.5} parent=39 // pred_region
        %p2351 = scmp.lt.s32.totalorder %s15, 1
        %s2352 = scalar_select %p2351, %s15, 1
        %s2353 = smul.addr %s2352, 4
        %s2354 = smul.addr %s2353, 2
        %s2355 = scalar_lea.vmem %s3, %s2354
      $region44: #{vgg_forward.5} parent=39 // pred_fallthru
        _
    $region40: #{vgg_forward.5} parent=5 // pred_fallthru
      _
  $region6: #{vgg_forward.5} parent=0 // loop_footer
    %s13 = sadd.s32 1, %s9
  $region7: #{vgg_forward.5} parent=0 // loop_footer_branch
    %8 = sbr.rel target = $region3
  $region8: #{vgg_forward.5} parent=0 // loop_exit
    _

// kernel: vgg_forward.4
$region0: #{vgg_forward.4}
  #allocation0 [shape = 'u32[]', space=smem, size = 0x4, offset = 0x4, fixed_abs, tag = 'smem constant byte address 0x4 - core index']
  #allocation1 [shape = 'u32[144,128]{1,0:T(1,128)}', space=vmem, size = 0x12000, scoped, tag = 'internal scratch']
  #allocation2 [shape = 'f32[288,128]{1,0:T(8,128)}', space=vmem, size = 0x24000, scoped, tag = 'scratch operand']
  %s0 = inlined_call_operand.vmem [shape: bf16[2,342,128], index: 0, kind: input, shape index: {}]
  %s1 = inlined_call_operand.vmem [shape: bf16[9,128,128], index: 1, kind: input, shape index: {}]
  %s2 = inlined_call_operand.vmem [shape: f32[1,128], index: 2, kind: input, shape index: {}]
  %s3 = inlined_call_operand.vmem [shape: bf16[2,8,8,128], index: 3, kind: output, shape index: {}]
  %s4 = sld [smem:[#allocation0]]
  $region45: #{vgg_forward.4} parent=0
    _
  %s6 = ssub.s32 1, %s4
  %s7 = scalar_select 0, %s6, %s4
  loop: start=0, step=1, limit=4
  $region2: #{vgg_forward.4} parent=0 // loop_pre_header
    _
  $region3: #{vgg_forward.4} parent=0 // loop_header
    %s9 = sphi 0, %s13
    %p10 = scmp.ge.s32.totalorder %s9, 4
    %s19 = sphi 0, %s21
    %s22 = sphi 0, %s19
    %s23 = sphi 0, %s22
    %s39 = sphi 0, %s23
    %s43 = sphi 0, %s43
    %s45 = sphi 0, %s43
    %s46 = sphi 0, %s45
    %s60 = sphi 0, %s46
    %s64 = sphi 0, %s64
    %s66 = sphi 0, %s64
    %s67 = sphi 0, %s66
    %s81 = sphi 0, %s67
    %s87 = sphi 0, %s89
    %s90 = sphi 0, %s87
    %s91 = sphi 0, %s90
    %s107 = sphi 0, %s91
  $region4: #{vgg_forward.4} parent=0 // loop_header_branch
    %12 = sbr.rel (%p10) target = $region8
  $region5: #{vgg_forward.4} parent=0 // loop_body
    %s14 = ssub.s32 %s9, 1
    %s15 = ssub.s32 %s9, 2
    %s16 = sadd.s32 %s9, 1
    %s17 = ssub.s32 %s9, %s16
    %p18 = scmp.eq.s32.totalorder %s17, 0
    %s20 = sadd.s32 %s19, 1
    %s21 = scalar_select %p18, %s19, %s20
    %p24 = pneg %p18
    %p25 = scmp.eq.s32.totalorder %s9, 1
    %p26 = por %p24, %p25
    %p27 = scmp.ne.s32.totalorder %s19, %s22
    %p28 = scmp.eq.s32.totalorder %s9, 0
    %p29 = por %p27, %p28
    %p30 = scmp.ne.s32.totalorder %s19, %s22
    %p31 = scmp.eq.s32.totalorder %s14, 1
    %p32 = por %p30, %p31
    %p33 = scmp.ne.s32.totalorder %s22, %s23
    %p34 = scmp.eq.s32.totalorder %s14, 0
    %p35 = por %p33, %p34
    %p36 = scmp.ne.s32.totalorder %s22, %s23
    %p37 = scmp.eq.s32.totalorder %s15, 1
    %p38 = por %p36, %p37
    %p40 = scmp.ne.s32.totalorder %s23, %s39
    %p41 = scmp.eq.s32.totalorder %s15, 0
    %p42 = por %p40, %p41
    %s44 = sadd.s32 %s43, 1
    %p47 = scmp.eq.s32.totalorder %s9, 1
    %p48 = scmp.ne.s32.totalorder %s43, %s45
    %p49 = scmp.eq.s32.totalorder %s9, 0
    %p50 = por %p48, %p49
    %p51 = scmp.ne.s32.totalorder %s43, %s45
    %p52 = scmp.eq.s32.totalorder %s14, 1
    %p53 = por %p51, %p52
    %p54 = scmp.ne.s32.totalorder %s45, %s46
    %p55 = scmp.eq.s32.totalorder %s14, 0
    %p56 = por %p54, %p55
    %p57 = scmp.ne.s32.totalorder %s45, %s46
    %p58 = scmp.eq.s32.totalorder %s15, 1
    %p59 = por %p57, %p58
    %p61 = scmp.ne.s32.totalorder %s46, %s60
    %p62 = scmp.eq.s32.totalorder %s15, 0
    %p63 = por %p61, %p62
    %s65 = sadd.s32 %s64, 1
    %p68 = scmp.eq.s32.totalorder %s9, 1
    %p69 = scmp.ne.s32.totalorder %s64, %s66
    %p70 = scmp.eq.s32.totalorder %s9, 0
    %p71 = por %p69, %p70
    %p72 = scmp.ne.s32.totalorder %s64, %s66
    %p73 = scmp.eq.s32.totalorder %s14, 1
    %p74 = por %p72, %p73
    %p75 = scmp.ne.s32.totalorder %s66, %s67
    %p76 = scmp.eq.s32.totalorder %s14, 0
    %p77 = por %p75, %p76
    %p78 = scmp.ne.s32.totalorder %s66, %s67
    %p79 = scmp.eq.s32.totalorder %s15, 1
    %p80 = por %p78, %p79
    %p82 = scmp.ne.s32.totalorder %s67, %s81
    %p83 = scmp.eq.s32.totalorder %s15, 0
    %p84 = por %p82, %p83
    %s85 = ssub.s32 %s9, %s16
    %p86 = scmp.eq.s32.totalorder %s85, 0
    %s88 = sadd.s32 %s87, 1
    %s89 = scalar_select %p86, %s87, %s88
    %p92 = pneg %p86
    %p93 = scmp.eq.s32.totalorder %s9, 1
    %p94 = por %p92, %p93
    %p95 = scmp.ne.s32.totalorder %s87, %s90
    %p96 = scmp.eq.s32.totalorder %s9, 0
    %p97 = por %p95, %p96
    %p98 = scmp.ne.s32.totalorder %s87, %s90
    %p99 = scmp.eq.s32.totalorder %s14, 1
    %p100 = por %p98, %p99
    %p101 = scmp.ne.s32.totalorder %s90, %s91
    %p102 = scmp.eq.s32.totalorder %s14, 0
    %p103 = por %p101, %p102
    %p104 = scmp.ne.s32.totalorder %s90, %s91
    %p105 = scmp.eq.s32.totalorder %s15, 1
    %p106 = por %p104, %p105
    %p108 = scmp.ne.s32.totalorder %s91, %s107
    %p109 = scmp.eq.s32.totalorder %s15, 0
    %p110 = por %p108, %p109
    %p111 = scmp.le.s32.totalorder 1, %s9
    %p112 = scmp.lt.s32.totalorder %s9, 3
    %p113 = pnand %p111, %p112
    %p114 = pneg %p113
    // Predicated region
    $region9: #{vgg_forward.4} parent=5 // pred_check
      _
    $region10: #{vgg_forward.4} parent=5 // pred_check_branch
      %116 = sbr.rel (%p113) target = $region12
    $region11: #{vgg_forward.4} parent=5 // pred_region
      %s117 = ssub.s32 %s9, 1
      // Predicated region
      $region13: #{vgg_forward.4} parent=11 // pred_check
        %p118 = pneg %p56
      $region14: #{vgg_forward.4} parent=11 // pred_check_branch
        %120 = sbr.rel (%p118) target = $region16
      $region15: #{vgg_forward.4} parent=11 // pred_region
        _
      $region16: #{vgg_forward.4} parent=11 // pred_fallthru
        _
      // Predicated region
      $region17: #{vgg_forward.4} parent=11 // pred_check
        %p121 = pneg %p77
      $region18: #{vgg_forward.4} parent=11 // pred_check_branch
        %123 = sbr.rel (%p121) target = $region20
      $region19: #{vgg_forward.4} parent=11 // pred_region
        _
      $region20: #{vgg_forward.4} parent=11 // pred_fallthru
        _
    $region12: #{vgg_forward.4} parent=5 // pred_fallthru
      _
    %p124 = scmp.lt.s32.totalorder %s9, 2
    // Predicated region
    $region21: #{vgg_forward.4} parent=5 // pred_check
      %p125 = pneg %p124
    $region22: #{vgg_forward.4} parent=5 // pred_check_branch
      %127 = sbr.rel (%p125) target = $region24
    $region23: #{vgg_forward.4} parent=5 // pred_region
      // Predicated region
      $region25: #{vgg_forward.4} parent=23 // pred_check
        %p128 = pneg %p29
      $region26: #{vgg_forward.4} parent=23 // pred_check_branch
        %130 = sbr.rel (%p128) target = $region28
      $region27: #{vgg_forward.4} parent=23 // pred_region
        %p131 = scmp.lt.s32.totalorder %s9, 1
        %s132 = scalar_select %p131, %s9, 1
        %s133 = smul.addr %s132, 43
        %s134 = smul.addr %s133, 4
        %s135 = scalar_lea.vmem %s0, %s134
      $region28: #{vgg_forward.4} parent=23 // pred_fallthru
        _
    $region24: #{vgg_forward.4} parent=5 // pred_fallthru
      _
    %p136 = scmp.le.s32.totalorder 1, %s9
    %p137 = scmp.lt.s32.totalorder %s9, 3
    %p138 = pnand %p136, %p137
    %p139 = pneg %p138
    // Predicated region
    $region29: #{vgg_forward.4} parent=5 // pred_check
      _
    $region30: #{vgg_forward.4} parent=5 // pred_check_branch
      %141 = sbr.rel (%p138) target = $region32
    $region31: #{vgg_forward.4} parent=5 // pred_region
      %s142 = ssub.s32 %s9, 1
      %p143 = scmp.lt.s32.totalorder %s14, 1
      %s144 = scalar_select %p143, %s14, 1
      %s145 = smul.addr %s144, 43
      %s146 = smul.addr %s145, 4
      %s147 = scalar_lea.vmem %s0, %s146
      %p148 = pneg %p35
      %p149 = pneg %p32
      %p150 = pneg %p56
      %p151 = pneg %p53
      %p152 = pneg %p77
      %p153 = pneg %p74
      %p154 = pneg %p103
      %p155 = pneg %p100
      %p156 = scmp.lt.s32.totalorder %s14, 1
      %s157 = scalar_select %p156, %s14, 1
      %s158 = smul.addr %s157, 8
      %s159 = smul.addr %s158, 4
      %s160 = scalar_lea.vmem %s3, %s159
      %p161 = scmp.lt.s32.totalorder %s14, 1
      %s162 = scalar_select %p161, %s14, 1
      %s163 = smul.addr %s162, 43
      %s164 = smul.addr %s163, 4
      %s165 = scalar_lea.vmem %s0, %s164
      %p166 = scmp.lt.s32.totalorder %s14, 1
      %s167 = scalar_select %p166, %s14, 1
      %s168 = smul.addr %s167, 8
      %s169 = smul.addr %s168, 4
      %s170 = scalar_lea.vmem %s3, %s169
      %v172 = vld [vmem:[%s165] sm:$0xf]
      %v173 = vld [vmem:[%s165 + $0x4] sm:$0xf]
      %v174 = vld [vmem:[%s165 + $0x8] sm:$0xf]
      %v175 = vld [vmem:[%s165 + $0xc] sm:$0xf]
      %v176 = vld [vmem:[%s165 + $0x10] sm:$0xf]
      %v177 = vld [vmem:[%s165 + $0x14] sm:$0xf]
      %v178 = vld [vmem:[%s165 + $0x18] sm:$0xf]
      %v179 = vld [vmem:[%s165 + $0x1c] sm:$0xf]
      %v180 = vld [vmem:[%s165 + $0x20] sm:$0xf]
      %v181 = vld [vmem:[%s165 + $0x24] sm:$0xf]
      %v182 = vld [vmem:[%s165 + $0x28] sm:$0xf]
      %v183 = vld [vmem:[%s165 + $0x2c] sm:$0xf]
      %v184 = vld [vmem:[%s165 + $0x30] sm:$0xf]
      %v185 = vld [vmem:[%s165 + $0x34] sm:$0xf]
      %v186 = vld [vmem:[%s165 + $0x38] sm:$0xf]
      %v187 = vld [vmem:[%s165 + $0x3c] sm:$0xf]
      %v188 = vld [vmem:[%s165 + $0x40] sm:$0xf]
      %v189 = vld [vmem:[%s165 + $0x44] sm:$0xf]
      %v190 = vld [vmem:[%s165 + $0x48] sm:$0xf]
      %v191 = vld [vmem:[%s165 + $0x4c] sm:$0xf]
      %v192 = vld [vmem:[%s165 + $0x50] sm:$0xf]
      %v193 = vld [vmem:[%s165 + $0x54] sm:$0xf]
      %v194 = vld [vmem:[%s165 + $0x58] sm:$0xf]
      %v195 = vld [vmem:[%s165 + $0x5c] sm:$0xf]
      %v196 = vld [vmem:[%s165 + $0x60] sm:$0xf]
      %v197 = vld [vmem:[%s165 + $0x64] sm:$0xf]
      %v198 = vld [vmem:[%s165 + $0x68] sm:$0xf]
      %v199 = vld [vmem:[%s165 + $0x6c] sm:$0xf]
      %v200 = vld [vmem:[%s165 + $0x70] sm:$0xf]
      %v201 = vld [vmem:[%s165 + $0x74] sm:$0xf]
      %v202 = vld [vmem:[%s165 + $0x78] sm:$0xf]
      %v203 = vld [vmem:[%s165 + $0x7c] sm:$0xf]
      %v204 = vld [vmem:[%s165 + $0x80] sm:$0xf]
      %v205 = vld [vmem:[%s165 + $0x84] sm:$0xf]
      %v206 = vld [vmem:[%s165 + $0x88] sm:$0xf]
      %v207 = vld [vmem:[%s165 + $0x8c] sm:$0xf]
      %v208 = vld [vmem:[%s1] sm:$0xf]
      %v209 = vld [vmem:[%s1 + $0x4] sm:$0xf]
      %v210 = vld [vmem:[%s1 + $0x8] sm:$0xf]
      %v211 = vld [vmem:[%s1 + $0xc] sm:$0xf]
      %v212 = vld [vmem:[%s1 + $0x10] sm:$0xf]
      %v213 = vld [vmem:[%s1 + $0x14] sm:$0xf]
      %v214 = vld [vmem:[%s1 + $0x18] sm:$0xf]
      %v215 = vld [vmem:[%s1 + $0x1c] sm:$0xf]
      %v216 = vld [vmem:[%s1 + $0x20] sm:$0xf]
      %v217 = vld [vmem:[%s1 + $0x24] sm:$0xf]
      %v218 = vld [vmem:[%s1 + $0x28] sm:$0xf]
      %v219 = vld [vmem:[%s1 + $0x2c] sm:$0xf]
      %v220 = vld [vmem:[%s1 + $0x30] sm:$0xf]
      %v221 = vld [vmem:[%s1 + $0x34] sm:$0xf]
      %v222 = vld [vmem:[%s1 + $0x38] sm:$0xf]
      %v223 = vld [vmem:[%s1 + $0x3c] sm:$0xf]
      %v260 = vunpack.c.l.b16 %v172
      %v261 = vunpack.c.l.b16 %v173
      %v262 = vunpack.c.l.b16 %v174
      %v263 = vunpack.c.l.b16 %v175
      %v264 = vunpack.c.l.b16 %v176
      %v265 = vunpack.c.l.b16 %v177
      %v266 = vunpack.c.l.b16 %v178
      %v267 = vunpack.c.l.b16 %v179
      %v268 = vunpack.c.l.b16 %v180
      %v269 = vunpack.c.l.b16 %v181
      %v270 = vunpack.c.l.b16 %v182
      %v271 = vunpack.c.l.b16 %v183
      %v272 = vunpack.c.l.b16 %v184
      %v273 = vunpack.c.l.b16 %v185
      %v274 = vunpack.c.l.b16 %v186
      %v275 = vunpack.c.l.b16 %v187
      %v276 = vunpack.c.l.b16 %v188
      %v277 = vunpack.c.l.b16 %v189
      %v278 = vunpack.c.l.b16 %v190
      %v279 = vunpack.c.l.b16 %v191
      %v280 = vunpack.c.l.b16 %v192
      %v281 = vunpack.c.l.b16 %v193
      %v282 = vunpack.c.l.b16 %v194
      %v283 = vunpack.c.l.b16 %v195
      %v284 = vunpack.c.l.b16 %v196
      %v285 = vunpack.c.l.b16 %v197
      %v286 = vunpack.c.l.b16 %v198
      %v287 = vunpack.c.l.b16 %v199
      %v288 = vunpack.c.l.b16 %v200
      %v289 = vunpack.c.l.b16 %v201
      %v290 = vunpack.c.l.b16 %v202
      %v291 = vunpack.c.l.b16 %v203
      %v292 = vunpack.c.l.b16 %v204
      %v293 = vunpack.c.l.b16 %v205
      %v294 = vunpack.c.l.b16 %v206
      %v295 = vunpack.c.l.b16 %v207
      %v296 = vpack.c.b16 %v261, %v260
      %v297 = vpack.c.b16 %v263, %v262
      %v298 = vpack.c.b16 %v265, %v264
      %v299 = vpack.c.b16 %v267, %v266
      %v300 = vpack.c.b16 %v269, %v268
      %v301 = vpack.c.b16 %v271, %v270
      %v302 = vpack.c.b16 %v273, %v272
      %v303 = vpack.c.b16 %v275, %v274
      %v304 = vpack.c.b16 %v277, %v276
      %v305 = vpack.c.b16 %v279, %v278
      %v306 = vpack.c.b16 %v281, %v280
      %v307 = vpack.c.b16 %v283, %v282
      %v308 = vpack.c.b16 %v285, %v284
      %v309 = vpack.c.b16 %v287, %v286
      %v310 = vpack.c.b16 %v289, %v288
      %v311 = vpack.c.b16 %v291, %v290
      %v312 = vpack.c.b16 %v293, %v292
      %v313 = vpack.c.b16 %v295, %v294
      %v348 = vunpack.c.l.b16 %v208
      %v349 = vunpack.c.l.b16 %v209
      %v350 = vunpack.c.l.b16 %v210
      %v351 = vunpack.c.l.b16 %v211
      %v352 = vunpack.c.l.b16 %v212
      %v353 = vunpack.c.l.b16 %v213
      %v354 = vunpack.c.l.b16 %v214
      %v355 = vunpack.c.l.b16 %v215
      %v356 = vunpack.c.l.b16 %v216
      %v357 = vunpack.c.l.b16 %v217
      %v358 = vunpack.c.l.b16 %v218
      %v359 = vunpack.c.l.b16 %v219
      %v360 = vunpack.c.l.b16 %v220
      %v361 = vunpack.c.l.b16 %v221
      %v362 = vunpack.c.l.b16 %v222
      %v363 = vunpack.c.l.b16 %v223
      %v364 = vpack.c.b16 %v349, %v348
      %v365 = vpack.c.b16 %v351, %v350
      %v366 = vpack.c.b16 %v353, %v352
      %v367 = vpack.c.b16 %v355, %v354
      %v368 = vpack.c.b16 %v357, %v356
      %v369 = vpack.c.b16 %v359, %v358
      %v370 = vpack.c.b16 %v361, %v360
      %v371 = vpack.c.b16 %v363, %v362
      %380 = vmatprep.subr.bf16.mxu0 0
      %381 = vmatpush1.bf16.msra.mxu0 %v364
      %382 = vmatprep.subr.bf16.mxu0 0
      %383 = vmatpush1.bf16.msra.mxu0 %v365
      %384 = vmatprep.subr.bf16.mxu0 0
      %385 = vmatpush1.bf16.msra.mxu0 %v366
      %386 = vmatprep.subr.bf16.mxu0 0
      %387 = vmatpush1.bf16.msra.mxu0 %v367
      %388 = vmatprep.subr.bf16.mxu0 0
      %389 = vmatpush1.bf16.msra.mxu0 %v368
      %390 = vmatprep.subr.bf16.mxu0 0
      %391 = vmatpush1.bf16.msra.mxu0 %v369
      %392 = vmatprep.subr.bf16.mxu0 0
      %393 = vmatpush1.bf16.msra.mxu0 %v370
      %394 = vmatprep.subr.bf16.mxu0 0
      %395 = vmatpush1.bf16.msra.mxu0 %v371
      %396 = vmatprep.subr.bf16.mxu0 0
      %397 = vmatpush1.bf16.msra.mxu0 0
      %398 = vmatprep.subr.bf16.mxu0 0
      %399 = vmatpush1.bf16.msra.mxu0 0
      %400 = vmatprep.subr.bf16.mxu0 0
      %401 = vmatpush1.bf16.msra.mxu0 0
      %402 = vmatprep.subr.bf16.mxu0 0
      %403 = vmatpush1.bf16.msra.mxu0 0
      %404 = vmatprep.subr.bf16.mxu0 0
      %405 = vmatpush1.bf16.msra.mxu0 0
      %406 = vmatprep.subr.bf16.mxu0 0
      %407 = vmatpush1.bf16.msra.mxu0 0
      %408 = vmatprep.subr.bf16.mxu0 0
      %409 = vmatpush1.bf16.msra.mxu0 0
      %410 = vmatprep.subr.bf16.mxu0 0
      %411 = vmatpush1.bf16.msra.mxu0 0
      %412 = vmatprep.mubr.bf16.mxu0 0
      %413 = vmatmul.mubr.bf16.gmra.mrb[0].mxu0 %v296
      %v414 = vpop.f32.mrb[0].mxu0
      %v415 = vadd.f32 0.0, %v414
      %v416 = vpop.f32.mrb[0].mxu0
      %v417 = vpop.f32.mrb[0].mxu0
      %v418 = vadd.f32 0.0, %v417
      %v419 = vpop.f32.mrb[0].mxu0
      %420 = vmatprep.mubr.bf16.mxu0 0
      %421 = vmatmul.mubr.bf16.gmra.mrb[0].mxu0 %v297
      %v422 = vpop.f32.mrb[0].mxu0
      %v423 = vadd.f32 0.0, %v422
      %v424 = vpop.f32.mrb[0].mxu0
      %v425 = vpop.f32.mrb[0].mxu0
      %v426 = vadd.f32 0.0, %v425
      %v427 = vpop.f32.mrb[0].mxu0
      %428 = vmatprep.mubr.bf16.mxu0 0
      %429 = vmatmul.mubr.bf16.gmra.mrb[0].mxu0 %v298
      %v430 = vpop.f32.mrb[0].mxu0
      %v431 = vadd.f32 0.0, %v430
      %v432 = vpop.f32.mrb[0].mxu0
      %v433 = vpop.f32.mrb[0].mxu0
      %v434 = vadd.f32 0.0, %v433
      %v435 = vpop.f32.mrb[0].mxu0
      %436 = vmatprep.mubr.bf16.mxu0 0
      %437 = vmatmul.mubr.bf16.gmra.mrb[0].mxu0 %v299
      %v438 = vpop.f32.mrb[0].mxu0
      %v439 = vadd.f32 0.0, %v438
      %v440 = vpop.f32.mrb[0].mxu0
      %v441 = vpop.f32.mrb[0].mxu0
      %v442 = vadd.f32 0.0, %v441
      %v443 = vpop.f32.mrb[0].mxu0
      %444 = vmatprep.mubr.bf16.mxu0 0
      %445 = vmatmul.mubr.bf16.gmra.mrb[0].mxu0 %v300
      %v446 = vpop.f32.mrb[0].mxu0
      %v447 = vadd.f32 0.0, %v446
      %v448 = vpop.f32.mrb[0].mxu0
      %v449 = vpop.f32.mrb[0].mxu0
      %v450 = vadd.f32 0.0, %v449
      %v451 = vpop.f32.mrb[0].mxu0
      %452 = vmatprep.mubr.bf16.mxu0 0
      %453 = vmatmul.mubr.bf16.gmra.mrb[0].mxu0 %v301
      %v454 = vpop.f32.mrb[0].mxu0
      %v455 = vadd.f32 0.0, %v454
      %v456 = vpop.f32.mrb[0].mxu0
      %v457 = vpop.f32.mrb[0].mxu0
      %v458 = vadd.f32 0.0, %v457
      %v459 = vpop.f32.mrb[0].mxu0
      %460 = vmatprep.mubr.bf16.mxu0 0
      %461 = vmatmul.mubr.bf16.gmra.mrb[0].mxu0 %v302
      %v462 = vpop.f32.mrb[0].mxu0
      %v463 = vadd.f32 0.0, %v462
      %v464 = vpop.f32.mrb[0].mxu0
      %v465 = vpop.f32.mrb[0].mxu0
      %v466 = vadd.f32 0.0, %v465
      %v467 = vpop.f32.mrb[0].mxu0
      %468 = vmatprep.mubr.bf16.mxu0 0
      %469 = vmatmul.mubr.bf16.gmra.mrb[0].mxu0 %v303
      %v470 = vpop.f32.mrb[0].mxu0
      %v471 = vadd.f32 0.0, %v470
      %v472 = vpop.f32.mrb[0].mxu0
      %v473 = vpop.f32.mrb[0].mxu0
      %v474 = vadd.f32 0.0, %v473
      %v475 = vpop.f32.mrb[0].mxu0
      %476 = vmatprep.mubr.bf16.mxu0 0
      %477 = vmatmul.mubr.bf16.gmra.mrb[0].mxu0 %v304
      %v478 = vpop.f32.mrb[0].mxu0
      %v479 = vadd.f32 0.0, %v478
      %v480 = vpop.f32.mrb[0].mxu0
      %v481 = vpop.f32.mrb[0].mxu0
      %v482 = vadd.f32 0.0, %v481
      %v483 = vpop.f32.mrb[0].mxu0
      %484 = vmatprep.mubr.bf16.mxu0 0
      %485 = vmatmul.mubr.bf16.gmra.mrb[0].mxu0 %v305
      %v486 = vpop.f32.mrb[0].mxu0
      %v487 = vadd.f32 0.0, %v486
      %v488 = vpop.f32.mrb[0].mxu0
      %v489 = vpop.f32.mrb[0].mxu0
      %v490 = vadd.f32 0.0, %v489
      %v491 = vpop.f32.mrb[0].mxu0
      %492 = vmatprep.mubr.bf16.mxu0 0
      %493 = vmatmul.mubr.bf16.gmra.mrb[0].mxu0 %v306
      %v494 = vpop.f32.mrb[0].mxu0
      %v495 = vadd.f32 0.0, %v494
      %v496 = vpop.f32.mrb[0].mxu0
      %v497 = vpop.f32.mrb[0].mxu0
      %v498 = vadd.f32 0.0, %v497
      %v499 = vpop.f32.mrb[0].mxu0
      %500 = vmatprep.mubr.bf16.mxu0 0
      %501 = vmatmul.mubr.bf16.gmra.mrb[0].mxu0 %v307
      %v502 = vpop.f32.mrb[0].mxu0
      %v503 = vadd.f32 0.0, %v502
      %v504 = vpop.f32.mrb[0].mxu0
      %v505 = vpop.f32.mrb[0].mxu0
      %v506 = vadd.f32 0.0, %v505
      %v507 = vpop.f32.mrb[0].mxu0
      %508 = vmatprep.mubr.bf16.mxu0 0
      %509 = vmatmul.mubr.bf16.gmra.mrb[0].mxu0 %v308
      %v510 = vpop.f32.mrb[0].mxu0
      %v511 = vadd.f32 0.0, %v510
      %v512 = vpop.f32.mrb[0].mxu0
      %v513 = vpop.f32.mrb[0].mxu0
      %v514 = vadd.f32 0.0, %v513
      %v515 = vpop.f32.mrb[0].mxu0
      %516 = vmatprep.mubr.bf16.mxu0 0
      %517 = vmatmul.mubr.bf16.gmra.mrb[0].mxu0 %v309
      %v518 = vpop.f32.mrb[0].mxu0
      %v519 = vadd.f32 0.0, %v518
      %v520 = vpop.f32.mrb[0].mxu0
      %v521 = vpop.f32.mrb[0].mxu0
      %v522 = vadd.f32 0.0, %v521
      %v523 = vpop.f32.mrb[0].mxu0
      %524 = vmatprep.mubr.bf16.mxu0 0
      %525 = vmatmul.mubr.bf16.gmra.mrb[0].mxu0 %v310
      %v526 = vpop.f32.mrb[0].mxu0
      %v527 = vadd.f32 0.0, %v526
      %v528 = vpop.f32.mrb[0].mxu0
      %v529 = vpop.f32.mrb[0].mxu0
      %v530 = vadd.f32 0.0, %v529
      %v531 = vpop.f32.mrb[0].mxu0
      %532 = vmatprep.mubr.bf16.mxu0 0
      %533 = vmatmul.mubr.bf16.gmra.mrb[0].mxu0 %v311
      %v534 = vpop.f32.mrb[0].mxu0
      %v535 = vadd.f32 0.0, %v534
      %v536 = vpop.f32.mrb[0].mxu0
      %v537 = vpop.f32.mrb[0].mxu0
      %v538 = vadd.f32 0.0, %v537
      %v539 = vpop.f32.mrb[0].mxu0
      %540 = vmatprep.mubr.bf16.mxu0 0
      %541 = vmatmul.mubr.bf16.gmra.mrb[0].mxu0 %v312
      %v542 = vpop.f32.mrb[0].mxu0
      %v543 = vadd.f32 0.0, %v542
      %v544 = vpop.f32.mrb[0].mxu0
      %v545 = vpop.f32.mrb[0].mxu0
      %v546 = vadd.f32 0.0, %v545
      %v547 = vpop.f32.mrb[0].mxu0
      %548 = vmatprep.mubr.bf16.mxu0 0
      %549 = vmatmul.mubr.bf16.gmra.mrb[0].mxu0 %v313
      %v550 = vpop.f32.mrb[0].mxu0
      %v551 = vadd.f32 0.0, %v550
      %v552 = vpop.f32.mrb[0].mxu0
      %v553 = vpop.f32.mrb[0].mxu0
      %v554 = vadd.f32 0.0, %v553
      %v555 = vpop.f32.mrb[0].mxu0
      %556 = vdwg.mxu0
      %557 = vst [vmem:[#allocation2] sm:$0xff] %v415
      %558 = vst [vmem:[#allocation2 + $0x8] sm:$0xff] %v418
      %559 = vst [vmem:[#allocation2 + $0x10] sm:$0xff] %v423
      %560 = vst [vmem:[#allocation2 + $0x18] sm:$0xff] %v426
      %561 = vst [vmem:[#allocation2 + $0x20] sm:$0xff] %v431
      %562 = vst [vmem:[#allocation2 + $0x28] sm:$0xff] %v434
      %563 = vst [vmem:[#allocation2 + $0x30] sm:$0xff] %v439
      %564 = vst [vmem:[#allocation2 + $0x38] sm:$0xff] %v442
      %565 = vst [vmem:[#allocation2 + $0x40] sm:$0xff] %v447
      %566 = vst [vmem:[#allocation2 + $0x48] sm:$0xff] %v450
      %567 = vst [vmem:[#allocation2 + $0x50] sm:$0xff] %v455
      %568 = vst [vmem:[#allocation2 + $0x58] sm:$0xff] %v458
      %569 = vst [vmem:[#allocation2 + $0x60] sm:$0xff] %v463
      %570 = vst [vmem:[#allocation2 + $0x68] sm:$0xff] %v466
      %571 = vst [vmem:[#allocation2 + $0x70] sm:$0xff] %v471
      %572 = vst [vmem:[#allocation2 + $0x78] sm:$0xff] %v474
      %573 = vst [vmem:[#allocation2 + $0x80] sm:$0xff] %v479
      %574 = vst [vmem:[#allocation2 + $0x88] sm:$0xff] %v482
      %575 = vst [vmem:[#allocation2 + $0x90] sm:$0xff] %v487
      %576 = vst [vmem:[#allocation2 + $0x98] sm:$0xff] %v490
      %577 = vst [vmem:[#allocation2 + $0xa0] sm:$0xff] %v495
      %578 = vst [vmem:[#allocation2 + $0xa8] sm:$0xff] %v498
      %579 = vst [vmem:[#allocation2 + $0xb0] sm:$0xff] %v503
      %580 = vst [vmem:[#allocation2 + $0xb8] sm:$0xff] %v506
      %581 = vst [vmem:[#allocation2 + $0xc0] sm:$0xff] %v511
      %582 = vst [vmem:[#allocation2 + $0xc8] sm:$0xff] %v514
      %583 = vst [vmem:[#allocation2 + $0xd0] sm:$0xff] %v519
      %584 = vst [vmem:[#allocation2 + $0xd8] sm:$0xff] %v522
      %585 = vst [vmem:[#allocation2 + $0xe0] sm:$0xff] %v527
      %586 = vst [vmem:[#allocation2 + $0xe8] sm:$0xff] %v530
      %587 = vst [vmem:[#allocation2 + $0xf0] sm:$0xff] %v535
      %588 = vst [vmem:[#allocation2 + $0xf8] sm:$0xff] %v538
      %589 = vst [vmem:[#allocation2 + $0x100] sm:$0xff] %v543
      %590 = vst [vmem:[#allocation2 + $0x108] sm:$0xff] %v546
      %591 = vst [vmem:[#allocation2 + $0x110] sm:$0xff] %v551
      %592 = vst [vmem:[#allocation2 + $0x118] sm:$0xff] %v554
      %v593 = vld [vmem:[%s165] sm:$0xf]
      %v594 = vld [vmem:[%s165 + $0x4] sm:$0xf]
      %v595 = vld [vmem:[%s165 + $0x8] sm:$0xf]
      %v596 = vld [vmem:[%s165 + $0xc] sm:$0xf]
      %v597 = vld [vmem:[%s165 + $0x10] sm:$0xf]
      %v598 = vld [vmem:[%s165 + $0x14] sm:$0xf]
      %v599 = vld [vmem:[%s165 + $0x18] sm:$0xf]
      %v600 = vld [vmem:[%s165 + $0x1c] sm:$0xf]
      %v601 = vld [vmem:[%s165 + $0x20] sm:$0xf]
      %v602 = vld [vmem:[%s165 + $0x24] sm:$0xf]
      %v603 = vld [vmem:[%s165 + $0x28] sm:$0xf]
      %v604 = vld [vmem:[%s165 + $0x2c] sm:$0xf]
      %v605 = vld [vmem:[%s165 + $0x30] sm:$0xf]
      %v606 = vld [vmem:[%s165 + $0x34] sm:$0xf]
      %v607 = vld [vmem:[%s165 + $0x38] sm:$0xf]
      %v608 = vld [vmem:[%s165 + $0x3c] sm:$0xf]
      %v609 = vld [vmem:[%s165 + $0x40] sm:$0xf]
      %v610 = vld [vmem:[%s165 + $0x44] sm:$0xf]
      %v611 = vld [vmem:[%s165 + $0x48] sm:$0xf]
      %v612 = vld [vmem:[%s165 + $0x4c] sm:$0xf]
      %v613 = vld [vmem:[%s165 + $0x50] sm:$0xf]
      %v614 = vld [vmem:[%s165 + $0x54] sm:$0xf]
      %v615 = vld [vmem:[%s165 + $0x58] sm:$0xf]
      %v616 = vld [vmem:[%s165 + $0x5c] sm:$0xf]
      %v617 = vld [vmem:[%s165 + $0x60] sm:$0xf]
      %v618 = vld [vmem:[%s165 + $0x64] sm:$0xf]
      %v619 = vld [vmem:[%s165 + $0x68] sm:$0xf]
      %v620 = vld [vmem:[%s165 + $0x6c] sm:$0xf]
      %v621 = vld [vmem:[%s165 + $0x70] sm:$0xf]
      %v622 = vld [vmem:[%s165 + $0x74] sm:$0xf]
      %v623 = vld [vmem:[%s165 + $0x78] sm:$0xf]
      %v624 = vld [vmem:[%s165 + $0x7c] sm:$0xf]
      %v625 = vld [vmem:[%s165 + $0x80] sm:$0xf]
      %v626 = vld [vmem:[%s165 + $0x84] sm:$0xf]
      %v627 = vld [vmem:[%s165 + $0x88] sm:$0xf]
      %v628 = vld [vmem:[%s165 + $0x8c] sm:$0xf]
      %v629 = vld [vmem:[%s165 + $0x90] sm:$0x1]
      %s630 = scalar_lea.vmem %s1, 64
      %v631 = vld [vmem:[%s630] sm:$0xf]
      %v632 = vld [vmem:[%s630 + $0x4] sm:$0xf]
      %v633 = vld [vmem:[%s630 + $0x8] sm:$0xf]
      %v634 = vld [vmem:[%s630 + $0xc] sm:$0xf]
      %v635 = vld [vmem:[%s630 + $0x10] sm:$0xf]
      %v636 = vld [vmem:[%s630 + $0x14] sm:$0xf]
      %v637 = vld [vmem:[%s630 + $0x18] sm:$0xf]
      %v638 = vld [vmem:[%s630 + $0x1c] sm:$0xf]
      %v639 = vld [vmem:[%s630 + $0x20] sm:$0xf]
      %v640 = vld [vmem:[%s630 + $0x24] sm:$0xf]
      %v641 = vld [vmem:[%s630 + $0x28] sm:$0xf]
      %v642 = vld [vmem:[%s630 + $0x2c] sm:$0xf]
      %v643 = vld [vmem:[%s630 + $0x30] sm:$0xf]
      %v644 = vld [vmem:[%s630 + $0x34] sm:$0xf]
      %v645 = vld [vmem:[%s630 + $0x38] sm:$0xf]
      %v646 = vld [vmem:[%s630 + $0x3c] sm:$0xf]
      %v684 = vunpack.c.l.b16 %v593
      %v685 = vunpack.c.l.b16 %v594
      %v686 = vunpack.c.l.b16 %v595
      %v687 = vunpack.c.l.b16 %v596
      %v688 = vunpack.c.l.b16 %v597
      %v689 = vunpack.c.l.b16 %v598
      %v690 = vunpack.c.l.b16 %v599
      %v691 = vunpack.c.l.b16 %v600
      %v692 = vunpack.c.l.b16 %v601
      %v693 = vunpack.c.l.b16 %v602
      %v694 = vunpack.c.l.b16 %v603
      %v695 = vunpack.c.l.b16 %v604
      %v696 = vunpack.c.l.b16 %v605
      %v697 = vunpack.c.l.b16 %v606
      %v698 = vunpack.c.l.b16 %v607
      %v699 = vunpack.c.l.b16 %v608
      %v700 = vunpack.c.l.b16 %v609
      %v701 = vunpack.c.l.b16 %v610
      %v702 = vunpack.c.l.b16 %v611
      %v703 = vunpack.c.l.b16 %v612
      %v704 = vunpack.c.l.b16 %v613
      %v705 = vunpack.c.l.b16 %v614
      %v706 = vunpack.c.l.b16 %v615
      %v707 = vunpack.c.l.b16 %v616
      %v708 = vunpack.c.l.b16 %v617
      %v709 = vunpack.c.l.b16 %v618
      %v710 = vunpack.c.l.b16 %v619
      %v711 = vunpack.c.l.b16 %v620
      %v712 = vunpack.c.l.b16 %v621
      %v713 = vunpack.c.l.b16 %v622
      %v714 = vunpack.c.l.b16 %v623
      %v715 = vunpack.c.l.b16 %v624
      %v716 = vunpack.c.l.b16 %v625
      %v717 = vunpack.c.l.b16 %v626
      %v718 = vunpack.c.l.b16 %v627
      %v719 = vunpack.c.l.b16 %v628
      %v720 = vunpack.c.l.b16 %v629
      %v721 = vpack.c.b16 %v685, %v684
      %v722 = vpack.c.b16 %v687, %v686
      %v723 = vpack.c.b16 %v689, %v688
      %v724 = vpack.c.b16 %v691, %v690
      %v725 = vpack.c.b16 %v693, %v692
      %v726 = vpack.c.b16 %v695, %v694
      %v727 = vpack.c.b16 %v697, %v696
      %v728 = vpack.c.b16 %v699, %v698
      %v729 = vpack.c.b16 %v701, %v700
      %v730 = vpack.c.b16 %v703, %v702
      %v731 = vpack.c.b16 %v705, %v704
      %v732 = vpack.c.b16 %v707, %v706
      %v733 = vpack.c.b16 %v709, %v708
      %v734 = vpack.c.b16 %v711, %v710
      %v735 = vpack.c.b16 %v713, %v712
      %v736 = vpack.c.b16 %v715, %v714
      %v737 = vpack.c.b16 %v717, %v716
      %v738 = vpack.c.b16 %v719, %v718
      %v739 = vpack.c.b16 %v720, %v720
      %vm740 = vsmask.f32 7424
      %v742 = vshrl.u32 %v721, 16
      %v744 = vshll.u32 %v721, 16
      %v746 = vrot.slane %v744, 1
      %v747 = vor.u32 %v742, %v746
      %v749 = vshll.u32 %v722, 16
      %v751 = vrot.slane %v749, 1
      %v752 = vsel %vm740, %v747, %v751
      %v753 = vshrl.u32 %v722, 16
      %v755 = vor.u32 %v753, %v751
      %v757 = vshll.u32 %v723, 16
      %v759 = vrot.slane %v757, 1
      %v760 = vsel %vm740, %v755, %v759
      %v761 = vshrl.u32 %v723, 16
      %v763 = vor.u32 %v761, %v759
      %v765 = vshll.u32 %v724, 16
      %v767 = vrot.slane %v765, 1
      %v768 = vsel %vm740, %v763, %v767
      %v769 = vshrl.u32 %v724, 16
      %v771 = vor.u32 %v769, %v767
      %v773 = vshll.u32 %v725, 16
      %v775 = vrot.slane %v773, 1
      %v776 = vsel %vm740, %v771, %v775
      %v777 = vshrl.u32 %v725, 16
      %v779 = vor.u32 %v777, %v775
      %v781 = vshll.u32 %v726, 16
      %v783 = vrot.slane %v781, 1
      %v784 = vsel %vm740, %v779, %v783
      %v785 = vshrl.u32 %v726, 16
      %v787 = vor.u32 %v785, %v783
      %v789 = vshll.u32 %v727, 16
      %v791 = vrot.slane %v789, 1
      %v792 = vsel %vm740, %v787, %v791
      %v793 = vshrl.u32 %v727, 16
      %v795 = vor.u32 %v793, %v791
      %v797 = vshll.u32 %v728, 16
      %v799 = vrot.slane %v797, 1
      %v800 = vsel %vm740, %v795, %v799
      %v801 = vshrl.u32 %v728, 16
      %v803 = vor.u32 %v801, %v799
      %v805 = vshll.u32 %v729, 16
      %v807 = vrot.slane %v805, 1
      %v808 = vsel %vm740, %v803, %v807
      %v809 = vshrl.u32 %v729, 16
      %v811 = vor.u32 %v809, %v807
      %v813 = vshll.u32 %v730, 16
      %v815 = vrot.slane %v813, 1
      %v816 = vsel %vm740, %v811, %v815
      %v817 = vshrl.u32 %v730, 16
      %v819 = vor.u32 %v817, %v815
      %v821 = vshll.u32 %v731, 16
      %v823 = vrot.slane %v821, 1
      %v824 = vsel %vm740, %v819, %v823
      %v825 = vshrl.u32 %v731, 16
      %v827 = vor.u32 %v825, %v823
      %v829 = vshll.u32 %v732, 16
      %v831 = vrot.slane %v829, 1
      %v832 = vsel %vm740, %v827, %v831
      %v833 = vshrl.u32 %v732, 16
      %v835 = vor.u32 %v833, %v831
      %v837 = vshll.u32 %v733, 16
      %v839 = vrot.slane %v837, 1
      %v840 = vsel %vm740, %v835, %v839
      %v841 = vshrl.u32 %v733, 16
      %v843 = vor.u32 %v841, %v839
      %v845 = vshll.u32 %v734, 16
      %v847 = vrot.slane %v845, 1
      %v848 = vsel %vm740, %v843, %v847
      %v849 = vshrl.u32 %v734, 16
      %v851 = vor.u32 %v849, %v847
      %v853 = vshll.u32 %v735, 16
      %v855 = vrot.slane %v853, 1
      %v856 = vsel %vm740, %v851, %v855
      %v857 = vshrl.u32 %v735, 16
      %v859 = vor.u32 %v857, %v855
      %v861 = vshll.u32 %v736, 16
      %v863 = vrot.slane %v861, 1
      %v864 = vsel %vm740, %v859, %v863
      %v865 = vshrl.u32 %v736, 16
      %v867 = vor.u32 %v865, %v863
      %v869 = vshll.u32 %v737, 16
      %v871 = vrot.slane %v869, 1
      %v872 = vsel %vm740, %v867, %v871
      %v873 = vshrl.u32 %v737, 16
      %v875 = vor.u32 %v873, %v871
      %v877 = vshll.u32 %v738, 16
      %v879 = vrot.slane %v877, 1
      %v880 = vsel %vm740, %v875, %v879
      %v881 = vshrl.u32 %v738, 16
      %v883 = vor.u32 %v881, %v879
      %v885 = vshll.u32 %v739, 16
      %v887 = vrot.slane %v885, 1
      %v888 = vsel %vm740, %v883, %v887
      %v923 = vunpack.c.l.b16 %v631
      %v924 = vunpack.c.l.b16 %v632
      %v925 = vunpack.c.l.b16 %v633
      %v926 = vunpack.c.l.b16 %v634
      %v927 = vunpack.c.l.b16 %v635
      %v928 = vunpack.c.l.b16 %v636
      %v929 = vunpack.c.l.b16 %v637
      %v930 = vunpack.c.l.b16 %v638
      %v931 = vunpack.c.l.b16 %v639
      %v932 = vunpack.c.l.b16 %v640
      %v933 = vunpack.c.l.b16 %v641
      %v934 = vunpack.c.l.b16 %v642
      %v935 = vunpack.c.l.b16 %v643
      %v936 = vunpack.c.l.b16 %v644
      %v937 = vunpack.c.l.b16 %v645
      %v938 = vunpack.c.l.b16 %v646
      %v939 = vpack.c.b16 %v924, %v923
      %v940 = vpack.c.b16 %v926, %v925
      %v941 = vpack.c.b16 %v928, %v927
      %v942 = vpack.c.b16 %v930, %v929
      %v943 = vpack.c.b16 %v932, %v931
      %v944 = vpack.c.b16 %v934, %v933
      %v945 = vpack.c.b16 %v936, %v935
      %v946 = vpack.c.b16 %v938, %v937
      %955 = vmatprep.subr.bf16.mxu0 0
      %956 = vmatpush1.bf16.msra.mxu0 %v939
      %957 = vmatprep.subr.bf16.mxu0 0
      %958 = vmatpush1.bf16.msra.mxu0 %v940
      %959 = vmatprep.subr.bf16.mxu0 0
      %960 = vmatpush1.bf16.msra.mxu0 %v941
      %961 = vmatprep.subr.bf16.mxu0 0
      %962 = vmatpush1.bf16.msra.mxu0 %v942
      %963 = vmatprep.subr.bf16.mxu0 0
      %964 = vmatpush1.bf16.msra.mxu0 %v943
      %965 = vmatprep.subr.bf16.mxu0 0
      %966 = vmatpush1.bf16.msra.mxu0 %v944
      %967 = vmatprep.subr.bf16.mxu0 0
      %968 = vmatpush1.bf16.msra.mxu0 %v945
      %969 = vmatprep.subr.bf16.mxu0 0
      %970 = vmatpush1.bf16.msra.mxu0 %v946
      %971 = vmatprep.subr.bf16.mxu0 0
      %972 = vmatpush1.bf16.msra.mxu0 0
      %973 = vmatprep.subr.bf16.mxu0 0
      %974 = vmatpush1.bf16.msra.mxu0 0
      %975 = vmatprep.subr.bf16.mxu0 0
      %976 = vmatpush1.bf16.msra.mxu0 0
      %977 = vmatprep.subr.bf16.mxu0 0
      %978 = vmatpush1.bf16.msra.mxu0 0
      %979 = vmatprep.subr.bf16.mxu0 0
      %980 = vmatpush1.bf16.msra.mxu0 0
      %981 = vmatprep.subr.bf16.mxu0 0
      %982 = vmatpush1.bf16.msra.mxu0 0
      %983 = vmatprep.subr.bf16.mxu0 0
      %984 = vmatpush1.bf16.msra.mxu0 0
      %985 = vmatprep.subr.bf16.mxu0 0
      %986 = vmatpush1.bf16.msra.mxu0 0
      %987 = vmatprep.mubr.bf16.mxu0 0
      %988 = vmatmul.mubr.bf16.gmra.mrb[0].mxu0 %v752
      %v989 = vpop.f32.mrb[0].mxu0
      %v990 = vadd.f32 0.0, %v989
      %v991 = vpop.f32.mrb[0].mxu0
      %v992 = vpop.f32.mrb[0].mxu0
      %v993 = vadd.f32 0.0, %v992
      %v994 = vpop.f32.mrb[0].mxu0
      %995 = vmatprep.mubr.bf16.mxu0 0
      %996 = vmatmul.mubr.bf16.gmra.mrb[0].mxu0 %v760
      %v997 = vpop.f32.mrb[0].mxu0
      %v998 = vadd.f32 0.0, %v997
      %v999 = vpop.f32.mrb[0].mxu0
      %v1000 = vpop.f32.mrb[0].mxu0
      %v1001 = vadd.f32 0.0, %v1000
      %v1002 = vpop.f32.mrb[0].mxu0
      %1003 = vmatprep.mubr.bf16.mxu0 0
      %1004 = vmatmul.mubr.bf16.gmra.mrb[0].mxu0 %v768
      %v1005 = vpop.f32.mrb[0].mxu0
      %v1006 = vadd.f32 0.0, %v1005
      %v1007 = vpop.f32.mrb[0].mxu0
      %v1008 = vpop.f32.mrb[0].mxu0
      %v1009 = vadd.f32 0.0, %v1008
      %v1010 = vpop.f32.mrb[0].mxu0
      %1011 = vmatprep.mubr.bf16.mxu0 0
      %1012 = vmatmul.mubr.bf16.gmra.mrb[0].mxu0 %v776
      %v1013 = vpop.f32.mrb[0].mxu0
      %v1014 = vadd.f32 0.0, %v1013
      %v1015 = vpop.f32.mrb[0].mxu0
      %v1016 = vpop.f32.mrb[0].mxu0
      %v1017 = vadd.f32 0.0, %v1016
      %v1018 = vpop.f32.mrb[0].mxu0
      %1019 = vmatprep.mubr.bf16.mxu0 0
      %1020 = vmatmul.mubr.bf16.gmra.mrb[0].mxu0 %v784
      %v1021 = vpop.f32.mrb[0].mxu0
      %v1022 = vadd.f32 0.0, %v1021
      %v1023 = vpop.f32.mrb[0].mxu0
      %v1024 = vpop.f32.mrb[0].mxu0
      %v1025 = vadd.f32 0.0, %v1024
      %v1026 = vpop.f32.mrb[0].mxu0
      %1027 = vmatprep.mubr.bf16.mxu0 0
      %1028 = vmatmul.mubr.bf16.gmra.mrb[0].mxu0 %v792
      %v1029 = vpop.f32.mrb[0].mxu0
      %v1030 = vadd.f32 0.0, %v1029
      %v1031 = vpop.f32.mrb[0].mxu0
      %v1032 = vpop.f32.mrb[0].mxu0
      %v1033 = vadd.f32 0.0, %v1032
      %v1034 = vpop.f32.mrb[0].mxu0
      %1035 = vmatprep.mubr.bf16.mxu0 0
      %1036 = vmatmul.mubr.bf16.gmra.mrb[0].mxu0 %v800
      %v1037 = vpop.f32.mrb[0].mxu0
      %v1038 = vadd.f32 0.0, %v1037
      %v1039 = vpop.f32.mrb[0].mxu0
      %v1040 = vpop.f32.mrb[0].mxu0
      %v1041 = vadd.f32 0.0, %v1040
      %v1042 = vpop.f32.mrb[0].mxu0
      %1043 = vmatprep.mubr.bf16.mxu0 0
      %1044 = vmatmul.mubr.bf16.gmra.mrb[0].mxu0 %v808
      %v1045 = vpop.f32.mrb[0].mxu0
      %v1046 = vadd.f32 0.0, %v1045
      %v1047 = vpop.f32.mrb[0].mxu0
      %v1048 = vpop.f32.mrb[0].mxu0
      %v1049 = vadd.f32 0.0, %v1048
      %v1050 = vpop.f32.mrb[0].mxu0
      %1051 = vmatprep.mubr.bf16.mxu0 0
      %1052 = vmatmul.mubr.bf16.gmra.mrb[0].mxu0 %v816
      %v1053 = vpop.f32.mrb[0].mxu0
      %v1054 = vadd.f32 0.0, %v1053
      %v1055 = vpop.f32.mrb[0].mxu0
      %v1056 = vpop.f32.mrb[0].mxu0
      %v1057 = vadd.f32 0.0, %v1056
      %v1058 = vpop.f32.mrb[0].mxu0
      %1059 = vmatprep.mubr.bf16.mxu0 0
      %1060 = vmatmul.mubr.bf16.gmra.mrb[0].mxu0 %v824
      %v1061 = vpop.f32.mrb[0].mxu0
      %v1062 = vadd.f32 0.0, %v1061
      %v1063 = vpop.f32.mrb[0].mxu0
      %v1064 = vpop.f32.mrb[0].mxu0
      %v1065 = vadd.f32 0.0, %v1064
      %v1066 = vpop.f32.mrb[0].mxu0
      %1067 = vmatprep.mubr.bf16.mxu0 0
      %1068 = vmatmul.mubr.bf16.gmra.mrb[0].mxu0 %v832
      %v1069 = vpop.f32.mrb[0].mxu0
      %v1070 = vadd.f32 0.0, %v1069
      %v1071 = vpop.f32.mrb[0].mxu0
      %v1072 = vpop.f32.mrb[0].mxu0
      %v1073 = vadd.f32 0.0, %v1072
      %v1074 = vpop.f32.mrb[0].mxu0
      %1075 = vmatprep.mubr.bf16.mxu0 0
      %1076 = vmatmul.mubr.bf16.gmra.mrb[0].mxu0 %v840
      %v1077 = vpop.f32.mrb[0].mxu0
      %v1078 = vadd.f32 0.0, %v1077
      %v1079 = vpop.f32.mrb[0].mxu0
      %v1080 = vpop.f32.mrb[0].mxu0
      %v1081 = vadd.f32 0.0, %v1080
      %v1082 = vpop.f32.mrb[0].mxu0
      %1083 = vmatprep.mubr.bf16.mxu0 0
      %1084 = vmatmul.mubr.bf16.gmra.mrb[0].mxu0 %v848
      %v1085 = vpop.f32.mrb[0].mxu0
      %v1086 = vadd.f32 0.0, %v1085
      %v1087 = vpop.f32.mrb[0].mxu0
      %v1088 = vpop.f32.mrb[0].mxu0
      %v1089 = vadd.f32 0.0, %v1088
      %v1090 = vpop.f32.mrb[0].mxu0
      %1091 = vmatprep.mubr.bf16.mxu0 0
      %1092 = vmatmul.mubr.bf16.gmra.mrb[0].mxu0 %v856
      %v1093 = vpop.f32.mrb[0].mxu0
      %v1094 = vadd.f32 0.0, %v1093
      %v1095 = vpop.f32.mrb[0].mxu0
      %v1096 = vpop.f32.mrb[0].mxu0
      %v1097 = vadd.f32 0.0, %v1096
      %v1098 = vpop.f32.mrb[0].mxu0
      %1099 = vmatprep.mubr.bf16.mxu0 0
      %1100 = vmatmul.mubr.bf16.gmra.mrb[0].mxu0 %v864
      %v1101 = vpop.f32.mrb[0].mxu0
      %v1102 = vadd.f32 0.0, %v1101
      %v1103 = vpop.f32.mrb[0].mxu0
      %v1104 = vpop.f32.mrb[0].mxu0
      %v1105 = vadd.f32 0.0, %v1104
      %v1106 = vpop.f32.mrb[0].mxu0
      %1107 = vmatprep.mubr.bf16.mxu0 0
      %1108 = vmatmul.mubr.bf16.gmra.mrb[0].mxu0 %v872
      %v1109 = vpop.f32.mrb[0].mxu0
      %v1110 = vadd.f32 0.0, %v1109
      %v1111 = vpop.f32.mrb[0].mxu0
      %v1112 = vpop.f32.mrb[0].mxu0
      %v1113 = vadd.f32 0.0, %v1112
      %v1114 = vpop.f32.mrb[0].mxu0
      %1115 = vmatprep.mubr.bf16.mxu0 0
      %1116 = vmatmul.mubr.bf16.gmra.mrb[0].mxu0 %v880
      %v1117 = vpop.f32.mrb[0].mxu0
      %v1118 = vadd.f32 0.0, %v1117
      %v1119 = vpop.f32.mrb[0].mxu0
      %v1120 = vpop.f32.mrb[0].mxu0
      %v1121 = vadd.f32 0.0, %v1120
      %v1122 = vpop.f32.mrb[0].mxu0
      %1123 = vmatprep.mubr.bf16.mxu0 0
      %1124 = vmatmul.mubr.bf16.gmra.mrb[0].mxu0 %v888
      %v1125 = vpop.f32.mrb[0].mxu0
      %v1126 = vadd.f32 0.0, %v1125
      %v1127 = vpop.f32.mrb[0].mxu0
      %v1128 = vpop.f32.mrb[0].mxu0
      %v1129 = vadd.f32 0.0, %v1128
      %v1130 = vpop.f32.mrb[0].mxu0
      %1131 = vdwg.mxu0
      %v1132 = vld [vmem:[#allocation2] sm:$0xff]
      %v1133 = vld [vmem:[#allocation2 + $0x8] sm:$0xff]
      %v1134 = vld [vmem:[#allocation2 + $0x10] sm:$0xff]
      %v1135 = vld [vmem:[#allocation2 + $0x18] sm:$0xff]
      %v1136 = vld [vmem:[#allocation2 + $0x20] sm:$0xff]
      %v1137 = vld [vmem:[#allocation2 + $0x28] sm:$0xff]
      %v1138 = vld [vmem:[#allocation2 + $0x30] sm:$0xff]
      %v1139 = vld [vmem:[#allocation2 + $0x38] sm:$0xff]
      %v1140 = vld [vmem:[#allocation2 + $0x40] sm:$0xff]
      %v1141 = vld [vmem:[#allocation2 + $0x48] sm:$0xff]
      %v1142 = vld [vmem:[#allocation2 + $0x50] sm:$0xff]
      %v1143 = vld [vmem:[#allocation2 + $0x58] sm:$0xff]
      %v1144 = vld [vmem:[#allocation2 + $0x60] sm:$0xff]
      %v1145 = vld [vmem:[#allocation2 + $0x68] sm:$0xff]
      %v1146 = vld [vmem:[#allocation2 + $0x70] sm:$0xff]
      %v1147 = vld [vmem:[#allocation2 + $0x78] sm:$0xff]
      %v1148 = vld [vmem:[#allocation2 + $0x80] sm:$0xff]
      %v1149 = vld [vmem:[#allocation2 + $0x88] sm:$0xff]
      %v1150 = vld [vmem:[#allocation2 + $0x90] sm:$0xff]
      %v1151 = vld [vmem:[#allocation2 + $0x98] sm:$0xff]
      %v1152 = vld [vmem:[#allocation2 + $0xa0] sm:$0xff]
      %v1153 = vld [vmem:[#allocation2 + $0xa8] sm:$0xff]
      %v1154 = vld [vmem:[#allocation2 + $0xb0] sm:$0xff]
      %v1155 = vld [vmem:[#allocation2 + $0xb8] sm:$0xff]
      %v1156 = vld [vmem:[#allocation2 + $0xc0] sm:$0xff]
      %v1157 = vld [vmem:[#allocation2 + $0xc8] sm:$0xff]
      %v1158 = vld [vmem:[#allocation2 + $0xd0] sm:$0xff]
      %v1159 = vld [vmem:[#allocation2 + $0xd8] sm:$0xff]
      %v1160 = vld [vmem:[#allocation2 + $0xe0] sm:$0xff]
      %v1161 = vld [vmem:[#allocation2 + $0xe8] sm:$0xff]
      %v1162 = vld [vmem:[#allocation2 + $0xf0] sm:$0xff]
      %v1163 = vld [vmem:[#allocation2 + $0xf8] sm:$0xff]
      %v1164 = vld [vmem:[#allocation2 + $0x100] sm:$0xff]
      %v1165 = vld [vmem:[#allocation2 + $0x108] sm:$0xff]
      %v1166 = vld [vmem:[#allocation2 + $0x110] sm:$0xff]
      %v1167 = vld [vmem:[#allocation2 + $0x118] sm:$0xff]
      %v1168 = vadd.f32 %v1132, %v990
      %v1169 = vadd.f32 %v1133, %v993
      %v1170 = vadd.f32 %v1134, %v998
      %v1171 = vadd.f32 %v1135, %v1001
      %v1172 = vadd.f32 %v1136, %v1006
      %v1173 = vadd.f32 %v1137, %v1009
      %v1174 = vadd.f32 %v1138, %v1014
      %v1175 = vadd.f32 %v1139, %v1017
      %v1176 = vadd.f32 %v1140, %v1022
      %v1177 = vadd.f32 %v1141, %v1025
      %v1178 = vadd.f32 %v1142, %v1030
      %v1179 = vadd.f32 %v1143, %v1033
      %v1180 = vadd.f32 %v1144, %v1038
      %v1181 = vadd.f32 %v1145, %v1041
      %v1182 = vadd.f32 %v1146, %v1046
      %v1183 = vadd.f32 %v1147, %v1049
      %v1184 = vadd.f32 %v1148, %v1054
      %v1185 = vadd.f32 %v1149, %v1057
      %v1186 = vadd.f32 %v1150, %v1062
      %v1187 = vadd.f32 %v1151, %v1065
      %v1188 = vadd.f32 %v1152, %v1070
      %v1189 = vadd.f32 %v1153, %v1073
      %v1190 = vadd.f32 %v1154, %v1078
      %v1191 = vadd.f32 %v1155, %v1081
      %v1192 = vadd.f32 %v1156, %v1086
      %v1193 = vadd.f32 %v1157, %v1089
      %v1194 = vadd.f32 %v1158, %v1094
      %v1195 = vadd.f32 %v1159, %v1097
      %v1196 = vadd.f32 %v1160, %v1102
      %v1197 = vadd.f32 %v1161, %v1105
      %v1198 = vadd.f32 %v1162, %v1110
      %v1199 = vadd.f32 %v1163, %v1113
      %v1200 = vadd.f32 %v1164, %v1118
      %v1201 = vadd.f32 %v1165, %v1121
      %v1202 = vadd.f32 %v1166, %v1126
      %v1203 = vadd.f32 %v1167, %v1129
      %1204 = vst [vmem:[#allocation2] sm:$0xff] %v1168
      %1205 = vst [vmem:[#allocation2 + $0x8] sm:$0xff] %v1169
      %1206 = vst [vmem:[#allocation2 + $0x10] sm:$0xff] %v1170
      %1207 = vst [vmem:[#allocation2 + $0x18] sm:$0xff] %v1171
      %1208 = vst [vmem:[#allocation2 + $0x20] sm:$0xff] %v1172
      %1209 = vst [vmem:[#allocation2 + $0x28] sm:$0xff] %v1173
      %1210 = vst [vmem:[#allocation2 + $0x30] sm:$0xff] %v1174
      %1211 = vst [vmem:[#allocation2 + $0x38] sm:$0xff] %v1175
      %1212 = vst [vmem:[#allocation2 + $0x40] sm:$0xff] %v1176
      %1213 = vst [vmem:[#allocation2 + $0x48] sm:$0xff] %v1177
      %1214 = vst [vmem:[#allocation2 + $0x50] sm:$0xff] %v1178
      %1215 = vst [vmem:[#allocation2 + $0x58] sm:$0xff] %v1179
      %1216 = vst [vmem:[#allocation2 + $0x60] sm:$0xff] %v1180
      %1217 = vst [vmem:[#allocation2 + $0x68] sm:$0xff] %v1181
      %1218 = vst [vmem:[#allocation2 + $0x70] sm:$0xff] %v1182
      %1219 = vst [vmem:[#allocation2 + $0x78] sm:$0xff] %v1183
      %1220 = vst [vmem:[#allocation2 + $0x80] sm:$0xff] %v1184
      %1221 = vst [vmem:[#allocation2 + $0x88] sm:$0xff] %v1185
      %1222 = vst [vmem:[#allocation2 + $0x90] sm:$0xff] %v1186
      %1223 = vst [vmem:[#allocation2 + $0x98] sm:$0xff] %v1187
      %1224 = vst [vmem:[#allocation2 + $0xa0] sm:$0xff] %v1188
      %1225 = vst [vmem:[#allocation2 + $0xa8] sm:$0xff] %v1189
      %1226 = vst [vmem:[#allocation2 + $0xb0] sm:$0xff] %v1190
      %1227 = vst [vmem:[#allocation2 + $0xb8] sm:$0xff] %v1191
      %1228 = vst [vmem:[#allocation2 + $0xc0] sm:$0xff] %v1192
      %1229 = vst [vmem:[#allocation2 + $0xc8] sm:$0xff] %v1193
      %1230 = vst [vmem:[#allocation2 + $0xd0] sm:$0xff] %v1194
      %1231 = vst [vmem:[#allocation2 + $0xd8] sm:$0xff] %v1195
      %1232 = vst [vmem:[#allocation2 + $0xe0] sm:$0xff] %v1196
      %1233 = vst [vmem:[#allocation2 + $0xe8] sm:$0xff] %v1197
      %1234 = vst [vmem:[#allocation2 + $0xf0] sm:$0xff] %v1198
      %1235 = vst [vmem:[#allocation2 + $0xf8] sm:$0xff] %v1199
      %1236 = vst [vmem:[#allocation2 + $0x100] sm:$0xff] %v1200
      %1237 = vst [vmem:[#allocation2 + $0x108] sm:$0xff] %v1201
      %1238 = vst [vmem:[#allocation2 + $0x110] sm:$0xff] %v1202
      %1239 = vst [vmem:[#allocation2 + $0x118] sm:$0xff] %v1203
      %v1240 = vld [vmem:[%s165] sm:$0xe]
      %v1241 = vld [vmem:[%s165 + $0x4] sm:$0xf]
      %v1242 = vld [vmem:[%s165 + $0x8] sm:$0xf]
      %v1243 = vld [vmem:[%s165 + $0xc] sm:$0xf]
      %v1244 = vld [vmem:[%s165 + $0x10] sm:$0xf]
      %v1245 = vld [vmem:[%s165 + $0x14] sm:$0xf]
      %v1246 = vld [vmem:[%s165 + $0x18] sm:$0xf]
      %v1247 = vld [vmem:[%s165 + $0x1c] sm:$0xf]
      %v1248 = vld [vmem:[%s165 + $0x20] sm:$0xf]
      %v1249 = vld [vmem:[%s165 + $0x24] sm:$0xf]
      %v1250 = vld [vmem:[%s165 + $0x28] sm:$0xf]
      %v1251 = vld [vmem:[%s165 + $0x2c] sm:$0xf]
      %v1252 = vld [vmem:[%s165 + $0x30] sm:$0xf]
      %v1253 = vld [vmem:[%s165 + $0x34] sm:$0xf]
      %v1254 = vld [vmem:[%s165 + $0x38] sm:$0xf]
      %v1255 = vld [vmem:[%s165 + $0x3c] sm:$0xf]
      %v1256 = vld [vmem:[%s165 + $0x40] sm:$0xf]
      %v1257 = vld [vmem:[%s165 + $0x44] sm:$0xf]
      %v1258 = vld [vmem:[%s165 + $0x48] sm:$0xf]
      %v1259 = vld [vmem:[%s165 + $0x4c] sm:$0xf]
      %v1260 = vld [vmem:[%s165 + $0x50] sm:$0xf]
      %v1261 = vld [vmem:[%s165 + $0x54] sm:$0xf]
      %v1262 = vld [vmem:[%s165 + $0x58] sm:$0xf]
      %v1263 = vld [vmem:[%s165 + $0x5c] sm:$0xf]
      %v1264 = vld [vmem:[%s165 + $0x60] sm:$0xf]
      %v1265 = vld [vmem:[%s165 + $0x64] sm:$0xf]
      %v1266 = vld [vmem:[%s165 + $0x68] sm:$0xf]
      %v1267 = vld [vmem:[%s165 + $0x6c] sm:$0xf]
      %v1268 = vld [vmem:[%s165 + $0x70] sm:$0xf]
      %v1269 = vld [vmem:[%s165 + $0x74] sm:$0xf]
      %v1270 = vld [vmem:[%s165 + $0x78] sm:$0xf]
      %v1271 = vld [vmem:[%s165 + $0x7c] sm:$0xf]
      %v1272 = vld [vmem:[%s165 + $0x80] sm:$0xf]
      %v1273 = vld [vmem:[%s165 + $0x84] sm:$0xf]
      %v1274 = vld [vmem:[%s165 + $0x88] sm:$0xf]
      %v1275 = vld [vmem:[%s165 + $0x8c] sm:$0xf]
      %v1276 = vld [vmem:[%s165 + $0x90] sm:$0x1]
      %s1277 = scalar_lea.vmem %s1, 128
      %v1278 = vld [vmem:[%s1277] sm:$0xf]
      %v1279 = vld [vmem:[%s1277 + $0x4] sm:$0xf]
      %v1280 = vld [vmem:[%s1277 + $0x8] sm:$0xf]
      %v1281 = vld [vmem:[%s1277 + $0xc] sm:$0xf]
      %v1282 = vld [vmem:[%s1277 + $0x10] sm:$0xf]
      %v1283 = vld [vmem:[%s1277 + $0x14] sm:$0xf]
      %v1284 = vld [vmem:[%s1277 + $0x18] sm:$0xf]
      %v1285 = vld [vmem:[%s1277 + $0x1c] sm:$0xf]
      %v1286 = vld [vmem:[%s1277 + $0x20] sm:$0xf]
      %v1287 = vld [vmem:[%s1277 + $0x24] sm:$0xf]
      %v1288 = vld [vmem:[%s1277 + $0x28] sm:$0xf]
      %v1289 = vld [vmem:[%s1277 + $0x2c] sm:$0xf]
      %v1290 = vld [vmem:[%s1277 + $0x30] sm:$0xf]
      %v1291 = vld [vmem:[%s1277 + $0x34] sm:$0xf]
      %v1292 = vld [vmem:[%s1277 + $0x38] sm:$0xf]
      %v1293 = vld [vmem:[%s1277 + $0x3c] sm:$0xf]
      %v1331 = vunpack.c.l.b16 %v1240
      %v1332 = vunpack.c.l.b16 %v1241
      %v1333 = vunpack.c.l.b16 %v1242
      %v1334 = vunpack.c.l.b16 %v1243
      %v1335 = vunpack.c.l.b16 %v1244
      %v1336 = vunpack.c.l.b16 %v1245
      %v1337 = vunpack.c.l.b16 %v1246
      %v1338 = vunpack.c.l.b16 %v1247
      %v1339 = vunpack.c.l.b16 %v1248
      %v1340 = vunpack.c.l.b16 %v1249
      %v1341 = vunpack.c.l.b16 %v1250
      %v1342 = vunpack.c.l.b16 %v1251
      %v1343 = vunpack.c.l.b16 %v1252
      %v1344 = vunpack.c.l.b16 %v1253
      %v1345 = vunpack.c.l.b16 %v1254
      %v1346 = vunpack.c.l.b16 %v1255
      %v1347 = vunpack.c.l.b16 %v1256
      %v1348 = vunpack.c.l.b16 %v1257
      %v1349 = vunpack.c.l.b16 %v1258
      %v1350 = vunpack.c.l.b16 %v1259
      %v1351 = vunpack.c.l.b16 %v1260
      %v1352 = vunpack.c.l.b16 %v1261
      %v1353 = vunpack.c.l.b16 %v1262
      %v1354 = vunpack.c.l.b16 %v1263
      %v1355 = vunpack.c.l.b16 %v1264
      %v1356 = vunpack.c.l.b16 %v1265
      %v1357 = vunpack.c.l.b16 %v1266
      %v1358 = vunpack.c.l.b16 %v1267
      %v1359 = vunpack.c.l.b16 %v1268
      %v1360 = vunpack.c.l.b16 %v1269
      %v1361 = vunpack.c.l.b16 %v1270
      %v1362 = vunpack.c.l.b16 %v1271
      %v1363 = vunpack.c.l.b16 %v1272
      %v1364 = vunpack.c.l.b16 %v1273
      %v1365 = vunpack.c.l.b16 %v1274
      %v1366 = vunpack.c.l.b16 %v1275
      %v1367 = vunpack.c.l.b16 %v1276
      %v1368 = vpack.c.b16 %v1332, %v1331
      %v1369 = vpack.c.b16 %v1334, %v1333
      %v1370 = vpack.c.b16 %v1336, %v1335
      %v1371 = vpack.c.b16 %v1338, %v1337
      %v1372 = vpack.c.b16 %v1340, %v1339
      %v1373 = vpack.c.b16 %v1342, %v1341
      %v1374 = vpack.c.b16 %v1344, %v1343
      %v1375 = vpack.c.b16 %v1346, %v1345
      %v1376 = vpack.c.b16 %v1348, %v1347
      %v1377 = vpack.c.b16 %v1350, %v1349
      %v1378 = vpack.c.b16 %v1352, %v1351
      %v1379 = vpack.c.b16 %v1354, %v1353
      %v1380 = vpack.c.b16 %v1356, %v1355
      %v1381 = vpack.c.b16 %v1358, %v1357
      %v1382 = vpack.c.b16 %v1360, %v1359
      %v1383 = vpack.c.b16 %v1362, %v1361
      %v1384 = vpack.c.b16 %v1364, %v1363
      %v1385 = vpack.c.b16 %v1366, %v1365
      %v1386 = vpack.c.b16 %v1367, %v1367
      %vm1387 = vcmask 1046528
      %v1388 = vrot.slane %v1368, 1
      %v1389 = vrot.slane %v1369, 1
      %v1390 = vsel %vm1387, %v1388, %v1389
      %v1391 = vrot.slane %v1370, 1
      %v1392 = vsel %vm1387, %v1389, %v1391
      %v1393 = vrot.slane %v1371, 1
      %v1394 = vsel %vm1387, %v1391, %v1393
      %v1395 = vrot.slane %v1372, 1
      %v1396 = vsel %vm1387, %v1393, %v1395
      %v1397 = vrot.slane %v1373, 1
      %v1398 = vsel %vm1387, %v1395, %v1397
      %v1399 = vrot.slane %v1374, 1
      %v1400 = vsel %vm1387, %v1397, %v1399
      %v1401 = vrot.slane %v1375, 1
      %v1402 = vsel %vm1387, %v1399, %v1401
      %v1403 = vrot.slane %v1376, 1
      %v1404 = vsel %vm1387, %v1401, %v1403
      %v1405 = vrot.slane %v1377, 1
      %v1406 = vsel %vm1387, %v1403, %v1405
      %v1407 = vrot.slane %v1378, 1
      %v1408 = vsel %vm1387, %v1405, %v1407
      %v1409 = vrot.slane %v1379, 1
      %v1410 = vsel %vm1387, %v1407, %v1409
      %v1411 = vrot.slane %v1380, 1
      %v1412 = vsel %vm1387, %v1409, %v1411
      %v1413 = vrot.slane %v1381, 1
      %v1414 = vsel %vm1387, %v1411, %v1413
      %v1415 = vrot.slane %v1382, 1
      %v1416 = vsel %vm1387, %v1413, %v1415
      %v1417 = vrot.slane %v1383, 1
      %v1418 = vsel %vm1387, %v1415, %v1417
      %v1419 = vrot.slane %v1384, 1
      %v1420 = vsel %vm1387, %v1417, %v1419
      %v1421 = vrot.slane %v1385, 1
      %v1422 = vsel %vm1387, %v1419, %v1421
      %v1423 = vrot.slane %v1386, 1
      %v1424 = vsel %vm1387, %v1421, %v1423
      %v1459 = vunpack.c.l.b16 %v1278
      %v1460 = vunpack.c.l.b16 %v1279
      %v1461 = vunpack.c.l.b16 %v1280
      %v1462 = vunpack.c.l.b16 %v1281
      %v1463 = vunpack.c.l.b16 %v1282
      %v1464 = vunpack.c.l.b16 %v1283
      %v1465 = vunpack.c.l.b16 %v1284
      %v1466 = vunpack.c.l.b16 %v1285
      %v1467 = vunpack.c.l.b16 %v1286
      %v1468 = vunpack.c.l.b16 %v1287
      %v1469 = vunpack.c.l.b16 %v1288
      %v1470 = vunpack.c.l.b16 %v1289
      %v1471 = vunpack.c.l.b16 %v1290
      %v1472 = vunpack.c.l.b16 %v1291
      %v1473 = vunpack.c.l.b16 %v1292
      %v1474 = vunpack.c.l.b16 %v1293
      %v1475 = vpack.c.b16 %v1460, %v1459
      %v1476 = vpack.c.b16 %v1462, %v1461
      %v1477 = vpack.c.b16 %v1464, %v1463
      %v1478 = vpack.c.b16 %v1466, %v1465
      %v1479 = vpack.c.b16 %v1468, %v1467
      %v1480 = vpack.c.b16 %v1470, %v1469
      %v1481 = vpack.c.b16 %v1472, %v1471
      %v1482 = vpack.c.b16 %v1474, %v1473
      %1491 = vmatprep.subr.bf16.mxu0 0
      %1492 = vmatpush1.bf16.msra.mxu0 %v1475
      %1493 = vmatprep.subr.bf16.mxu0 0
      %1494 = vmatpush1.bf16.msra.mxu0 %v1476
      %1495 = vmatprep.subr.bf16.mxu0 0
      %1496 = vmatpush1.bf16.msra.mxu0 %v1477
      %1497 = vmatprep.subr.bf16.mxu0 0
      %1498 = vmatpush1.bf16.msra.mxu0 %v1478
      %1499 = vmatprep.subr.bf16.mxu0 0
      %1500 = vmatpush1.bf16.msra.mxu0 %v1479
      %1501 = vmatprep.subr.bf16.mxu0 0
      %1502 = vmatpush1.bf16.msra.mxu0 %v1480
      %1503 = vmatprep.subr.bf16.mxu0 0
      %1504 = vmatpush1.bf16.msra.mxu0 %v1481
      %1505 = vmatprep.subr.bf16.mxu0 0
      %1506 = vmatpush1.bf16.msra.mxu0 %v1482
      %1507 = vmatprep.subr.bf16.mxu0 0
      %1508 = vmatpush1.bf16.msra.mxu0 0
      %1509 = vmatprep.subr.bf16.mxu0 0
      %1510 = vmatpush1.bf16.msra.mxu0 0
      %1511 = vmatprep.subr.bf16.mxu0 0
      %1512 = vmatpush1.bf16.msra.mxu0 0
      %1513 = vmatprep.subr.bf16.mxu0 0
      %1514 = vmatpush1.bf16.msra.mxu0 0
      %1515 = vmatprep.subr.bf16.mxu0 0
      %1516 = vmatpush1.bf16.msra.mxu0 0
      %1517 = vmatprep.subr.bf16.mxu0 0
      %1518 = vmatpush1.bf16.msra.mxu0 0
      %1519 = vmatprep.subr.bf16.mxu0 0
      %1520 = vmatpush1.bf16.msra.mxu0 0
      %1521 = vmatprep.subr.bf16.mxu0 0
      %1522 = vmatpush1.bf16.msra.mxu0 0
      %1523 = vmatprep.mubr.bf16.mxu0 0
      %1524 = vmatmul.mubr.bf16.gmra.mrb[0].mxu0 %v1390
      %v1525 = vpop.f32.mrb[0].mxu0
      %v1526 = vadd.f32 0.0, %v1525
      %v1527 = vpop.f32.mrb[0].mxu0
      %v1528 = vpop.f32.mrb[0].mxu0
      %v1529 = vadd.f32 0.0, %v1528
      %v1530 = vpop.f32.mrb[0].mxu0
      %1531 = vmatprep.mubr.bf16.mxu0 0
      %1532 = vmatmul.mubr.bf16.gmra.mrb[0].mxu0 %v1392
      %v1533 = vpop.f32.mrb[0].mxu0
      %v1534 = vadd.f32 0.0, %v1533
      %v1535 = vpop.f32.mrb[0].mxu0
      %v1536 = vpop.f32.mrb[0].mxu0
      %v1537 = vadd.f32 0.0, %v1536
      %v1538 = vpop.f32.mrb[0].mxu0
      %1539 = vmatprep.mubr.bf16.mxu0 0
      %1540 = vmatmul.mubr.bf16.gmra.mrb[0].mxu0 %v1394
      %v1541 = vpop.f32.mrb[0].mxu0
      %v1542 = vadd.f32 0.0, %v1541
      %v1543 = vpop.f32.mrb[0].mxu0
      %v1544 = vpop.f32.mrb[0].mxu0
      %v1545 = vadd.f32 0.0, %v1544
      %v1546 = vpop.f32.mrb[0].mxu0
      %1547 = vmatprep.mubr.bf16.mxu0 0
      %1548 = vmatmul.mubr.bf16.gmra.mrb[0].mxu0 %v1396
      %v1549 = vpop.f32.mrb[0].mxu0
      %v1550 = vadd.f32 0.0, %v1549
      %v1551 = vpop.f32.mrb[0].mxu0
      %v1552 = vpop.f32.mrb[0].mxu0
      %v1553 = vadd.f32 0.0, %v1552
      %v1554 = vpop.f32.mrb[0].mxu0
      %1555 = vmatprep.mubr.bf16.mxu0 0
      %1556 = vmatmul.mubr.bf16.gmra.mrb[0].mxu0 %v1398
      %v1557 = vpop.f32.mrb[0].mxu0
      %v1558 = vadd.f32 0.0, %v1557
      %v1559 = vpop.f32.mrb[0].mxu0
      %v1560 = vpop.f32.mrb[0].mxu0
      %v1561 = vadd.f32 0.0, %v1560
      %v1562 = vpop.f32.mrb[0].mxu0
      %1563 = vmatprep.mubr.bf16.mxu0 0
      %1564 = vmatmul.mubr.bf16.gmra.mrb[0].mxu0 %v1400
      %v1565 = vpop.f32.mrb[0].mxu0
      %v1566 = vadd.f32 0.0, %v1565
      %v1567 = vpop.f32.mrb[0].mxu0
      %v1568 = vpop.f32.mrb[0].mxu0
      %v1569 = vadd.f32 0.0, %v1568
      %v1570 = vpop.f32.mrb[0].mxu0
      %1571 = vmatprep.mubr.bf16.mxu0 0
      %1572 = vmatmul.mubr.bf16.gmra.mrb[0].mxu0 %v1402
      %v1573 = vpop.f32.mrb[0].mxu0
      %v1574 = vadd.f32 0.0, %v1573
      %v1575 = vpop.f32.mrb[0].mxu0
      %v1576 = vpop.f32.mrb[0].mxu0
      %v1577 = vadd.f32 0.0, %v1576
      %v1578 = vpop.f32.mrb[0].mxu0
      %1579 = vmatprep.mubr.bf16.mxu0 0
      %1580 = vmatmul.mubr.bf16.gmra.mrb[0].mxu0 %v1404
      %v1581 = vpop.f32.mrb[0].mxu0
      %v1582 = vadd.f32 0.0, %v1581
      %v1583 = vpop.f32.mrb[0].mxu0
      %v1584 = vpop.f32.mrb[0].mxu0
      %v1585 = vadd.f32 0.0, %v1584
      %v1586 = vpop.f32.mrb[0].mxu0
      %1587 = vmatprep.mubr.bf16.mxu0 0
      %1588 = vmatmul.mubr.bf16.gmra.mrb[0].mxu0 %v1406
      %v1589 = vpop.f32.mrb[0].mxu0
      %v1590 = vadd.f32 0.0, %v1589
      %v1591 = vpop.f32.mrb[0].mxu0
      %v1592 = vpop.f32.mrb[0].mxu0
      %v1593 = vadd.f32 0.0, %v1592
      %v1594 = vpop.f32.mrb[0].mxu0
      %1595 = vmatprep.mubr.bf16.mxu0 0
      %1596 = vmatmul.mubr.bf16.gmra.mrb[0].mxu0 %v1408
      %v1597 = vpop.f32.mrb[0].mxu0
      %v1598 = vadd.f32 0.0, %v1597
      %v1599 = vpop.f32.mrb[0].mxu0
      %v1600 = vpop.f32.mrb[0].mxu0
      %v1601 = vadd.f32 0.0, %v1600
      %v1602 = vpop.f32.mrb[0].mxu0
      %1603 = vmatprep.mubr.bf16.mxu0 0
      %1604 = vmatmul.mubr.bf16.gmra.mrb[0].mxu0 %v1410
      %v1605 = vpop.f32.mrb[0].mxu0
      %v1606 = vadd.f32 0.0, %v1605
      %v1607 = vpop.f32.mrb[0].mxu0
      %v1608 = vpop.f32.mrb[0].mxu0
      %v1609 = vadd.f32 0.0, %v1608
      %v1610 = vpop.f32.mrb[0].mxu0
      %1611 = vmatprep.mubr.bf16.mxu0 0
      %1612 = vmatmul.mubr.bf16.gmra.mrb[0].mxu0 %v1412
      %v1613 = vpop.f32.mrb[0].mxu0
      %v1614 = vadd.f32 0.0, %v1613
      %v1615 = vpop.f32.mrb[0].mxu0
      %v1616 = vpop.f32.mrb[0].mxu0
      %v1617 = vadd.f32 0.0, %v1616
      %v1618 = vpop.f32.mrb[0].mxu0
      %1619 = vmatprep.mubr.bf16.mxu0 0
      %1620 = vmatmul.mubr.bf16.gmra.mrb[0].mxu0 %v1414
      %v1621 = vpop.f32.mrb[0].mxu0
      %v1622 = vadd.f32 0.0, %v1621
      %v1623 = vpop.f32.mrb[0].mxu0
      %v1624 = vpop.f32.mrb[0].mxu0
      %v1625 = vadd.f32 0.0, %v1624
      %v1626 = vpop.f32.mrb[0].mxu0
      %1627 = vmatprep.mubr.bf16.mxu0 0
      %1628 = vmatmul.mubr.bf16.gmra.mrb[0].mxu0 %v1416
      %v1629 = vpop.f32.mrb[0].mxu0
      %v1630 = vadd.f32 0.0, %v1629
      %v1631 = vpop.f32.mrb[0].mxu0
      %v1632 = vpop.f32.mrb[0].mxu0
      %v1633 = vadd.f32 0.0, %v1632
      %v1634 = vpop.f32.mrb[0].mxu0
      %1635 = vmatprep.mubr.bf16.mxu0 0
      %1636 = vmatmul.mubr.bf16.gmra.mrb[0].mxu0 %v1418
      %v1637 = vpop.f32.mrb[0].mxu0
      %v1638 = vadd.f32 0.0, %v1637
      %v1639 = vpop.f32.mrb[0].mxu0
      %v1640 = vpop.f32.mrb[0].mxu0
      %v1641 = vadd.f32 0.0, %v1640
      %v1642 = vpop.f32.mrb[0].mxu0
      %1643 = vmatprep.mubr.bf16.mxu0 0
      %1644 = vmatmul.mubr.bf16.gmra.mrb[0].mxu0 %v1420
      %v1645 = vpop.f32.mrb[0].mxu0
      %v1646 = vadd.f32 0.0, %v1645
      %v1647 = vpop.f32.mrb[0].mxu0
      %v1648 = vpop.f32.mrb[0].mxu0
      %v1649 = vadd.f32 0.0, %v1648
      %v1650 = vpop.f32.mrb[0].mxu0
      %1651 = vmatprep.mubr.bf16.mxu0 0
      %1652 = vmatmul.mubr.bf16.gmra.mrb[0].mxu0 %v1422
      %v1653 = vpop.f32.mrb[0].mxu0
      %v1654 = vadd.f32 0.0, %v1653
      %v1655 = vpop.f32.mrb[0].mxu0
      %v1656 = vpop.f32.mrb[0].mxu0
      %v1657 = vadd.f32 0.0, %v1656
      %v1658 = vpop.f32.mrb[0].mxu0
      %1659 = vmatprep.mubr.bf16.mxu0 0
      %1660 = vmatmul.mubr.bf16.gmra.mrb[0].mxu0 %v1424
      %v1661 = vpop.f32.mrb[0].mxu0
      %v1662 = vadd.f32 0.0, %v1661
      %v1663 = vpop.f32.mrb[0].mxu0
      %v1664 = vpop.f32.mrb[0].mxu0
      %v1665 = vadd.f32 0.0, %v1664
      %v1666 = vpop.f32.mrb[0].mxu0
      %1667 = vdwg.mxu0
      %v1668 = vld [vmem:[#allocation2] sm:$0xff]
      %v1669 = vld [vmem:[#allocation2 + $0x8] sm:$0xff]
      %v1670 = vld [vmem:[#allocation2 + $0x10] sm:$0xff]
      %v1671 = vld [vmem:[#allocation2 + $0x18] sm:$0xff]
      %v1672 = vld [vmem:[#allocation2 + $0x20] sm:$0xff]
      %v1673 = vld [vmem:[#allocation2 + $0x28] sm:$0xff]
      %v1674 = vld [vmem:[#allocation2 + $0x30] sm:$0xff]
      %v1675 = vld [vmem:[#allocation2 + $0x38] sm:$0xff]
      %v1676 = vld [vmem:[#allocation2 + $0x40] sm:$0xff]
      %v1677 = vld [vmem:[#allocation2 + $0x48] sm:$0xff]
      %v1678 = vld [vmem:[#allocation2 + $0x50] sm:$0xff]
      %v1679 = vld [vmem:[#allocation2 + $0x58] sm:$0xff]
      %v1680 = vld [vmem:[#allocation2 + $0x60] sm:$0xff]
      %v1681 = vld [vmem:[#allocation2 + $0x68] sm:$0xff]
      %v1682 = vld [vmem:[#allocation2 + $0x70] sm:$0xff]
      %v1683 = vld [vmem:[#allocation2 + $0x78] sm:$0xff]
      %v1684 = vld [vmem:[#allocation2 + $0x80] sm:$0xff]
      %v1685 = vld [vmem:[#allocation2 + $0x88] sm:$0xff]
      %v1686 = vld [vmem:[#allocation2 + $0x90] sm:$0xff]
      %v1687 = vld [vmem:[#allocation2 + $0x98] sm:$0xff]
      %v1688 = vld [vmem:[#allocation2 + $0xa0] sm:$0xff]
      %v1689 = vld [vmem:[#allocation2 + $0xa8] sm:$0xff]
      %v1690 = vld [vmem:[#allocation2 + $0xb0] sm:$0xff]
      %v1691 = vld [vmem:[#allocation2 + $0xb8] sm:$0xff]
      %v1692 = vld [vmem:[#allocation2 + $0xc0] sm:$0xff]
      %v1693 = vld [vmem:[#allocation2 + $0xc8] sm:$0xff]
      %v1694 = vld [vmem:[#allocation2 + $0xd0] sm:$0xff]
      %v1695 = vld [vmem:[#allocation2 + $0xd8] sm:$0xff]
      %v1696 = vld [vmem:[#allocation2 + $0xe0] sm:$0xff]
      %v1697 = vld [vmem:[#allocation2 + $0xe8] sm:$0xff]
      %v1698 = vld [vmem:[#allocation2 + $0xf0] sm:$0xff]
      %v1699 = vld [vmem:[#allocation2 + $0xf8] sm:$0xff]
      %v1700 = vld [vmem:[#allocation2 + $0x100] sm:$0xff]
      %v1701 = vld [vmem:[#allocation2 + $0x108] sm:$0xff]
      %v1702 = vld [vmem:[#allocation2 + $0x110] sm:$0xff]
      %v1703 = vld [vmem:[#allocation2 + $0x118] sm:$0xff]
      %v1704 = vadd.f32 %v1668, %v1526
      %v1705 = vadd.f32 %v1669, %v1529
      %v1706 = vadd.f32 %v1670, %v1534
      %v1707 = vadd.f32 %v1671, %v1537
      %v1708 = vadd.f32 %v1672, %v1542
      %v1709 = vadd.f32 %v1673, %v1545
      %v1710 = vadd.f32 %v1674, %v1550
      %v1711 = vadd.f32 %v1675, %v1553
      %v1712 = vadd.f32 %v1676, %v1558
      %v1713 = vadd.f32 %v1677, %v1561
      %v1714 = vadd.f32 %v1678, %v1566
      %v1715 = vadd.f32 %v1679, %v1569
      %v1716 = vadd.f32 %v1680, %v1574
      %v1717 = vadd.f32 %v1681, %v1577
      %v1718 = vadd.f32 %v1682, %v1582
      %v1719 = vadd.f32 %v1683, %v1585
      %v1720 = vadd.f32 %v1684, %v1590
      %v1721 = vadd.f32 %v1685, %v1593
      %v1722 = vadd.f32 %v1686, %v1598
      %v1723 = vadd.f32 %v1687, %v1601
      %v1724 = vadd.f32 %v1688, %v1606
      %v1725 = vadd.f32 %v1689, %v1609
      %v1726 = vadd.f32 %v1690, %v1614
      %v1727 = vadd.f32 %v1691, %v1617
      %v1728 = vadd.f32 %v1692, %v1622
      %v1729 = vadd.f32 %v1693, %v1625
      %v1730 = vadd.f32 %v1694, %v1630
      %v1731 = vadd.f32 %v1695, %v1633
      %v1732 = vadd.f32 %v1696, %v1638
      %v1733 = vadd.f32 %v1697, %v1641
      %v1734 = vadd.f32 %v1698, %v1646
      %v1735 = vadd.f32 %v1699, %v1649
      %v1736 = vadd.f32 %v1700, %v1654
      %v1737 = vadd.f32 %v1701, %v1657
      %v1738 = vadd.f32 %v1702, %v1662
      %v1739 = vadd.f32 %v1703, %v1665
      %1740 = vst [vmem:[#allocation2] sm:$0xff] %v1704
      %1741 = vst [vmem:[#allocation2 + $0x8] sm:$0xff] %v1705
      %1742 = vst [vmem:[#allocation2 + $0x10] sm:$0xff] %v1706
      %1743 = vst [vmem:[#allocation2 + $0x18] sm:$0xff] %v1707
      %1744 = vst [vmem:[#allocation2 + $0x20] sm:$0xff] %v1708
      %1745 = vst [vmem:[#allocation2 + $0x28] sm:$0xff] %v1709
      %1746 = vst [vmem:[#allocation2 + $0x30] sm:$0xff] %v1710
      %1747 = vst [vmem:[#allocation2 + $0x38] sm:$0xff] %v1711
      %1748 = vst [vmem:[#allocation2 + $0x40] sm:$0xff] %v1712
      %1749 = vst [vmem:[#allocation2 + $0x48] sm:$0xff] %v1713
      %1750 = vst [vmem:[#allocation2 + $0x50] sm:$0xff] %v1714
      %1751 = vst [vmem:[#allocation2 + $0x58] sm:$0xff] %v1715
      %1752 = vst [vmem:[#allocation2 + $0x60] sm:$0xff] %v1716
      %1753 = vst [vmem:[#allocation2 + $0x68] sm:$0xff] %v1717
      %1754 = vst [vmem:[#allocation2 + $0x70] sm:$0xff] %v1718
      %1755 = vst [vmem:[#allocation2 + $0x78] sm:$0xff] %v1719
      %1756 = vst [vmem:[#allocation2 + $0x80] sm:$0xff] %v1720
      %1757 = vst [vmem:[#allocation2 + $0x88] sm:$0xff] %v1721
      %1758 = vst [vmem:[#allocation2 + $0x90] sm:$0xff] %v1722
      %1759 = vst [vmem:[#allocation2 + $0x98] sm:$0xff] %v1723
      %1760 = vst [vmem:[#allocation2 + $0xa0] sm:$0xff] %v1724
      %1761 = vst [vmem:[#allocation2 + $0xa8] sm:$0xff] %v1725
      %1762 = vst [vmem:[#allocation2 + $0xb0] sm:$0xff] %v1726
      %1763 = vst [vmem:[#allocation2 + $0xb8] sm:$0xff] %v1727
      %1764 = vst [vmem:[#allocation2 + $0xc0] sm:$0xff] %v1728
      %1765 = vst [vmem:[#allocation2 + $0xc8] sm:$0xff] %v1729
      %1766 = vst [vmem:[#allocation2 + $0xd0] sm:$0xff] %v1730
      %1767 = vst [vmem:[#allocation2 + $0xd8] sm:$0xff] %v1731
      %1768 = vst [vmem:[#allocation2 + $0xe0] sm:$0xff] %v1732
      %1769 = vst [vmem:[#allocation2 + $0xe8] sm:$0xff] %v1733
      %1770 = vst [vmem:[#allocation2 + $0xf0] sm:$0xff] %v1734
      %1771 = vst [vmem:[#allocation2 + $0xf8] sm:$0xff] %v1735
      %1772 = vst [vmem:[#allocation2 + $0x100] sm:$0xff] %v1736
      %1773 = vst [vmem:[#allocation2 + $0x108] sm:$0xff] %v1737
      %1774 = vst [vmem:[#allocation2 + $0x110] sm:$0xff] %v1738
      %1775 = vst [vmem:[#allocation2 + $0x118] sm:$0xff] %v1739
      %v1776 = vld [vmem:[%s165 + $0x8] sm:$0xe]
      %v1777 = vld [vmem:[%s165 + $0xc] sm:$0xf]
      %v1778 = vld [vmem:[%s165 + $0x10] sm:$0xf]
      %v1779 = vld [vmem:[%s165 + $0x14] sm:$0xf]
      %v1780 = vld [vmem:[%s165 + $0x18] sm:$0xf]
      %v1781 = vld [vmem:[%s165 + $0x1c] sm:$0xf]
      %v1782 = vld [vmem:[%s165 + $0x20] sm:$0xf]
      %v1783 = vld [vmem:[%s165 + $0x24] sm:$0xf]
      %v1784 = vld [vmem:[%s165 + $0x28] sm:$0xf]
      %v1785 = vld [vmem:[%s165 + $0x2c] sm:$0xf]
      %v1786 = vld [vmem:[%s165 + $0x30] sm:$0xf]
      %v1787 = vld [vmem:[%s165 + $0x34] sm:$0xf]
      %v1788 = vld [vmem:[%s165 + $0x38] sm:$0xf]
      %v1789 = vld [vmem:[%s165 + $0x3c] sm:$0xf]
      %v1790 = vld [vmem:[%s165 + $0x40] sm:$0xf]
      %v1791 = vld [vmem:[%s165 + $0x44] sm:$0xf]
      %v1792 = vld [vmem:[%s165 + $0x48] sm:$0xf]
      %v1793 = vld [vmem:[%s165 + $0x4c] sm:$0xf]
      %v1794 = vld [vmem:[%s165 + $0x50] sm:$0xf]
      %v1795 = vld [vmem:[%s165 + $0x54] sm:$0xf]
      %v1796 = vld [vmem:[%s165 + $0x58] sm:$0xf]
      %v1797 = vld [vmem:[%s165 + $0x5c] sm:$0xf]
      %v1798 = vld [vmem:[%s165 + $0x60] sm:$0xf]
      %v1799 = vld [vmem:[%s165 + $0x64] sm:$0xf]
      %v1800 = vld [vmem:[%s165 + $0x68] sm:$0xf]
      %v1801 = vld [vmem:[%s165 + $0x6c] sm:$0xf]
      %v1802 = vld [vmem:[%s165 + $0x70] sm:$0xf]
      %v1803 = vld [vmem:[%s165 + $0x74] sm:$0xf]
      %v1804 = vld [vmem:[%s165 + $0x78] sm:$0xf]
      %v1805 = vld [vmem:[%s165 + $0x7c] sm:$0xf]
      %v1806 = vld [vmem:[%s165 + $0x80] sm:$0xf]
      %v1807 = vld [vmem:[%s165 + $0x84] sm:$0xf]
      %v1808 = vld [vmem:[%s165 + $0x88] sm:$0xf]
      %v1809 = vld [vmem:[%s165 + $0x8c] sm:$0xf]
      %v1810 = vld [vmem:[%s165 + $0x90] sm:$0xf]
      %v1811 = vld [vmem:[%s165 + $0x94] sm:$0xf]
      %v1812 = vld [vmem:[%s165 + $0x98] sm:$0x1]
      %s1813 = scalar_lea.vmem %s1, 192
      %v1814 = vld [vmem:[%s1813] sm:$0xf]
      %v1815 = vld [vmem:[%s1813 + $0x4] sm:$0xf]
      %v1816 = vld [vmem:[%s1813 + $0x8] sm:$0xf]
      %v1817 = vld [vmem:[%s1813 + $0xc] sm:$0xf]
      %v1818 = vld [vmem:[%s1813 + $0x10] sm:$0xf]
      %v1819 = vld [vmem:[%s1813 + $0x14] sm:$0xf]
      %v1820 = vld [vmem:[%s1813 + $0x18] sm:$0xf]
      %v1821 = vld [vmem:[%s1813 + $0x1c] sm:$0xf]
      %v1822 = vld [vmem:[%s1813 + $0x20] sm:$0xf]
      %v1823 = vld [vmem:[%s1813 + $0x24] sm:$0xf]
      %v1824 = vld [vmem:[%s1813 + $0x28] sm:$0xf]
      %v1825 = vld [vmem:[%s1813 + $0x2c] sm:$0xf]
      %v1826 = vld [vmem:[%s1813 + $0x30] sm:$0xf]
      %v1827 = vld [vmem:[%s1813 + $0x34] sm:$0xf]
      %v1828 = vld [vmem:[%s1813 + $0x38] sm:$0xf]
      %v1829 = vld [vmem:[%s1813 + $0x3c] sm:$0xf]
      %v1867 = vunpack.c.l.b16 %v1776
      %v1868 = vunpack.c.l.b16 %v1777
      %v1869 = vunpack.c.l.b16 %v1778
      %v1870 = vunpack.c.l.b16 %v1779
      %v1871 = vunpack.c.l.b16 %v1780
      %v1872 = vunpack.c.l.b16 %v1781
      %v1873 = vunpack.c.l.b16 %v1782
      %v1874 = vunpack.c.l.b16 %v1783
      %v1875 = vunpack.c.l.b16 %v1784
      %v1876 = vunpack.c.l.b16 %v1785
      %v1877 = vunpack.c.l.b16 %v1786
      %v1878 = vunpack.c.l.b16 %v1787
      %v1879 = vunpack.c.l.b16 %v1788
      %v1880 = vunpack.c.l.b16 %v1789
      %v1881 = vunpack.c.l.b16 %v1790
      %v1882 = vunpack.c.l.b16 %v1791
      %v1883 = vunpack.c.l.b16 %v1792
      %v1884 = vunpack.c.l.b16 %v1793
      %v1885 = vunpack.c.l.b16 %v1794
      %v1886 = vunpack.c.l.b16 %v1795
      %v1887 = vunpack.c.l.b16 %v1796
      %v1888 = vunpack.c.l.b16 %v1797
      %v1889 = vunpack.c.l.b16 %v1798
      %v1890 = vunpack.c.l.b16 %v1799
      %v1891 = vunpack.c.l.b16 %v1800
      %v1892 = vunpack.c.l.b16 %v1801
      %v1893 = vunpack.c.l.b16 %v1802
      %v1894 = vunpack.c.l.b16 %v1803
      %v1895 = vunpack.c.l.b16 %v1804
      %v1896 = vunpack.c.l.b16 %v1805
      %v1897 = vunpack.c.l.b16 %v1806
      %v1898 = vunpack.c.l.b16 %v1807
      %v1899 = vunpack.c.l.b16 %v1808
      %v1900 = vunpack.c.l.b16 %v1809
      %v1901 = vunpack.c.l.b16 %v1810
      %v1902 = vunpack.c.l.b16 %v1811
      %v1903 = vunpack.c.l.b16 %v1812
      %v1904 = vpack.c.b16 %v1868, %v1867
      %v1905 = vpack.c.b16 %v1870, %v1869
      %v1906 = vpack.c.b16 %v1872, %v1871
      %v1907 = vpack.c.b16 %v1874, %v1873
      %v1908 = vpack.c.b16 %v1876, %v1875
      %v1909 = vpack.c.b16 %v1878, %v1877
      %v1910 = vpack.c.b16 %v1880, %v1879
      %v1911 = vpack.c.b16 %v1882, %v1881
      %v1912 = vpack.c.b16 %v1884, %v1883
      %v1913 = vpack.c.b16 %v1886, %v1885
      %v1914 = vpack.c.b16 %v1888, %v1887
      %v1915 = vpack.c.b16 %v1890, %v1889
      %v1916 = vpack.c.b16 %v1892, %v1891
      %v1917 = vpack.c.b16 %v1894, %v1893
      %v1918 = vpack.c.b16 %v1896, %v1895
      %v1919 = vpack.c.b16 %v1898, %v1897
      %v1920 = vpack.c.b16 %v1900, %v1899
      %v1921 = vpack.c.b16 %v1902, %v1901
      %v1922 = vpack.c.b16 %v1903, %v1903
      %v1923 = vrot.slane %v1904, 1
      %v1924 = vrot.slane %v1905, 1
      %v1925 = vsel %vm1387, %v1923, %v1924
      %v1926 = vrot.slane %v1906, 1
      %v1927 = vsel %vm1387, %v1924, %v1926
      %v1928 = vrot.slane %v1907, 1
      %v1929 = vsel %vm1387, %v1926, %v1928
      %v1930 = vrot.slane %v1908, 1
      %v1931 = vsel %vm1387, %v1928, %v1930
      %v1932 = vrot.slane %v1909, 1
      %v1933 = vsel %vm1387, %v1930, %v1932
      %v1934 = vrot.slane %v1910, 1
      %v1935 = vsel %vm1387, %v1932, %v1934
      %v1936 = vrot.slane %v1911, 1
      %v1937 = vsel %vm1387, %v1934, %v1936
      %v1938 = vrot.slane %v1912, 1
      %v1939 = vsel %vm1387, %v1936, %v1938
      %v1940 = vrot.slane %v1913, 1
      %v1941 = vsel %vm1387, %v1938, %v1940
      %v1942 = vrot.slane %v1914, 1
      %v1943 = vsel %vm1387, %v1940, %v1942
      %v1944 = vrot.slane %v1915, 1
      %v1945 = vsel %vm1387, %v1942, %v1944
      %v1946 = vrot.slane %v1916, 1
      %v1947 = vsel %vm1387, %v1944, %v1946
      %v1948 = vrot.slane %v1917, 1
      %v1949 = vsel %vm1387, %v1946, %v1948
      %v1950 = vrot.slane %v1918, 1
      %v1951 = vsel %vm1387, %v1948, %v1950
      %v1952 = vrot.slane %v1919, 1
      %v1953 = vsel %vm1387, %v1950, %v1952
      %v1954 = vrot.slane %v1920, 1
      %v1955 = vsel %vm1387, %v1952, %v1954
      %v1956 = vrot.slane %v1921, 1
      %v1957 = vsel %vm1387, %v1954, %v1956
      %v1958 = vrot.slane %v1922, 1
      %v1959 = vsel %vm1387, %v1956, %v1958
      %v1994 = vunpack.c.l.b16 %v1814
      %v1995 = vunpack.c.l.b16 %v1815
      %v1996 = vunpack.c.l.b16 %v1816
      %v1997 = vunpack.c.l.b16 %v1817
      %v1998 = vunpack.c.l.b16 %v1818
      %v1999 = vunpack.c.l.b16 %v1819
      %v2000 = vunpack.c.l.b16 %v1820
      %v2001 = vunpack.c.l.b16 %v1821
      %v2002 = vunpack.c.l.b16 %v1822
      %v2003 = vunpack.c.l.b16 %v1823
      %v2004 = vunpack.c.l.b16 %v1824
      %v2005 = vunpack.c.l.b16 %v1825
      %v2006 = vunpack.c.l.b16 %v1826
      %v2007 = vunpack.c.l.b16 %v1827
      %v2008 = vunpack.c.l.b16 %v1828
      %v2009 = vunpack.c.l.b16 %v1829
      %v2010 = vpack.c.b16 %v1995, %v1994
      %v2011 = vpack.c.b16 %v1997, %v1996
      %v2012 = vpack.c.b16 %v1999, %v1998
      %v2013 = vpack.c.b16 %v2001, %v2000
      %v2014 = vpack.c.b16 %v2003, %v2002
      %v2015 = vpack.c.b16 %v2005, %v2004
      %v2016 = vpack.c.b16 %v2007, %v2006
      %v2017 = vpack.c.b16 %v2009, %v2008
      %2026 = vmatprep.subr.bf16.mxu0 0
      %2027 = vmatpush1.bf16.msra.mxu0 %v2010
      %2028 = vmatprep.subr.bf16.mxu0 0
      %2029 = vmatpush1.bf16.msra.mxu0 %v2011
      %2030 = vmatprep.subr.bf16.mxu0 0
      %2031 = vmatpush1.bf16.msra.mxu0 %v2012
      %2032 = vmatprep.subr.bf16.mxu0 0
      %2033 = vmatpush1.bf16.msra.mxu0 %v2013
      %2034 = vmatprep.subr.bf16.mxu0 0
      %2035 = vmatpush1.bf16.msra.mxu0 %v2014
      %2036 = vmatprep.subr.bf16.mxu0 0
      %2037 = vmatpush1.bf16.msra.mxu0 %v2015
      %2038 = vmatprep.subr.bf16.mxu0 0
      %2039 = vmatpush1.bf16.msra.mxu0 %v2016
      %2040 = vmatprep.subr.bf16.mxu0 0
      %2041 = vmatpush1.bf16.msra.mxu0 %v2017
      %2042 = vmatprep.subr.bf16.mxu0 0
      %2043 = vmatpush1.bf16.msra.mxu0 0
      %2044 = vmatprep.subr.bf16.mxu0 0
      %2045 = vmatpush1.bf16.msra.mxu0 0
      %2046 = vmatprep.subr.bf16.mxu0 0
      %2047 = vmatpush1.bf16.msra.mxu0 0
      %2048 = vmatprep.subr.bf16.mxu0 0
      %2049 = vmatpush1.bf16.msra.mxu0 0
      %2050 = vmatprep.subr.bf16.mxu0 0
      %2051 = vmatpush1.bf16.msra.mxu0 0
      %2052 = vmatprep.subr.bf16.mxu0 0
      %2053 = vmatpush1.bf16.msra.mxu0 0
      %2054 = vmatprep.subr.bf16.mxu0 0
      %2055 = vmatpush1.bf16.msra.mxu0 0
      %2056 = vmatprep.subr.bf16.mxu0 0
      %2057 = vmatpush1.bf16.msra.mxu0 0
      %2058 = vmatprep.mubr.bf16.mxu0 0
      %2059 = vmatmul.mubr.bf16.gmra.mrb[0].mxu0 %v1925
      %v2060 = vpop.f32.mrb[0].mxu0
      %v2061 = vadd.f32 0.0, %v2060
      %v2062 = vpop.f32.mrb[0].mxu0
      %v2063 = vpop.f32.mrb[0].mxu0
      %v2064 = vadd.f32 0.0, %v2063
      %v2065 = vpop.f32.mrb[0].mxu0
      %2066 = vmatprep.mubr.bf16.mxu0 0
      %2067 = vmatmul.mubr.bf16.gmra.mrb[0].mxu0 %v1927
      %v2068 = vpop.f32.mrb[0].mxu0
      %v2069 = vadd.f32 0.0, %v2068
      %v2070 = vpop.f32.mrb[0].mxu0
      %v2071 = vpop.f32.mrb[0].mxu0
      %v2072 = vadd.f32 0.0, %v2071
      %v2073 = vpop.f32.mrb[0].mxu0
      %2074 = vmatprep.mubr.bf16.mxu0 0
      %2075 = vmatmul.mubr.bf16.gmra.mrb[0].mxu0 %v1929
      %v2076 = vpop.f32.mrb[0].mxu0
      %v2077 = vadd.f32 0.0, %v2076
      %v2078 = vpop.f32.mrb[0].mxu0
      %v2079 = vpop.f32.mrb[0].mxu0
      %v2080 = vadd.f32 0.0, %v2079
      %v2081 = vpop.f32.mrb[0].mxu0
      %2082 = vmatprep.mubr.bf16.mxu0 0
      %2083 = vmatmul.mubr.bf16.gmra.mrb[0].mxu0 %v1931
      %v2084 = vpop.f32.mrb[0].mxu0
      %v2085 = vadd.f32 0.0, %v2084
      %v2086 = vpop.f32.mrb[0].mxu0
      %v2087 = vpop.f32.mrb[0].mxu0
      %v2088 = vadd.f32 0.0, %v2087
      %v2089 = vpop.f32.mrb[0].mxu0
      %2090 = vmatprep.mubr.bf16.mxu0 0
      %2091 = vmatmul.mubr.bf16.gmra.mrb[0].mxu0 %v1933
      %v2092 = vpop.f32.mrb[0].mxu0
      %v2093 = vadd.f32 0.0, %v2092
      %v2094 = vpop.f32.mrb[0].mxu0
      %v2095 = vpop.f32.mrb[0].mxu0
      %v2096 = vadd.f32 0.0, %v2095
      %v2097 = vpop.f32.mrb[0].mxu0
      %2098 = vmatprep.mubr.bf16.mxu0 0
      %2099 = vmatmul.mubr.bf16.gmra.mrb[0].mxu0 %v1935
      %v2100 = vpop.f32.mrb[0].mxu0
      %v2101 = vadd.f32 0.0, %v2100
      %v2102 = vpop.f32.mrb[0].mxu0
      %v2103 = vpop.f32.mrb[0].mxu0
      %v2104 = vadd.f32 0.0, %v2103
      %v2105 = vpop.f32.mrb[0].mxu0
      %2106 = vmatprep.mubr.bf16.mxu0 0
      %2107 = vmatmul.mubr.bf16.gmra.mrb[0].mxu0 %v1937
      %v2108 = vpop.f32.mrb[0].mxu0
      %v2109 = vadd.f32 0.0, %v2108
      %v2110 = vpop.f32.mrb[0].mxu0
      %v2111 = vpop.f32.mrb[0].mxu0
      %v2112 = vadd.f32 0.0, %v2111
      %v2113 = vpop.f32.mrb[0].mxu0
      %2114 = vmatprep.mubr.bf16.mxu0 0
      %2115 = vmatmul.mubr.bf16.gmra.mrb[0].mxu0 %v1939
      %v2116 = vpop.f32.mrb[0].mxu0
      %v2117 = vadd.f32 0.0, %v2116
      %v2118 = vpop.f32.mrb[0].mxu0
      %v2119 = vpop.f32.mrb[0].mxu0
      %v2120 = vadd.f32 0.0, %v2119
      %v2121 = vpop.f32.mrb[0].mxu0
      %2122 = vmatprep.mubr.bf16.mxu0 0
      %2123 = vmatmul.mubr.bf16.gmra.mrb[0].mxu0 %v1941
      %v2124 = vpop.f32.mrb[0].mxu0
      %v2125 = vadd.f32 0.0, %v2124
      %v2126 = vpop.f32.mrb[0].mxu0
      %v2127 = vpop.f32.mrb[0].mxu0
      %v2128 = vadd.f32 0.0, %v2127
      %v2129 = vpop.f32.mrb[0].mxu0
      %2130 = vmatprep.mubr.bf16.mxu0 0
      %2131 = vmatmul.mubr.bf16.gmra.mrb[0].mxu0 %v1943
      %v2132 = vpop.f32.mrb[0].mxu0
      %v2133 = vadd.f32 0.0, %v2132
      %v2134 = vpop.f32.mrb[0].mxu0
      %v2135 = vpop.f32.mrb[0].mxu0
      %v2136 = vadd.f32 0.0, %v2135
      %v2137 = vpop.f32.mrb[0].mxu0
      %2138 = vmatprep.mubr.bf16.mxu0 0
      %2139 = vmatmul.mubr.bf16.gmra.mrb[0].mxu0 %v1945
      %v2140 = vpop.f32.mrb[0].mxu0
      %v2141 = vadd.f32 0.0, %v2140
      %v2142 = vpop.f32.mrb[0].mxu0
      %v2143 = vpop.f32.mrb[0].mxu0
      %v2144 = vadd.f32 0.0, %v2143
      %v2145 = vpop.f32.mrb[0].mxu0
      %2146 = vmatprep.mubr.bf16.mxu0 0
      %2147 = vmatmul.mubr.bf16.gmra.mrb[0].mxu0 %v1947
      %v2148 = vpop.f32.mrb[0].mxu0
      %v2149 = vadd.f32 0.0, %v2148
      %v2150 = vpop.f32.mrb[0].mxu0
      %v2151 = vpop.f32.mrb[0].mxu0
      %v2152 = vadd.f32 0.0, %v2151
      %v2153 = vpop.f32.mrb[0].mxu0
      %2154 = vmatprep.mubr.bf16.mxu0 0
      %2155 = vmatmul.mubr.bf16.gmra.mrb[0].mxu0 %v1949
      %v2156 = vpop.f32.mrb[0].mxu0
      %v2157 = vadd.f32 0.0, %v2156
      %v2158 = vpop.f32.mrb[0].mxu0
      %v2159 = vpop.f32.mrb[0].mxu0
      %v2160 = vadd.f32 0.0, %v2159
      %v2161 = vpop.f32.mrb[0].mxu0
      %2162 = vmatprep.mubr.bf16.mxu0 0
      %2163 = vmatmul.mubr.bf16.gmra.mrb[0].mxu0 %v1951
      %v2164 = vpop.f32.mrb[0].mxu0
      %v2165 = vadd.f32 0.0, %v2164
      %v2166 = vpop.f32.mrb[0].mxu0
      %v2167 = vpop.f32.mrb[0].mxu0
      %v2168 = vadd.f32 0.0, %v2167
      %v2169 = vpop.f32.mrb[0].mxu0
      %2170 = vmatprep.mubr.bf16.mxu0 0
      %2171 = vmatmul.mubr.bf16.gmra.mrb[0].mxu0 %v1953
      %v2172 = vpop.f32.mrb[0].mxu0
      %v2173 = vadd.f32 0.0, %v2172
      %v2174 = vpop.f32.mrb[0].mxu0
      %v2175 = vpop.f32.mrb[0].mxu0
      %v2176 = vadd.f32 0.0, %v2175
      %v2177 = vpop.f32.mrb[0].mxu0
      %2178 = vmatprep.mubr.bf16.mxu0 0
      %2179 = vmatmul.mubr.bf16.gmra.mrb[0].mxu0 %v1955
      %v2180 = vpop.f32.mrb[0].mxu0
      %v2181 = vadd.f32 0.0, %v2180
      %v2182 = vpop.f32.mrb[0].mxu0
      %v2183 = vpop.f32.mrb[0].mxu0
      %v2184 = vadd.f32 0.0, %v2183
      %v2185 = vpop.f32.mrb[0].mxu0
      %2186 = vmatprep.mubr.bf16.mxu0 0
      %2187 = vmatmul.mubr.bf16.gmra.mrb[0].mxu0 %v1957
      %v2188 = vpop.f32.mrb[0].mxu0
      %v2189 = vadd.f32 0.0, %v2188
      %v2190 = vpop.f32.mrb[0].mxu0
      %v2191 = vpop.f32.mrb[0].mxu0
      %v2192 = vadd.f32 0.0, %v2191
      %v2193 = vpop.f32.mrb[0].mxu0
      %2194 = vmatprep.mubr.bf16.mxu0 0
      %2195 = vmatmul.mubr.bf16.gmra.mrb[0].mxu0 %v1959
      %v2196 = vpop.f32.mrb[0].mxu0
      %v2197 = vadd.f32 0.0, %v2196
      %v2198 = vpop.f32.mrb[0].mxu0
      %v2199 = vpop.f32.mrb[0].mxu0
      %v2200 = vadd.f32 0.0, %v2199
      %v2201 = vpop.f32.mrb[0].mxu0
      %2202 = vdwg.mxu0
      %v2203 = vld [vmem:[#allocation2] sm:$0xff]
      %v2204 = vld [vmem:[#allocation2 + $0x8] sm:$0xff]
      %v2205 = vld [vmem:[#allocation2 + $0x10] sm:$0xff]
      %v2206 = vld [vmem:[#allocation2 + $0x18] sm:$0xff]
      %v2207 = vld [vmem:[#allocation2 + $0x20] sm:$0xff]
      %v2208 = vld [vmem:[#allocation2 + $0x28] sm:$0xff]
      %v2209 = vld [vmem:[#allocation2 + $0x30] sm:$0xff]
      %v2210 = vld [vmem:[#allocation2 + $0x38] sm:$0xff]
      %v2211 = vld [vmem:[#allocation2 + $0x40] sm:$0xff]
      %v2212 = vld [vmem:[#allocation2 + $0x48] sm:$0xff]
      %v2213 = vld [vmem:[#allocation2 + $0x50] sm:$0xff]
      %v2214 = vld [vmem:[#allocation2 + $0x58] sm:$0xff]
      %v2215 = vld [vmem:[#allocation2 + $0x60] sm:$0xff]
      %v2216 = vld [vmem:[#allocation2 + $0x68] sm:$0xff]
      %v2217 = vld [vmem:[#allocation2 + $0x70] sm:$0xff]
      %v2218 = vld [vmem:[#allocation2 + $0x78] sm:$0xff]
      %v2219 = vld [vmem:[#allocation2 + $0x80] sm:$0xff]
      %v2220 = vld [vmem:[#allocation2 + $0x88] sm:$0xff]
      %v2221 = vld [vmem:[#allocation2 + $0x90] sm:$0xff]
      %v2222 = vld [vmem:[#allocation2 + $0x98] sm:$0xff]
      %v2223 = vld [vmem:[#allocation2 + $0xa0] sm:$0xff]
      %v2224 = vld [vmem:[#allocation2 + $0xa8] sm:$0xff]
      %v2225 = vld [vmem:[#allocation2 + $0xb0] sm:$0xff]
      %v2226 = vld [vmem:[#allocation2 + $0xb8] sm:$0xff]
      %v2227 = vld [vmem:[#allocation2 + $0xc0] sm:$0xff]
      %v2228 = vld [vmem:[#allocation2 + $0xc8] sm:$0xff]
      %v2229 = vld [vmem:[#allocation2 + $0xd0] sm:$0xff]
      %v2230 = vld [vmem:[#allocation2 + $0xd8] sm:$0xff]
      %v2231 = vld [vmem:[#allocation2 + $0xe0] sm:$0xff]
      %v2232 = vld [vmem:[#allocation2 + $0xe8] sm:$0xff]
      %v2233 = vld [vmem:[#allocation2 + $0xf0] sm:$0xff]
      %v2234 = vld [vmem:[#allocation2 + $0xf8] sm:$0xff]
      %v2235 = vld [vmem:[#allocation2 + $0x100] sm:$0xff]
      %v2236 = vld [vmem:[#allocation2 + $0x108] sm:$0xff]
      %v2237 = vld [vmem:[#allocation2 + $0x110] sm:$0xff]
      %v2238 = vld [vmem:[#allocation2 + $0x118] sm:$0xff]
      %v2239 = vadd.f32 %v2203, %v2061
      %v2240 = vadd.f32 %v2204, %v2064
      %v2241 = vadd.f32 %v2205, %v2069
      %v2242 = vadd.f32 %v2206, %v2072
      %v2243 = vadd.f32 %v2207, %v2077
      %v2244 = vadd.f32 %v2208, %v2080
      %v2245 = vadd.f32 %v2209, %v2085
      %v2246 = vadd.f32 %v2210, %v2088
      %v2247 = vadd.f32 %v2211, %v2093
      %v2248 = vadd.f32 %v2212, %v2096
      %v2249 = vadd.f32 %v2213, %v2101
      %v2250 = vadd.f32 %v2214, %v2104
      %v2251 = vadd.f32 %v2215, %v2109
      %v2252 = vadd.f32 %v2216, %v2112
      %v2253 = vadd.f32 %v2217, %v2117
      %v2254 = vadd.f32 %v2218, %v2120
      %v2255 = vadd.f32 %v2219, %v2125
      %v2256 = vadd.f32 %v2220, %v2128
      %v2257 = vadd.f32 %v2221, %v2133
      %v2258 = vadd.f32 %v2222, %v2136
      %v2259 = vadd.f32 %v2223, %v2141
      %v2260 = vadd.f32 %v2224, %v2144
      %v2261 = vadd.f32 %v2225, %v2149
      %v2262 = vadd.f32 %v2226, %v2152
      %v2263 = vadd.f32 %v2227, %v2157
      %v2264 = vadd.f32 %v2228, %v2160
      %v2265 = vadd.f32 %v2229, %v2165
      %v2266 = vadd.f32 %v2230, %v2168
      %v2267 = vadd.f32 %v2231, %v2173
      %v2268 = vadd.f32 %v2232, %v2176
      %v2269 = vadd.f32 %v2233, %v2181
      %v2270 = vadd.f32 %v2234, %v2184
      %v2271 = vadd.f32 %v2235, %v2189
      %v2272 = vadd.f32 %v2236, %v2192
      %v2273 = vadd.f32 %v2237, %v2197
      %v2274 = vadd.f32 %v2238, %v2200
      %2275 = vst [vmem:[#allocation2] sm:$0xff] %v2239
      %2276 = vst [vmem:[#allocation2 + $0x8] sm:$0xff] %v2240
      %2277 = vst [vmem:[#allocation2 + $0x10] sm:$0xff] %v2241
      %2278 = vst [vmem:[#allocation2 + $0x18] sm:$0xff] %v2242
      %2279 = vst [vmem:[#allocation2 + $0x20] sm:$0xff] %v2243
      %2280 = vst [vmem:[#allocation2 + $0x28] sm:$0xff] %v2244
      %2281 = vst [vmem:[#allocation2 + $0x30] sm:$0xff] %v2245
      %2282 = vst [vmem:[#allocation2 + $0x38] sm:$0xff] %v2246
      %2283 = vst [vmem:[#allocation2 + $0x40] sm:$0xff] %v2247
      %2284 = vst [vmem:[#allocation2 + $0x48] sm:$0xff] %v2248
      %2285 = vst [vmem:[#allocation2 + $0x50] sm:$0xff] %v2249
      %2286 = vst [vmem:[#allocation2 + $0x58] sm:$0xff] %v2250
      %2287 = vst [vmem:[#allocation2 + $0x60] sm:$0xff] %v2251
      %2288 = vst [vmem:[#allocation2 + $0x68] sm:$0xff] %v2252
      %2289 = vst [vmem:[#allocation2 + $0x70] sm:$0xff] %v2253
      %2290 = vst [vmem:[#allocation2 + $0x78] sm:$0xff] %v2254
      %2291 = vst [vmem:[#allocation2 + $0x80] sm:$0xff] %v2255
      %2292 = vst [vmem:[#allocation2 + $0x88] sm:$0xff] %v2256
      %2293 = vst [vmem:[#allocation2 + $0x90] sm:$0xff] %v2257
      %2294 = vst [vmem:[#allocation2 + $0x98] sm:$0xff] %v2258
      %2295 = vst [vmem:[#allocation2 + $0xa0] sm:$0xff] %v2259
      %2296 = vst [vmem:[#allocation2 + $0xa8] sm:$0xff] %v2260
      %2297 = vst [vmem:[#allocation2 + $0xb0] sm:$0xff] %v2261
      %2298 = vst [vmem:[#allocation2 + $0xb8] sm:$0xff] %v2262
      %2299 = vst [vmem:[#allocation2 + $0xc0] sm:$0xff] %v2263
      %2300 = vst [vmem:[#allocation2 + $0xc8] sm:$0xff] %v2264
      %2301 = vst [vmem:[#allocation2 + $0xd0] sm:$0xff] %v2265
      %2302 = vst [vmem:[#allocation2 + $0xd8] sm:$0xff] %v2266
      %2303 = vst [vmem:[#allocation2 + $0xe0] sm:$0xff] %v2267
      %2304 = vst [vmem:[#allocation2 + $0xe8] sm:$0xff] %v2268
      %2305 = vst [vmem:[#allocation2 + $0xf0] sm:$0xff] %v2269
      %2306 = vst [vmem:[#allocation2 + $0xf8] sm:$0xff] %v2270
      %2307 = vst [vmem:[#allocation2 + $0x100] sm:$0xff] %v2271
      %2308 = vst [vmem:[#allocation2 + $0x108] sm:$0xff] %v2272
      %2309 = vst [vmem:[#allocation2 + $0x110] sm:$0xff] %v2273
      %2310 = vst [vmem:[#allocation2 + $0x118] sm:$0xff] %v2274
      %v2311 = vld [vmem:[%s165 + $0x8] sm:$0xe]
      %v2312 = vld [vmem:[%s165 + $0xc] sm:$0xf]
      %v2313 = vld [vmem:[%s165 + $0x10] sm:$0xf]
      %v2314 = vld [vmem:[%s165 + $0x14] sm:$0xf]
      %v2315 = vld [vmem:[%s165 + $0x18] sm:$0xf]
      %v2316 = vld [vmem:[%s165 + $0x1c] sm:$0xf]
      %v2317 = vld [vmem:[%s165 + $0x20] sm:$0xf]
      %v2318 = vld [vmem:[%s165 + $0x24] sm:$0xf]
      %v2319 = vld [vmem:[%s165 + $0x28] sm:$0xf]
      %v2320 = vld [vmem:[%s165 + $0x2c] sm:$0xf]
      %v2321 = vld [vmem:[%s165 + $0x30] sm:$0xf]
      %v2322 = vld [vmem:[%s165 + $0x34] sm:$0xf]
      %v2323 = vld [vmem:[%s165 + $0x38] sm:$0xf]
      %v2324 = vld [vmem:[%s165 + $0x3c] sm:$0xf]
      %v2325 = vld [vmem:[%s165 + $0x40] sm:$0xf]
      %v2326 = vld [vmem:[%s165 + $0x44] sm:$0xf]
      %v2327 = vld [vmem:[%s165 + $0x48] sm:$0xf]
      %v2328 = vld [vmem:[%s165 + $0x4c] sm:$0xf]
      %v2329 = vld [vmem:[%s165 + $0x50] sm:$0xf]
      %v2330 = vld [vmem:[%s165 + $0x54] sm:$0xf]
      %v2331 = vld [vmem:[%s165 + $0x58] sm:$0xf]
      %v2332 = vld [vmem:[%s165 + $0x5c] sm:$0xf]
      %v2333 = vld [vmem:[%s165 + $0x60] sm:$0xf]
      %v2334 = vld [vmem:[%s165 + $0x64] sm:$0xf]
      %v2335 = vld [vmem:[%s165 + $0x68] sm:$0xf]
      %v2336 = vld [vmem:[%s165 + $0x6c] sm:$0xf]
      %v2337 = vld [vmem:[%s165 + $0x70] sm:$0xf]
      %v2338 = vld [vmem:[%s165 + $0x74] sm:$0xf]
      %v2339 = vld [vmem:[%s165 + $0x78] sm:$0xf]
      %v2340 = vld [vmem:[%s165 + $0x7c] sm:$0xf]
      %v2341 = vld [vmem:[%s165 + $0x80] sm:$0xf]
      %v2342 = vld [vmem:[%s165 + $0x84] sm:$0xf]
      %v2343 = vld [vmem:[%s165 + $0x88] sm:$0xf]
      %v2344 = vld [vmem:[%s165 + $0x8c] sm:$0xf]
      %v2345 = vld [vmem:[%s165 + $0x90] sm:$0xf]
      %v2346 = vld [vmem:[%s165 + $0x94] sm:$0xf]
      %v2347 = vld [vmem:[%s165 + $0x98] sm:$0x3]
      %s2348 = scalar_lea.vmem %s1, 256
      %v2349 = vld [vmem:[%s2348] sm:$0xf]
      %v2350 = vld [vmem:[%s2348 + $0x4] sm:$0xf]
      %v2351 = vld [vmem:[%s2348 + $0x8] sm:$0xf]
      %v2352 = vld [vmem:[%s2348 + $0xc] sm:$0xf]
      %v2353 = vld [vmem:[%s2348 + $0x10] sm:$0xf]
      %v2354 = vld [vmem:[%s2348 + $0x14] sm:$0xf]
      %v2355 = vld [vmem:[%s2348 + $0x18] sm:$0xf]
      %v2356 = vld [vmem:[%s2348 + $0x1c] sm:$0xf]
      %v2357 = vld [vmem:[%s2348 + $0x20] sm:$0xf]
      %v2358 = vld [vmem:[%s2348 + $0x24] sm:$0xf]
      %v2359 = vld [vmem:[%s2348 + $0x28] sm:$0xf]
      %v2360 = vld [vmem:[%s2348 + $0x2c] sm:$0xf]
      %v2361 = vld [vmem:[%s2348 + $0x30] sm:$0xf]
      %v2362 = vld [vmem:[%s2348 + $0x34] sm:$0xf]
      %v2363 = vld [vmem:[%s2348 + $0x38] sm:$0xf]
      %v2364 = vld [vmem:[%s2348 + $0x3c] sm:$0xf]
      %v2402 = vunpack.c.l.b16 %v2311
      %v2403 = vunpack.c.l.b16 %v2312
      %v2404 = vunpack.c.l.b16 %v2313
      %v2405 = vunpack.c.l.b16 %v2314
      %v2406 = vunpack.c.l.b16 %v2315
      %v2407 = vunpack.c.l.b16 %v2316
      %v2408 = vunpack.c.l.b16 %v2317
      %v2409 = vunpack.c.l.b16 %v2318
      %v2410 = vunpack.c.l.b16 %v2319
      %v2411 = vunpack.c.l.b16 %v2320
      %v2412 = vunpack.c.l.b16 %v2321
      %v2413 = vunpack.c.l.b16 %v2322
      %v2414 = vunpack.c.l.b16 %v2323
      %v2415 = vunpack.c.l.b16 %v2324
      %v2416 = vunpack.c.l.b16 %v2325
      %v2417 = vunpack.c.l.b16 %v2326
      %v2418 = vunpack.c.l.b16 %v2327
      %v2419 = vunpack.c.l.b16 %v2328
      %v2420 = vunpack.c.l.b16 %v2329
      %v2421 = vunpack.c.l.b16 %v2330
      %v2422 = vunpack.c.l.b16 %v2331
      %v2423 = vunpack.c.l.b16 %v2332
      %v2424 = vunpack.c.l.b16 %v2333
      %v2425 = vunpack.c.l.b16 %v2334
      %v2426 = vunpack.c.l.b16 %v2335
      %v2427 = vunpack.c.l.b16 %v2336
      %v2428 = vunpack.c.l.b16 %v2337
      %v2429 = vunpack.c.l.b16 %v2338
      %v2430 = vunpack.c.l.b16 %v2339
      %v2431 = vunpack.c.l.b16 %v2340
      %v2432 = vunpack.c.l.b16 %v2341
      %v2433 = vunpack.c.l.b16 %v2342
      %v2434 = vunpack.c.l.b16 %v2343
      %v2435 = vunpack.c.l.b16 %v2344
      %v2436 = vunpack.c.l.b16 %v2345
      %v2437 = vunpack.c.l.b16 %v2346
      %v2438 = vunpack.c.l.b16 %v2347
      %v2439 = vpack.c.b16 %v2403, %v2402
      %v2440 = vpack.c.b16 %v2405, %v2404
      %v2441 = vpack.c.b16 %v2407, %v2406
      %v2442 = vpack.c.b16 %v2409, %v2408
      %v2443 = vpack.c.b16 %v2411, %v2410
      %v2444 = vpack.c.b16 %v2413, %v2412
      %v2445 = vpack.c.b16 %v2415, %v2414
      %v2446 = vpack.c.b16 %v2417, %v2416
      %v2447 = vpack.c.b16 %v2419, %v2418
      %v2448 = vpack.c.b16 %v2421, %v2420
      %v2449 = vpack.c.b16 %v2423, %v2422
      %v2450 = vpack.c.b16 %v2425, %v2424
      %v2451 = vpack.c.b16 %v2427, %v2426
      %v2452 = vpack.c.b16 %v2429, %v2428
      %v2453 = vpack.c.b16 %v2431, %v2430
      %v2454 = vpack.c.b16 %v2433, %v2432
      %v2455 = vpack.c.b16 %v2435, %v2434
      %v2456 = vpack.c.b16 %v2437, %v2436
      %v2457 = vpack.c.b16 %v2438, %v2438
      %vm2458 = vsmask.f32 6400
      %v2460 = vshrl.u32 %v2439, 16
      %v2462 = vrot.slane %v2460, 1
      %v2463 = vshll.u32 %v2439, 16
      %v2465 = vrot.slane %v2463, 2
      %v2466 = vor.u32 %v2462, %v2465
      %v2468 = vshrl.u32 %v2440, 16
      %v2470 = vrot.slane %v2468, 1
      %v2471 = vshll.u32 %v2440, 16
      %v2473 = vrot.slane %v2471, 2
      %v2474 = vor.u32 %v2470, %v2473
      %v2475 = vsel %vm2458, %v2466, %v2474
      %v2477 = vshrl.u32 %v2441, 16
      %v2479 = vrot.slane %v2477, 1
      %v2480 = vshll.u32 %v2441, 16
      %v2482 = vrot.slane %v2480, 2
      %v2483 = vor.u32 %v2479, %v2482
      %v2484 = vsel %vm2458, %v2474, %v2483
      %v2486 = vshrl.u32 %v2442, 16
      %v2488 = vrot.slane %v2486, 1
      %v2489 = vshll.u32 %v2442, 16
      %v2491 = vrot.slane %v2489, 2
      %v2492 = vor.u32 %v2488, %v2491
      %v2493 = vsel %vm2458, %v2483, %v2492
      %v2495 = vshrl.u32 %v2443, 16
      %v2497 = vrot.slane %v2495, 1
      %v2498 = vshll.u32 %v2443, 16
      %v2500 = vrot.slane %v2498, 2
      %v2501 = vor.u32 %v2497, %v2500
      %v2502 = vsel %vm2458, %v2492, %v2501
      %v2504 = vshrl.u32 %v2444, 16
      %v2506 = vrot.slane %v2504, 1
      %v2507 = vshll.u32 %v2444, 16
      %v2509 = vrot.slane %v2507, 2
      %v2510 = vor.u32 %v2506, %v2509
      %v2511 = vsel %vm2458, %v2501, %v2510
      %v2513 = vshrl.u32 %v2445, 16
      %v2515 = vrot.slane %v2513, 1
      %v2516 = vshll.u32 %v2445, 16
      %v2518 = vrot.slane %v2516, 2
      %v2519 = vor.u32 %v2515, %v2518
      %v2520 = vsel %vm2458, %v2510, %v2519
      %v2522 = vshrl.u32 %v2446, 16
      %v2524 = vrot.slane %v2522, 1
      %v2525 = vshll.u32 %v2446, 16
      %v2527 = vrot.slane %v2525, 2
      %v2528 = vor.u32 %v2524, %v2527
      %v2529 = vsel %vm2458, %v2519, %v2528
      %v2531 = vshrl.u32 %v2447, 16
      %v2533 = vrot.slane %v2531, 1
      %v2534 = vshll.u32 %v2447, 16
      %v2536 = vrot.slane %v2534, 2
      %v2537 = vor.u32 %v2533, %v2536
      %v2538 = vsel %vm2458, %v2528, %v2537
      %v2540 = vshrl.u32 %v2448, 16
      %v2542 = vrot.slane %v2540, 1
      %v2543 = vshll.u32 %v2448, 16
      %v2545 = vrot.slane %v2543, 2
      %v2546 = vor.u32 %v2542, %v2545
      %v2547 = vsel %vm2458, %v2537, %v2546
      %v2549 = vshrl.u32 %v2449, 16
      %v2551 = vrot.slane %v2549, 1
      %v2552 = vshll.u32 %v2449, 16
      %v2554 = vrot.slane %v2552, 2
      %v2555 = vor.u32 %v2551, %v2554
      %v2556 = vsel %vm2458, %v2546, %v2555
      %v2558 = vshrl.u32 %v2450, 16
      %v2560 = vrot.slane %v2558, 1
      %v2561 = vshll.u32 %v2450, 16
      %v2563 = vrot.slane %v2561, 2
      %v2564 = vor.u32 %v2560, %v2563
      %v2565 = vsel %vm2458, %v2555, %v2564
      %v2567 = vshrl.u32 %v2451, 16
      %v2569 = vrot.slane %v2567, 1
      %v2570 = vshll.u32 %v2451, 16
      %v2572 = vrot.slane %v2570, 2
      %v2573 = vor.u32 %v2569, %v2572
      %v2574 = vsel %vm2458, %v2564, %v2573
      %v2576 = vshrl.u32 %v2452, 16
      %v2578 = vrot.slane %v2576, 1
      %v2579 = vshll.u32 %v2452, 16
      %v2581 = vrot.slane %v2579, 2
      %v2582 = vor.u32 %v2578, %v2581
      %v2583 = vsel %vm2458, %v2573, %v2582
      %v2585 = vshrl.u32 %v2453, 16
      %v2587 = vrot.slane %v2585, 1
      %v2588 = vshll.u32 %v2453, 16
      %v2590 = vrot.slane %v2588, 2
      %v2591 = vor.u32 %v2587, %v2590
      %v2592 = vsel %vm2458, %v2582, %v2591
      %v2594 = vshrl.u32 %v2454, 16
      %v2596 = vrot.slane %v2594, 1
      %v2597 = vshll.u32 %v2454, 16
      %v2599 = vrot.slane %v2597, 2
      %v2600 = vor.u32 %v2596, %v2599
      %v2601 = vsel %vm2458, %v2591, %v2600
      %v2603 = vshrl.u32 %v2455, 16
      %v2605 = vrot.slane %v2603, 1
      %v2606 = vshll.u32 %v2455, 16
      %v2608 = vrot.slane %v2606, 2
      %v2609 = vor.u32 %v2605, %v2608
      %v2610 = vsel %vm2458, %v2600, %v2609
      %v2612 = vshrl.u32 %v2456, 16
      %v2614 = vrot.slane %v2612, 1
      %v2615 = vshll.u32 %v2456, 16
      %v2617 = vrot.slane %v2615, 2
      %v2618 = vor.u32 %v2614, %v2617
      %v2619 = vsel %vm2458, %v2609, %v2618
      %v2621 = vshrl.u32 %v2457, 16
      %v2623 = vrot.slane %v2621, 1
      %v2624 = vshll.u32 %v2457, 16
      %v2626 = vrot.slane %v2624, 2
      %v2627 = vor.u32 %v2623, %v2626
      %v2628 = vsel %vm2458, %v2618, %v2627
      %v2663 = vunpack.c.l.b16 %v2349
      %v2664 = vunpack.c.l.b16 %v2350
      %v2665 = vunpack.c.l.b16 %v2351
      %v2666 = vunpack.c.l.b16 %v2352
      %v2667 = vunpack.c.l.b16 %v2353
      %v2668 = vunpack.c.l.b16 %v2354
      %v2669 = vunpack.c.l.b16 %v2355
      %v2670 = vunpack.c.l.b16 %v2356
      %v2671 = vunpack.c.l.b16 %v2357
      %v2672 = vunpack.c.l.b16 %v2358
      %v2673 = vunpack.c.l.b16 %v2359
      %v2674 = vunpack.c.l.b16 %v2360
      %v2675 = vunpack.c.l.b16 %v2361
      %v2676 = vunpack.c.l.b16 %v2362
      %v2677 = vunpack.c.l.b16 %v2363
      %v2678 = vunpack.c.l.b16 %v2364
      %v2679 = vpack.c.b16 %v2664, %v2663
      %v2680 = vpack.c.b16 %v2666, %v2665
      %v2681 = vpack.c.b16 %v2668, %v2667
      %v2682 = vpack.c.b16 %v2670, %v2669
      %v2683 = vpack.c.b16 %v2672, %v2671
      %v2684 = vpack.c.b16 %v2674, %v2673
      %v2685 = vpack.c.b16 %v2676, %v2675
      %v2686 = vpack.c.b16 %v2678, %v2677
      %2695 = vmatprep.subr.bf16.mxu0 0
      %2696 = vmatpush1.bf16.msra.mxu0 %v2679
      %2697 = vmatprep.subr.bf16.mxu0 0
      %2698 = vmatpush1.bf16.msra.mxu0 %v2680
      %2699 = vmatprep.subr.bf16.mxu0 0
      %2700 = vmatpush1.bf16.msra.mxu0 %v2681
      %2701 = vmatprep.subr.bf16.mxu0 0
      %2702 = vmatpush1.bf16.msra.mxu0 %v2682
      %2703 = vmatprep.subr.bf16.mxu0 0
      %2704 = vmatpush1.bf16.msra.mxu0 %v2683
      %2705 = vmatprep.subr.bf16.mxu0 0
      %2706 = vmatpush1.bf16.msra.mxu0 %v2684
      %2707 = vmatprep.subr.bf16.mxu0 0
      %2708 = vmatpush1.bf16.msra.mxu0 %v2685
      %2709 = vmatprep.subr.bf16.mxu0 0
      %2710 = vmatpush1.bf16.msra.mxu0 %v2686
      %2711 = vmatprep.subr.bf16.mxu0 0
      %2712 = vmatpush1.bf16.msra.mxu0 0
      %2713 = vmatprep.subr.bf16.mxu0 0
      %2714 = vmatpush1.bf16.msra.mxu0 0
      %2715 = vmatprep.subr.bf16.mxu0 0
      %2716 = vmatpush1.bf16.msra.mxu0 0
      %2717 = vmatprep.subr.bf16.mxu0 0
      %2718 = vmatpush1.bf16.msra.mxu0 0
      %2719 = vmatprep.subr.bf16.mxu0 0
      %2720 = vmatpush1.bf16.msra.mxu0 0
      %2721 = vmatprep.subr.bf16.mxu0 0
      %2722 = vmatpush1.bf16.msra.mxu0 0
      %2723 = vmatprep.subr.bf16.mxu0 0
      %2724 = vmatpush1.bf16.msra.mxu0 0
      %2725 = vmatprep.subr.bf16.mxu0 0
      %2726 = vmatpush1.bf16.msra.mxu0 0
      %2727 = vmatprep.mubr.bf16.mxu0 0
      %2728 = vmatmul.mubr.bf16.gmra.mrb[0].mxu0 %v2475
      %v2729 = vpop.f32.mrb[0].mxu0
      %v2730 = vadd.f32 0.0, %v2729
      %v2731 = vpop.f32.mrb[0].mxu0
      %v2732 = vpop.f32.mrb[0].mxu0
      %v2733 = vadd.f32 0.0, %v2732
      %v2734 = vpop.f32.mrb[0].mxu0
      %2735 = vmatprep.mubr.bf16.mxu0 0
      %2736 = vmatmul.mubr.bf16.gmra.mrb[0].mxu0 %v2484
      %v2737 = vpop.f32.mrb[0].mxu0
      %v2738 = vadd.f32 0.0, %v2737
      %v2739 = vpop.f32.mrb[0].mxu0
      %v2740 = vpop.f32.mrb[0].mxu0
      %v2741 = vadd.f32 0.0, %v2740
      %v2742 = vpop.f32.mrb[0].mxu0
      %2743 = vmatprep.mubr.bf16.mxu0 0
      %2744 = vmatmul.mubr.bf16.gmra.mrb[0].mxu0 %v2493
      %v2745 = vpop.f32.mrb[0].mxu0
      %v2746 = vadd.f32 0.0, %v2745
      %v2747 = vpop.f32.mrb[0].mxu0
      %v2748 = vpop.f32.mrb[0].mxu0
      %v2749 = vadd.f32 0.0, %v2748
      %v2750 = vpop.f32.mrb[0].mxu0
      %2751 = vmatprep.mubr.bf16.mxu0 0
      %2752 = vmatmul.mubr.bf16.gmra.mrb[0].mxu0 %v2502
      %v2753 = vpop.f32.mrb[0].mxu0
      %v2754 = vadd.f32 0.0, %v2753
      %v2755 = vpop.f32.mrb[0].mxu0
      %v2756 = vpop.f32.mrb[0].mxu0
      %v2757 = vadd.f32 0.0, %v2756
      %v2758 = vpop.f32.mrb[0].mxu0
      %2759 = vmatprep.mubr.bf16.mxu0 0
      %2760 = vmatmul.mubr.bf16.gmra.mrb[0].mxu0 %v2511
      %v2761 = vpop.f32.mrb[0].mxu0
      %v2762 = vadd.f32 0.0, %v2761
      %v2763 = vpop.f32.mrb[0].mxu0
      %v2764 = vpop.f32.mrb[0].mxu0
      %v2765 = vadd.f32 0.0, %v2764
      %v2766 = vpop.f32.mrb[0].mxu0
      %2767 = vmatprep.mubr.bf16.mxu0 0
      %2768 = vmatmul.mubr.bf16.gmra.mrb[0].mxu0 %v2520
      %v2769 = vpop.f32.mrb[0].mxu0
      %v2770 = vadd.f32 0.0, %v2769
      %v2771 = vpop.f32.mrb[0].mxu0
      %v2772 = vpop.f32.mrb[0].mxu0
      %v2773 = vadd.f32 0.0, %v2772
      %v2774 = vpop.f32.mrb[0].mxu0
      %2775 = vmatprep.mubr.bf16.mxu0 0
      %2776 = vmatmul.mubr.bf16.gmra.mrb[0].mxu0 %v2529
      %v2777 = vpop.f32.mrb[0].mxu0
      %v2778 = vadd.f32 0.0, %v2777
      %v2779 = vpop.f32.mrb[0].mxu0
      %v2780 = vpop.f32.mrb[0].mxu0
      %v2781 = vadd.f32 0.0, %v2780
      %v2782 = vpop.f32.mrb[0].mxu0
      %2783 = vmatprep.mubr.bf16.mxu0 0
      %2784 = vmatmul.mubr.bf16.gmra.mrb[0].mxu0 %v2538
      %v2785 = vpop.f32.mrb[0].mxu0
      %v2786 = vadd.f32 0.0, %v2785
      %v2787 = vpop.f32.mrb[0].mxu0
      %v2788 = vpop.f32.mrb[0].mxu0
      %v2789 = vadd.f32 0.0, %v2788
      %v2790 = vpop.f32.mrb[0].mxu0
      %2791 = vmatprep.mubr.bf16.mxu0 0
      %2792 = vmatmul.mubr.bf16.gmra.mrb[0].mxu0 %v2547
      %v2793 = vpop.f32.mrb[0].mxu0
      %v2794 = vadd.f32 0.0, %v2793
      %v2795 = vpop.f32.mrb[0].mxu0
      %v2796 = vpop.f32.mrb[0].mxu0
      %v2797 = vadd.f32 0.0, %v2796
      %v2798 = vpop.f32.mrb[0].mxu0
      %2799 = vmatprep.mubr.bf16.mxu0 0
      %2800 = vmatmul.mubr.bf16.gmra.mrb[0].mxu0 %v2556
      %v2801 = vpop.f32.mrb[0].mxu0
      %v2802 = vadd.f32 0.0, %v2801
      %v2803 = vpop.f32.mrb[0].mxu0
      %v2804 = vpop.f32.mrb[0].mxu0
      %v2805 = vadd.f32 0.0, %v2804
      %v2806 = vpop.f32.mrb[0].mxu0
      %2807 = vmatprep.mubr.bf16.mxu0 0
      %2808 = vmatmul.mubr.bf16.gmra.mrb[0].mxu0 %v2565
      %v2809 = vpop.f32.mrb[0].mxu0
      %v2810 = vadd.f32 0.0, %v2809
      %v2811 = vpop.f32.mrb[0].mxu0
      %v2812 = vpop.f32.mrb[0].mxu0
      %v2813 = vadd.f32 0.0, %v2812
      %v2814 = vpop.f32.mrb[0].mxu0
      %2815 = vmatprep.mubr.bf16.mxu0 0
      %2816 = vmatmul.mubr.bf16.gmra.mrb[0].mxu0 %v2574
      %v2817 = vpop.f32.mrb[0].mxu0
      %v2818 = vadd.f32 0.0, %v2817
      %v2819 = vpop.f32.mrb[0].mxu0
      %v2820 = vpop.f32.mrb[0].mxu0
      %v2821 = vadd.f32 0.0, %v2820
      %v2822 = vpop.f32.mrb[0].mxu0
      %2823 = vmatprep.mubr.bf16.mxu0 0
      %2824 = vmatmul.mubr.bf16.gmra.mrb[0].mxu0 %v2583
      %v2825 = vpop.f32.mrb[0].mxu0
      %v2826 = vadd.f32 0.0, %v2825
      %v2827 = vpop.f32.mrb[0].mxu0
      %v2828 = vpop.f32.mrb[0].mxu0
      %v2829 = vadd.f32 0.0, %v2828
      %v2830 = vpop.f32.mrb[0].mxu0
      %2831 = vmatprep.mubr.bf16.mxu0 0
      %2832 = vmatmul.mubr.bf16.gmra.mrb[0].mxu0 %v2592
      %v2833 = vpop.f32.mrb[0].mxu0
      %v2834 = vadd.f32 0.0, %v2833
      %v2835 = vpop.f32.mrb[0].mxu0
      %v2836 = vpop.f32.mrb[0].mxu0
      %v2837 = vadd.f32 0.0, %v2836
      %v2838 = vpop.f32.mrb[0].mxu0
      %2839 = vmatprep.mubr.bf16.mxu0 0
      %2840 = vmatmul.mubr.bf16.gmra.mrb[0].mxu0 %v2601
      %v2841 = vpop.f32.mrb[0].mxu0
      %v2842 = vadd.f32 0.0, %v2841
      %v2843 = vpop.f32.mrb[0].mxu0
      %v2844 = vpop.f32.mrb[0].mxu0
      %v2845 = vadd.f32 0.0, %v2844
      %v2846 = vpop.f32.mrb[0].mxu0
      %2847 = vmatprep.mubr.bf16.mxu0 0
      %2848 = vmatmul.mubr.bf16.gmra.mrb[0].mxu0 %v2610
      %v2849 = vpop.f32.mrb[0].mxu0
      %v2850 = vadd.f32 0.0, %v2849
      %v2851 = vpop.f32.mrb[0].mxu0
      %v2852 = vpop.f32.mrb[0].mxu0
      %v2853 = vadd.f32 0.0, %v2852
      %v2854 = vpop.f32.mrb[0].mxu0
      %2855 = vmatprep.mubr.bf16.mxu0 0
      %2856 = vmatmul.mubr.bf16.gmra.mrb[0].mxu0 %v2619
      %v2857 = vpop.f32.mrb[0].mxu0
      %v2858 = vadd.f32 0.0, %v2857
      %v2859 = vpop.f32.mrb[0].mxu0
      %v2860 = vpop.f32.mrb[0].mxu0
      %v2861 = vadd.f32 0.0, %v2860
      %v2862 = vpop.f32.mrb[0].mxu0
      %2863 = vmatprep.mubr.bf16.mxu0 0
      %2864 = vmatmul.mubr.bf16.gmra.mrb[0].mxu0 %v2628
      %v2865 = vpop.f32.mrb[0].mxu0
      %v2866 = vadd.f32 0.0, %v2865
      %v2867 = vpop.f32.mrb[0].mxu0
      %v2868 = vpop.f32.mrb[0].mxu0
      %v2869 = vadd.f32 0.0, %v2868
      %v2870 = vpop.f32.mrb[0].mxu0
      %2871 = vdwg.mxu0
      %v2872 = vld [vmem:[#allocation2] sm:$0xff]
      %v2873 = vld [vmem:[#allocation2 + $0x8] sm:$0xff]
      %v2874 = vld [vmem:[#allocation2 + $0x10] sm:$0xff]
      %v2875 = vld [vmem:[#allocation2 + $0x18] sm:$0xff]
      %v2876 = vld [vmem:[#allocation2 + $0x20] sm:$0xff]
      %v2877 = vld [vmem:[#allocation2 + $0x28] sm:$0xff]
      %v2878 = vld [vmem:[#allocation2 + $0x30] sm:$0xff]
      %v2879 = vld [vmem:[#allocation2 + $0x38] sm:$0xff]
      %v2880 = vld [vmem:[#allocation2 + $0x40] sm:$0xff]
      %v2881 = vld [vmem:[#allocation2 + $0x48] sm:$0xff]
      %v2882 = vld [vmem:[#allocation2 + $0x50] sm:$0xff]
      %v2883 = vld [vmem:[#allocation2 + $0x58] sm:$0xff]
      %v2884 = vld [vmem:[#allocation2 + $0x60] sm:$0xff]
      %v2885 = vld [vmem:[#allocation2 + $0x68] sm:$0xff]
      %v2886 = vld [vmem:[#allocation2 + $0x70] sm:$0xff]
      %v2887 = vld [vmem:[#allocation2 + $0x78] sm:$0xff]
      %v2888 = vld [vmem:[#allocation2 + $0x80] sm:$0xff]
      %v2889 = vld [vmem:[#allocation2 + $0x88] sm:$0xff]
      %v2890 = vld [vmem:[#allocation2 + $0x90] sm:$0xff]
      %v2891 = vld [vmem:[#allocation2 + $0x98] sm:$0xff]
      %v2892 = vld [vmem:[#allocation2 + $0xa0] sm:$0xff]
      %v2893 = vld [vmem:[#allocation2 + $0xa8] sm:$0xff]
      %v2894 = vld [vmem:[#allocation2 + $0xb0] sm:$0xff]
      %v2895 = vld [vmem:[#allocation2 + $0xb8] sm:$0xff]
      %v2896 = vld [vmem:[#allocation2 + $0xc0] sm:$0xff]
      %v2897 = vld [vmem:[#allocation2 + $0xc8] sm:$0xff]
      %v2898 = vld [vmem:[#allocation2 + $0xd0] sm:$0xff]
      %v2899 = vld [vmem:[#allocation2 + $0xd8] sm:$0xff]
      %v2900 = vld [vmem:[#allocation2 + $0xe0] sm:$0xff]
      %v2901 = vld [vmem:[#allocation2 + $0xe8] sm:$0xff]
      %v2902 = vld [vmem:[#allocation2 + $0xf0] sm:$0xff]
      %v2903 = vld [vmem:[#allocation2 + $0xf8] sm:$0xff]
      %v2904 = vld [vmem:[#allocation2 + $0x100] sm:$0xff]
      %v2905 = vld [vmem:[#allocation2 + $0x108] sm:$0xff]
      %v2906 = vld [vmem:[#allocation2 + $0x110] sm:$0xff]
      %v2907 = vld [vmem:[#allocation2 + $0x118] sm:$0xff]
      %v2908 = vadd.f32 %v2872, %v2730
      %v2909 = vadd.f32 %v2873, %v2733
      %v2910 = vadd.f32 %v2874, %v2738
      %v2911 = vadd.f32 %v2875, %v2741
      %v2912 = vadd.f32 %v2876, %v2746
      %v2913 = vadd.f32 %v2877, %v2749
      %v2914 = vadd.f32 %v2878, %v2754
      %v2915 = vadd.f32 %v2879, %v2757
      %v2916 = vadd.f32 %v2880, %v2762
      %v2917 = vadd.f32 %v2881, %v2765
      %v2918 = vadd.f32 %v2882, %v2770
      %v2919 = vadd.f32 %v2883, %v2773
      %v2920 = vadd.f32 %v2884, %v2778
      %v2921 = vadd.f32 %v2885, %v2781
      %v2922 = vadd.f32 %v2886, %v2786
      %v2923 = vadd.f32 %v2887, %v2789
      %v2924 = vadd.f32 %v2888, %v2794
      %v2925 = vadd.f32 %v2889, %v2797
      %v2926 = vadd.f32 %v2890, %v2802
      %v2927 = vadd.f32 %v2891, %v2805
      %v2928 = vadd.f32 %v2892, %v2810
      %v2929 = vadd.f32 %v2893, %v2813
      %v2930 = vadd.f32 %v2894, %v2818
      %v2931 = vadd.f32 %v2895, %v2821
      %v2932 = vadd.f32 %v2896, %v2826
      %v2933 = vadd.f32 %v2897, %v2829
      %v2934 = vadd.f32 %v2898, %v2834
      %v2935 = vadd.f32 %v2899, %v2837
      %v2936 = vadd.f32 %v2900, %v2842
      %v2937 = vadd.f32 %v2901, %v2845
      %v2938 = vadd.f32 %v2902, %v2850
      %v2939 = vadd.f32 %v2903, %v2853
      %v2940 = vadd.f32 %v2904, %v2858
      %v2941 = vadd.f32 %v2905, %v2861
      %v2942 = vadd.f32 %v2906, %v2866
      %v2943 = vadd.f32 %v2907, %v2869
      %2944 = vst [vmem:[#allocation2] sm:$0xff] %v2908
      %2945 = vst [vmem:[#allocation2 + $0x8] sm:$0xff] %v2909
      %2946 = vst [vmem:[#allocation2 + $0x10] sm:$0xff] %v2910
      %2947 = vst [vmem:[#allocation2 + $0x18] sm:$0xff] %v2911
      %2948 = vst [vmem:[#allocation2 + $0x20] sm:$0xff] %v2912
      %2949 = vst [vmem:[#allocation2 + $0x28] sm:$0xff] %v2913
      %2950 = vst [vmem:[#allocation2 + $0x30] sm:$0xff] %v2914
      %2951 = vst [vmem:[#allocation2 + $0x38] sm:$0xff] %v2915
      %2952 = vst [vmem:[#allocation2 + $0x40] sm:$0xff] %v2916
      %2953 = vst [vmem:[#allocation2 + $0x48] sm:$0xff] %v2917
      %2954 = vst [vmem:[#allocation2 + $0x50] sm:$0xff] %v2918
      %2955 = vst [vmem:[#allocation2 + $0x58] sm:$0xff] %v2919
      %2956 = vst [vmem:[#allocation2 + $0x60] sm:$0xff] %v2920
      %2957 = vst [vmem:[#allocation2 + $0x68] sm:$0xff] %v2921
      %2958 = vst [vmem:[#allocation2 + $0x70] sm:$0xff] %v2922
      %2959 = vst [vmem:[#allocation2 + $0x78] sm:$0xff] %v2923
      %2960 = vst [vmem:[#allocation2 + $0x80] sm:$0xff] %v2924
      %2961 = vst [vmem:[#allocation2 + $0x88] sm:$0xff] %v2925
      %2962 = vst [vmem:[#allocation2 + $0x90] sm:$0xff] %v2926
      %2963 = vst [vmem:[#allocation2 + $0x98] sm:$0xff] %v2927
      %2964 = vst [vmem:[#allocation2 + $0xa0] sm:$0xff] %v2928
      %2965 = vst [vmem:[#allocation2 + $0xa8] sm:$0xff] %v2929
      %2966 = vst [vmem:[#allocation2 + $0xb0] sm:$0xff] %v2930
      %2967 = vst [vmem:[#allocation2 + $0xb8] sm:$0xff] %v2931
      %2968 = vst [vmem:[#allocation2 + $0xc0] sm:$0xff] %v2932
      %2969 = vst [vmem:[#allocation2 + $0xc8] sm:$0xff] %v2933
      %2970 = vst [vmem:[#allocation2 + $0xd0] sm:$0xff] %v2934
      %2971 = vst [vmem:[#allocation2 + $0xd8] sm:$0xff] %v2935
      %2972 = vst [vmem:[#allocation2 + $0xe0] sm:$0xff] %v2936
      %2973 = vst [vmem:[#allocation2 + $0xe8] sm:$0xff] %v2937
      %2974 = vst [vmem:[#allocation2 + $0xf0] sm:$0xff] %v2938
      %2975 = vst [vmem:[#allocation2 + $0xf8] sm:$0xff] %v2939
      %2976 = vst [vmem:[#allocation2 + $0x100] sm:$0xff] %v2940
      %2977 = vst [vmem:[#allocation2 + $0x108] sm:$0xff] %v2941
      %2978 = vst [vmem:[#allocation2 + $0x110] sm:$0xff] %v2942
      %2979 = vst [vmem:[#allocation2 + $0x118] sm:$0xff] %v2943
      %v2980 = vld [vmem:[%s165 + $0x8] sm:$0xc]
      %v2981 = vld [vmem:[%s165 + $0xc] sm:$0xf]
      %v2982 = vld [vmem:[%s165 + $0x10] sm:$0xf]
      %v2983 = vld [vmem:[%s165 + $0x14] sm:$0xf]
      %v2984 = vld [vmem:[%s165 + $0x18] sm:$0xf]
      %v2985 = vld [vmem:[%s165 + $0x1c] sm:$0xf]
      %v2986 = vld [vmem:[%s165 + $0x20] sm:$0xf]
      %v2987 = vld [vmem:[%s165 + $0x24] sm:$0xf]
      %v2988 = vld [vmem:[%s165 + $0x28] sm:$0xf]
      %v2989 = vld [vmem:[%s165 + $0x2c] sm:$0xf]
      %v2990 = vld [vmem:[%s165 + $0x30] sm:$0xf]
      %v2991 = vld [vmem:[%s165 + $0x34] sm:$0xf]
      %v2992 = vld [vmem:[%s165 + $0x38] sm:$0xf]
      %v2993 = vld [vmem:[%s165 + $0x3c] sm:$0xf]
      %v2994 = vld [vmem:[%s165 + $0x40] sm:$0xf]
      %v2995 = vld [vmem:[%s165 + $0x44] sm:$0xf]
      %v2996 = vld [vmem:[%s165 + $0x48] sm:$0xf]
      %v2997 = vld [vmem:[%s165 + $0x4c] sm:$0xf]
      %v2998 = vld [vmem:[%s165 + $0x50] sm:$0xf]
      %v2999 = vld [vmem:[%s165 + $0x54] sm:$0xf]
      %v3000 = vld [vmem:[%s165 + $0x58] sm:$0xf]
      %v3001 = vld [vmem:[%s165 + $0x5c] sm:$0xf]
      %v3002 = vld [vmem:[%s165 + $0x60] sm:$0xf]
      %v3003 = vld [vmem:[%s165 + $0x64] sm:$0xf]
      %v3004 = vld [vmem:[%s165 + $0x68] sm:$0xf]
      %v3005 = vld [vmem:[%s165 + $0x6c] sm:$0xf]
      %v3006 = vld [vmem:[%s165 + $0x70] sm:$0xf]
      %v3007 = vld [vmem:[%s165 + $0x74] sm:$0xf]
      %v3008 = vld [vmem:[%s165 + $0x78] sm:$0xf]
      %v3009 = vld [vmem:[%s165 + $0x7c] sm:$0xf]
      %v3010 = vld [vmem:[%s165 + $0x80] sm:$0xf]
      %v3011 = vld [vmem:[%s165 + $0x84] sm:$0xf]
      %v3012 = vld [vmem:[%s165 + $0x88] sm:$0xf]
      %v3013 = vld [vmem:[%s165 + $0x8c] sm:$0xf]
      %v3014 = vld [vmem:[%s165 + $0x90] sm:$0xf]
      %v3015 = vld [vmem:[%s165 + $0x94] sm:$0xf]
      %v3016 = vld [vmem:[%s165 + $0x98] sm:$0x3]
      %s3017 = scalar_lea.vmem %s1, 320
      %v3018 = vld [vmem:[%s3017] sm:$0xf]
      %v3019 = vld [vmem:[%s3017 + $0x4] sm:$0xf]
      %v3020 = vld [vmem:[%s3017 + $0x8] sm:$0xf]
      %v3021 = vld [vmem:[%s3017 + $0xc] sm:$0xf]
      %v3022 = vld [vmem:[%s3017 + $0x10] sm:$0xf]
      %v3023 = vld [vmem:[%s3017 + $0x14] sm:$0xf]
      %v3024 = vld [vmem:[%s3017 + $0x18] sm:$0xf]
      %v3025 = vld [vmem:[%s3017 + $0x1c] sm:$0xf]
      %v3026 = vld [vmem:[%s3017 + $0x20] sm:$0xf]
      %v3027 = vld [vmem:[%s3017 + $0x24] sm:$0xf]
      %v3028 = vld [vmem:[%s3017 + $0x28] sm:$0xf]
      %v3029 = vld [vmem:[%s3017 + $0x2c] sm:$0xf]
      %v3030 = vld [vmem:[%s3017 + $0x30] sm:$0xf]
      %v3031 = vld [vmem:[%s3017 + $0x34] sm:$0xf]
      %v3032 = vld [vmem:[%s3017 + $0x38] sm:$0xf]
      %v3033 = vld [vmem:[%s3017 + $0x3c] sm:$0xf]
      %v3071 = vunpack.c.l.b16 %v2980
      %v3072 = vunpack.c.l.b16 %v2981
      %v3073 = vunpack.c.l.b16 %v2982
      %v3074 = vunpack.c.l.b16 %v2983
      %v3075 = vunpack.c.l.b16 %v2984
      %v3076 = vunpack.c.l.b16 %v2985
      %v3077 = vunpack.c.l.b16 %v2986
      %v3078 = vunpack.c.l.b16 %v2987
      %v3079 = vunpack.c.l.b16 %v2988
      %v3080 = vunpack.c.l.b16 %v2989
      %v3081 = vunpack.c.l.b16 %v2990
      %v3082 = vunpack.c.l.b16 %v2991
      %v3083 = vunpack.c.l.b16 %v2992
      %v3084 = vunpack.c.l.b16 %v2993
      %v3085 = vunpack.c.l.b16 %v2994
      %v3086 = vunpack.c.l.b16 %v2995
      %v3087 = vunpack.c.l.b16 %v2996
      %v3088 = vunpack.c.l.b16 %v2997
      %v3089 = vunpack.c.l.b16 %v2998
      %v3090 = vunpack.c.l.b16 %v2999
      %v3091 = vunpack.c.l.b16 %v3000
      %v3092 = vunpack.c.l.b16 %v3001
      %v3093 = vunpack.c.l.b16 %v3002
      %v3094 = vunpack.c.l.b16 %v3003
      %v3095 = vunpack.c.l.b16 %v3004
      %v3096 = vunpack.c.l.b16 %v3005
      %v3097 = vunpack.c.l.b16 %v3006
      %v3098 = vunpack.c.l.b16 %v3007
      %v3099 = vunpack.c.l.b16 %v3008
      %v3100 = vunpack.c.l.b16 %v3009
      %v3101 = vunpack.c.l.b16 %v3010
      %v3102 = vunpack.c.l.b16 %v3011
      %v3103 = vunpack.c.l.b16 %v3012
      %v3104 = vunpack.c.l.b16 %v3013
      %v3105 = vunpack.c.l.b16 %v3014
      %v3106 = vunpack.c.l.b16 %v3015
      %v3107 = vunpack.c.l.b16 %v3016
      %v3108 = vpack.c.b16 %v3072, %v3071
      %v3109 = vpack.c.b16 %v3074, %v3073
      %v3110 = vpack.c.b16 %v3076, %v3075
      %v3111 = vpack.c.b16 %v3078, %v3077
      %v3112 = vpack.c.b16 %v3080, %v3079
      %v3113 = vpack.c.b16 %v3082, %v3081
      %v3114 = vpack.c.b16 %v3084, %v3083
      %v3115 = vpack.c.b16 %v3086, %v3085
      %v3116 = vpack.c.b16 %v3088, %v3087
      %v3117 = vpack.c.b16 %v3090, %v3089
      %v3118 = vpack.c.b16 %v3092, %v3091
      %v3119 = vpack.c.b16 %v3094, %v3093
      %v3120 = vpack.c.b16 %v3096, %v3095
      %v3121 = vpack.c.b16 %v3098, %v3097
      %v3122 = vpack.c.b16 %v3100, %v3099
      %v3123 = vpack.c.b16 %v3102, %v3101
      %v3124 = vpack.c.b16 %v3104, %v3103
      %v3125 = vpack.c.b16 %v3106, %v3105
      %v3126 = vpack.c.b16 %v3107, %v3107
      %vm3127 = vcmask 1045504
      %v3128 = vrot.slane %v3108, 2
      %v3129 = vrot.slane %v3109, 2
      %v3130 = vsel %vm3127, %v3128, %v3129
      %v3131 = vrot.slane %v3110, 2
      %v3132 = vsel %vm3127, %v3129, %v3131
      %v3133 = vrot.slane %v3111, 2
      %v3134 = vsel %vm3127, %v3131, %v3133
      %v3135 = vrot.slane %v3112, 2
      %v3136 = vsel %vm3127, %v3133, %v3135
      %v3137 = vrot.slane %v3113, 2
      %v3138 = vsel %vm3127, %v3135, %v3137
      %v3139 = vrot.slane %v3114, 2
      %v3140 = vsel %vm3127, %v3137, %v3139
      %v3141 = vrot.slane %v3115, 2
      %v3142 = vsel %vm3127, %v3139, %v3141
      %v3143 = vrot.slane %v3116, 2
      %v3144 = vsel %vm3127, %v3141, %v3143
      %v3145 = vrot.slane %v3117, 2
      %v3146 = vsel %vm3127, %v3143, %v3145
      %v3147 = vrot.slane %v3118, 2
      %v3148 = vsel %vm3127, %v3145, %v3147
      %v3149 = vrot.slane %v3119, 2
      %v3150 = vsel %vm3127, %v3147, %v3149
      %v3151 = vrot.slane %v3120, 2
      %v3152 = vsel %vm3127, %v3149, %v3151
      %v3153 = vrot.slane %v3121, 2
      %v3154 = vsel %vm3127, %v3151, %v3153
      %v3155 = vrot.slane %v3122, 2
      %v3156 = vsel %vm3127, %v3153, %v3155
      %v3157 = vrot.slane %v3123, 2
      %v3158 = vsel %vm3127, %v3155, %v3157
      %v3159 = vrot.slane %v3124, 2
      %v3160 = vsel %vm3127, %v3157, %v3159
      %v3161 = vrot.slane %v3125, 2
      %v3162 = vsel %vm3127, %v3159, %v3161
      %v3163 = vrot.slane %v3126, 2
      %v3164 = vsel %vm3127, %v3161, %v3163
      %v3199 = vunpack.c.l.b16 %v3018
      %v3200 = vunpack.c.l.b16 %v3019
      %v3201 = vunpack.c.l.b16 %v3020
      %v3202 = vunpack.c.l.b16 %v3021
      %v3203 = vunpack.c.l.b16 %v3022
      %v3204 = vunpack.c.l.b16 %v3023
      %v3205 = vunpack.c.l.b16 %v3024
      %v3206 = vunpack.c.l.b16 %v3025
      %v3207 = vunpack.c.l.b16 %v3026
      %v3208 = vunpack.c.l.b16 %v3027
      %v3209 = vunpack.c.l.b16 %v3028
      %v3210 = vunpack.c.l.b16 %v3029
      %v3211 = vunpack.c.l.b16 %v3030
      %v3212 = vunpack.c.l.b16 %v3031
      %v3213 = vunpack.c.l.b16 %v3032
      %v3214 = vunpack.c.l.b16 %v3033
      %v3215 = vpack.c.b16 %v3200, %v3199
      %v3216 = vpack.c.b16 %v3202, %v3201
      %v3217 = vpack.c.b16 %v3204, %v3203
      %v3218 = vpack.c.b16 %v3206, %v3205
      %v3219 = vpack.c.b16 %v3208, %v3207
      %v3220 = vpack.c.b16 %v3210, %v3209
      %v3221 = vpack.c.b16 %v3212, %v3211
      %v3222 = vpack.c.b16 %v3214, %v3213
      %3231 = vmatprep.subr.bf16.mxu0 0
      %3232 = vmatpush1.bf16.msra.mxu0 %v3215
      %3233 = vmatprep.subr.bf16.mxu0 0
      %3234 = vmatpush1.bf16.msra.mxu0 %v3216
      %3235 = vmatprep.subr.bf16.mxu0 0
      %3236 = vmatpush1.bf16.msra.mxu0 %v3217
      %3237 = vmatprep.subr.bf16.mxu0 0
      %3238 = vmatpush1.bf16.msra.mxu0 %v3218
      %3239 = vmatprep.subr.bf16.mxu0 0
      %3240 = vmatpush1.bf16.msra.mxu0 %v3219
      %3241 = vmatprep.subr.bf16.mxu0 0
      %3242 = vmatpush1.bf16.msra.mxu0 %v3220
      %3243 = vmatprep.subr.bf16.mxu0 0
      %3244 = vmatpush1.bf16.msra.mxu0 %v3221
      %3245 = vmatprep.subr.bf16.mxu0 0
      %3246 = vmatpush1.bf16.msra.mxu0 %v3222
      %3247 = vmatprep.subr.bf16.mxu0 0
      %3248 = vmatpush1.bf16.msra.mxu0 0
      %3249 = vmatprep.subr.bf16.mxu0 0
      %3250 = vmatpush1.bf16.msra.mxu0 0
      %3251 = vmatprep.subr.bf16.mxu0 0
      %3252 = vmatpush1.bf16.msra.mxu0 0
      %3253 = vmatprep.subr.bf16.mxu0 0
      %3254 = vmatpush1.bf16.msra.mxu0 0
      %3255 = vmatprep.subr.bf16.mxu0 0
      %3256 = vmatpush1.bf16.msra.mxu0 0
      %3257 = vmatprep.subr.bf16.mxu0 0
      %3258 = vmatpush1.bf16.msra.mxu0 0
      %3259 = vmatprep.subr.bf16.mxu0 0
      %3260 = vmatpush1.bf16.msra.mxu0 0
      %3261 = vmatprep.subr.bf16.mxu0 0
      %3262 = vmatpush1.bf16.msra.mxu0 0
      %3263 = vmatprep.mubr.bf16.mxu0 0
      %3264 = vmatmul.mubr.bf16.gmra.mrb[0].mxu0 %v3130
      %v3265 = vpop.f32.mrb[0].mxu0
      %v3266 = vadd.f32 0.0, %v3265
      %v3267 = vpop.f32.mrb[0].mxu0
      %v3268 = vpop.f32.mrb[0].mxu0
      %v3269 = vadd.f32 0.0, %v3268
      %v3270 = vpop.f32.mrb[0].mxu0
      %3271 = vmatprep.mubr.bf16.mxu0 0
      %3272 = vmatmul.mubr.bf16.gmra.mrb[0].mxu0 %v3132
      %v3273 = vpop.f32.mrb[0].mxu0
      %v3274 = vadd.f32 0.0, %v3273
      %v3275 = vpop.f32.mrb[0].mxu0
      %v3276 = vpop.f32.mrb[0].mxu0
      %v3277 = vadd.f32 0.0, %v3276
      %v3278 = vpop.f32.mrb[0].mxu0
      %3279 = vmatprep.mubr.bf16.mxu0 0
      %3280 = vmatmul.mubr.bf16.gmra.mrb[0].mxu0 %v3134
      %v3281 = vpop.f32.mrb[0].mxu0
      %v3282 = vadd.f32 0.0, %v3281
      %v3283 = vpop.f32.mrb[0].mxu0
      %v3284 = vpop.f32.mrb[0].mxu0
      %v3285 = vadd.f32 0.0, %v3284
      %v3286 = vpop.f32.mrb[0].mxu0
      %3287 = vmatprep.mubr.bf16.mxu0 0
      %3288 = vmatmul.mubr.bf16.gmra.mrb[0].mxu0 %v3136
      %v3289 = vpop.f32.mrb[0].mxu0
      %v3290 = vadd.f32 0.0, %v3289
      %v3291 = vpop.f32.mrb[0].mxu0
      %v3292 = vpop.f32.mrb[0].mxu0
      %v3293 = vadd.f32 0.0, %v3292
      %v3294 = vpop.f32.mrb[0].mxu0
      %3295 = vmatprep.mubr.bf16.mxu0 0
      %3296 = vmatmul.mubr.bf16.gmra.mrb[0].mxu0 %v3138
      %v3297 = vpop.f32.mrb[0].mxu0
      %v3298 = vadd.f32 0.0, %v3297
      %v3299 = vpop.f32.mrb[0].mxu0
      %v3300 = vpop.f32.mrb[0].mxu0
      %v3301 = vadd.f32 0.0, %v3300
      %v3302 = vpop.f32.mrb[0].mxu0
      %3303 = vmatprep.mubr.bf16.mxu0 0
      %3304 = vmatmul.mubr.bf16.gmra.mrb[0].mxu0 %v3140
      %v3305 = vpop.f32.mrb[0].mxu0
      %v3306 = vadd.f32 0.0, %v3305
      %v3307 = vpop.f32.mrb[0].mxu0
      %v3308 = vpop.f32.mrb[0].mxu0
      %v3309 = vadd.f32 0.0, %v3308
      %v3310 = vpop.f32.mrb[0].mxu0
      %3311 = vmatprep.mubr.bf16.mxu0 0
      %3312 = vmatmul.mubr.bf16.gmra.mrb[0].mxu0 %v3142
      %v3313 = vpop.f32.mrb[0].mxu0
      %v3314 = vadd.f32 0.0, %v3313
      %v3315 = vpop.f32.mrb[0].mxu0
      %v3316 = vpop.f32.mrb[0].mxu0
      %v3317 = vadd.f32 0.0, %v3316
      %v3318 = vpop.f32.mrb[0].mxu0
      %3319 = vmatprep.mubr.bf16.mxu0 0
      %3320 = vmatmul.mubr.bf16.gmra.mrb[0].mxu0 %v3144
      %v3321 = vpop.f32.mrb[0].mxu0
      %v3322 = vadd.f32 0.0, %v3321
      %v3323 = vpop.f32.mrb[0].mxu0
      %v3324 = vpop.f32.mrb[0].mxu0
      %v3325 = vadd.f32 0.0, %v3324
      %v3326 = vpop.f32.mrb[0].mxu0
      %3327 = vmatprep.mubr.bf16.mxu0 0
      %3328 = vmatmul.mubr.bf16.gmra.mrb[0].mxu0 %v3146
      %v3329 = vpop.f32.mrb[0].mxu0
      %v3330 = vadd.f32 0.0, %v3329
      %v3331 = vpop.f32.mrb[0].mxu0
      %v3332 = vpop.f32.mrb[0].mxu0
      %v3333 = vadd.f32 0.0, %v3332
      %v3334 = vpop.f32.mrb[0].mxu0
      %3335 = vmatprep.mubr.bf16.mxu0 0
      %3336 = vmatmul.mubr.bf16.gmra.mrb[0].mxu0 %v3148
      %v3337 = vpop.f32.mrb[0].mxu0
      %v3338 = vadd.f32 0.0, %v3337
      %v3339 = vpop.f32.mrb[0].mxu0
      %v3340 = vpop.f32.mrb[0].mxu0
      %v3341 = vadd.f32 0.0, %v3340
      %v3342 = vpop.f32.mrb[0].mxu0
      %3343 = vmatprep.mubr.bf16.mxu0 0
      %3344 = vmatmul.mubr.bf16.gmra.mrb[0].mxu0 %v3150
      %v3345 = vpop.f32.mrb[0].mxu0
      %v3346 = vadd.f32 0.0, %v3345
      %v3347 = vpop.f32.mrb[0].mxu0
      %v3348 = vpop.f32.mrb[0].mxu0
      %v3349 = vadd.f32 0.0, %v3348
      %v3350 = vpop.f32.mrb[0].mxu0
      %3351 = vmatprep.mubr.bf16.mxu0 0
      %3352 = vmatmul.mubr.bf16.gmra.mrb[0].mxu0 %v3152
      %v3353 = vpop.f32.mrb[0].mxu0
      %v3354 = vadd.f32 0.0, %v3353
      %v3355 = vpop.f32.mrb[0].mxu0
      %v3356 = vpop.f32.mrb[0].mxu0
      %v3357 = vadd.f32 0.0, %v3356
      %v3358 = vpop.f32.mrb[0].mxu0
      %3359 = vmatprep.mubr.bf16.mxu0 0
      %3360 = vmatmul.mubr.bf16.gmra.mrb[0].mxu0 %v3154
      %v3361 = vpop.f32.mrb[0].mxu0
      %v3362 = vadd.f32 0.0, %v3361
      %v3363 = vpop.f32.mrb[0].mxu0
      %v3364 = vpop.f32.mrb[0].mxu0
      %v3365 = vadd.f32 0.0, %v3364
      %v3366 = vpop.f32.mrb[0].mxu0
      %3367 = vmatprep.mubr.bf16.mxu0 0
      %3368 = vmatmul.mubr.bf16.gmra.mrb[0].mxu0 %v3156
      %v3369 = vpop.f32.mrb[0].mxu0
      %v3370 = vadd.f32 0.0, %v3369
      %v3371 = vpop.f32.mrb[0].mxu0
      %v3372 = vpop.f32.mrb[0].mxu0
      %v3373 = vadd.f32 0.0, %v3372
      %v3374 = vpop.f32.mrb[0].mxu0
      %3375 = vmatprep.mubr.bf16.mxu0 0
      %3376 = vmatmul.mubr.bf16.gmra.mrb[0].mxu0 %v3158
      %v3377 = vpop.f32.mrb[0].mxu0
      %v3378 = vadd.f32 0.0, %v3377
      %v3379 = vpop.f32.mrb[0].mxu0
      %v3380 = vpop.f32.mrb[0].mxu0
      %v3381 = vadd.f32 0.0, %v3380
      %v3382 = vpop.f32.mrb[0].mxu0
      %3383 = vmatprep.mubr.bf16.mxu0 0
      %3384 = vmatmul.mubr.bf16.gmra.mrb[0].mxu0 %v3160
      %v3385 = vpop.f32.mrb[0].mxu0
      %v3386 = vadd.f32 0.0, %v3385
      %v3387 = vpop.f32.mrb[0].mxu0
      %v3388 = vpop.f32.mrb[0].mxu0
      %v3389 = vadd.f32 0.0, %v3388
      %v3390 = vpop.f32.mrb[0].mxu0
      %3391 = vmatprep.mubr.bf16.mxu0 0
      %3392 = vmatmul.mubr.bf16.gmra.mrb[0].mxu0 %v3162
      %v3393 = vpop.f32.mrb[0].mxu0
      %v3394 = vadd.f32 0.0, %v3393
      %v3395 = vpop.f32.mrb[0].mxu0
      %v3396 = vpop.f32.mrb[0].mxu0
      %v3397 = vadd.f32 0.0, %v3396
      %v3398 = vpop.f32.mrb[0].mxu0
      %3399 = vmatprep.mubr.bf16.mxu0 0
      %3400 = vmatmul.mubr.bf16.gmra.mrb[0].mxu0 %v3164
      %v3401 = vpop.f32.mrb[0].mxu0
      %v3402 = vadd.f32 0.0, %v3401
      %v3403 = vpop.f32.mrb[0].mxu0
      %v3404 = vpop.f32.mrb[0].mxu0
      %v3405 = vadd.f32 0.0, %v3404
      %v3406 = vpop.f32.mrb[0].mxu0
      %3407 = vdwg.mxu0
      %v3408 = vld [vmem:[#allocation2] sm:$0xff]
      %v3409 = vld [vmem:[#allocation2 + $0x8] sm:$0xff]
      %v3410 = vld [vmem:[#allocation2 + $0x10] sm:$0xff]
      %v3411 = vld [vmem:[#allocation2 + $0x18] sm:$0xff]
      %v3412 = vld [vmem:[#allocation2 + $0x20] sm:$0xff]
      %v3413 = vld [vmem:[#allocation2 + $0x28] sm:$0xff]
      %v3414 = vld [vmem:[#allocation2 + $0x30] sm:$0xff]
      %v3415 = vld [vmem:[#allocation2 + $0x38] sm:$0xff]
      %v3416 = vld [vmem:[#allocation2 + $0x40] sm:$0xff]
      %v3417 = vld [vmem:[#allocation2 + $0x48] sm:$0xff]
      %v3418 = vld [vmem:[#allocation2 + $0x50] sm:$0xff]
      %v3419 = vld [vmem:[#allocation2 + $0x58] sm:$0xff]
      %v3420 = vld [vmem:[#allocation2 + $0x60] sm:$0xff]
      %v3421 = vld [vmem:[#allocation2 + $0x68] sm:$0xff]
      %v3422 = vld [vmem:[#allocation2 + $0x70] sm:$0xff]
      %v3423 = vld [vmem:[#allocation2 + $0x78] sm:$0xff]
      %v3424 = vld [vmem:[#allocation2 + $0x80] sm:$0xff]
      %v3425 = vld [vmem:[#allocation2 + $0x88] sm:$0xff]
      %v3426 = vld [vmem:[#allocation2 + $0x90] sm:$0xff]
      %v3427 = vld [vmem:[#allocation2 + $0x98] sm:$0xff]
      %v3428 = vld [vmem:[#allocation2 + $0xa0] sm:$0xff]
      %v3429 = vld [vmem:[#allocation2 + $0xa8] sm:$0xff]
      %v3430 = vld [vmem:[#allocation2 + $0xb0] sm:$0xff]
      %v3431 = vld [vmem:[#allocation2 + $0xb8] sm:$0xff]
      %v3432 = vld [vmem:[#allocation2 + $0xc0] sm:$0xff]
      %v3433 = vld [vmem:[#allocation2 + $0xc8] sm:$0xff]
      %v3434 = vld [vmem:[#allocation2 + $0xd0] sm:$0xff]
      %v3435 = vld [vmem:[#allocation2 + $0xd8] sm:$0xff]
      %v3436 = vld [vmem:[#allocation2 + $0xe0] sm:$0xff]
      %v3437 = vld [vmem:[#allocation2 + $0xe8] sm:$0xff]
      %v3438 = vld [vmem:[#allocation2 + $0xf0] sm:$0xff]
      %v3439 = vld [vmem:[#allocation2 + $0xf8] sm:$0xff]
      %v3440 = vld [vmem:[#allocation2 + $0x100] sm:$0xff]
      %v3441 = vld [vmem:[#allocation2 + $0x108] sm:$0xff]
      %v3442 = vld [vmem:[#allocation2 + $0x110] sm:$0xff]
      %v3443 = vld [vmem:[#allocation2 + $0x118] sm:$0xff]
      %v3444 = vadd.f32 %v3408, %v3266
      %v3445 = vadd.f32 %v3409, %v3269
      %v3446 = vadd.f32 %v3410, %v3274
      %v3447 = vadd.f32 %v3411, %v3277
      %v3448 = vadd.f32 %v3412, %v3282
      %v3449 = vadd.f32 %v3413, %v3285
      %v3450 = vadd.f32 %v3414, %v3290
      %v3451 = vadd.f32 %v3415, %v3293
      %v3452 = vadd.f32 %v3416, %v3298
      %v3453 = vadd.f32 %v3417, %v3301
      %v3454 = vadd.f32 %v3418, %v3306
      %v3455 = vadd.f32 %v3419, %v3309
      %v3456 = vadd.f32 %v3420, %v3314
      %v3457 = vadd.f32 %v3421, %v3317
      %v3458 = vadd.f32 %v3422, %v3322
      %v3459 = vadd.f32 %v3423, %v3325
      %v3460 = vadd.f32 %v3424, %v3330
      %v3461 = vadd.f32 %v3425, %v3333
      %v3462 = vadd.f32 %v3426, %v3338
      %v3463 = vadd.f32 %v3427, %v3341
      %v3464 = vadd.f32 %v3428, %v3346
      %v3465 = vadd.f32 %v3429, %v3349
      %v3466 = vadd.f32 %v3430, %v3354
      %v3467 = vadd.f32 %v3431, %v3357
      %v3468 = vadd.f32 %v3432, %v3362
      %v3469 = vadd.f32 %v3433, %v3365
      %v3470 = vadd.f32 %v3434, %v3370
      %v3471 = vadd.f32 %v3435, %v3373
      %v3472 = vadd.f32 %v3436, %v3378
      %v3473 = vadd.f32 %v3437, %v3381
      %v3474 = vadd.f32 %v3438, %v3386
      %v3475 = vadd.f32 %v3439, %v3389
      %v3476 = vadd.f32 %v3440, %v3394
      %v3477 = vadd.f32 %v3441, %v3397
      %v3478 = vadd.f32 %v3442, %v3402
      %v3479 = vadd.f32 %v3443, %v3405
      %3480 = vst [vmem:[#allocation2] sm:$0xff] %v3444
      %3481 = vst [vmem:[#allocation2 + $0x8] sm:$0xff] %v3445
      %3482 = vst [vmem:[#allocation2 + $0x10] sm:$0xff] %v3446
      %3483 = vst [vmem:[#allocation2 + $0x18] sm:$0xff] %v3447
      %3484 = vst [vmem:[#allocation2 + $0x20] sm:$0xff] %v3448
      %3485 = vst [vmem:[#allocation2 + $0x28] sm:$0xff] %v3449
      %3486 = vst [vmem:[#allocation2 + $0x30] sm:$0xff] %v3450
      %3487 = vst [vmem:[#allocation2 + $0x38] sm:$0xff] %v3451
      %3488 = vst [vmem:[#allocation2 + $0x40] sm:$0xff] %v3452
      %3489 = vst [vmem:[#allocation2 + $0x48] sm:$0xff] %v3453
      %3490 = vst [vmem:[#allocation2 + $0x50] sm:$0xff] %v3454
      %3491 = vst [vmem:[#allocation2 + $0x58] sm:$0xff] %v3455
      %3492 = vst [vmem:[#allocation2 + $0x60] sm:$0xff] %v3456
      %3493 = vst [vmem:[#allocation2 + $0x68] sm:$0xff] %v3457
      %3494 = vst [vmem:[#allocation2 + $0x70] sm:$0xff] %v3458
      %3495 = vst [vmem:[#allocation2 + $0x78] sm:$0xff] %v3459
      %3496 = vst [vmem:[#allocation2 + $0x80] sm:$0xff] %v3460
      %3497 = vst [vmem:[#allocation2 + $0x88] sm:$0xff] %v3461
      %3498 = vst [vmem:[#allocation2 + $0x90] sm:$0xff] %v3462
      %3499 = vst [vmem:[#allocation2 + $0x98] sm:$0xff] %v3463
      %3500 = vst [vmem:[#allocation2 + $0xa0] sm:$0xff] %v3464
      %3501 = vst [vmem:[#allocation2 + $0xa8] sm:$0xff] %v3465
      %3502 = vst [vmem:[#allocation2 + $0xb0] sm:$0xff] %v3466
      %3503 = vst [vmem:[#allocation2 + $0xb8] sm:$0xff] %v3467
      %3504 = vst [vmem:[#allocation2 + $0xc0] sm:$0xff] %v3468
      %3505 = vst [vmem:[#allocation2 + $0xc8] sm:$0xff] %v3469
      %3506 = vst [vmem:[#allocation2 + $0xd0] sm:$0xff] %v3470
      %3507 = vst [vmem:[#allocation2 + $0xd8] sm:$0xff] %v3471
      %3508 = vst [vmem:[#allocation2 + $0xe0] sm:$0xff] %v3472
      %3509 = vst [vmem:[#allocation2 + $0xe8] sm:$0xff] %v3473
      %3510 = vst [vmem:[#allocation2 + $0xf0] sm:$0xff] %v3474
      %3511 = vst [vmem:[#allocation2 + $0xf8] sm:$0xff] %v3475
      %3512 = vst [vmem:[#allocation2 + $0x100] sm:$0xff] %v3476
      %3513 = vst [vmem:[#allocation2 + $0x108] sm:$0xff] %v3477
      %3514 = vst [vmem:[#allocation2 + $0x110] sm:$0xff] %v3478
      %3515 = vst [vmem:[#allocation2 + $0x118] sm:$0xff] %v3479
      %v3516 = vld [vmem:[%s165 + $0x10] sm:$0xc]
      %v3517 = vld [vmem:[%s165 + $0x14] sm:$0xf]
      %v3518 = vld [vmem:[%s165 + $0x18] sm:$0xf]
      %v3519 = vld [vmem:[%s165 + $0x1c] sm:$0xf]
      %v3520 = vld [vmem:[%s165 + $0x20] sm:$0xf]
      %v3521 = vld [vmem:[%s165 + $0x24] sm:$0xf]
      %v3522 = vld [vmem:[%s165 + $0x28] sm:$0xf]
      %v3523 = vld [vmem:[%s165 + $0x2c] sm:$0xf]
      %v3524 = vld [vmem:[%s165 + $0x30] sm:$0xf]
      %v3525 = vld [vmem:[%s165 + $0x34] sm:$0xf]
      %v3526 = vld [vmem:[%s165 + $0x38] sm:$0xf]
      %v3527 = vld [vmem:[%s165 + $0x3c] sm:$0xf]
      %v3528 = vld [vmem:[%s165 + $0x40] sm:$0xf]
      %v3529 = vld [vmem:[%s165 + $0x44] sm:$0xf]
      %v3530 = vld [vmem:[%s165 + $0x48] sm:$0xf]
      %v3531 = vld [vmem:[%s165 + $0x4c] sm:$0xf]
      %v3532 = vld [vmem:[%s165 + $0x50] sm:$0xf]
      %v3533 = vld [vmem:[%s165 + $0x54] sm:$0xf]
      %v3534 = vld [vmem:[%s165 + $0x58] sm:$0xf]
      %v3535 = vld [vmem:[%s165 + $0x5c] sm:$0xf]
      %v3536 = vld [vmem:[%s165 + $0x60] sm:$0xf]
      %v3537 = vld [vmem:[%s165 + $0x64] sm:$0xf]
      %v3538 = vld [vmem:[%s165 + $0x68] sm:$0xf]
      %v3539 = vld [vmem:[%s165 + $0x6c] sm:$0xf]
      %v3540 = vld [vmem:[%s165 + $0x70] sm:$0xf]
      %v3541 = vld [vmem:[%s165 + $0x74] sm:$0xf]
      %v3542 = vld [vmem:[%s165 + $0x78] sm:$0xf]
      %v3543 = vld [vmem:[%s165 + $0x7c] sm:$0xf]
      %v3544 = vld [vmem:[%s165 + $0x80] sm:$0xf]
      %v3545 = vld [vmem:[%s165 + $0x84] sm:$0xf]
      %v3546 = vld [vmem:[%s165 + $0x88] sm:$0xf]
      %v3547 = vld [vmem:[%s165 + $0x8c] sm:$0xf]
      %v3548 = vld [vmem:[%s165 + $0x90] sm:$0xf]
      %v3549 = vld [vmem:[%s165 + $0x94] sm:$0xf]
      %v3550 = vld [vmem:[%s165 + $0x98] sm:$0xf]
      %v3551 = vld [vmem:[%s165 + $0x9c] sm:$0xf]
      %v3552 = vld [vmem:[%s165 + $0xa0] sm:$0x3]
      %s3553 = scalar_lea.vmem %s1, 384
      %v3554 = vld [vmem:[%s3553] sm:$0xf]
      %v3555 = vld [vmem:[%s3553 + $0x4] sm:$0xf]
      %v3556 = vld [vmem:[%s3553 + $0x8] sm:$0xf]
      %v3557 = vld [vmem:[%s3553 + $0xc] sm:$0xf]
      %v3558 = vld [vmem:[%s3553 + $0x10] sm:$0xf]
      %v3559 = vld [vmem:[%s3553 + $0x14] sm:$0xf]
      %v3560 = vld [vmem:[%s3553 + $0x18] sm:$0xf]
      %v3561 = vld [vmem:[%s3553 + $0x1c] sm:$0xf]
      %v3562 = vld [vmem:[%s3553 + $0x20] sm:$0xf]
      %v3563 = vld [vmem:[%s3553 + $0x24] sm:$0xf]
      %v3564 = vld [vmem:[%s3553 + $0x28] sm:$0xf]
      %v3565 = vld [vmem:[%s3553 + $0x2c] sm:$0xf]
      %v3566 = vld [vmem:[%s3553 + $0x30] sm:$0xf]
      %v3567 = vld [vmem:[%s3553 + $0x34] sm:$0xf]
      %v3568 = vld [vmem:[%s3553 + $0x38] sm:$0xf]
      %v3569 = vld [vmem:[%s3553 + $0x3c] sm:$0xf]
      %v3607 = vunpack.c.l.b16 %v3516
      %v3608 = vunpack.c.l.b16 %v3517
      %v3609 = vunpack.c.l.b16 %v3518
      %v3610 = vunpack.c.l.b16 %v3519
      %v3611 = vunpack.c.l.b16 %v3520
      %v3612 = vunpack.c.l.b16 %v3521
      %v3613 = vunpack.c.l.b16 %v3522
      %v3614 = vunpack.c.l.b16 %v3523
      %v3615 = vunpack.c.l.b16 %v3524
      %v3616 = vunpack.c.l.b16 %v3525
      %v3617 = vunpack.c.l.b16 %v3526
      %v3618 = vunpack.c.l.b16 %v3527
      %v3619 = vunpack.c.l.b16 %v3528
      %v3620 = vunpack.c.l.b16 %v3529
      %v3621 = vunpack.c.l.b16 %v3530
      %v3622 = vunpack.c.l.b16 %v3531
      %v3623 = vunpack.c.l.b16 %v3532
      %v3624 = vunpack.c.l.b16 %v3533
      %v3625 = vunpack.c.l.b16 %v3534
      %v3626 = vunpack.c.l.b16 %v3535
      %v3627 = vunpack.c.l.b16 %v3536
      %v3628 = vunpack.c.l.b16 %v3537
      %v3629 = vunpack.c.l.b16 %v3538
      %v3630 = vunpack.c.l.b16 %v3539
      %v3631 = vunpack.c.l.b16 %v3540
      %v3632 = vunpack.c.l.b16 %v3541
      %v3633 = vunpack.c.l.b16 %v3542
      %v3634 = vunpack.c.l.b16 %v3543
      %v3635 = vunpack.c.l.b16 %v3544
      %v3636 = vunpack.c.l.b16 %v3545
      %v3637 = vunpack.c.l.b16 %v3546
      %v3638 = vunpack.c.l.b16 %v3547
      %v3639 = vunpack.c.l.b16 %v3548
      %v3640 = vunpack.c.l.b16 %v3549
      %v3641 = vunpack.c.l.b16 %v3550
      %v3642 = vunpack.c.l.b16 %v3551
      %v3643 = vunpack.c.l.b16 %v3552
      %v3644 = vpack.c.b16 %v3608, %v3607
      %v3645 = vpack.c.b16 %v3610, %v3609
      %v3646 = vpack.c.b16 %v3612, %v3611
      %v3647 = vpack.c.b16 %v3614, %v3613
      %v3648 = vpack.c.b16 %v3616, %v3615
      %v3649 = vpack.c.b16 %v3618, %v3617
      %v3650 = vpack.c.b16 %v3620, %v3619
      %v3651 = vpack.c.b16 %v3622, %v3621
      %v3652 = vpack.c.b16 %v3624, %v3623
      %v3653 = vpack.c.b16 %v3626, %v3625
      %v3654 = vpack.c.b16 %v3628, %v3627
      %v3655 = vpack.c.b16 %v3630, %v3629
      %v3656 = vpack.c.b16 %v3632, %v3631
      %v3657 = vpack.c.b16 %v3634, %v3633
      %v3658 = vpack.c.b16 %v3636, %v3635
      %v3659 = vpack.c.b16 %v3638, %v3637
      %v3660 = vpack.c.b16 %v3640, %v3639
      %v3661 = vpack.c.b16 %v3642, %v3641
      %v3662 = vpack.c.b16 %v3643, %v3643
      %v3663 = vrot.slane %v3644, 2
      %v3664 = vrot.slane %v3645, 2
      %v3665 = vsel %vm3127, %v3663, %v3664
      %v3666 = vrot.slane %v3646, 2
      %v3667 = vsel %vm3127, %v3664, %v3666
      %v3668 = vrot.slane %v3647, 2
      %v3669 = vsel %vm3127, %v3666, %v3668
      %v3670 = vrot.slane %v3648, 2
      %v3671 = vsel %vm3127, %v3668, %v3670
      %v3672 = vrot.slane %v3649, 2
      %v3673 = vsel %vm3127, %v3670, %v3672
      %v3674 = vrot.slane %v3650, 2
      %v3675 = vsel %vm3127, %v3672, %v3674
      %v3676 = vrot.slane %v3651, 2
      %v3677 = vsel %vm3127, %v3674, %v3676
      %v3678 = vrot.slane %v3652, 2
      %v3679 = vsel %vm3127, %v3676, %v3678
      %v3680 = vrot.slane %v3653, 2
      %v3681 = vsel %vm3127, %v3678, %v3680
      %v3682 = vrot.slane %v3654, 2
      %v3683 = vsel %vm3127, %v3680, %v3682
      %v3684 = vrot.slane %v3655, 2
      %v3685 = vsel %vm3127, %v3682, %v3684
      %v3686 = vrot.slane %v3656, 2
      %v3687 = vsel %vm3127, %v3684, %v3686
      %v3688 = vrot.slane %v3657, 2
      %v3689 = vsel %vm3127, %v3686, %v3688
      %v3690 = vrot.slane %v3658, 2
      %v3691 = vsel %vm3127, %v3688, %v3690
      %v3692 = vrot.slane %v3659, 2
      %v3693 = vsel %vm3127, %v3690, %v3692
      %v3694 = vrot.slane %v3660, 2
      %v3695 = vsel %vm3127, %v3692, %v3694
      %v3696 = vrot.slane %v3661, 2
      %v3697 = vsel %vm3127, %v3694, %v3696
      %v3698 = vrot.slane %v3662, 2
      %v3699 = vsel %vm3127, %v3696, %v3698
      %v3734 = vunpack.c.l.b16 %v3554
      %v3735 = vunpack.c.l.b16 %v3555
      %v3736 = vunpack.c.l.b16 %v3556
      %v3737 = vunpack.c.l.b16 %v3557
      %v3738 = vunpack.c.l.b16 %v3558
      %v3739 = vunpack.c.l.b16 %v3559
      %v3740 = vunpack.c.l.b16 %v3560
      %v3741 = vunpack.c.l.b16 %v3561
      %v3742 = vunpack.c.l.b16 %v3562
      %v3743 = vunpack.c.l.b16 %v3563
      %v3744 = vunpack.c.l.b16 %v3564
      %v3745 = vunpack.c.l.b16 %v3565
      %v3746 = vunpack.c.l.b16 %v3566
      %v3747 = vunpack.c.l.b16 %v3567
      %v3748 = vunpack.c.l.b16 %v3568
      %v3749 = vunpack.c.l.b16 %v3569
      %v3750 = vpack.c.b16 %v3735, %v3734
      %v3751 = vpack.c.b16 %v3737, %v3736
      %v3752 = vpack.c.b16 %v3739, %v3738
      %v3753 = vpack.c.b16 %v3741, %v3740
      %v3754 = vpack.c.b16 %v3743, %v3742
      %v3755 = vpack.c.b16 %v3745, %v3744
      %v3756 = vpack.c.b16 %v3747, %v3746
      %v3757 = vpack.c.b16 %v3749, %v3748
      %3766 = vmatprep.subr.bf16.mxu0 0
      %3767 = vmatpush1.bf16.msra.mxu0 %v3750
      %3768 = vmatprep.subr.bf16.mxu0 0
      %3769 = vmatpush1.bf16.msra.mxu0 %v3751
      %3770 = vmatprep.subr.bf16.mxu0 0
      %3771 = vmatpush1.bf16.msra.mxu0 %v3752
      %3772 = vmatprep.subr.bf16.mxu0 0
      %3773 = vmatpush1.bf16.msra.mxu0 %v3753
      %3774 = vmatprep.subr.bf16.mxu0 0
      %3775 = vmatpush1.bf16.msra.mxu0 %v3754
      %3776 = vmatprep.subr.bf16.mxu0 0
      %3777 = vmatpush1.bf16.msra.mxu0 %v3755
      %3778 = vmatprep.subr.bf16.mxu0 0
      %3779 = vmatpush1.bf16.msra.mxu0 %v3756
      %3780 = vmatprep.subr.bf16.mxu0 0
      %3781 = vmatpush1.bf16.msra.mxu0 %v3757
      %3782 = vmatprep.subr.bf16.mxu0 0
      %3783 = vmatpush1.bf16.msra.mxu0 0
      %3784 = vmatprep.subr.bf16.mxu0 0
      %3785 = vmatpush1.bf16.msra.mxu0 0
      %3786 = vmatprep.subr.bf16.mxu0 0
      %3787 = vmatpush1.bf16.msra.mxu0 0
      %3788 = vmatprep.subr.bf16.mxu0 0
      %3789 = vmatpush1.bf16.msra.mxu0 0
      %3790 = vmatprep.subr.bf16.mxu0 0
      %3791 = vmatpush1.bf16.msra.mxu0 0
      %3792 = vmatprep.subr.bf16.mxu0 0
      %3793 = vmatpush1.bf16.msra.mxu0 0
      %3794 = vmatprep.subr.bf16.mxu0 0
      %3795 = vmatpush1.bf16.msra.mxu0 0
      %3796 = vmatprep.subr.bf16.mxu0 0
      %3797 = vmatpush1.bf16.msra.mxu0 0
      %3798 = vmatprep.mubr.bf16.mxu0 0
      %3799 = vmatmul.mubr.bf16.gmra.mrb[0].mxu0 %v3665
      %v3800 = vpop.f32.mrb[0].mxu0
      %v3801 = vadd.f32 0.0, %v3800
      %v3802 = vpop.f32.mrb[0].mxu0
      %v3803 = vpop.f32.mrb[0].mxu0
      %v3804 = vadd.f32 0.0, %v3803
      %v3805 = vpop.f32.mrb[0].mxu0
      %3806 = vmatprep.mubr.bf16.mxu0 0
      %3807 = vmatmul.mubr.bf16.gmra.mrb[0].mxu0 %v3667
      %v3808 = vpop.f32.mrb[0].mxu0
      %v3809 = vadd.f32 0.0, %v3808
      %v3810 = vpop.f32.mrb[0].mxu0
      %v3811 = vpop.f32.mrb[0].mxu0
      %v3812 = vadd.f32 0.0, %v3811
      %v3813 = vpop.f32.mrb[0].mxu0
      %3814 = vmatprep.mubr.bf16.mxu0 0
      %3815 = vmatmul.mubr.bf16.gmra.mrb[0].mxu0 %v3669
      %v3816 = vpop.f32.mrb[0].mxu0
      %v3817 = vadd.f32 0.0, %v3816
      %v3818 = vpop.f32.mrb[0].mxu0
      %v3819 = vpop.f32.mrb[0].mxu0
      %v3820 = vadd.f32 0.0, %v3819
      %v3821 = vpop.f32.mrb[0].mxu0
      %3822 = vmatprep.mubr.bf16.mxu0 0
      %3823 = vmatmul.mubr.bf16.gmra.mrb[0].mxu0 %v3671
      %v3824 = vpop.f32.mrb[0].mxu0
      %v3825 = vadd.f32 0.0, %v3824
      %v3826 = vpop.f32.mrb[0].mxu0
      %v3827 = vpop.f32.mrb[0].mxu0
      %v3828 = vadd.f32 0.0, %v3827
      %v3829 = vpop.f32.mrb[0].mxu0
      %3830 = vmatprep.mubr.bf16.mxu0 0
      %3831 = vmatmul.mubr.bf16.gmra.mrb[0].mxu0 %v3673
      %v3832 = vpop.f32.mrb[0].mxu0
      %v3833 = vadd.f32 0.0, %v3832
      %v3834 = vpop.f32.mrb[0].mxu0
      %v3835 = vpop.f32.mrb[0].mxu0
      %v3836 = vadd.f32 0.0, %v3835
      %v3837 = vpop.f32.mrb[0].mxu0
      %3838 = vmatprep.mubr.bf16.mxu0 0
      %3839 = vmatmul.mubr.bf16.gmra.mrb[0].mxu0 %v3675
      %v3840 = vpop.f32.mrb[0].mxu0
      %v3841 = vadd.f32 0.0, %v3840
      %v3842 = vpop.f32.mrb[0].mxu0
      %v3843 = vpop.f32.mrb[0].mxu0
      %v3844 = vadd.f32 0.0, %v3843
      %v3845 = vpop.f32.mrb[0].mxu0
      %3846 = vmatprep.mubr.bf16.mxu0 0
      %3847 = vmatmul.mubr.bf16.gmra.mrb[0].mxu0 %v3677
      %v3848 = vpop.f32.mrb[0].mxu0
      %v3849 = vadd.f32 0.0, %v3848
      %v3850 = vpop.f32.mrb[0].mxu0
      %v3851 = vpop.f32.mrb[0].mxu0
      %v3852 = vadd.f32 0.0, %v3851
      %v3853 = vpop.f32.mrb[0].mxu0
      %3854 = vmatprep.mubr.bf16.mxu0 0
      %3855 = vmatmul.mubr.bf16.gmra.mrb[0].mxu0 %v3679
      %v3856 = vpop.f32.mrb[0].mxu0
      %v3857 = vadd.f32 0.0, %v3856
      %v3858 = vpop.f32.mrb[0].mxu0
      %v3859 = vpop.f32.mrb[0].mxu0
      %v3860 = vadd.f32 0.0, %v3859
      %v3861 = vpop.f32.mrb[0].mxu0
      %3862 = vmatprep.mubr.bf16.mxu0 0
      %3863 = vmatmul.mubr.bf16.gmra.mrb[0].mxu0 %v3681
      %v3864 = vpop.f32.mrb[0].mxu0
      %v3865 = vadd.f32 0.0, %v3864
      %v3866 = vpop.f32.mrb[0].mxu0
      %v3867 = vpop.f32.mrb[0].mxu0
      %v3868 = vadd.f32 0.0, %v3867
      %v3869 = vpop.f32.mrb[0].mxu0
      %3870 = vmatprep.mubr.bf16.mxu0 0
      %3871 = vmatmul.mubr.bf16.gmra.mrb[0].mxu0 %v3683
      %v3872 = vpop.f32.mrb[0].mxu0
      %v3873 = vadd.f32 0.0, %v3872
      %v3874 = vpop.f32.mrb[0].mxu0
      %v3875 = vpop.f32.mrb[0].mxu0
      %v3876 = vadd.f32 0.0, %v3875
      %v3877 = vpop.f32.mrb[0].mxu0
      %3878 = vmatprep.mubr.bf16.mxu0 0
      %3879 = vmatmul.mubr.bf16.gmra.mrb[0].mxu0 %v3685
      %v3880 = vpop.f32.mrb[0].mxu0
      %v3881 = vadd.f32 0.0, %v3880
      %v3882 = vpop.f32.mrb[0].mxu0
      %v3883 = vpop.f32.mrb[0].mxu0
      %v3884 = vadd.f32 0.0, %v3883
      %v3885 = vpop.f32.mrb[0].mxu0
      %3886 = vmatprep.mubr.bf16.mxu0 0
      %3887 = vmatmul.mubr.bf16.gmra.mrb[0].mxu0 %v3687
      %v3888 = vpop.f32.mrb[0].mxu0
      %v3889 = vadd.f32 0.0, %v3888
      %v3890 = vpop.f32.mrb[0].mxu0
      %v3891 = vpop.f32.mrb[0].mxu0
      %v3892 = vadd.f32 0.0, %v3891
      %v3893 = vpop.f32.mrb[0].mxu0
      %3894 = vmatprep.mubr.bf16.mxu0 0
      %3895 = vmatmul.mubr.bf16.gmra.mrb[0].mxu0 %v3689
      %v3896 = vpop.f32.mrb[0].mxu0
      %v3897 = vadd.f32 0.0, %v3896
      %v3898 = vpop.f32.mrb[0].mxu0
      %v3899 = vpop.f32.mrb[0].mxu0
      %v3900 = vadd.f32 0.0, %v3899
      %v3901 = vpop.f32.mrb[0].mxu0
      %3902 = vmatprep.mubr.bf16.mxu0 0
      %3903 = vmatmul.mubr.bf16.gmra.mrb[0].mxu0 %v3691
      %v3904 = vpop.f32.mrb[0].mxu0
      %v3905 = vadd.f32 0.0, %v3904
      %v3906 = vpop.f32.mrb[0].mxu0
      %v3907 = vpop.f32.mrb[0].mxu0
      %v3908 = vadd.f32 0.0, %v3907
      %v3909 = vpop.f32.mrb[0].mxu0
      %3910 = vmatprep.mubr.bf16.mxu0 0
      %3911 = vmatmul.mubr.bf16.gmra.mrb[0].mxu0 %v3693
      %v3912 = vpop.f32.mrb[0].mxu0
      %v3913 = vadd.f32 0.0, %v3912
      %v3914 = vpop.f32.mrb[0].mxu0
      %v3915 = vpop.f32.mrb[0].mxu0
      %v3916 = vadd.f32 0.0, %v3915
      %v3917 = vpop.f32.mrb[0].mxu0
      %3918 = vmatprep.mubr.bf16.mxu0 0
      %3919 = vmatmul.mubr.bf16.gmra.mrb[0].mxu0 %v3695
      %v3920 = vpop.f32.mrb[0].mxu0
      %v3921 = vadd.f32 0.0, %v3920
      %v3922 = vpop.f32.mrb[0].mxu0
      %v3923 = vpop.f32.mrb[0].mxu0
      %v3924 = vadd.f32 0.0, %v3923
      %v3925 = vpop.f32.mrb[0].mxu0
      %3926 = vmatprep.mubr.bf16.mxu0 0
      %3927 = vmatmul.mubr.bf16.gmra.mrb[0].mxu0 %v3697
      %v3928 = vpop.f32.mrb[0].mxu0
      %v3929 = vadd.f32 0.0, %v3928
      %v3930 = vpop.f32.mrb[0].mxu0
      %v3931 = vpop.f32.mrb[0].mxu0
      %v3932 = vadd.f32 0.0, %v3931
      %v3933 = vpop.f32.mrb[0].mxu0
      %3934 = vmatprep.mubr.bf16.mxu0 0
      %3935 = vmatmul.mubr.bf16.gmra.mrb[0].mxu0 %v3699
      %v3936 = vpop.f32.mrb[0].mxu0
      %v3937 = vadd.f32 0.0, %v3936
      %v3938 = vpop.f32.mrb[0].mxu0
      %v3939 = vpop.f32.mrb[0].mxu0
      %v3940 = vadd.f32 0.0, %v3939
      %v3941 = vpop.f32.mrb[0].mxu0
      %3942 = vdwg.mxu0
      %v3943 = vld [vmem:[#allocation2] sm:$0xff]
      %v3944 = vld [vmem:[#allocation2 + $0x8] sm:$0xff]
      %v3945 = vld [vmem:[#allocation2 + $0x10] sm:$0xff]
      %v3946 = vld [vmem:[#allocation2 + $0x18] sm:$0xff]
      %v3947 = vld [vmem:[#allocation2 + $0x20] sm:$0xff]
      %v3948 = vld [vmem:[#allocation2 + $0x28] sm:$0xff]
      %v3949 = vld [vmem:[#allocation2 + $0x30] sm:$0xff]
      %v3950 = vld [vmem:[#allocation2 + $0x38] sm:$0xff]
      %v3951 = vld [vmem:[#allocation2 + $0x40] sm:$0xff]
      %v3952 = vld [vmem:[#allocation2 + $0x48] sm:$0xff]
      %v3953 = vld [vmem:[#allocation2 + $0x50] sm:$0xff]
      %v3954 = vld [vmem:[#allocation2 + $0x58] sm:$0xff]
      %v3955 = vld [vmem:[#allocation2 + $0x60] sm:$0xff]
      %v3956 = vld [vmem:[#allocation2 + $0x68] sm:$0xff]
      %v3957 = vld [vmem:[#allocation2 + $0x70] sm:$0xff]
      %v3958 = vld [vmem:[#allocation2 + $0x78] sm:$0xff]
      %v3959 = vld [vmem:[#allocation2 + $0x80] sm:$0xff]
      %v3960 = vld [vmem:[#allocation2 + $0x88] sm:$0xff]
      %v3961 = vld [vmem:[#allocation2 + $0x90] sm:$0xff]
      %v3962 = vld [vmem:[#allocation2 + $0x98] sm:$0xff]
      %v3963 = vld [vmem:[#allocation2 + $0xa0] sm:$0xff]
      %v3964 = vld [vmem:[#allocation2 + $0xa8] sm:$0xff]
      %v3965 = vld [vmem:[#allocation2 + $0xb0] sm:$0xff]
      %v3966 = vld [vmem:[#allocation2 + $0xb8] sm:$0xff]
      %v3967 = vld [vmem:[#allocation2 + $0xc0] sm:$0xff]
      %v3968 = vld [vmem:[#allocation2 + $0xc8] sm:$0xff]
      %v3969 = vld [vmem:[#allocation2 + $0xd0] sm:$0xff]
      %v3970 = vld [vmem:[#allocation2 + $0xd8] sm:$0xff]
      %v3971 = vld [vmem:[#allocation2 + $0xe0] sm:$0xff]
      %v3972 = vld [vmem:[#allocation2 + $0xe8] sm:$0xff]
      %v3973 = vld [vmem:[#allocation2 + $0xf0] sm:$0xff]
      %v3974 = vld [vmem:[#allocation2 + $0xf8] sm:$0xff]
      %v3975 = vld [vmem:[#allocation2 + $0x100] sm:$0xff]
      %v3976 = vld [vmem:[#allocation2 + $0x108] sm:$0xff]
      %v3977 = vld [vmem:[#allocation2 + $0x110] sm:$0xff]
      %v3978 = vld [vmem:[#allocation2 + $0x118] sm:$0xff]
      %v3979 = vadd.f32 %v3943, %v3801
      %v3980 = vadd.f32 %v3944, %v3804
      %v3981 = vadd.f32 %v3945, %v3809
      %v3982 = vadd.f32 %v3946, %v3812
      %v3983 = vadd.f32 %v3947, %v3817
      %v3984 = vadd.f32 %v3948, %v3820
      %v3985 = vadd.f32 %v3949, %v3825
      %v3986 = vadd.f32 %v3950, %v3828
      %v3987 = vadd.f32 %v3951, %v3833
      %v3988 = vadd.f32 %v3952, %v3836
      %v3989 = vadd.f32 %v3953, %v3841
      %v3990 = vadd.f32 %v3954, %v3844
      %v3991 = vadd.f32 %v3955, %v3849
      %v3992 = vadd.f32 %v3956, %v3852
      %v3993 = vadd.f32 %v3957, %v3857
      %v3994 = vadd.f32 %v3958, %v3860
      %v3995 = vadd.f32 %v3959, %v3865
      %v3996 = vadd.f32 %v3960, %v3868
      %v3997 = vadd.f32 %v3961, %v3873
      %v3998 = vadd.f32 %v3962, %v3876
      %v3999 = vadd.f32 %v3963, %v3881
      %v4000 = vadd.f32 %v3964, %v3884
      %v4001 = vadd.f32 %v3965, %v3889
      %v4002 = vadd.f32 %v3966, %v3892
      %v4003 = vadd.f32 %v3967, %v3897
      %v4004 = vadd.f32 %v3968, %v3900
      %v4005 = vadd.f32 %v3969, %v3905
      %v4006 = vadd.f32 %v3970, %v3908
      %v4007 = vadd.f32 %v3971, %v3913
      %v4008 = vadd.f32 %v3972, %v3916
      %v4009 = vadd.f32 %v3973, %v3921
      %v4010 = vadd.f32 %v3974, %v3924
      %v4011 = vadd.f32 %v3975, %v3929
      %v4012 = vadd.f32 %v3976, %v3932
      %v4013 = vadd.f32 %v3977, %v3937
      %v4014 = vadd.f32 %v3978, %v3940
      %4015 = vst [vmem:[#allocation2] sm:$0xff] %v3979
      %4016 = vst [vmem:[#allocation2 + $0x8] sm:$0xff] %v3980
      %4017 = vst [vmem:[#allocation2 + $0x10] sm:$0xff] %v3981
      %4018 = vst [vmem:[#allocation2 + $0x18] sm:$0xff] %v3982
      %4019 = vst [vmem:[#allocation2 + $0x20] sm:$0xff] %v3983
      %4020 = vst [vmem:[#allocation2 + $0x28] sm:$0xff] %v3984
      %4021 = vst [vmem:[#allocation2 + $0x30] sm:$0xff] %v3985
      %4022 = vst [vmem:[#allocation2 + $0x38] sm:$0xff] %v3986
      %4023 = vst [vmem:[#allocation2 + $0x40] sm:$0xff] %v3987
      %4024 = vst [vmem:[#allocation2 + $0x48] sm:$0xff] %v3988
      %4025 = vst [vmem:[#allocation2 + $0x50] sm:$0xff] %v3989
      %4026 = vst [vmem:[#allocation2 + $0x58] sm:$0xff] %v3990
      %4027 = vst [vmem:[#allocation2 + $0x60] sm:$0xff] %v3991
      %4028 = vst [vmem:[#allocation2 + $0x68] sm:$0xff] %v3992
      %4029 = vst [vmem:[#allocation2 + $0x70] sm:$0xff] %v3993
      %4030 = vst [vmem:[#allocation2 + $0x78] sm:$0xff] %v3994
      %4031 = vst [vmem:[#allocation2 + $0x80] sm:$0xff] %v3995
      %4032 = vst [vmem:[#allocation2 + $0x88] sm:$0xff] %v3996
      %4033 = vst [vmem:[#allocation2 + $0x90] sm:$0xff] %v3997
      %4034 = vst [vmem:[#allocation2 + $0x98] sm:$0xff] %v3998
      %4035 = vst [vmem:[#allocation2 + $0xa0] sm:$0xff] %v3999
      %4036 = vst [vmem:[#allocation2 + $0xa8] sm:$0xff] %v4000
      %4037 = vst [vmem:[#allocation2 + $0xb0] sm:$0xff] %v4001
      %4038 = vst [vmem:[#allocation2 + $0xb8] sm:$0xff] %v4002
      %4039 = vst [vmem:[#allocation2 + $0xc0] sm:$0xff] %v4003
      %4040 = vst [vmem:[#allocation2 + $0xc8] sm:$0xff] %v4004
      %4041 = vst [vmem:[#allocation2 + $0xd0] sm:$0xff] %v4005
      %4042 = vst [vmem:[#allocation2 + $0xd8] sm:$0xff] %v4006
      %4043 = vst [vmem:[#allocation2 + $0xe0] sm:$0xff] %v4007
      %4044 = vst [vmem:[#allocation2 + $0xe8] sm:$0xff] %v4008
      %4045 = vst [vmem:[#allocation2 + $0xf0] sm:$0xff] %v4009
      %4046 = vst [vmem:[#allocation2 + $0xf8] sm:$0xff] %v4010
      %4047 = vst [vmem:[#allocation2 + $0x100] sm:$0xff] %v4011
      %4048 = vst [vmem:[#allocation2 + $0x108] sm:$0xff] %v4012
      %4049 = vst [vmem:[#allocation2 + $0x110] sm:$0xff] %v4013
      %4050 = vst [vmem:[#allocation2 + $0x118] sm:$0xff] %v4014
      %v4051 = vld [vmem:[%s165 + $0x10] sm:$0xc]
      %v4052 = vld [vmem:[%s165 + $0x14] sm:$0xf]
      %v4053 = vld [vmem:[%s165 + $0x18] sm:$0xf]
      %v4054 = vld [vmem:[%s165 + $0x1c] sm:$0xf]
      %v4055 = vld [vmem:[%s165 + $0x20] sm:$0xf]
      %v4056 = vld [vmem:[%s165 + $0x24] sm:$0xf]
      %v4057 = vld [vmem:[%s165 + $0x28] sm:$0xf]
      %v4058 = vld [vmem:[%s165 + $0x2c] sm:$0xf]
      %v4059 = vld [vmem:[%s165 + $0x30] sm:$0xf]
      %v4060 = vld [vmem:[%s165 + $0x34] sm:$0xf]
      %v4061 = vld [vmem:[%s165 + $0x38] sm:$0xf]
      %v4062 = vld [vmem:[%s165 + $0x3c] sm:$0xf]
      %v4063 = vld [vmem:[%s165 + $0x40] sm:$0xf]
      %v4064 = vld [vmem:[%s165 + $0x44] sm:$0xf]
      %v4065 = vld [vmem:[%s165 + $0x48] sm:$0xf]
      %v4066 = vld [vmem:[%s165 + $0x4c] sm:$0xf]
      %v4067 = vld [vmem:[%s165 + $0x50] sm:$0xf]
      %v4068 = vld [vmem:[%s165 + $0x54] sm:$0xf]
      %v4069 = vld [vmem:[%s165 + $0x58] sm:$0xf]
      %v4070 = vld [vmem:[%s165 + $0x5c] sm:$0xf]
      %v4071 = vld [vmem:[%s165 + $0x60] sm:$0xf]
      %v4072 = vld [vmem:[%s165 + $0x64] sm:$0xf]
      %v4073 = vld [vmem:[%s165 + $0x68] sm:$0xf]
      %v4074 = vld [vmem:[%s165 + $0x6c] sm:$0xf]
      %v4075 = vld [vmem:[%s165 + $0x70] sm:$0xf]
      %v4076 = vld [vmem:[%s165 + $0x74] sm:$0xf]
      %v4077 = vld [vmem:[%s165 + $0x78] sm:$0xf]
      %v4078 = vld [vmem:[%s165 + $0x7c] sm:$0xf]
      %v4079 = vld [vmem:[%s165 + $0x80] sm:$0xf]
      %v4080 = vld [vmem:[%s165 + $0x84] sm:$0xf]
      %v4081 = vld [vmem:[%s165 + $0x88] sm:$0xf]
      %v4082 = vld [vmem:[%s165 + $0x8c] sm:$0xf]
      %v4083 = vld [vmem:[%s165 + $0x90] sm:$0xf]
      %v4084 = vld [vmem:[%s165 + $0x94] sm:$0xf]
      %v4085 = vld [vmem:[%s165 + $0x98] sm:$0xf]
      %v4086 = vld [vmem:[%s165 + $0x9c] sm:$0xf]
      %v4087 = vld [vmem:[%s165 + $0xa0] sm:$0x7]
      %s4088 = scalar_lea.vmem %s1, 448
      %v4089 = vld [vmem:[%s4088] sm:$0xf]
      %v4090 = vld [vmem:[%s4088 + $0x4] sm:$0xf]
      %v4091 = vld [vmem:[%s4088 + $0x8] sm:$0xf]
      %v4092 = vld [vmem:[%s4088 + $0xc] sm:$0xf]
      %v4093 = vld [vmem:[%s4088 + $0x10] sm:$0xf]
      %v4094 = vld [vmem:[%s4088 + $0x14] sm:$0xf]
      %v4095 = vld [vmem:[%s4088 + $0x18] sm:$0xf]
      %v4096 = vld [vmem:[%s4088 + $0x1c] sm:$0xf]
      %v4097 = vld [vmem:[%s4088 + $0x20] sm:$0xf]
      %v4098 = vld [vmem:[%s4088 + $0x24] sm:$0xf]
      %v4099 = vld [vmem:[%s4088 + $0x28] sm:$0xf]
      %v4100 = vld [vmem:[%s4088 + $0x2c] sm:$0xf]
      %v4101 = vld [vmem:[%s4088 + $0x30] sm:$0xf]
      %v4102 = vld [vmem:[%s4088 + $0x34] sm:$0xf]
      %v4103 = vld [vmem:[%s4088 + $0x38] sm:$0xf]
      %v4104 = vld [vmem:[%s4088 + $0x3c] sm:$0xf]
      %v4142 = vunpack.c.l.b16 %v4051
      %v4143 = vunpack.c.l.b16 %v4052
      %v4144 = vunpack.c.l.b16 %v4053
      %v4145 = vunpack.c.l.b16 %v4054
      %v4146 = vunpack.c.l.b16 %v4055
      %v4147 = vunpack.c.l.b16 %v4056
      %v4148 = vunpack.c.l.b16 %v4057
      %v4149 = vunpack.c.l.b16 %v4058
      %v4150 = vunpack.c.l.b16 %v4059
      %v4151 = vunpack.c.l.b16 %v4060
      %v4152 = vunpack.c.l.b16 %v4061
      %v4153 = vunpack.c.l.b16 %v4062
      %v4154 = vunpack.c.l.b16 %v4063
      %v4155 = vunpack.c.l.b16 %v4064
      %v4156 = vunpack.c.l.b16 %v4065
      %v4157 = vunpack.c.l.b16 %v4066
      %v4158 = vunpack.c.l.b16 %v4067
      %v4159 = vunpack.c.l.b16 %v4068
      %v4160 = vunpack.c.l.b16 %v4069
      %v4161 = vunpack.c.l.b16 %v4070
      %v4162 = vunpack.c.l.b16 %v4071
      %v4163 = vunpack.c.l.b16 %v4072
      %v4164 = vunpack.c.l.b16 %v4073
      %v4165 = vunpack.c.l.b16 %v4074
      %v4166 = vunpack.c.l.b16 %v4075
      %v4167 = vunpack.c.l.b16 %v4076
      %v4168 = vunpack.c.l.b16 %v4077
      %v4169 = vunpack.c.l.b16 %v4078
      %v4170 = vunpack.c.l.b16 %v4079
      %v4171 = vunpack.c.l.b16 %v4080
      %v4172 = vunpack.c.l.b16 %v4081
      %v4173 = vunpack.c.l.b16 %v4082
      %v4174 = vunpack.c.l.b16 %v4083
      %v4175 = vunpack.c.l.b16 %v4084
      %v4176 = vunpack.c.l.b16 %v4085
      %v4177 = vunpack.c.l.b16 %v4086
      %v4178 = vunpack.c.l.b16 %v4087
      %v4179 = vpack.c.b16 %v4143, %v4142
      %v4180 = vpack.c.b16 %v4145, %v4144
      %v4181 = vpack.c.b16 %v4147, %v4146
      %v4182 = vpack.c.b16 %v4149, %v4148
      %v4183 = vpack.c.b16 %v4151, %v4150
      %v4184 = vpack.c.b16 %v4153, %v4152
      %v4185 = vpack.c.b16 %v4155, %v4154
      %v4186 = vpack.c.b16 %v4157, %v4156
      %v4187 = vpack.c.b16 %v4159, %v4158
      %v4188 = vpack.c.b16 %v4161, %v4160
      %v4189 = vpack.c.b16 %v4163, %v4162
      %v4190 = vpack.c.b16 %v4165, %v4164
      %v4191 = vpack.c.b16 %v4167, %v4166
      %v4192 = vpack.c.b16 %v4169, %v4168
      %v4193 = vpack.c.b16 %v4171, %v4170
      %v4194 = vpack.c.b16 %v4173, %v4172
      %v4195 = vpack.c.b16 %v4175, %v4174
      %v4196 = vpack.c.b16 %v4177, %v4176
      %v4197 = vpack.c.b16 %v4178, %v4178
      %vm4198 = vsmask.f32 5376
      %v4200 = vshrl.u32 %v4179, 16
      %v4202 = vrot.slane %v4200, 2
      %v4203 = vshll.u32 %v4179, 16
      %v4205 = vrot.slane %v4203, 3
      %v4206 = vor.u32 %v4202, %v4205
      %v4208 = vshrl.u32 %v4180, 16
      %v4210 = vrot.slane %v4208, 2
      %v4211 = vshll.u32 %v4180, 16
      %v4213 = vrot.slane %v4211, 3
      %v4214 = vor.u32 %v4210, %v4213
      %v4215 = vsel %vm4198, %v4206, %v4214
      %v4217 = vshrl.u32 %v4181, 16
      %v4219 = vrot.slane %v4217, 2
      %v4220 = vshll.u32 %v4181, 16
      %v4222 = vrot.slane %v4220, 3
      %v4223 = vor.u32 %v4219, %v4222
      %v4224 = vsel %vm4198, %v4214, %v4223
      %v4226 = vshrl.u32 %v4182, 16
      %v4228 = vrot.slane %v4226, 2
      %v4229 = vshll.u32 %v4182, 16
      %v4231 = vrot.slane %v4229, 3
      %v4232 = vor.u32 %v4228, %v4231
      %v4233 = vsel %vm4198, %v4223, %v4232
      %v4235 = vshrl.u32 %v4183, 16
      %v4237 = vrot.slane %v4235, 2
      %v4238 = vshll.u32 %v4183, 16
      %v4240 = vrot.slane %v4238, 3
      %v4241 = vor.u32 %v4237, %v4240
      %v4242 = vsel %vm4198, %v4232, %v4241
      %v4244 = vshrl.u32 %v4184, 16
      %v4246 = vrot.slane %v4244, 2
      %v4247 = vshll.u32 %v4184, 16
      %v4249 = vrot.slane %v4247, 3
      %v4250 = vor.u32 %v4246, %v4249
      %v4251 = vsel %vm4198, %v4241, %v4250
      %v4253 = vshrl.u32 %v4185, 16
      %v4255 = vrot.slane %v4253, 2
      %v4256 = vshll.u32 %v4185, 16
      %v4258 = vrot.slane %v4256, 3
      %v4259 = vor.u32 %v4255, %v4258
      %v4260 = vsel %vm4198, %v4250, %v4259
      %v4262 = vshrl.u32 %v4186, 16
      %v4264 = vrot.slane %v4262, 2
      %v4265 = vshll.u32 %v4186, 16
      %v4267 = vrot.slane %v4265, 3
      %v4268 = vor.u32 %v4264, %v4267
      %v4269 = vsel %vm4198, %v4259, %v4268
      %v4271 = vshrl.u32 %v4187, 16
      %v4273 = vrot.slane %v4271, 2
      %v4274 = vshll.u32 %v4187, 16
      %v4276 = vrot.slane %v4274, 3
      %v4277 = vor.u32 %v4273, %v4276
      %v4278 = vsel %vm4198, %v4268, %v4277
      %v4280 = vshrl.u32 %v4188, 16
      %v4282 = vrot.slane %v4280, 2
      %v4283 = vshll.u32 %v4188, 16
      %v4285 = vrot.slane %v4283, 3
      %v4286 = vor.u32 %v4282, %v4285
      %v4287 = vsel %vm4198, %v4277, %v4286
      %v4289 = vshrl.u32 %v4189, 16
      %v4291 = vrot.slane %v4289, 2
      %v4292 = vshll.u32 %v4189, 16
      %v4294 = vrot.slane %v4292, 3
      %v4295 = vor.u32 %v4291, %v4294
      %v4296 = vsel %vm4198, %v4286, %v4295
      %v4298 = vshrl.u32 %v4190, 16
      %v4300 = vrot.slane %v4298, 2
      %v4301 = vshll.u32 %v4190, 16
      %v4303 = vrot.slane %v4301, 3
      %v4304 = vor.u32 %v4300, %v4303
      %v4305 = vsel %vm4198, %v4295, %v4304
      %v4307 = vshrl.u32 %v4191, 16
      %v4309 = vrot.slane %v4307, 2
      %v4310 = vshll.u32 %v4191, 16
      %v4312 = vrot.slane %v4310, 3
      %v4313 = vor.u32 %v4309, %v4312
      %v4314 = vsel %vm4198, %v4304, %v4313
      %v4316 = vshrl.u32 %v4192, 16
      %v4318 = vrot.slane %v4316, 2
      %v4319 = vshll.u32 %v4192, 16
      %v4321 = vrot.slane %v4319, 3
      %v4322 = vor.u32 %v4318, %v4321
      %v4323 = vsel %vm4198, %v4313, %v4322
      %v4325 = vshrl.u32 %v4193, 16
      %v4327 = vrot.slane %v4325, 2
      %v4328 = vshll.u32 %v4193, 16
      %v4330 = vrot.slane %v4328, 3
      %v4331 = vor.u32 %v4327, %v4330
      %v4332 = vsel %vm4198, %v4322, %v4331
      %v4334 = vshrl.u32 %v4194, 16
      %v4336 = vrot.slane %v4334, 2
      %v4337 = vshll.u32 %v4194, 16
      %v4339 = vrot.slane %v4337, 3
      %v4340 = vor.u32 %v4336, %v4339
      %v4341 = vsel %vm4198, %v4331, %v4340
      %v4343 = vshrl.u32 %v4195, 16
      %v4345 = vrot.slane %v4343, 2
      %v4346 = vshll.u32 %v4195, 16
      %v4348 = vrot.slane %v4346, 3
      %v4349 = vor.u32 %v4345, %v4348
      %v4350 = vsel %vm4198, %v4340, %v4349
      %v4352 = vshrl.u32 %v4196, 16
      %v4354 = vrot.slane %v4352, 2
      %v4355 = vshll.u32 %v4196, 16
      %v4357 = vrot.slane %v4355, 3
      %v4358 = vor.u32 %v4354, %v4357
      %v4359 = vsel %vm4198, %v4349, %v4358
      %v4361 = vshrl.u32 %v4197, 16
      %v4363 = vrot.slane %v4361, 2
      %v4364 = vshll.u32 %v4197, 16
      %v4366 = vrot.slane %v4364, 3
      %v4367 = vor.u32 %v4363, %v4366
      %v4368 = vsel %vm4198, %v4358, %v4367
      %v4403 = vunpack.c.l.b16 %v4089
      %v4404 = vunpack.c.l.b16 %v4090
      %v4405 = vunpack.c.l.b16 %v4091
      %v4406 = vunpack.c.l.b16 %v4092
      %v4407 = vunpack.c.l.b16 %v4093
      %v4408 = vunpack.c.l.b16 %v4094
      %v4409 = vunpack.c.l.b16 %v4095
      %v4410 = vunpack.c.l.b16 %v4096
      %v4411 = vunpack.c.l.b16 %v4097
      %v4412 = vunpack.c.l.b16 %v4098
      %v4413 = vunpack.c.l.b16 %v4099
      %v4414 = vunpack.c.l.b16 %v4100
      %v4415 = vunpack.c.l.b16 %v4101
      %v4416 = vunpack.c.l.b16 %v4102
      %v4417 = vunpack.c.l.b16 %v4103
      %v4418 = vunpack.c.l.b16 %v4104
      %v4419 = vpack.c.b16 %v4404, %v4403
      %v4420 = vpack.c.b16 %v4406, %v4405
      %v4421 = vpack.c.b16 %v4408, %v4407
      %v4422 = vpack.c.b16 %v4410, %v4409
      %v4423 = vpack.c.b16 %v4412, %v4411
      %v4424 = vpack.c.b16 %v4414, %v4413
      %v4425 = vpack.c.b16 %v4416, %v4415
      %v4426 = vpack.c.b16 %v4418, %v4417
      %4435 = vmatprep.subr.bf16.mxu0 0
      %4436 = vmatpush1.bf16.msra.mxu0 %v4419
      %4437 = vmatprep.subr.bf16.mxu0 0
      %4438 = vmatpush1.bf16.msra.mxu0 %v4420
      %4439 = vmatprep.subr.bf16.mxu0 0
      %4440 = vmatpush1.bf16.msra.mxu0 %v4421
      %4441 = vmatprep.subr.bf16.mxu0 0
      %4442 = vmatpush1.bf16.msra.mxu0 %v4422
      %4443 = vmatprep.subr.bf16.mxu0 0
      %4444 = vmatpush1.bf16.msra.mxu0 %v4423
      %4445 = vmatprep.subr.bf16.mxu0 0
      %4446 = vmatpush1.bf16.msra.mxu0 %v4424
      %4447 = vmatprep.subr.bf16.mxu0 0
      %4448 = vmatpush1.bf16.msra.mxu0 %v4425
      %4449 = vmatprep.subr.bf16.mxu0 0
      %4450 = vmatpush1.bf16.msra.mxu0 %v4426
      %4451 = vmatprep.subr.bf16.mxu0 0
      %4452 = vmatpush1.bf16.msra.mxu0 0
      %4453 = vmatprep.subr.bf16.mxu0 0
      %4454 = vmatpush1.bf16.msra.mxu0 0
      %4455 = vmatprep.subr.bf16.mxu0 0
      %4456 = vmatpush1.bf16.msra.mxu0 0
      %4457 = vmatprep.subr.bf16.mxu0 0
      %4458 = vmatpush1.bf16.msra.mxu0 0
      %4459 = vmatprep.subr.bf16.mxu0 0
      %4460 = vmatpush1.bf16.msra.mxu0 0
      %4461 = vmatprep.subr.bf16.mxu0 0
      %4462 = vmatpush1.bf16.msra.mxu0 0
      %4463 = vmatprep.subr.bf16.mxu0 0
      %4464 = vmatpush1.bf16.msra.mxu0 0
      %4465 = vmatprep.subr.bf16.mxu0 0
      %4466 = vmatpush1.bf16.msra.mxu0 0
      %4467 = vmatprep.mubr.bf16.mxu0 0
      %4468 = vmatmul.mubr.bf16.gmra.mrb[0].mxu0 %v4215
      %v4469 = vpop.f32.mrb[0].mxu0
      %v4470 = vadd.f32 0.0, %v4469
      %v4471 = vpop.f32.mrb[0].mxu0
      %v4472 = vpop.f32.mrb[0].mxu0
      %v4473 = vadd.f32 0.0, %v4472
      %v4474 = vpop.f32.mrb[0].mxu0
      %4475 = vmatprep.mubr.bf16.mxu0 0
      %4476 = vmatmul.mubr.bf16.gmra.mrb[0].mxu0 %v4224
      %v4477 = vpop.f32.mrb[0].mxu0
      %v4478 = vadd.f32 0.0, %v4477
      %v4479 = vpop.f32.mrb[0].mxu0
      %v4480 = vpop.f32.mrb[0].mxu0
      %v4481 = vadd.f32 0.0, %v4480
      %v4482 = vpop.f32.mrb[0].mxu0
      %4483 = vmatprep.mubr.bf16.mxu0 0
      %4484 = vmatmul.mubr.bf16.gmra.mrb[0].mxu0 %v4233
      %v4485 = vpop.f32.mrb[0].mxu0
      %v4486 = vadd.f32 0.0, %v4485
      %v4487 = vpop.f32.mrb[0].mxu0
      %v4488 = vpop.f32.mrb[0].mxu0
      %v4489 = vadd.f32 0.0, %v4488
      %v4490 = vpop.f32.mrb[0].mxu0
      %4491 = vmatprep.mubr.bf16.mxu0 0
      %4492 = vmatmul.mubr.bf16.gmra.mrb[0].mxu0 %v4242
      %v4493 = vpop.f32.mrb[0].mxu0
      %v4494 = vadd.f32 0.0, %v4493
      %v4495 = vpop.f32.mrb[0].mxu0
      %v4496 = vpop.f32.mrb[0].mxu0
      %v4497 = vadd.f32 0.0, %v4496
      %v4498 = vpop.f32.mrb[0].mxu0
      %4499 = vmatprep.mubr.bf16.mxu0 0
      %4500 = vmatmul.mubr.bf16.gmra.mrb[0].mxu0 %v4251
      %v4501 = vpop.f32.mrb[0].mxu0
      %v4502 = vadd.f32 0.0, %v4501
      %v4503 = vpop.f32.mrb[0].mxu0
      %v4504 = vpop.f32.mrb[0].mxu0
      %v4505 = vadd.f32 0.0, %v4504
      %v4506 = vpop.f32.mrb[0].mxu0
      %4507 = vmatprep.mubr.bf16.mxu0 0
      %4508 = vmatmul.mubr.bf16.gmra.mrb[0].mxu0 %v4260
      %v4509 = vpop.f32.mrb[0].mxu0
      %v4510 = vadd.f32 0.0, %v4509
      %v4511 = vpop.f32.mrb[0].mxu0
      %v4512 = vpop.f32.mrb[0].mxu0
      %v4513 = vadd.f32 0.0, %v4512
      %v4514 = vpop.f32.mrb[0].mxu0
      %4515 = vmatprep.mubr.bf16.mxu0 0
      %4516 = vmatmul.mubr.bf16.gmra.mrb[0].mxu0 %v4269
      %v4517 = vpop.f32.mrb[0].mxu0
      %v4518 = vadd.f32 0.0, %v4517
      %v4519 = vpop.f32.mrb[0].mxu0
      %v4520 = vpop.f32.mrb[0].mxu0
      %v4521 = vadd.f32 0.0, %v4520
      %v4522 = vpop.f32.mrb[0].mxu0
      %4523 = vmatprep.mubr.bf16.mxu0 0
      %4524 = vmatmul.mubr.bf16.gmra.mrb[0].mxu0 %v4278
      %v4525 = vpop.f32.mrb[0].mxu0
      %v4526 = vadd.f32 0.0, %v4525
      %v4527 = vpop.f32.mrb[0].mxu0
      %v4528 = vpop.f32.mrb[0].mxu0
      %v4529 = vadd.f32 0.0, %v4528
      %v4530 = vpop.f32.mrb[0].mxu0
      %4531 = vmatprep.mubr.bf16.mxu0 0
      %4532 = vmatmul.mubr.bf16.gmra.mrb[0].mxu0 %v4287
      %v4533 = vpop.f32.mrb[0].mxu0
      %v4534 = vadd.f32 0.0, %v4533
      %v4535 = vpop.f32.mrb[0].mxu0
      %v4536 = vpop.f32.mrb[0].mxu0
      %v4537 = vadd.f32 0.0, %v4536
      %v4538 = vpop.f32.mrb[0].mxu0
      %4539 = vmatprep.mubr.bf16.mxu0 0
      %4540 = vmatmul.mubr.bf16.gmra.mrb[0].mxu0 %v4296
      %v4541 = vpop.f32.mrb[0].mxu0
      %v4542 = vadd.f32 0.0, %v4541
      %v4543 = vpop.f32.mrb[0].mxu0
      %v4544 = vpop.f32.mrb[0].mxu0
      %v4545 = vadd.f32 0.0, %v4544
      %v4546 = vpop.f32.mrb[0].mxu0
      %4547 = vmatprep.mubr.bf16.mxu0 0
      %4548 = vmatmul.mubr.bf16.gmra.mrb[0].mxu0 %v4305
      %v4549 = vpop.f32.mrb[0].mxu0
      %v4550 = vadd.f32 0.0, %v4549
      %v4551 = vpop.f32.mrb[0].mxu0
      %v4552 = vpop.f32.mrb[0].mxu0
      %v4553 = vadd.f32 0.0, %v4552
      %v4554 = vpop.f32.mrb[0].mxu0
      %4555 = vmatprep.mubr.bf16.mxu0 0
      %4556 = vmatmul.mubr.bf16.gmra.mrb[0].mxu0 %v4314
      %v4557 = vpop.f32.mrb[0].mxu0
      %v4558 = vadd.f32 0.0, %v4557
      %v4559 = vpop.f32.mrb[0].mxu0
      %v4560 = vpop.f32.mrb[0].mxu0
      %v4561 = vadd.f32 0.0, %v4560
      %v4562 = vpop.f32.mrb[0].mxu0
      %4563 = vmatprep.mubr.bf16.mxu0 0
      %4564 = vmatmul.mubr.bf16.gmra.mrb[0].mxu0 %v4323
      %v4565 = vpop.f32.mrb[0].mxu0
      %v4566 = vadd.f32 0.0, %v4565
      %v4567 = vpop.f32.mrb[0].mxu0
      %v4568 = vpop.f32.mrb[0].mxu0
      %v4569 = vadd.f32 0.0, %v4568
      %v4570 = vpop.f32.mrb[0].mxu0
      %4571 = vmatprep.mubr.bf16.mxu0 0
      %4572 = vmatmul.mubr.bf16.gmra.mrb[0].mxu0 %v4332
      %v4573 = vpop.f32.mrb[0].mxu0
      %v4574 = vadd.f32 0.0, %v4573
      %v4575 = vpop.f32.mrb[0].mxu0
      %v4576 = vpop.f32.mrb[0].mxu0
      %v4577 = vadd.f32 0.0, %v4576
      %v4578 = vpop.f32.mrb[0].mxu0
      %4579 = vmatprep.mubr.bf16.mxu0 0
      %4580 = vmatmul.mubr.bf16.gmra.mrb[0].mxu0 %v4341
      %v4581 = vpop.f32.mrb[0].mxu0
      %v4582 = vadd.f32 0.0, %v4581
      %v4583 = vpop.f32.mrb[0].mxu0
      %v4584 = vpop.f32.mrb[0].mxu0
      %v4585 = vadd.f32 0.0, %v4584
      %v4586 = vpop.f32.mrb[0].mxu0
      %4587 = vmatprep.mubr.bf16.mxu0 0
      %4588 = vmatmul.mubr.bf16.gmra.mrb[0].mxu0 %v4350
      %v4589 = vpop.f32.mrb[0].mxu0
      %v4590 = vadd.f32 0.0, %v4589
      %v4591 = vpop.f32.mrb[0].mxu0
      %v4592 = vpop.f32.mrb[0].mxu0
      %v4593 = vadd.f32 0.0, %v4592
      %v4594 = vpop.f32.mrb[0].mxu0
      %4595 = vmatprep.mubr.bf16.mxu0 0
      %4596 = vmatmul.mubr.bf16.gmra.mrb[0].mxu0 %v4359
      %v4597 = vpop.f32.mrb[0].mxu0
      %v4598 = vadd.f32 0.0, %v4597
      %v4599 = vpop.f32.mrb[0].mxu0
      %v4600 = vpop.f32.mrb[0].mxu0
      %v4601 = vadd.f32 0.0, %v4600
      %v4602 = vpop.f32.mrb[0].mxu0
      %4603 = vmatprep.mubr.bf16.mxu0 0
      %4604 = vmatmul.mubr.bf16.gmra.mrb[0].mxu0 %v4368
      %v4605 = vpop.f32.mrb[0].mxu0
      %v4606 = vadd.f32 0.0, %v4605
      %v4607 = vpop.f32.mrb[0].mxu0
      %v4608 = vpop.f32.mrb[0].mxu0
      %v4609 = vadd.f32 0.0, %v4608
      %v4610 = vpop.f32.mrb[0].mxu0
      %4611 = vdwg.mxu0
      %v4612 = vld [vmem:[#allocation2] sm:$0xff]
      %v4613 = vld [vmem:[#allocation2 + $0x8] sm:$0xff]
      %v4614 = vld [vmem:[#allocation2 + $0x10] sm:$0xff]
      %v4615 = vld [vmem:[#allocation2 + $0x18] sm:$0xff]
      %v4616 = vld [vmem:[#allocation2 + $0x20] sm:$0xff]
      %v4617 = vld [vmem:[#allocation2 + $0x28] sm:$0xff]
      %v4618 = vld [vmem:[#allocation2 + $0x30] sm:$0xff]
      %v4619 = vld [vmem:[#allocation2 + $0x38] sm:$0xff]
      %v4620 = vld [vmem:[#allocation2 + $0x40] sm:$0xff]
      %v4621 = vld [vmem:[#allocation2 + $0x48] sm:$0xff]
      %v4622 = vld [vmem:[#allocation2 + $0x50] sm:$0xff]
      %v4623 = vld [vmem:[#allocation2 + $0x58] sm:$0xff]
      %v4624 = vld [vmem:[#allocation2 + $0x60] sm:$0xff]
      %v4625 = vld [vmem:[#allocation2 + $0x68] sm:$0xff]
      %v4626 = vld [vmem:[#allocation2 + $0x70] sm:$0xff]
      %v4627 = vld [vmem:[#allocation2 + $0x78] sm:$0xff]
      %v4628 = vld [vmem:[#allocation2 + $0x80] sm:$0xff]
      %v4629 = vld [vmem:[#allocation2 + $0x88] sm:$0xff]
      %v4630 = vld [vmem:[#allocation2 + $0x90] sm:$0xff]
      %v4631 = vld [vmem:[#allocation2 + $0x98] sm:$0xff]
      %v4632 = vld [vmem:[#allocation2 + $0xa0] sm:$0xff]
      %v4633 = vld [vmem:[#allocation2 + $0xa8] sm:$0xff]
      %v4634 = vld [vmem:[#allocation2 + $0xb0] sm:$0xff]
      %v4635 = vld [vmem:[#allocation2 + $0xb8] sm:$0xff]
      %v4636 = vld [vmem:[#allocation2 + $0xc0] sm:$0xff]
      %v4637 = vld [vmem:[#allocation2 + $0xc8] sm:$0xff]
      %v4638 = vld [vmem:[#allocation2 + $0xd0] sm:$0xff]
      %v4639 = vld [vmem:[#allocation2 + $0xd8] sm:$0xff]
      %v4640 = vld [vmem:[#allocation2 + $0xe0] sm:$0xff]
      %v4641 = vld [vmem:[#allocation2 + $0xe8] sm:$0xff]
      %v4642 = vld [vmem:[#allocation2 + $0xf0] sm:$0xff]
      %v4643 = vld [vmem:[#allocation2 + $0xf8] sm:$0xff]
      %v4644 = vld [vmem:[#allocation2 + $0x100] sm:$0xff]
      %v4645 = vld [vmem:[#allocation2 + $0x108] sm:$0xff]
      %v4646 = vld [vmem:[#allocation2 + $0x110] sm:$0xff]
      %v4647 = vld [vmem:[#allocation2 + $0x118] sm:$0xff]
      %v4648 = vadd.f32 %v4612, %v4470
      %v4649 = vadd.f32 %v4613, %v4473
      %v4650 = vadd.f32 %v4614, %v4478
      %v4651 = vadd.f32 %v4615, %v4481
      %v4652 = vadd.f32 %v4616, %v4486
      %v4653 = vadd.f32 %v4617, %v4489
      %v4654 = vadd.f32 %v4618, %v4494
      %v4655 = vadd.f32 %v4619, %v4497
      %v4656 = vadd.f32 %v4620, %v4502
      %v4657 = vadd.f32 %v4621, %v4505
      %v4658 = vadd.f32 %v4622, %v4510
      %v4659 = vadd.f32 %v4623, %v4513
      %v4660 = vadd.f32 %v4624, %v4518
      %v4661 = vadd.f32 %v4625, %v4521
      %v4662 = vadd.f32 %v4626, %v4526
      %v4663 = vadd.f32 %v4627, %v4529
      %v4664 = vadd.f32 %v4628, %v4534
      %v4665 = vadd.f32 %v4629, %v4537
      %v4666 = vadd.f32 %v4630, %v4542
      %v4667 = vadd.f32 %v4631, %v4545
      %v4668 = vadd.f32 %v4632, %v4550
      %v4669 = vadd.f32 %v4633, %v4553
      %v4670 = vadd.f32 %v4634, %v4558
      %v4671 = vadd.f32 %v4635, %v4561
      %v4672 = vadd.f32 %v4636, %v4566
      %v4673 = vadd.f32 %v4637, %v4569
      %v4674 = vadd.f32 %v4638, %v4574
      %v4675 = vadd.f32 %v4639, %v4577
      %v4676 = vadd.f32 %v4640, %v4582
      %v4677 = vadd.f32 %v4641, %v4585
      %v4678 = vadd.f32 %v4642, %v4590
      %v4679 = vadd.f32 %v4643, %v4593
      %v4680 = vadd.f32 %v4644, %v4598
      %v4681 = vadd.f32 %v4645, %v4601
      %v4682 = vadd.f32 %v4646, %v4606
      %v4683 = vadd.f32 %v4647, %v4609
      %4684 = vst [vmem:[#allocation2] sm:$0xff] %v4648
      %4685 = vst [vmem:[#allocation2 + $0x8] sm:$0xff] %v4649
      %4686 = vst [vmem:[#allocation2 + $0x10] sm:$0xff] %v4650
      %4687 = vst [vmem:[#allocation2 + $0x18] sm:$0xff] %v4651
      %4688 = vst [vmem:[#allocation2 + $0x20] sm:$0xff] %v4652
      %4689 = vst [vmem:[#allocation2 + $0x28] sm:$0xff] %v4653
      %4690 = vst [vmem:[#allocation2 + $0x30] sm:$0xff] %v4654
      %4691 = vst [vmem:[#allocation2 + $0x38] sm:$0xff] %v4655
      %4692 = vst [vmem:[#allocation2 + $0x40] sm:$0xff] %v4656
      %4693 = vst [vmem:[#allocation2 + $0x48] sm:$0xff] %v4657
      %4694 = vst [vmem:[#allocation2 + $0x50] sm:$0xff] %v4658
      %4695 = vst [vmem:[#allocation2 + $0x58] sm:$0xff] %v4659
      %4696 = vst [vmem:[#allocation2 + $0x60] sm:$0xff] %v4660
      %4697 = vst [vmem:[#allocation2 + $0x68] sm:$0xff] %v4661
      %4698 = vst [vmem:[#allocation2 + $0x70] sm:$0xff] %v4662
      %4699 = vst [vmem:[#allocation2 + $0x78] sm:$0xff] %v4663
      %4700 = vst [vmem:[#allocation2 + $0x80] sm:$0xff] %v4664
      %4701 = vst [vmem:[#allocation2 + $0x88] sm:$0xff] %v4665
      %4702 = vst [vmem:[#allocation2 + $0x90] sm:$0xff] %v4666
      %4703 = vst [vmem:[#allocation2 + $0x98] sm:$0xff] %v4667
      %4704 = vst [vmem:[#allocation2 + $0xa0] sm:$0xff] %v4668
      %4705 = vst [vmem:[#allocation2 + $0xa8] sm:$0xff] %v4669
      %4706 = vst [vmem:[#allocation2 + $0xb0] sm:$0xff] %v4670
      %4707 = vst [vmem:[#allocation2 + $0xb8] sm:$0xff] %v4671
      %4708 = vst [vmem:[#allocation2 + $0xc0] sm:$0xff] %v4672
      %4709 = vst [vmem:[#allocation2 + $0xc8] sm:$0xff] %v4673
      %4710 = vst [vmem:[#allocation2 + $0xd0] sm:$0xff] %v4674
      %4711 = vst [vmem:[#allocation2 + $0xd8] sm:$0xff] %v4675
      %4712 = vst [vmem:[#allocation2 + $0xe0] sm:$0xff] %v4676
      %4713 = vst [vmem:[#allocation2 + $0xe8] sm:$0xff] %v4677
      %4714 = vst [vmem:[#allocation2 + $0xf0] sm:$0xff] %v4678
      %4715 = vst [vmem:[#allocation2 + $0xf8] sm:$0xff] %v4679
      %4716 = vst [vmem:[#allocation2 + $0x100] sm:$0xff] %v4680
      %4717 = vst [vmem:[#allocation2 + $0x108] sm:$0xff] %v4681
      %4718 = vst [vmem:[#allocation2 + $0x110] sm:$0xff] %v4682
      %4719 = vst [vmem:[#allocation2 + $0x118] sm:$0xff] %v4683
      %v4720 = vld [vmem:[%s165 + $0x10] sm:$0x8]
      %v4721 = vld [vmem:[%s165 + $0x14] sm:$0xf]
      %v4722 = vld [vmem:[%s165 + $0x18] sm:$0xf]
      %v4723 = vld [vmem:[%s165 + $0x1c] sm:$0xf]
      %v4724 = vld [vmem:[%s165 + $0x20] sm:$0xf]
      %v4725 = vld [vmem:[%s165 + $0x24] sm:$0xf]
      %v4726 = vld [vmem:[%s165 + $0x28] sm:$0xf]
      %v4727 = vld [vmem:[%s165 + $0x2c] sm:$0xf]
      %v4728 = vld [vmem:[%s165 + $0x30] sm:$0xf]
      %v4729 = vld [vmem:[%s165 + $0x34] sm:$0xf]
      %v4730 = vld [vmem:[%s165 + $0x38] sm:$0xf]
      %v4731 = vld [vmem:[%s165 + $0x3c] sm:$0xf]
      %v4732 = vld [vmem:[%s165 + $0x40] sm:$0xf]
      %v4733 = vld [vmem:[%s165 + $0x44] sm:$0xf]
      %v4734 = vld [vmem:[%s165 + $0x48] sm:$0xf]
      %v4735 = vld [vmem:[%s165 + $0x4c] sm:$0xf]
      %v4736 = vld [vmem:[%s165 + $0x50] sm:$0xf]
      %v4737 = vld [vmem:[%s165 + $0x54] sm:$0xf]
      %v4738 = vld [vmem:[%s165 + $0x58] sm:$0xf]
      %v4739 = vld [vmem:[%s165 + $0x5c] sm:$0xf]
      %v4740 = vld [vmem:[%s165 + $0x60] sm:$0xf]
      %v4741 = vld [vmem:[%s165 + $0x64] sm:$0xf]
      %v4742 = vld [vmem:[%s165 + $0x68] sm:$0xf]
      %v4743 = vld [vmem:[%s165 + $0x6c] sm:$0xf]
      %v4744 = vld [vmem:[%s165 + $0x70] sm:$0xf]
      %v4745 = vld [vmem:[%s165 + $0x74] sm:$0xf]
      %v4746 = vld [vmem:[%s165 + $0x78] sm:$0xf]
      %v4747 = vld [vmem:[%s165 + $0x7c] sm:$0xf]
      %v4748 = vld [vmem:[%s165 + $0x80] sm:$0xf]
      %v4749 = vld [vmem:[%s165 + $0x84] sm:$0xf]
      %v4750 = vld [vmem:[%s165 + $0x88] sm:$0xf]
      %v4751 = vld [vmem:[%s165 + $0x8c] sm:$0xf]
      %v4752 = vld [vmem:[%s165 + $0x90] sm:$0xf]
      %v4753 = vld [vmem:[%s165 + $0x94] sm:$0xf]
      %v4754 = vld [vmem:[%s165 + $0x98] sm:$0xf]
      %v4755 = vld [vmem:[%s165 + $0x9c] sm:$0xf]
      %v4756 = vld [vmem:[%s165 + $0xa0] sm:$0x7]
      %s4757 = scalar_lea.vmem %s1, 512
      %v4758 = vld [vmem:[%s4757] sm:$0xf]
      %v4759 = vld [vmem:[%s4757 + $0x4] sm:$0xf]
      %v4760 = vld [vmem:[%s4757 + $0x8] sm:$0xf]
      %v4761 = vld [vmem:[%s4757 + $0xc] sm:$0xf]
      %v4762 = vld [vmem:[%s4757 + $0x10] sm:$0xf]
      %v4763 = vld [vmem:[%s4757 + $0x14] sm:$0xf]
      %v4764 = vld [vmem:[%s4757 + $0x18] sm:$0xf]
      %v4765 = vld [vmem:[%s4757 + $0x1c] sm:$0xf]
      %v4766 = vld [vmem:[%s4757 + $0x20] sm:$0xf]
      %v4767 = vld [vmem:[%s4757 + $0x24] sm:$0xf]
      %v4768 = vld [vmem:[%s4757 + $0x28] sm:$0xf]
      %v4769 = vld [vmem:[%s4757 + $0x2c] sm:$0xf]
      %v4770 = vld [vmem:[%s4757 + $0x30] sm:$0xf]
      %v4771 = vld [vmem:[%s4757 + $0x34] sm:$0xf]
      %v4772 = vld [vmem:[%s4757 + $0x38] sm:$0xf]
      %v4773 = vld [vmem:[%s4757 + $0x3c] sm:$0xf]
      %v4811 = vunpack.c.l.b16 %v4720
      %v4812 = vunpack.c.l.b16 %v4721
      %v4813 = vunpack.c.l.b16 %v4722
      %v4814 = vunpack.c.l.b16 %v4723
      %v4815 = vunpack.c.l.b16 %v4724
      %v4816 = vunpack.c.l.b16 %v4725
      %v4817 = vunpack.c.l.b16 %v4726
      %v4818 = vunpack.c.l.b16 %v4727
      %v4819 = vunpack.c.l.b16 %v4728
      %v4820 = vunpack.c.l.b16 %v4729
      %v4821 = vunpack.c.l.b16 %v4730
      %v4822 = vunpack.c.l.b16 %v4731
      %v4823 = vunpack.c.l.b16 %v4732
      %v4824 = vunpack.c.l.b16 %v4733
      %v4825 = vunpack.c.l.b16 %v4734
      %v4826 = vunpack.c.l.b16 %v4735
      %v4827 = vunpack.c.l.b16 %v4736
      %v4828 = vunpack.c.l.b16 %v4737
      %v4829 = vunpack.c.l.b16 %v4738
      %v4830 = vunpack.c.l.b16 %v4739
      %v4831 = vunpack.c.l.b16 %v4740
      %v4832 = vunpack.c.l.b16 %v4741
      %v4833 = vunpack.c.l.b16 %v4742
      %v4834 = vunpack.c.l.b16 %v4743
      %v4835 = vunpack.c.l.b16 %v4744
      %v4836 = vunpack.c.l.b16 %v4745
      %v4837 = vunpack.c.l.b16 %v4746
      %v4838 = vunpack.c.l.b16 %v4747
      %v4839 = vunpack.c.l.b16 %v4748
      %v4840 = vunpack.c.l.b16 %v4749
      %v4841 = vunpack.c.l.b16 %v4750
      %v4842 = vunpack.c.l.b16 %v4751
      %v4843 = vunpack.c.l.b16 %v4752
      %v4844 = vunpack.c.l.b16 %v4753
      %v4845 = vunpack.c.l.b16 %v4754
      %v4846 = vunpack.c.l.b16 %v4755
      %v4847 = vunpack.c.l.b16 %v4756
      %v4848 = vpack.c.b16 %v4812, %v4811
      %v4849 = vpack.c.b16 %v4814, %v4813
      %v4850 = vpack.c.b16 %v4816, %v4815
      %v4851 = vpack.c.b16 %v4818, %v4817
      %v4852 = vpack.c.b16 %v4820, %v4819
      %v4853 = vpack.c.b16 %v4822, %v4821
      %v4854 = vpack.c.b16 %v4824, %v4823
      %v4855 = vpack.c.b16 %v4826, %v4825
      %v4856 = vpack.c.b16 %v4828, %v4827
      %v4857 = vpack.c.b16 %v4830, %v4829
      %v4858 = vpack.c.b16 %v4832, %v4831
      %v4859 = vpack.c.b16 %v4834, %v4833
      %v4860 = vpack.c.b16 %v4836, %v4835
      %v4861 = vpack.c.b16 %v4838, %v4837
      %v4862 = vpack.c.b16 %v4840, %v4839
      %v4863 = vpack.c.b16 %v4842, %v4841
      %v4864 = vpack.c.b16 %v4844, %v4843
      %v4865 = vpack.c.b16 %v4846, %v4845
      %v4866 = vpack.c.b16 %v4847, %v4847
      %vm4867 = vcmask 1044480
      %v4868 = vrot.slane %v4848, 3
      %v4869 = vrot.slane %v4849, 3
      %v4870 = vsel %vm4867, %v4868, %v4869
      %v4871 = vrot.slane %v4850, 3
      %v4872 = vsel %vm4867, %v4869, %v4871
      %v4873 = vrot.slane %v4851, 3
      %v4874 = vsel %vm4867, %v4871, %v4873
      %v4875 = vrot.slane %v4852, 3
      %v4876 = vsel %vm4867, %v4873, %v4875
      %v4877 = vrot.slane %v4853, 3
      %v4878 = vsel %vm4867, %v4875, %v4877
      %v4879 = vrot.slane %v4854, 3
      %v4880 = vsel %vm4867, %v4877, %v4879
      %v4881 = vrot.slane %v4855, 3
      %v4882 = vsel %vm4867, %v4879, %v4881
      %v4883 = vrot.slane %v4856, 3
      %v4884 = vsel %vm4867, %v4881, %v4883
      %v4885 = vrot.slane %v4857, 3
      %v4886 = vsel %vm4867, %v4883, %v4885
      %v4887 = vrot.slane %v4858, 3
      %v4888 = vsel %vm4867, %v4885, %v4887
      %v4889 = vrot.slane %v4859, 3
      %v4890 = vsel %vm4867, %v4887, %v4889
      %v4891 = vrot.slane %v4860, 3
      %v4892 = vsel %vm4867, %v4889, %v4891
      %v4893 = vrot.slane %v4861, 3
      %v4894 = vsel %vm4867, %v4891, %v4893
      %v4895 = vrot.slane %v4862, 3
      %v4896 = vsel %vm4867, %v4893, %v4895
      %v4897 = vrot.slane %v4863, 3
      %v4898 = vsel %vm4867, %v4895, %v4897
      %v4899 = vrot.slane %v4864, 3
      %v4900 = vsel %vm4867, %v4897, %v4899
      %v4901 = vrot.slane %v4865, 3
      %v4902 = vsel %vm4867, %v4899, %v4901
      %v4903 = vrot.slane %v4866, 3
      %v4904 = vsel %vm4867, %v4901, %v4903
      %v4939 = vunpack.c.l.b16 %v4758
      %v4940 = vunpack.c.l.b16 %v4759
      %v4941 = vunpack.c.l.b16 %v4760
      %v4942 = vunpack.c.l.b16 %v4761
      %v4943 = vunpack.c.l.b16 %v4762
      %v4944 = vunpack.c.l.b16 %v4763
      %v4945 = vunpack.c.l.b16 %v4764
      %v4946 = vunpack.c.l.b16 %v4765
      %v4947 = vunpack.c.l.b16 %v4766
      %v4948 = vunpack.c.l.b16 %v4767
      %v4949 = vunpack.c.l.b16 %v4768
      %v4950 = vunpack.c.l.b16 %v4769
      %v4951 = vunpack.c.l.b16 %v4770
      %v4952 = vunpack.c.l.b16 %v4771
      %v4953 = vunpack.c.l.b16 %v4772
      %v4954 = vunpack.c.l.b16 %v4773
      %v4955 = vpack.c.b16 %v4940, %v4939
      %v4956 = vpack.c.b16 %v4942, %v4941
      %v4957 = vpack.c.b16 %v4944, %v4943
      %v4958 = vpack.c.b16 %v4946, %v4945
      %v4959 = vpack.c.b16 %v4948, %v4947
      %v4960 = vpack.c.b16 %v4950, %v4949
      %v4961 = vpack.c.b16 %v4952, %v4951
      %v4962 = vpack.c.b16 %v4954, %v4953
      %4971 = vmatprep.subr.bf16.mxu0 0
      %4972 = vmatpush1.bf16.msra.mxu0 %v4955
      %4973 = vmatprep.subr.bf16.mxu0 0
      %4974 = vmatpush1.bf16.msra.mxu0 %v4956
      %4975 = vmatprep.subr.bf16.mxu0 0
      %4976 = vmatpush1.bf16.msra.mxu0 %v4957
      %4977 = vmatprep.subr.bf16.mxu0 0
      %4978 = vmatpush1.bf16.msra.mxu0 %v4958
      %4979 = vmatprep.subr.bf16.mxu0 0
      %4980 = vmatpush1.bf16.msra.mxu0 %v4959
      %4981 = vmatprep.subr.bf16.mxu0 0
      %4982 = vmatpush1.bf16.msra.mxu0 %v4960
      %4983 = vmatprep.subr.bf16.mxu0 0
      %4984 = vmatpush1.bf16.msra.mxu0 %v4961
      %4985 = vmatprep.subr.bf16.mxu0 0
      %4986 = vmatpush1.bf16.msra.mxu0 %v4962
      %4987 = vmatprep.subr.bf16.mxu0 0
      %4988 = vmatpush1.bf16.msra.mxu0 0
      %4989 = vmatprep.subr.bf16.mxu0 0
      %4990 = vmatpush1.bf16.msra.mxu0 0
      %4991 = vmatprep.subr.bf16.mxu0 0
      %4992 = vmatpush1.bf16.msra.mxu0 0
      %4993 = vmatprep.subr.bf16.mxu0 0
      %4994 = vmatpush1.bf16.msra.mxu0 0
      %4995 = vmatprep.subr.bf16.mxu0 0
      %4996 = vmatpush1.bf16.msra.mxu0 0
      %4997 = vmatprep.subr.bf16.mxu0 0
      %4998 = vmatpush1.bf16.msra.mxu0 0
      %4999 = vmatprep.subr.bf16.mxu0 0
      %5000 = vmatpush1.bf16.msra.mxu0 0
      %5001 = vmatprep.subr.bf16.mxu0 0
      %5002 = vmatpush1.bf16.msra.mxu0 0
      %5003 = vmatprep.mubr.bf16.mxu0 0
      %5004 = vmatmul.mubr.bf16.gmra.mrb[0].mxu0 %v4870
      %v5005 = vpop.f32.mrb[0].mxu0
      %v5006 = vadd.f32 0.0, %v5005
      %v5007 = vpop.f32.mrb[0].mxu0
      %v5008 = vpop.f32.mrb[0].mxu0
      %v5009 = vadd.f32 0.0, %v5008
      %v5010 = vpop.f32.mrb[0].mxu0
      %5011 = vmatprep.mubr.bf16.mxu0 0
      %5012 = vmatmul.mubr.bf16.gmra.mrb[0].mxu0 %v4872
      %v5013 = vpop.f32.mrb[0].mxu0
      %v5014 = vadd.f32 0.0, %v5013
      %v5015 = vpop.f32.mrb[0].mxu0
      %v5016 = vpop.f32.mrb[0].mxu0
      %v5017 = vadd.f32 0.0, %v5016
      %v5018 = vpop.f32.mrb[0].mxu0
      %5019 = vmatprep.mubr.bf16.mxu0 0
      %5020 = vmatmul.mubr.bf16.gmra.mrb[0].mxu0 %v4874
      %v5021 = vpop.f32.mrb[0].mxu0
      %v5022 = vadd.f32 0.0, %v5021
      %v5023 = vpop.f32.mrb[0].mxu0
      %v5024 = vpop.f32.mrb[0].mxu0
      %v5025 = vadd.f32 0.0, %v5024
      %v5026 = vpop.f32.mrb[0].mxu0
      %5027 = vmatprep.mubr.bf16.mxu0 0
      %5028 = vmatmul.mubr.bf16.gmra.mrb[0].mxu0 %v4876
      %v5029 = vpop.f32.mrb[0].mxu0
      %v5030 = vadd.f32 0.0, %v5029
      %v5031 = vpop.f32.mrb[0].mxu0
      %v5032 = vpop.f32.mrb[0].mxu0
      %v5033 = vadd.f32 0.0, %v5032
      %v5034 = vpop.f32.mrb[0].mxu0
      %5035 = vmatprep.mubr.bf16.mxu0 0
      %5036 = vmatmul.mubr.bf16.gmra.mrb[0].mxu0 %v4878
      %v5037 = vpop.f32.mrb[0].mxu0
      %v5038 = vadd.f32 0.0, %v5037
      %v5039 = vpop.f32.mrb[0].mxu0
      %v5040 = vpop.f32.mrb[0].mxu0
      %v5041 = vadd.f32 0.0, %v5040
      %v5042 = vpop.f32.mrb[0].mxu0
      %5043 = vmatprep.mubr.bf16.mxu0 0
      %5044 = vmatmul.mubr.bf16.gmra.mrb[0].mxu0 %v4880
      %v5045 = vpop.f32.mrb[0].mxu0
      %v5046 = vadd.f32 0.0, %v5045
      %v5047 = vpop.f32.mrb[0].mxu0
      %v5048 = vpop.f32.mrb[0].mxu0
      %v5049 = vadd.f32 0.0, %v5048
      %v5050 = vpop.f32.mrb[0].mxu0
      %5051 = vmatprep.mubr.bf16.mxu0 0
      %5052 = vmatmul.mubr.bf16.gmra.mrb[0].mxu0 %v4882
      %v5053 = vpop.f32.mrb[0].mxu0
      %v5054 = vadd.f32 0.0, %v5053
      %v5055 = vpop.f32.mrb[0].mxu0
      %v5056 = vpop.f32.mrb[0].mxu0
      %v5057 = vadd.f32 0.0, %v5056
      %v5058 = vpop.f32.mrb[0].mxu0
      %5059 = vmatprep.mubr.bf16.mxu0 0
      %5060 = vmatmul.mubr.bf16.gmra.mrb[0].mxu0 %v4884
      %v5061 = vpop.f32.mrb[0].mxu0
      %v5062 = vadd.f32 0.0, %v5061
      %v5063 = vpop.f32.mrb[0].mxu0
      %v5064 = vpop.f32.mrb[0].mxu0
      %v5065 = vadd.f32 0.0, %v5064
      %v5066 = vpop.f32.mrb[0].mxu0
      %5067 = vmatprep.mubr.bf16.mxu0 0
      %5068 = vmatmul.mubr.bf16.gmra.mrb[0].mxu0 %v4886
      %v5069 = vpop.f32.mrb[0].mxu0
      %v5070 = vadd.f32 0.0, %v5069
      %v5071 = vpop.f32.mrb[0].mxu0
      %v5072 = vpop.f32.mrb[0].mxu0
      %v5073 = vadd.f32 0.0, %v5072
      %v5074 = vpop.f32.mrb[0].mxu0
      %5075 = vmatprep.mubr.bf16.mxu0 0
      %5076 = vmatmul.mubr.bf16.gmra.mrb[0].mxu0 %v4888
      %v5077 = vpop.f32.mrb[0].mxu0
      %v5078 = vadd.f32 0.0, %v5077
      %v5079 = vpop.f32.mrb[0].mxu0
      %v5080 = vpop.f32.mrb[0].mxu0
      %v5081 = vadd.f32 0.0, %v5080
      %v5082 = vpop.f32.mrb[0].mxu0
      %5083 = vmatprep.mubr.bf16.mxu0 0
      %5084 = vmatmul.mubr.bf16.gmra.mrb[0].mxu0 %v4890
      %v5085 = vpop.f32.mrb[0].mxu0
      %v5086 = vadd.f32 0.0, %v5085
      %v5087 = vpop.f32.mrb[0].mxu0
      %v5088 = vpop.f32.mrb[0].mxu0
      %v5089 = vadd.f32 0.0, %v5088
      %v5090 = vpop.f32.mrb[0].mxu0
      %5091 = vmatprep.mubr.bf16.mxu0 0
      %5092 = vmatmul.mubr.bf16.gmra.mrb[0].mxu0 %v4892
      %v5093 = vpop.f32.mrb[0].mxu0
      %v5094 = vadd.f32 0.0, %v5093
      %v5095 = vpop.f32.mrb[0].mxu0
      %v5096 = vpop.f32.mrb[0].mxu0
      %v5097 = vadd.f32 0.0, %v5096
      %v5098 = vpop.f32.mrb[0].mxu0
      %5099 = vmatprep.mubr.bf16.mxu0 0
      %5100 = vmatmul.mubr.bf16.gmra.mrb[0].mxu0 %v4894
      %v5101 = vpop.f32.mrb[0].mxu0
      %v5102 = vadd.f32 0.0, %v5101
      %v5103 = vpop.f32.mrb[0].mxu0
      %v5104 = vpop.f32.mrb[0].mxu0
      %v5105 = vadd.f32 0.0, %v5104
      %v5106 = vpop.f32.mrb[0].mxu0
      %5107 = vmatprep.mubr.bf16.mxu0 0
      %5108 = vmatmul.mubr.bf16.gmra.mrb[0].mxu0 %v4896
      %v5109 = vpop.f32.mrb[0].mxu0
      %v5110 = vadd.f32 0.0, %v5109
      %v5111 = vpop.f32.mrb[0].mxu0
      %v5112 = vpop.f32.mrb[0].mxu0
      %v5113 = vadd.f32 0.0, %v5112
      %v5114 = vpop.f32.mrb[0].mxu0
      %5115 = vmatprep.mubr.bf16.mxu0 0
      %5116 = vmatmul.mubr.bf16.gmra.mrb[0].mxu0 %v4898
      %v5117 = vpop.f32.mrb[0].mxu0
      %v5118 = vadd.f32 0.0, %v5117
      %v5119 = vpop.f32.mrb[0].mxu0
      %v5120 = vpop.f32.mrb[0].mxu0
      %v5121 = vadd.f32 0.0, %v5120
      %v5122 = vpop.f32.mrb[0].mxu0
      %5123 = vmatprep.mubr.bf16.mxu0 0
      %5124 = vmatmul.mubr.bf16.gmra.mrb[0].mxu0 %v4900
      %v5125 = vpop.f32.mrb[0].mxu0
      %v5126 = vadd.f32 0.0, %v5125
      %v5127 = vpop.f32.mrb[0].mxu0
      %v5128 = vpop.f32.mrb[0].mxu0
      %v5129 = vadd.f32 0.0, %v5128
      %v5130 = vpop.f32.mrb[0].mxu0
      %5131 = vmatprep.mubr.bf16.mxu0 0
      %5132 = vmatmul.mubr.bf16.gmra.mrb[0].mxu0 %v4902
      %v5133 = vpop.f32.mrb[0].mxu0
      %v5134 = vadd.f32 0.0, %v5133
      %v5135 = vpop.f32.mrb[0].mxu0
      %v5136 = vpop.f32.mrb[0].mxu0
      %v5137 = vadd.f32 0.0, %v5136
      %v5138 = vpop.f32.mrb[0].mxu0
      %5139 = vmatprep.mubr.bf16.mxu0 0
      %5140 = vmatmul.mubr.bf16.gmra.mrb[0].mxu0 %v4904
      %v5141 = vpop.f32.mrb[0].mxu0
      %v5142 = vadd.f32 0.0, %v5141
      %v5143 = vpop.f32.mrb[0].mxu0
      %v5144 = vpop.f32.mrb[0].mxu0
      %v5145 = vadd.f32 0.0, %v5144
      %v5146 = vpop.f32.mrb[0].mxu0
      %5147 = vdwg.mxu0
      %v5148 = vld [vmem:[#allocation2] sm:$0xff]
      %v5149 = vld [vmem:[#allocation2 + $0x8] sm:$0xff]
      %v5150 = vld [vmem:[#allocation2 + $0x10] sm:$0xff]
      %v5151 = vld [vmem:[#allocation2 + $0x18] sm:$0xff]
      %v5152 = vld [vmem:[#allocation2 + $0x20] sm:$0xff]
      %v5153 = vld [vmem:[#allocation2 + $0x28] sm:$0xff]
      %v5154 = vld [vmem:[#allocation2 + $0x30] sm:$0xff]
      %v5155 = vld [vmem:[#allocation2 + $0x38] sm:$0xff]
      %v5156 = vld [vmem:[#allocation2 + $0x40] sm:$0xff]
      %v5157 = vld [vmem:[#allocation2 + $0x48] sm:$0xff]
      %v5158 = vld [vmem:[#allocation2 + $0x50] sm:$0xff]
      %v5159 = vld [vmem:[#allocation2 + $0x58] sm:$0xff]
      %v5160 = vld [vmem:[#allocation2 + $0x60] sm:$0xff]
      %v5161 = vld [vmem:[#allocation2 + $0x68] sm:$0xff]
      %v5162 = vld [vmem:[#allocation2 + $0x70] sm:$0xff]
      %v5163 = vld [vmem:[#allocation2 + $0x78] sm:$0xff]
      %v5164 = vld [vmem:[#allocation2 + $0x80] sm:$0xff]
      %v5165 = vld [vmem:[#allocation2 + $0x88] sm:$0xff]
      %v5166 = vld [vmem:[#allocation2 + $0x90] sm:$0xff]
      %v5167 = vld [vmem:[#allocation2 + $0x98] sm:$0xff]
      %v5168 = vld [vmem:[#allocation2 + $0xa0] sm:$0xff]
      %v5169 = vld [vmem:[#allocation2 + $0xa8] sm:$0xff]
      %v5170 = vld [vmem:[#allocation2 + $0xb0] sm:$0xff]
      %v5171 = vld [vmem:[#allocation2 + $0xb8] sm:$0xff]
      %v5172 = vld [vmem:[#allocation2 + $0xc0] sm:$0xff]
      %v5173 = vld [vmem:[#allocation2 + $0xc8] sm:$0xff]
      %v5174 = vld [vmem:[#allocation2 + $0xd0] sm:$0xff]
      %v5175 = vld [vmem:[#allocation2 + $0xd8] sm:$0xff]
      %v5176 = vld [vmem:[#allocation2 + $0xe0] sm:$0xff]
      %v5177 = vld [vmem:[#allocation2 + $0xe8] sm:$0xff]
      %v5178 = vld [vmem:[#allocation2 + $0xf0] sm:$0xff]
      %v5179 = vld [vmem:[#allocation2 + $0xf8] sm:$0xff]
      %v5180 = vld [vmem:[#allocation2 + $0x100] sm:$0xff]
      %v5181 = vld [vmem:[#allocation2 + $0x108] sm:$0xff]
      %v5182 = vld [vmem:[#allocation2 + $0x110] sm:$0xff]
      %v5183 = vld [vmem:[#allocation2 + $0x118] sm:$0xff]
      %v5184 = vadd.f32 %v5148, %v5006
      %v5185 = vadd.f32 %v5149, %v5009
      %v5186 = vadd.f32 %v5150, %v5014
      %v5187 = vadd.f32 %v5151, %v5017
      %v5188 = vadd.f32 %v5152, %v5022
      %v5189 = vadd.f32 %v5153, %v5025
      %v5190 = vadd.f32 %v5154, %v5030
      %v5191 = vadd.f32 %v5155, %v5033
      %v5192 = vadd.f32 %v5156, %v5038
      %v5193 = vadd.f32 %v5157, %v5041
      %v5194 = vadd.f32 %v5158, %v5046
      %v5195 = vadd.f32 %v5159, %v5049
      %v5196 = vadd.f32 %v5160, %v5054
      %v5197 = vadd.f32 %v5161, %v5057
      %v5198 = vadd.f32 %v5162, %v5062
      %v5199 = vadd.f32 %v5163, %v5065
      %v5200 = vadd.f32 %v5164, %v5070
      %v5201 = vadd.f32 %v5165, %v5073
      %v5202 = vadd.f32 %v5166, %v5078
      %v5203 = vadd.f32 %v5167, %v5081
      %v5204 = vadd.f32 %v5168, %v5086
      %v5205 = vadd.f32 %v5169, %v5089
      %v5206 = vadd.f32 %v5170, %v5094
      %v5207 = vadd.f32 %v5171, %v5097
      %v5208 = vadd.f32 %v5172, %v5102
      %v5209 = vadd.f32 %v5173, %v5105
      %v5210 = vadd.f32 %v5174, %v5110
      %v5211 = vadd.f32 %v5175, %v5113
      %v5212 = vadd.f32 %v5176, %v5118
      %v5213 = vadd.f32 %v5177, %v5121
      %v5214 = vadd.f32 %v5178, %v5126
      %v5215 = vadd.f32 %v5179, %v5129
      %v5216 = vadd.f32 %v5180, %v5134
      %v5217 = vadd.f32 %v5181, %v5137
      %v5218 = vadd.f32 %v5182, %v5142
      %v5219 = vadd.f32 %v5183, %v5145
      %5220 = vst [vmem:[#allocation2] sm:$0xff] %v5184
      %5221 = vst [vmem:[#allocation2 + $0x8] sm:$0xff] %v5185
      %5222 = vst [vmem:[#allocation2 + $0x10] sm:$0xff] %v5186
      %5223 = vst [vmem:[#allocation2 + $0x18] sm:$0xff] %v5187
      %5224 = vst [vmem:[#allocation2 + $0x20] sm:$0xff] %v5188
      %5225 = vst [vmem:[#allocation2 + $0x28] sm:$0xff] %v5189
      %5226 = vst [vmem:[#allocation2 + $0x30] sm:$0xff] %v5190
      %5227 = vst [vmem:[#allocation2 + $0x38] sm:$0xff] %v5191
      %5228 = vst [vmem:[#allocation2 + $0x40] sm:$0xff] %v5192
      %5229 = vst [vmem:[#allocation2 + $0x48] sm:$0xff] %v5193
      %5230 = vst [vmem:[#allocation2 + $0x50] sm:$0xff] %v5194
      %5231 = vst [vmem:[#allocation2 + $0x58] sm:$0xff] %v5195
      %5232 = vst [vmem:[#allocation2 + $0x60] sm:$0xff] %v5196
      %5233 = vst [vmem:[#allocation2 + $0x68] sm:$0xff] %v5197
      %5234 = vst [vmem:[#allocation2 + $0x70] sm:$0xff] %v5198
      %5235 = vst [vmem:[#allocation2 + $0x78] sm:$0xff] %v5199
      %5236 = vst [vmem:[#allocation2 + $0x80] sm:$0xff] %v5200
      %5237 = vst [vmem:[#allocation2 + $0x88] sm:$0xff] %v5201
      %5238 = vst [vmem:[#allocation2 + $0x90] sm:$0xff] %v5202
      %5239 = vst [vmem:[#allocation2 + $0x98] sm:$0xff] %v5203
      %5240 = vst [vmem:[#allocation2 + $0xa0] sm:$0xff] %v5204
      %5241 = vst [vmem:[#allocation2 + $0xa8] sm:$0xff] %v5205
      %5242 = vst [vmem:[#allocation2 + $0xb0] sm:$0xff] %v5206
      %5243 = vst [vmem:[#allocation2 + $0xb8] sm:$0xff] %v5207
      %5244 = vst [vmem:[#allocation2 + $0xc0] sm:$0xff] %v5208
      %5245 = vst [vmem:[#allocation2 + $0xc8] sm:$0xff] %v5209
      %5246 = vst [vmem:[#allocation2 + $0xd0] sm:$0xff] %v5210
      %5247 = vst [vmem:[#allocation2 + $0xd8] sm:$0xff] %v5211
      %5248 = vst [vmem:[#allocation2 + $0xe0] sm:$0xff] %v5212
      %5249 = vst [vmem:[#allocation2 + $0xe8] sm:$0xff] %v5213
      %5250 = vst [vmem:[#allocation2 + $0xf0] sm:$0xff] %v5214
      %5251 = vst [vmem:[#allocation2 + $0xf8] sm:$0xff] %v5215
      %5252 = vst [vmem:[#allocation2 + $0x100] sm:$0xff] %v5216
      %5253 = vst [vmem:[#allocation2 + $0x108] sm:$0xff] %v5217
      %5254 = vst [vmem:[#allocation2 + $0x110] sm:$0xff] %v5218
      %5255 = vst [vmem:[#allocation2 + $0x118] sm:$0xff] %v5219
      %v5256 = vld [vmem:[%s2] sm:$0x1]
      %v5257 = vld [vmem:[#allocation2] ss:$2 sm:$0xff]
      %s5258 = scalar_lea.vmem [#allocation2], 1
      %v5259 = vld [vmem:[%s5258] ss:$2 sm:$0xff]
      %v5260 = vmax.f32 %v5257, %v5259
      %s5261 = scalar_lea.vmem [#allocation2], 18
      %v5262 = vld [vmem:[%s5261] ss:$2 sm:$0xff]
      %s5263 = scalar_lea.vmem [#allocation2], 19
      %v5264 = vld [vmem:[%s5263] ss:$2 sm:$0xff]
      %v5265 = vmax.f32 %v5262, %v5264
      %v5266 = vmax.f32 %v5260, %v5265
      %v5268 = vlaneseq
      %v5269 = vshrl.u32 %v5268, 7
      %v5270 = vsub.s32 0, %v5269
      %v5271 = vrot.slane %v5256, %v5270
      %v5273 = vadd.f32 %v5266, %v5271
      %v5274 = vmax.f32 %v5273, 0.0
      %v5275 = vpack.c.bf16 %v5274, %v5274
      %5276 = vst [vmem:[%s170] sm:$0xf] %v5275
      %s5277 = scalar_lea.vmem [#allocation2], 36
      %v5278 = vld [vmem:[%s5277] ss:$2 sm:$0xff]
      %s5279 = scalar_lea.vmem [#allocation2], 37
      %v5280 = vld [vmem:[%s5279] ss:$2 sm:$0xff]
      %v5281 = vmax.f32 %v5278, %v5280
      %s5282 = scalar_lea.vmem [#allocation2], 54
      %v5283 = vld [vmem:[%s5282] ss:$2 sm:$0xff]
      %s5284 = scalar_lea.vmem [#allocation2], 55
      %v5285 = vld [vmem:[%s5284] ss:$2 sm:$0xff]
      %v5286 = vmax.f32 %v5283, %v5285
      %v5287 = vmax.f32 %v5281, %v5286
      %v5288 = vadd.f32 %v5287, %v5271
      %v5289 = vmax.f32 %v5288, 0.0
      %v5290 = vpack.c.bf16 %v5289, %v5289
      %s5291 = scalar_lea.vmem %s170, 4
      %5292 = vst [vmem:[%s5291] sm:$0xf] %v5290
      %s5293 = scalar_lea.vmem [#allocation2], 72
      %v5294 = vld [vmem:[%s5293] ss:$2 sm:$0xff]
      %s5295 = scalar_lea.vmem [#allocation2], 73
      %v5296 = vld [vmem:[%s5295] ss:$2 sm:$0xff]
      %v5297 = vmax.f32 %v5294, %v5296
      %s5298 = scalar_lea.vmem [#allocation2], 90
      %v5299 = vld [vmem:[%s5298] ss:$2 sm:$0xff]
      %s5300 = scalar_lea.vmem [#allocation2], 91
      %v5301 = vld [vmem:[%s5300] ss:$2 sm:$0xff]
      %v5302 = vmax.f32 %v5299, %v5301
      %v5303 = vmax.f32 %v5297, %v5302
      %v5304 = vadd.f32 %v5303, %v5271
      %v5305 = vmax.f32 %v5304, 0.0
      %v5306 = vpack.c.bf16 %v5305, %v5305
      %s5307 = scalar_lea.vmem %s170, 8
      %5308 = vst [vmem:[%s5307] sm:$0xf] %v5306
      %s5309 = scalar_lea.vmem [#allocation2], 108
      %v5310 = vld [vmem:[%s5309] ss:$2 sm:$0xff]
      %s5311 = scalar_lea.vmem [#allocation2], 109
      %v5312 = vld [vmem:[%s5311] ss:$2 sm:$0xff]
      %v5313 = vmax.f32 %v5310, %v5312
      %s5314 = scalar_lea.vmem [#allocation2], 126
      %v5315 = vld [vmem:[%s5314] ss:$2 sm:$0xff]
      %s5316 = scalar_lea.vmem [#allocation2], 127
      %v5317 = vld [vmem:[%s5316] ss:$2 sm:$0xff]
      %v5318 = vmax.f32 %v5315, %v5317
      %v5319 = vmax.f32 %v5313, %v5318
      %v5320 = vadd.f32 %v5319, %v5271
      %v5321 = vmax.f32 %v5320, 0.0
      %v5322 = vpack.c.bf16 %v5321, %v5321
      %s5323 = scalar_lea.vmem %s170, 12
      %5324 = vst [vmem:[%s5323] sm:$0xf] %v5322
      %s5325 = scalar_lea.vmem [#allocation2], 144
      %v5326 = vld [vmem:[%s5325] ss:$2 sm:$0xff]
      %s5327 = scalar_lea.vmem [#allocation2], 145
      %v5328 = vld [vmem:[%s5327] ss:$2 sm:$0xff]
      %v5329 = vmax.f32 %v5326, %v5328
      %s5330 = scalar_lea.vmem [#allocation2], 162
      %v5331 = vld [vmem:[%s5330] ss:$2 sm:$0xff]
      %s5332 = scalar_lea.vmem [#allocation2], 163
      %v5333 = vld [vmem:[%s5332] ss:$2 sm:$0xff]
      %v5334 = vmax.f32 %v5331, %v5333
      %v5335 = vmax.f32 %v5329, %v5334
      %v5336 = vadd.f32 %v5335, %v5271
      %v5337 = vmax.f32 %v5336, 0.0
      %v5338 = vpack.c.bf16 %v5337, %v5337
      %s5339 = scalar_lea.vmem %s170, 16
      %5340 = vst [vmem:[%s5339] sm:$0xf] %v5338
      %s5341 = scalar_lea.vmem [#allocation2], 180
      %v5342 = vld [vmem:[%s5341] ss:$2 sm:$0xff]
      %s5343 = scalar_lea.vmem [#allocation2], 181
      %v5344 = vld [vmem:[%s5343] ss:$2 sm:$0xff]
      %v5345 = vmax.f32 %v5342, %v5344
      %s5346 = scalar_lea.vmem [#allocation2], 198
      %v5347 = vld [vmem:[%s5346] ss:$2 sm:$0xff]
      %s5348 = scalar_lea.vmem [#allocation2], 199
      %v5349 = vld [vmem:[%s5348] ss:$2 sm:$0xff]
      %v5350 = vmax.f32 %v5347, %v5349
      %v5351 = vmax.f32 %v5345, %v5350
      %v5352 = vadd.f32 %v5351, %v5271
      %v5353 = vmax.f32 %v5352, 0.0
      %v5354 = vpack.c.bf16 %v5353, %v5353
      %s5355 = scalar_lea.vmem %s170, 20
      %5356 = vst [vmem:[%s5355] sm:$0xf] %v5354
      %s5357 = scalar_lea.vmem [#allocation2], 216
      %v5358 = vld [vmem:[%s5357] ss:$2 sm:$0xff]
      %s5359 = scalar_lea.vmem [#allocation2], 217
      %v5360 = vld [vmem:[%s5359] ss:$2 sm:$0xff]
      %v5361 = vmax.f32 %v5358, %v5360
      %s5362 = scalar_lea.vmem [#allocation2], 234
      %v5363 = vld [vmem:[%s5362] ss:$2 sm:$0xff]
      %s5364 = scalar_lea.vmem [#allocation2], 235
      %v5365 = vld [vmem:[%s5364] ss:$2 sm:$0xff]
      %v5366 = vmax.f32 %v5363, %v5365
      %v5367 = vmax.f32 %v5361, %v5366
      %v5368 = vadd.f32 %v5367, %v5271
      %v5369 = vmax.f32 %v5368, 0.0
      %v5370 = vpack.c.bf16 %v5369, %v5369
      %s5371 = scalar_lea.vmem %s170, 24
      %5372 = vst [vmem:[%s5371] sm:$0xf] %v5370
      %s5373 = scalar_lea.vmem [#allocation2], 252
      %v5374 = vld [vmem:[%s5373] ss:$2 sm:$0xff]
      %s5375 = scalar_lea.vmem [#allocation2], 253
      %v5376 = vld [vmem:[%s5375] ss:$2 sm:$0xff]
      %v5377 = vmax.f32 %v5374, %v5376
      %s5378 = scalar_lea.vmem [#allocation2], 270
      %v5379 = vld [vmem:[%s5378] ss:$2 sm:$0xff]
      %s5380 = scalar_lea.vmem [#allocation2], 271
      %v5381 = vld [vmem:[%s5380] ss:$2 sm:$0xff]
      %v5382 = vmax.f32 %v5379, %v5381
      %v5383 = vmax.f32 %v5377, %v5382
      %v5384 = vadd.f32 %v5383, %v5271
      %v5385 = vmax.f32 %v5384, 0.0
      %v5386 = vpack.c.bf16 %v5385, %v5385
      %s5387 = scalar_lea.vmem %s170, 28
      %5388 = vst [vmem:[%s5387] sm:$0xf] %v5386
      %p5389 = scmp.lt.s32.totalorder %s14, 1
      %s5390 = scalar_select %p5389, %s14, 1
      %s5391 = smul.addr %s5390, 8
      %s5392 = smul.addr %s5391, 4
      %s5393 = scalar_lea.vmem %s3, %s5392
      // Predicated region
      $region33: #{vgg_forward.4} parent=31 // pred_check
        %p5394 = pneg %p100
      $region34: #{vgg_forward.4} parent=31 // pred_check_branch
        %5396 = sbr.rel (%p5394) target = $region36
      $region35: #{vgg_forward.4} parent=31 // pred_region
        _
      $region36: #{vgg_forward.4} parent=31 // pred_fallthru
        _
    $region32: #{vgg_forward.4} parent=5 // pred_fallthru
      _
    %p5397 = scmp.le.s32.totalorder 2, %s9
    // Predicated region
    $region37: #{vgg_forward.4} parent=5 // pred_check
      %p5398 = pneg %p5397
    $region38: #{vgg_forward.4} parent=5 // pred_check_branch
      %5400 = sbr.rel (%p5398) target = $region40
    $region39: #{vgg_forward.4} parent=5 // pred_region
      %s5401 = ssub.s32 %s9, 2
      // Predicated region
      $region41: #{vgg_forward.4} parent=39 // pred_check
        %p5402 = pneg %p106
      $region42: #{vgg_forward.4} parent=39 // pred_check_branch
        %5404 = sbr.rel (%p5402) target = $region44
      $region43: #{vgg_forward.4} parent=39 // pred_region
        %p5405 = scmp.lt.s32.totalorder %s15, 1
        %s5406 = scalar_select %p5405, %s15, 1
        %s5407 = smul.addr %s5406, 8
        %s5408 = smul.addr %s5407, 4
        %s5409 = scalar_lea.vmem %s3, %s5408
      $region44: #{vgg_forward.4} parent=39 // pred_fallthru
        _
    $region40: #{vgg_forward.4} parent=5 // pred_fallthru
      _
  $region6: #{vgg_forward.4} parent=0 // loop_footer
    %s13 = sadd.s32 1, %s9
  $region7: #{vgg_forward.4} parent=0 // loop_footer_branch
    %8 = sbr.rel target = $region3
  $region8: #{vgg_forward.4} parent=0 // loop_exit
    _

</llo_original>
